<compile_context>
chip_gen: v6e
topology: v6e:2x2x1
jax: 0.10.0
libtpu: 0.0.40
codegen_flags: <defaults>
</compile_context>

<pallas_src>
import collections
import functools
import math

import jax
import jax.numpy as jnp
from jax.experimental import pallas as pl
from jax.experimental.pallas import tpu as pltpu

GlobalParams = collections.namedtuple(
    "GlobalParams",
    ["batch_norm_momentum", "batch_norm_epsilon", "dropout_rate", "num_classes",
     "width_coefficient", "depth_coefficient", "depth_divisor", "min_depth",
     "drop_connect_rate", "image_size"])

BlockArgs = collections.namedtuple(
    "BlockArgs",
    ["kernel_size", "num_repeat", "input_filters", "output_filters",
     "expand_ratio", "id_skip", "stride", "se_ratio"])


# ----------------------------------------------------------------------------
# Small helpers
# ----------------------------------------------------------------------------

def _round_up(x, m):
    return (x + m - 1) // m * m


def _pick_tile(dim, candidates):
    """Largest candidate tile that evenly divides `dim`; else the full extent
    (a full-extent block is always a legal TPU block shape)."""
    for t in candidates:
        if dim >= t and dim % t == 0:
            return t
    return dim


def same_pad_nhwc(x, k, stride):
    """TF 'SAME' padding as in get_same_padding_conv2d."""
    _, H, W, _ = x.shape
    oh = -(-H // stride)
    ow = -(-W // stride)
    ph = max((oh - 1) * stride + k - H, 0)
    pw = max((ow - 1) * stride + k - W, 0)
    if ph > 0 or pw > 0:
        x = jnp.pad(x, ((0, 0), (ph // 2, ph - ph // 2), (pw // 2, pw - pw // 2), (0, 0)))
    return x


def _call_strided_conv(build, stride, hp, wp, k, ho, wo):
    """build(s, ho, wo) -> (N, ho, wo, C) conv output with in-kernel input stride s.
    Prefer computing only the strided output inside the kernel (4x less VPU work and
    HBM writeback for stride-2 blocks); if strided in-kernel reads do not lower on this
    backend, fall back to the dense stride-1 output + subsample (same semantics)."""
    if stride == 1:
        return build(1, ho, wo)
    try:
        return build(stride, ho, wo)
    except Exception:  # lowering fallback only
        y = build(1, hp - k + 1, wp - k + 1)
        return y[:, ::stride, ::stride, :]


# ----------------------------------------------------------------------------
# Pallas kernels
# ----------------------------------------------------------------------------

def _mm_kernel(*refs, act, has_gate, has_res):
    # refs: a(1,tm,tk) f32, w(tk,tn) bf16, scale(1,tn), bias(1,tn),
    #       [gate(1,tk)], [residual(1,tm,tn)], out(1,tm,tn), acc(tm,tn) f32 scratch
    a_ref, w_ref, s_ref, b_ref = refs[:4]
    pos = 4
    g_ref = r_ref = None
    if has_gate:
        g_ref = refs[pos]
        pos += 1
    if has_res:
        r_ref = refs[pos]
        pos += 1
    o_ref = refs[pos]
    acc_ref = refs[pos + 1]

    @pl.when(pl.program_id(3) == 0)
    def _():
        acc_ref[...] = jnp.zeros_like(acc_ref)

    a = a_ref[0].astype(jnp.float32)
    if has_gate:
        a = a * g_ref[...]                      # per-sample SE gate along K (channels)
    acc_ref[...] += jnp.dot(a.astype(jnp.bfloat16), w_ref[...],
                            preferred_element_type=jnp.float32)

    @pl.when(pl.program_id(3) == pl.num_programs(3) - 1)
    def _():
        y = acc_ref[...] * s_ref[...] + b_ref[...]      # folded BatchNorm
        if act == "swish":
            y = y * jax.nn.sigmoid(y)                   # relu_fn
        if has_res:
            y = y + r_ref[0].astype(jnp.float32)        # fused identity skip
        o_ref[0] = y.astype(o_ref.dtype)


def _dw_kernel(x_ref, w_ref, s_ref, b_ref, o_ref, *, k, stride, ho, wo):
    # x: (1, Hp, Wp, C) SAME-padded. w: (k*k, C). scale/bias: (1, C). out: (1, ho, wo, C)
    w = w_ref[...].astype(jnp.float32)
    acc = None
    for kh in range(k):
        for kw in range(k):
            if stride == 1:
                patch = x_ref[:, pl.ds(kh, ho), pl.ds(kw, wo), :]
            else:
                patch = x_ref[:, pl.ds(kh, ho, stride=stride),
                              pl.ds(kw, wo, stride=stride), :]
            t = patch.astype(jnp.float32) * w[kh * k + kw]
            acc = t if acc is None else acc + t          # first tap initializes acc
    y = acc * s_ref[...] + b_ref[...]
    y = y * jax.nn.sigmoid(y)                            # swish (relu_fn)
    o_ref[...] = y.astype(o_ref.dtype)


def _stem_kernel(x_ref, w_ref, s_ref, b_ref, o_ref, *, k, stride, cin, ho, wo):
    # Full (non-depthwise) kxk conv with tiny cin via tap accumulation (no im2col in HBM).
    # x: (1, Hp, Wp, cin). w: (k*k*cin, Np) with row order (kh, kw, ci). out: (1, ho, wo, Np)
    w = w_ref[...].astype(jnp.float32)
    acc = None
    for kh in range(k):
        for kw in range(k):
            if stride == 1:
                patch = x_ref[:, pl.ds(kh, ho), pl.ds(kw, wo), :]
            else:
                patch = x_ref[:, pl.ds(kh, ho, stride=stride),
                              pl.ds(kw, wo, stride=stride), :]
            patch = patch.astype(jnp.float32)
            for ci in range(cin):
                t = patch[:, :, :, ci:ci + 1] * w[(kh * k + kw) * cin + ci]
                acc = t if acc is None else acc + t
    y = acc * s_ref[...] + b_ref[...]
    y = y * jax.nn.sigmoid(y)
    o_ref[...] = y.astype(o_ref.dtype)


def _se_kernel(x_ref, w1_ref, b1_ref, w2_ref, b2_ref, o_ref):
    # Fused SE branch: GAP + reduce FC + swish + expand FC + sigmoid -> gate (1, C)
    x = x_ref[...].astype(jnp.float32)                   # (1, H, W, C)
    pooled = jnp.mean(x, axis=(1, 2))                    # (1, C)
    h = jnp.dot(pooled, w1_ref[...], preferred_element_type=jnp.float32) + b1_ref[...]
    h = h * jax.nn.sigmoid(h)                            # swish
    g = jnp.dot(h, w2_ref[...], preferred_element_type=jnp.float32) + b2_ref[...]
    o_ref[...] = jax.nn.sigmoid(g).astype(o_ref.dtype)


def _gap_kernel(x_ref, o_ref):
    o_ref[...] = jnp.mean(x_ref[...].astype(jnp.float32), axis=(1, 2)).astype(o_ref.dtype)


# ----------------------------------------------------------------------------
# Kernel wrappers
# ----------------------------------------------------------------------------

def fused_matmul(a, w, scale, bias, *, act="none", gate=None, residual=None):
    """(B, M, K) @ (K, N) with fused BN scale/bias, optional per-sample SE gate on K,
    optional residual add and optional swish.  bf16 MXU, f32 K-axis accumulator."""
    B, M, K = a.shape
    N = w.shape[1]
    Np = 128 if N < 128 else N                 # lane-dense outputs for tiny Cout
    if Np != N:
        pad = Np - N
        w = jnp.pad(w, ((0, 0), (0, pad)))
        scale = jnp.pad(scale, ((0, 0), (0, pad)))
        bias = jnp.pad(bias, ((0, 0), (0, pad)))
        if residual is not None:
            residual = jnp.pad(residual, ((0, 0), (0, 0), (0, pad)))
    w = w.astype(jnp.bfloat16)                 # halve weight HBM / VMEM traffic

    tm = _pick_tile(M, (256, 128))             # sized for v7x's 32 MiB scoped VMEM default
    tn = _pick_tile(Np, (512, 256, 128))
    tk = _pick_tile(K, (512, 256, 128))
    grid = (B, M // tm, Np // tn, K // tk)

    in_specs = [
        pl.BlockSpec((1, tm, tk), lambda b, i, j, kk: (b, i, kk)),
        pl.BlockSpec((tk, tn), lambda b, i, j, kk: (kk, j)),
        pl.BlockSpec((1, tn), lambda b, i, j, kk: (0, j)),
        pl.BlockSpec((1, tn), lambda b, i, j, kk: (0, j)),
    ]
    args = [a, w, scale, bias]
    if gate is not None:
        in_specs.append(pl.BlockSpec((1, tk), lambda b, i, j, kk: (b, kk)))
        args.append(gate)
    if residual is not None:
        in_specs.append(pl.BlockSpec((1, tm, tn), lambda b, i, j, kk: (b, i, j)))
        args.append(residual)

    out = pl.pallas_call(
        functools.partial(_mm_kernel, act=act,
                          has_gate=gate is not None, has_res=residual is not None),
        out_shape=jax.ShapeDtypeStruct((B, M, Np), jnp.float32),
        grid=grid,
        in_specs=in_specs,
        out_specs=pl.BlockSpec((1, tm, tn), lambda b, i, j, kk: (b, i, j)),
        scratch_shapes=[pltpu.VMEM((tm, tn), jnp.float32)],
        compiler_params=pltpu.CompilerParams(
            dimension_semantics=("parallel", "parallel", "parallel", "arbitrary")),
    )(*args)
    return out[:, :, :N] if Np != N else out


def conv1x1(x, w, scale, bias, act="none", gate=None, residual=None):
    Nb, H, W, C = x.shape
    Cout = w.shape[1]
    res = residual.reshape(Nb, H * W, Cout) if residual is not None else None
    y = fused_matmul(x.reshape(Nb, H * W, C), w, scale, bias,
                     act=act, gate=gate, residual=res)
    return y.reshape(Nb, H, W, Cout)


def conv_stem(x, w_flat, scale, bias, *, k, stride):
    """Stem kxk conv (tiny Cin) + folded BN + swish via in-kernel tap accumulation."""
    Nb, H, W, Cin = x.shape
    Cout = w_flat.shape[1]
    Ho, Wo = -(-H // stride), -(-W // stride)
    Np = 128 if Cout < 128 else Cout
    if Np != Cout:
        w_flat = jnp.pad(w_flat, ((0, 0), (0, Np - Cout)))
        scale = jnp.pad(scale, ((0, 0), (0, Np - Cout)))
        bias = jnp.pad(bias, ((0, 0), (0, Np - Cout)))
    xp = same_pad_nhwc(x, k, stride)
    _, Hp, Wp, _ = xp.shape

    def build(s, ho, wo):
        return pl.pallas_call(
            functools.partial(_stem_kernel, k=k, stride=s, cin=Cin, ho=ho, wo=wo),
            out_shape=jax.ShapeDtypeStruct((Nb, ho, wo, Np), jnp.float32),
            grid=(Nb,),
            in_specs=[
                pl.BlockSpec((1, Hp, Wp, Cin), lambda b: (b, 0, 0, 0)),
                pl.BlockSpec((k * k * Cin, Np), lambda b: (0, 0)),
                pl.BlockSpec((1, Np), lambda b: (0, 0)),
                pl.BlockSpec((1, Np), lambda b: (0, 0)),
            ],
            out_specs=pl.BlockSpec((1, ho, wo, Np), lambda b: (b, 0, 0, 0)),
            compiler_params=pltpu.CompilerParams(dimension_semantics=("parallel",)),
        )(xp, w_flat, scale, bias)

    y = _call_strided_conv(build, stride, Hp, Wp, k, Ho, Wo)
    return y[..., :Cout] if Np != Cout else y


def depthwise_bn_swish(x, w, scale, bias, *, k, stride):
    """Depthwise kxk conv + folded BN + swish; stride applied to in-kernel reads."""
    Nb, H, W, C = x.shape
    Ho, Wo = -(-H // stride), -(-W // stride)
    xp = same_pad_nhwc(x, k, stride)
    _, Hp, Wp, _ = xp.shape

    def build(s, ho, wo):
        return pl.pallas_call(
            functools.partial(_dw_kernel, k=k, stride=s, ho=ho, wo=wo),
            out_shape=jax.ShapeDtypeStruct((Nb, ho, wo, C), jnp.float32),
            grid=(Nb,),
            in_specs=[
                pl.BlockSpec((1, Hp, Wp, C), lambda b: (b, 0, 0, 0)),
                pl.BlockSpec((k * k, C), lambda b: (0, 0)),
                pl.BlockSpec((1, C), lambda b: (0, 0)),
                pl.BlockSpec((1, C), lambda b: (0, 0)),
            ],
            out_specs=pl.BlockSpec((1, ho, wo, C), lambda b: (b, 0, 0, 0)),
            compiler_params=pltpu.CompilerParams(dimension_semantics=("parallel",)),
        )(xp, w, scale, bias)

    return _call_strided_conv(build, stride, Hp, Wp, k, Ho, Wo)


def se_gate(x, w1, b1, w2, b2):
    """Fused SE branch; returns sigmoid gate of shape (Nb, C)."""
    Nb, H, W, C = x.shape
    S = w1.shape[1]
    Sp = 128 if S < 128 else S                 # lane-dense squeezed width
    if Sp != S:
        w1 = jnp.pad(w1, ((0, 0), (0, Sp - S)))
        b1 = jnp.pad(b1, ((0, 0), (0, Sp - S)))
        w2 = jnp.pad(w2, ((0, Sp - S), (0, 0)))
    return pl.pallas_call(
        _se_kernel,
        out_shape=jax.ShapeDtypeStruct((Nb, C), jnp.float32),
        grid=(Nb,),
        in_specs=[
            pl.BlockSpec((1, H, W, C), lambda b: (b, 0, 0, 0)),
            pl.BlockSpec((C, Sp), lambda b: (0, 0)),
            pl.BlockSpec((1, Sp), lambda b: (0, 0)),
            pl.BlockSpec((Sp, C), lambda b: (0, 0)),
            pl.BlockSpec((1, C), lambda b: (0, 0)),
        ],
        out_specs=pl.BlockSpec((1, C), lambda b: (b, 0)),
        compiler_params=pltpu.CompilerParams(dimension_semantics=("parallel",)),
    )(x, w1, b1, w2, b2)


def global_avg_pool(x):
    Nb, H, W, C = x.shape
    return pl.pallas_call(
        _gap_kernel,
        out_shape=jax.ShapeDtypeStruct((Nb, C), jnp.float32),
        grid=(Nb,),
        in_specs=[pl.BlockSpec((1, H, W, C), lambda b: (b, 0, 0, 0))],
        out_specs=pl.BlockSpec((1, C), lambda b: (b, 0)),
        compiler_params=pltpu.CompilerParams(dimension_semantics=("parallel",)),
    )(x)


# ----------------------------------------------------------------------------
# Parameter construction (deterministic synthetic init)
# ----------------------------------------------------------------------------

def round_filters(filters, gp):
    multiplier = gp.width_coefficient
    if not multiplier:
        return filters
    divisor = gp.depth_divisor
    min_depth = gp.min_depth
    filters *= multiplier
    min_depth = min_depth or divisor
    new_filters = max(min_depth, int(filters + divisor / 2) // divisor * divisor)
    if new_filters < 0.9 * filters:
        new_filters += divisor
    return int(new_filters)


def round_repeats(repeats, gp):
    multiplier = gp.depth_coefficient
    if not multiplier:
        return repeats
    return int(math.ceil(multiplier * repeats))


def init_bn_fold(key, c, eps):
    k1, k2, k3, k4 = jax.random.split(key, 4)
    gamma = 1.0 + 0.1 * jax.random.normal(k1, (c,), jnp.float32)
    beta = 0.1 * jax.random.normal(k2, (c,), jnp.float32)
    mean = 0.1 * jax.random.normal(k3, (c,), jnp.float32)
    var = 1.0 + 0.1 * jnp.abs(jax.random.normal(k4, (c,), jnp.float32))
    scale = gamma / jnp.sqrt(var + eps)
    bias = beta - mean * scale
    return scale.reshape(1, c), bias.reshape(1, c)


def init_mbconv(key, ba, eps):
    ks = iter(jax.random.split(key, 16))
    p = {}
    inp = ba.input_filters
    oup = inp * ba.expand_ratio
    if ba.expand_ratio != 1:
        p["expand_w"] = 0.1 * jax.random.normal(next(ks), (inp, oup), jnp.float32)
        p["bn0"] = init_bn_fold(next(ks), oup, eps)
    k = ba.kernel_size
    p["dw_w"] = 0.1 * jax.random.normal(next(ks), (k * k, oup), jnp.float32)
    p["bn1"] = init_bn_fold(next(ks), oup, eps)
    if ba.se_ratio is not None and 0 < ba.se_ratio <= 1:
        nsq = max(1, int(ba.input_filters * ba.se_ratio))
        p["se_r_w"] = 0.1 * jax.random.normal(next(ks), (oup, nsq), jnp.float32)
        p["se_r_b"] = 0.01 * jax.random.normal(next(ks), (1, nsq), jnp.float32)
        p["se_e_w"] = 0.1 * jax.random.normal(next(ks), (nsq, oup), jnp.float32)
        p["se_e_b"] = 0.01 * jax.random.normal(next(ks), (1, oup), jnp.float32)
    p["proj_w"] = 0.1 * jax.random.normal(next(ks), (oup, ba.output_filters), jnp.float32)
    p["bn2"] = init_bn_fold(next(ks), ba.output_filters, eps)
    return p


def build_efficientnet_params(key, blocks_args, gp):
    keys = iter(jax.random.split(key, 256))
    eps = gp.batch_norm_epsilon
    params = {}

    stem_out = round_filters(32, gp)
    # stem weight rows ordered (kh, kw, cin) -- must match _stem_kernel's tap order
    params["stem_w"] = 0.1 * jax.random.normal(next(keys), (3 * 3 * 3, stem_out), jnp.float32)
    params["stem_bn"] = init_bn_fold(next(keys), stem_out, eps)

    blocks, cfgs = [], []
    for block_args in blocks_args:
        ba = block_args._replace(
            input_filters=round_filters(block_args.input_filters, gp),
            output_filters=round_filters(block_args.output_filters, gp),
            num_repeat=round_repeats(block_args.num_repeat, gp))
        cfgs.append(ba)
        blocks.append(init_mbconv(next(keys), ba, eps))
        if ba.num_repeat > 1:
            ba = ba._replace(input_filters=ba.output_filters, stride=1)
        for _ in range(ba.num_repeat - 1):
            cfgs.append(ba)
            blocks.append(init_mbconv(next(keys), ba, eps))
    params["blocks"] = blocks
    params["block_cfgs"] = cfgs

    in_ch = cfgs[-1].output_filters
    head_out = round_filters(1280, gp)
    params["head_w"] = 0.1 * jax.random.normal(next(keys), (in_ch, head_out), jnp.float32)
    params["head_bn"] = init_bn_fold(next(keys), head_out, eps)
    params["fc_w"] = 0.1 * jax.random.normal(next(keys), (head_out, gp.num_classes), jnp.float32)
    params["fc_b"] = 0.01 * jax.random.normal(next(keys), (1, gp.num_classes), jnp.float32)
    return params


# ----------------------------------------------------------------------------
# Forward pass
# ----------------------------------------------------------------------------

def mbconv_forward(x, p, ba):
    inputs = x
    if ba.expand_ratio != 1:
        s0, b0 = p["bn0"]
        x = conv1x1(x, p["expand_w"], s0, b0, act="swish")
    k = ba.kernel_size
    stride = ba.stride if isinstance(ba.stride, int) else ba.stride[0]
    s1, b1 = p["bn1"]
    x = depthwise_bn_swish(x, p["dw_w"], s1, b1, k=k, stride=stride)

    gate = None
    if "se_r_w" in p:
        gate = se_gate(x, p["se_r_w"], p["se_r_b"], p["se_e_w"], p["se_e_b"])

    s2, b2 = p["bn2"]
    use_skip = ba.id_skip and stride == 1 and ba.input_filters == ba.output_filters
    residual = inputs if use_skip else None       # drop_connect skipped (rate None, eval)
    x = conv1x1(x, p["proj_w"], s2, b2, act="none", gate=gate, residual=residual)
    return x


def efficientnet_forward(params, gp, x_nchw):
    x = jnp.transpose(x_nchw.astype(jnp.float32), (0, 2, 3, 1))   # NCHW -> NHWC
    s, b = params["stem_bn"]
    x = conv_stem(x, params["stem_w"], s, b, k=3, stride=2)
    for p, ba in zip(params["blocks"], params["block_cfgs"]):
        x = mbconv_forward(x, p, ba)
    s, b = params["head_bn"]
    x = conv1x1(x, params["head_w"], s, b, act="swish")
    x = global_avg_pool(x)                    # adaptive_avg_pool2d(.,1).squeeze(-1).squeeze(-1)
    # dropout_rate = 0.0 -> `if self._dropout:` is falsy -> skipped
    ones = jnp.ones_like(params["fc_b"])
    logits = fused_matmul(x[None], params["fc_w"], ones, params["fc_b"], act="none")
    return logits[0]


# ----------------------------------------------------------------------------
# Main
# ----------------------------------------------------------------------------

if __name__ == "__main__":
    gp = GlobalParams(
        batch_norm_momentum=0.99, batch_norm_epsilon=1e-3, dropout_rate=0.0,
        num_classes=10, width_coefficient=0.1, depth_coefficient=1.0,
        depth_divisor=8, min_depth=None, drop_connect_rate=None, image_size=16)

    blocks_args = [
        BlockArgs(kernel_size=3, num_repeat=1, input_filters=32, output_filters=16,
                  expand_ratio=1, id_skip=True, stride=1, se_ratio=0.25),
        BlockArgs(kernel_size=3, num_repeat=2, input_filters=16, output_filters=24,
                  expand_ratio=6, id_skip=True, stride=2, se_ratio=0.25),
        BlockArgs(kernel_size=5, num_repeat=1, input_filters=24, output_filters=40,
                  expand_ratio=6, id_skip=True, stride=2, se_ratio=0.25),
    ]

    root = jax.random.PRNGKey(0)
    k_params, k_input = jax.random.split(root)
    params = build_efficientnet_params(k_params, blocks_args, gp)

    x = jax.random.normal(k_input, (2, 3, 16, 16), jnp.float32)   # NCHW, like PyTorch

    logits = efficientnet_forward(params, gp, x)
    logits = jax.block_until_ready(logits)
    assert logits.shape == (2, gp.num_classes)
    assert bool(jnp.all(jnp.isfinite(logits)))
    print("KERNEL_OK")
</pallas_src>

<mosaic_0001>
module attributes {stable_mosaic.version = 11 : i64} {
  func.func @_stem_kernel(%arg0: i32, %arg1: memref<1x17x17x3xf32, #tpu.memory_space<vmem>>, %arg2: memref<27x128xf32, #tpu.memory_space<vmem>>, %arg3: memref<1x128xf32, #tpu.memory_space<vmem>>, %arg4: memref<1x128xf32, #tpu.memory_space<vmem>>, %arg5: memref<1x8x8x128xf32, #tpu.memory_space<vmem>>) attributes {dimension_semantics = [#tpu.dimension_semantics<parallel>], iteration_bounds = array<i64: 2>, scalar_prefetch = 0 : i64, scratch_operands = 0 : i64, tpu.core_type = #tpu.core_type<tc>, window_params = [{transform_indices = @transform_0, window_bounds = array<i64: 1, 17, 17, 3>}, {pipeline_mode = #tpu.pipeline_mode<synchronous>, transform_indices = @transform_1, window_bounds = array<i64: 27, 128>}, {pipeline_mode = #tpu.pipeline_mode<synchronous>, transform_indices = @transform_2, window_bounds = array<i64: 1, 128>}, {pipeline_mode = #tpu.pipeline_mode<synchronous>, transform_indices = @transform_3, window_bounds = array<i64: 1, 128>}, {transform_indices = @transform_4, window_bounds = array<i64: 1, 8, 8, 128>}]} {
    %c0 = arith.constant 0 : index
    %c0_0 = arith.constant 0 : index
    %0 = vector.load %arg2[%c0, %c0_0] : memref<27x128xf32, #tpu.memory_space<vmem>>, vector<27x128xf32>
    %c0_1 = arith.constant 0 : index
    %c0_2 = arith.constant 0 : index
    %c0_3 = arith.constant 0 : index
    %c0_4 = arith.constant 0 : index
    %1 = tpu.strided_load %arg1[%c0_1, %c0_2, %c0_3, %c0_4] {strides = array<i32: 1, 2, 2, 1>} : memref<1x17x17x3xf32, #tpu.memory_space<vmem>>, vector<1x8x8x3xf32>
    %2 = vector.extract_strided_slice %1 {offsets = [0, 0, 0, 0], sizes = [1, 8, 8, 1], strides = [1, 1, 1, 1]} : vector<1x8x8x3xf32> to vector<1x8x8x1xf32>
    %3 = vector.extract_strided_slice %0 {offsets = [0, 0], sizes = [1, 128], strides = [1, 1]} : vector<27x128xf32> to vector<1x128xf32>
    %4 = vector.shape_cast %3 : vector<1x128xf32> to vector<128xf32>
    %5 = vector.shape_cast %4 : vector<128xf32> to vector<1x1x1x128xf32>
    %6 = vector.broadcast %2 : vector<1x8x8x1xf32> to vector<1x8x8x128xf32>
    %7 = vector.broadcast %5 : vector<1x1x1x128xf32> to vector<1x8x8x128xf32>
    %8 = arith.mulf %6, %7 : vector<1x8x8x128xf32>
    %9 = vector.extract_strided_slice %1 {offsets = [0, 0, 0, 1], sizes = [1, 8, 8, 1], strides = [1, 1, 1, 1]} : vector<1x8x8x3xf32> to vector<1x8x8x1xf32>
    %10 = vector.extract_strided_slice %0 {offsets = [1, 0], sizes = [1, 128], strides = [1, 1]} : vector<27x128xf32> to vector<1x128xf32>
    %11 = vector.shape_cast %10 : vector<1x128xf32> to vector<128xf32>
    %12 = vector.shape_cast %11 : vector<128xf32> to vector<1x1x1x128xf32>
    %13 = vector.broadcast %9 : vector<1x8x8x1xf32> to vector<1x8x8x128xf32>
    %14 = vector.broadcast %12 : vector<1x1x1x128xf32> to vector<1x8x8x128xf32>
    %15 = arith.mulf %13, %14 : vector<1x8x8x128xf32>
    %16 = arith.addf %8, %15 : vector<1x8x8x128xf32>
    %17 = vector.extract_strided_slice %1 {offsets = [0, 0, 0, 2], sizes = [1, 8, 8, 1], strides = [1, 1, 1, 1]} : vector<1x8x8x3xf32> to vector<1x8x8x1xf32>
    %18 = vector.extract_strided_slice %0 {offsets = [2, 0], sizes = [1, 128], strides = [1, 1]} : vector<27x128xf32> to vector<1x128xf32>
    %19 = vector.shape_cast %18 : vector<1x128xf32> to vector<128xf32>
    %20 = vector.shape_cast %19 : vector<128xf32> to vector<1x1x1x128xf32>
    %21 = vector.broadcast %17 : vector<1x8x8x1xf32> to vector<1x8x8x128xf32>
    %22 = vector.broadcast %20 : vector<1x1x1x128xf32> to vector<1x8x8x128xf32>
    %23 = arith.mulf %21, %22 : vector<1x8x8x128xf32>
    %24 = arith.addf %16, %23 : vector<1x8x8x128xf32>
    %c0_5 = arith.constant 0 : index
    %c0_6 = arith.constant 0 : index
    %c1 = arith.constant 1 : index
    %c0_7 = arith.constant 0 : index
    %25 = tpu.strided_load %arg1[%c0_5, %c0_6, %c1, %c0_7] {strides = array<i32: 1, 2, 2, 1>} : memref<1x17x17x3xf32, #tpu.memory_space<vmem>>, vector<1x8x8x3xf32>
    %26 = vector.extract_strided_slice %25 {offsets = [0, 0, 0, 0], sizes = [1, 8, 8, 1], strides = [1, 1, 1, 1]} : vector<1x8x8x3xf32> to vector<1x8x8x1xf32>
    %27 = vector.extract_strided_slice %0 {offsets = [3, 0], sizes = [1, 128], strides = [1, 1]} : vector<27x128xf32> to vector<1x128xf32>
    %28 = vector.shape_cast %27 : vector<1x128xf32> to vector<128xf32>
    %29 = vector.shape_cast %28 : vector<128xf32> to vector<1x1x1x128xf32>
    %30 = vector.broadcast %26 : vector<1x8x8x1xf32> to vector<1x8x8x128xf32>
    %31 = vector.broadcast %29 : vector<1x1x1x128xf32> to vector<1x8x8x128xf32>
    %32 = arith.mulf %30, %31 : vector<1x8x8x128xf32>
    %33 = arith.addf %24, %32 : vector<1x8x8x128xf32>
    %34 = vector.extract_strided_slice %25 {offsets = [0, 0, 0, 1], sizes = [1, 8, 8, 1], strides = [1, 1, 1, 1]} : vector<1x8x8x3xf32> to vector<1x8x8x1xf32>
    %35 = vector.extract_strided_slice %0 {offsets = [4, 0], sizes = [1, 128], strides = [1, 1]} : vector<27x128xf32> to vector<1x128xf32>
    %36 = vector.shape_cast %35 : vector<1x128xf32> to vector<128xf32>
    %37 = vector.shape_cast %36 : vector<128xf32> to vector<1x1x1x128xf32>
    %38 = vector.broadcast %34 : vector<1x8x8x1xf32> to vector<1x8x8x128xf32>
    %39 = vector.broadcast %37 : vector<1x1x1x128xf32> to vector<1x8x8x128xf32>
    %40 = arith.mulf %38, %39 : vector<1x8x8x128xf32>
    %41 = arith.addf %33, %40 : vector<1x8x8x128xf32>
    %42 = vector.extract_strided_slice %25 {offsets = [0, 0, 0, 2], sizes = [1, 8, 8, 1], strides = [1, 1, 1, 1]} : vector<1x8x8x3xf32> to vector<1x8x8x1xf32>
    %43 = vector.extract_strided_slice %0 {offsets = [5, 0], sizes = [1, 128], strides = [1, 1]} : vector<27x128xf32> to vector<1x128xf32>
    %44 = vector.shape_cast %43 : vector<1x128xf32> to vector<128xf32>
    %45 = vector.shape_cast %44 : vector<128xf32> to vector<1x1x1x128xf32>
    %46 = vector.broadcast %42 : vector<1x8x8x1xf32> to vector<1x8x8x128xf32>
    %47 = vector.broadcast %45 : vector<1x1x1x128xf32> to vector<1x8x8x128xf32>
    %48 = arith.mulf %46, %47 : vector<1x8x8x128xf32>
    %49 = arith.addf %41, %48 : vector<1x8x8x128xf32>
    %c0_8 = arith.constant 0 : index
    %c0_9 = arith.constant 0 : index
    %c2 = arith.constant 2 : index
    %c0_10 = arith.constant 0 : index
    %50 = tpu.strided_load %arg1[%c0_8, %c0_9, %c2, %c0_10] {strides = array<i32: 1, 2, 2, 1>} : memref<1x17x17x3xf32, #tpu.memory_space<vmem>>, vector<1x8x8x3xf32>
    %51 = vector.extract_strided_slice %50 {offsets = [0, 0, 0, 0], sizes = [1, 8, 8, 1], strides = [1, 1, 1, 1]} : vector<1x8x8x3xf32> to vector<1x8x8x1xf32>
    %52 = vector.extract_strided_slice %0 {offsets = [6, 0], sizes = [1, 128], strides = [1, 1]} : vector<27x128xf32> to vector<1x128xf32>
    %53 = vector.shape_cast %52 : vector<1x128xf32> to vector<128xf32>
    %54 = vector.shape_cast %53 : vector<128xf32> to vector<1x1x1x128xf32>
    %55 = vector.broadcast %51 : vector<1x8x8x1xf32> to vector<1x8x8x128xf32>
    %56 = vector.broadcast %54 : vector<1x1x1x128xf32> to vector<1x8x8x128xf32>
    %57 = arith.mulf %55, %56 : vector<1x8x8x128xf32>
    %58 = arith.addf %49, %57 : vector<1x8x8x128xf32>
    %59 = vector.extract_strided_slice %50 {offsets = [0, 0, 0, 1], sizes = [1, 8, 8, 1], strides = [1, 1, 1, 1]} : vector<1x8x8x3xf32> to vector<1x8x8x1xf32>
    %60 = vector.extract_strided_slice %0 {offsets = [7, 0], sizes = [1, 128], strides = [1, 1]} : vector<27x128xf32> to vector<1x128xf32>
    %61 = vector.shape_cast %60 : vector<1x128xf32> to vector<128xf32>
    %62 = vector.shape_cast %61 : vector<128xf32> to vector<1x1x1x128xf32>
    %63 = vector.broadcast %59 : vector<1x8x8x1xf32> to vector<1x8x8x128xf32>
    %64 = vector.broadcast %62 : vector<1x1x1x128xf32> to vector<1x8x8x128xf32>
    %65 = arith.mulf %63, %64 : vector<1x8x8x128xf32>
    %66 = arith.addf %58, %65 : vector<1x8x8x128xf32>
    %67 = vector.extract_strided_slice %50 {offsets = [0, 0, 0, 2], sizes = [1, 8, 8, 1], strides = [1, 1, 1, 1]} : vector<1x8x8x3xf32> to vector<1x8x8x1xf32>
    %68 = vector.extract_strided_slice %0 {offsets = [8, 0], sizes = [1, 128], strides = [1, 1]} : vector<27x128xf32> to vector<1x128xf32>
    %69 = vector.shape_cast %68 : vector<1x128xf32> to vector<128xf32>
    %70 = vector.shape_cast %69 : vector<128xf32> to vector<1x1x1x128xf32>
    %71 = vector.broadcast %67 : vector<1x8x8x1xf32> to vector<1x8x8x128xf32>
    %72 = vector.broadcast %70 : vector<1x1x1x128xf32> to vector<1x8x8x128xf32>
    %73 = arith.mulf %71, %72 : vector<1x8x8x128xf32>
    %74 = arith.addf %66, %73 : vector<1x8x8x128xf32>
    %c0_11 = arith.constant 0 : index
    %c1_12 = arith.constant 1 : index
    %c0_13 = arith.constant 0 : index
    %c0_14 = arith.constant 0 : index
    %75 = tpu.strided_load %arg1[%c0_11, %c1_12, %c0_13, %c0_14] {strides = array<i32: 1, 2, 2, 1>} : memref<1x17x17x3xf32, #tpu.memory_space<vmem>>, vector<1x8x8x3xf32>
    %76 = vector.extract_strided_slice %75 {offsets = [0, 0, 0, 0], sizes = [1, 8, 8, 1], strides = [1, 1, 1, 1]} : vector<1x8x8x3xf32> to vector<1x8x8x1xf32>
    %77 = vector.extract_strided_slice %0 {offsets = [9, 0], sizes = [1, 128], strides = [1, 1]} : vector<27x128xf32> to vector<1x128xf32>
    %78 = vector.shape_cast %77 : vector<1x128xf32> to vector<128xf32>
    %79 = vector.shape_cast %78 : vector<128xf32> to vector<1x1x1x128xf32>
    %80 = vector.broadcast %76 : vector<1x8x8x1xf32> to vector<1x8x8x128xf32>
    %81 = vector.broadcast %79 : vector<1x1x1x128xf32> to vector<1x8x8x128xf32>
    %82 = arith.mulf %80, %81 : vector<1x8x8x128xf32>
    %83 = arith.addf %74, %82 : vector<1x8x8x128xf32>
    %84 = vector.extract_strided_slice %75 {offsets = [0, 0, 0, 1], sizes = [1, 8, 8, 1], strides = [1, 1, 1, 1]} : vector<1x8x8x3xf32> to vector<1x8x8x1xf32>
    %85 = vector.extract_strided_slice %0 {offsets = [10, 0], sizes = [1, 128], strides = [1, 1]} : vector<27x128xf32> to vector<1x128xf32>
    %86 = vector.shape_cast %85 : vector<1x128xf32> to vector<128xf32>
    %87 = vector.shape_cast %86 : vector<128xf32> to vector<1x1x1x128xf32>
    %88 = vector.broadcast %84 : vector<1x8x8x1xf32> to vector<1x8x8x128xf32>
    %89 = vector.broadcast %87 : vector<1x1x1x128xf32> to vector<1x8x8x128xf32>
    %90 = arith.mulf %88, %89 : vector<1x8x8x128xf32>
    %91 = arith.addf %83, %90 : vector<1x8x8x128xf32>
    %92 = vector.extract_strided_slice %75 {offsets = [0, 0, 0, 2], sizes = [1, 8, 8, 1], strides = [1, 1, 1, 1]} : vector<1x8x8x3xf32> to vector<1x8x8x1xf32>
    %93 = vector.extract_strided_slice %0 {offsets = [11, 0], sizes = [1, 128], strides = [1, 1]} : vector<27x128xf32> to vector<1x128xf32>
    %94 = vector.shape_cast %93 : vector<1x128xf32> to vector<128xf32>
    %95 = vector.shape_cast %94 : vector<128xf32> to vector<1x1x1x128xf32>
    %96 = vector.broadcast %92 : vector<1x8x8x1xf32> to vector<1x8x8x128xf32>
    %97 = vector.broadcast %95 : vector<1x1x1x128xf32> to vector<1x8x8x128xf32>
    %98 = arith.mulf %96, %97 : vector<1x8x8x128xf32>
    %99 = arith.addf %91, %98 : vector<1x8x8x128xf32>
    %c0_15 = arith.constant 0 : index
    %c1_16 = arith.constant 1 : index
    %c1_17 = arith.constant 1 : index
    %c0_18 = arith.constant 0 : index
    %100 = tpu.strided_load %arg1[%c0_15, %c1_16, %c1_17, %c0_18] {strides = array<i32: 1, 2, 2, 1>} : memref<1x17x17x3xf32, #tpu.memory_space<vmem>>, vector<1x8x8x3xf32>
    %101 = vector.extract_strided_slice %100 {offsets = [0, 0, 0, 0], sizes = [1, 8, 8, 1], strides = [1, 1, 1, 1]} : vector<1x8x8x3xf32> to vector<1x8x8x1xf32>
    %102 = vector.extract_strided_slice %0 {offsets = [12, 0], sizes = [1, 128], strides = [1, 1]} : vector<27x128xf32> to vector<1x128xf32>
    %103 = vector.shape_cast %102 : vector<1x128xf32> to vector<128xf32>
    %104 = vector.shape_cast %103 : vector<128xf32> to vector<1x1x1x128xf32>
    %105 = vector.broadcast %101 : vector<1x8x8x1xf32> to vector<1x8x8x128xf32>
    %106 = vector.broadcast %104 : vector<1x1x1x128xf32> to vector<1x8x8x128xf32>
    %107 = arith.mulf %105, %106 : vector<1x8x8x128xf32>
    %108 = arith.addf %99, %107 : vector<1x8x8x128xf32>
    %109 = vector.extract_strided_slice %100 {offsets = [0, 0, 0, 1], sizes = [1, 8, 8, 1], strides = [1, 1, 1, 1]} : vector<1x8x8x3xf32> to vector<1x8x8x1xf32>
    %110 = vector.extract_strided_slice %0 {offsets = [13, 0], sizes = [1, 128], strides = [1, 1]} : vector<27x128xf32> to vector<1x128xf32>
    %111 = vector.shape_cast %110 : vector<1x128xf32> to vector<128xf32>
    %112 = vector.shape_cast %111 : vector<128xf32> to vector<1x1x1x128xf32>
    %113 = vector.broadcast %109 : vector<1x8x8x1xf32> to vector<1x8x8x128xf32>
    %114 = vector.broadcast %112 : vector<1x1x1x128xf32> to vector<1x8x8x128xf32>
    %115 = arith.mulf %113, %114 : vector<1x8x8x128xf32>
    %116 = arith.addf %108, %115 : vector<1x8x8x128xf32>
    %117 = vector.extract_strided_slice %100 {offsets = [0, 0, 0, 2], sizes = [1, 8, 8, 1], strides = [1, 1, 1, 1]} : vector<1x8x8x3xf32> to vector<1x8x8x1xf32>
    %118 = vector.extract_strided_slice %0 {offsets = [14, 0], sizes = [1, 128], strides = [1, 1]} : vector<27x128xf32> to vector<1x128xf32>
    %119 = vector.shape_cast %118 : vector<1x128xf32> to vector<128xf32>
    %120 = vector.shape_cast %119 : vector<128xf32> to vector<1x1x1x128xf32>
    %121 = vector.broadcast %117 : vector<1x8x8x1xf32> to vector<1x8x8x128xf32>
    %122 = vector.broadcast %120 : vector<1x1x1x128xf32> to vector<1x8x8x128xf32>
    %123 = arith.mulf %121, %122 : vector<1x8x8x128xf32>
    %124 = arith.addf %116, %123 : vector<1x8x8x128xf32>
    %c0_19 = arith.constant 0 : index
    %c1_20 = arith.constant 1 : index
    %c2_21 = arith.constant 2 : index
    %c0_22 = arith.constant 0 : index
    %125 = tpu.strided_load %arg1[%c0_19, %c1_20, %c2_21, %c0_22] {strides = array<i32: 1, 2, 2, 1>} : memref<1x17x17x3xf32, #tpu.memory_space<vmem>>, vector<1x8x8x3xf32>
    %126 = vector.extract_strided_slice %125 {offsets = [0, 0, 0, 0], sizes = [1, 8, 8, 1], strides = [1, 1, 1, 1]} : vector<1x8x8x3xf32> to vector<1x8x8x1xf32>
    %127 = vector.extract_strided_slice %0 {offsets = [15, 0], sizes = [1, 128], strides = [1, 1]} : vector<27x128xf32> to vector<1x128xf32>
    %128 = vector.shape_cast %127 : vector<1x128xf32> to vector<128xf32>
    %129 = vector.shape_cast %128 : vector<128xf32> to vector<1x1x1x128xf32>
    %130 = vector.broadcast %126 : vector<1x8x8x1xf32> to vector<1x8x8x128xf32>
    %131 = vector.broadcast %129 : vector<1x1x1x128xf32> to vector<1x8x8x128xf32>
    %132 = arith.mulf %130, %131 : vector<1x8x8x128xf32>
    %133 = arith.addf %124, %132 : vector<1x8x8x128xf32>
    %134 = vector.extract_strided_slice %125 {offsets = [0, 0, 0, 1], sizes = [1, 8, 8, 1], strides = [1, 1, 1, 1]} : vector<1x8x8x3xf32> to vector<1x8x8x1xf32>
    %135 = vector.extract_strided_slice %0 {offsets = [16, 0], sizes = [1, 128], strides = [1, 1]} : vector<27x128xf32> to vector<1x128xf32>
    %136 = vector.shape_cast %135 : vector<1x128xf32> to vector<128xf32>
    %137 = vector.shape_cast %136 : vector<128xf32> to vector<1x1x1x128xf32>
    %138 = vector.broadcast %134 : vector<1x8x8x1xf32> to vector<1x8x8x128xf32>
    %139 = vector.broadcast %137 : vector<1x1x1x128xf32> to vector<1x8x8x128xf32>
    %140 = arith.mulf %138, %139 : vector<1x8x8x128xf32>
    %141 = arith.addf %133, %140 : vector<1x8x8x128xf32>
    %142 = vector.extract_strided_slice %125 {offsets = [0, 0, 0, 2], sizes = [1, 8, 8, 1], strides = [1, 1, 1, 1]} : vector<1x8x8x3xf32> to vector<1x8x8x1xf32>
    %143 = vector.extract_strided_slice %0 {offsets = [17, 0], sizes = [1, 128], strides = [1, 1]} : vector<27x128xf32> to vector<1x128xf32>
    %144 = vector.shape_cast %143 : vector<1x128xf32> to vector<128xf32>
    %145 = vector.shape_cast %144 : vector<128xf32> to vector<1x1x1x128xf32>
    %146 = vector.broadcast %142 : vector<1x8x8x1xf32> to vector<1x8x8x128xf32>
    %147 = vector.broadcast %145 : vector<1x1x1x128xf32> to vector<1x8x8x128xf32>
    %148 = arith.mulf %146, %147 : vector<1x8x8x128xf32>
    %149 = arith.addf %141, %148 : vector<1x8x8x128xf32>
    %c0_23 = arith.constant 0 : index
    %c2_24 = arith.constant 2 : index
    %c0_25 = arith.constant 0 : index
    %c0_26 = arith.constant 0 : index
    %150 = tpu.strided_load %arg1[%c0_23, %c2_24, %c0_25, %c0_26] {strides = array<i32: 1, 2, 2, 1>} : memref<1x17x17x3xf32, #tpu.memory_space<vmem>>, vector<1x8x8x3xf32>
    %151 = vector.extract_strided_slice %150 {offsets = [0, 0, 0, 0], sizes = [1, 8, 8, 1], strides = [1, 1, 1, 1]} : vector<1x8x8x3xf32> to vector<1x8x8x1xf32>
    %152 = vector.extract_strided_slice %0 {offsets = [18, 0], sizes = [1, 128], strides = [1, 1]} : vector<27x128xf32> to vector<1x128xf32>
    %153 = vector.shape_cast %152 : vector<1x128xf32> to vector<128xf32>
    %154 = vector.shape_cast %153 : vector<128xf32> to vector<1x1x1x128xf32>
    %155 = vector.broadcast %151 : vector<1x8x8x1xf32> to vector<1x8x8x128xf32>
    %156 = vector.broadcast %154 : vector<1x1x1x128xf32> to vector<1x8x8x128xf32>
    %157 = arith.mulf %155, %156 : vector<1x8x8x128xf32>
    %158 = arith.addf %149, %157 : vector<1x8x8x128xf32>
    %159 = vector.extract_strided_slice %150 {offsets = [0, 0, 0, 1], sizes = [1, 8, 8, 1], strides = [1, 1, 1, 1]} : vector<1x8x8x3xf32> to vector<1x8x8x1xf32>
    %160 = vector.extract_strided_slice %0 {offsets = [19, 0], sizes = [1, 128], strides = [1, 1]} : vector<27x128xf32> to vector<1x128xf32>
    %161 = vector.shape_cast %160 : vector<1x128xf32> to vector<128xf32>
    %162 = vector.shape_cast %161 : vector<128xf32> to vector<1x1x1x128xf32>
    %163 = vector.broadcast %159 : vector<1x8x8x1xf32> to vector<1x8x8x128xf32>
    %164 = vector.broadcast %162 : vector<1x1x1x128xf32> to vector<1x8x8x128xf32>
    %165 = arith.mulf %163, %164 : vector<1x8x8x128xf32>
    %166 = arith.addf %158, %165 : vector<1x8x8x128xf32>
    %167 = vector.extract_strided_slice %150 {offsets = [0, 0, 0, 2], sizes = [1, 8, 8, 1], strides = [1, 1, 1, 1]} : vector<1x8x8x3xf32> to vector<1x8x8x1xf32>
    %168 = vector.extract_strided_slice %0 {offsets = [20, 0], sizes = [1, 128], strides = [1, 1]} : vector<27x128xf32> to vector<1x128xf32>
    %169 = vector.shape_cast %168 : vector<1x128xf32> to vector<128xf32>
    %170 = vector.shape_cast %169 : vector<128xf32> to vector<1x1x1x128xf32>
    %171 = vector.broadcast %167 : vector<1x8x8x1xf32> to vector<1x8x8x128xf32>
    %172 = vector.broadcast %170 : vector<1x1x1x128xf32> to vector<1x8x8x128xf32>
    %173 = arith.mulf %171, %172 : vector<1x8x8x128xf32>
    %174 = arith.addf %166, %173 : vector<1x8x8x128xf32>
    %c0_27 = arith.constant 0 : index
    %c2_28 = arith.constant 2 : index
    %c1_29 = arith.constant 1 : index
    %c0_30 = arith.constant 0 : index
    %175 = tpu.strided_load %arg1[%c0_27, %c2_28, %c1_29, %c0_30] {strides = array<i32: 1, 2, 2, 1>} : memref<1x17x17x3xf32, #tpu.memory_space<vmem>>, vector<1x8x8x3xf32>
    %176 = vector.extract_strided_slice %175 {offsets = [0, 0, 0, 0], sizes = [1, 8, 8, 1], strides = [1, 1, 1, 1]} : vector<1x8x8x3xf32> to vector<1x8x8x1xf32>
    %177 = vector.extract_strided_slice %0 {offsets = [21, 0], sizes = [1, 128], strides = [1, 1]} : vector<27x128xf32> to vector<1x128xf32>
    %178 = vector.shape_cast %177 : vector<1x128xf32> to vector<128xf32>
    %179 = vector.shape_cast %178 : vector<128xf32> to vector<1x1x1x128xf32>
    %180 = vector.broadcast %176 : vector<1x8x8x1xf32> to vector<1x8x8x128xf32>
    %181 = vector.broadcast %179 : vector<1x1x1x128xf32> to vector<1x8x8x128xf32>
    %182 = arith.mulf %180, %181 : vector<1x8x8x128xf32>
    %183 = arith.addf %174, %182 : vector<1x8x8x128xf32>
    %184 = vector.extract_strided_slice %175 {offsets = [0, 0, 0, 1], sizes = [1, 8, 8, 1], strides = [1, 1, 1, 1]} : vector<1x8x8x3xf32> to vector<1x8x8x1xf32>
    %185 = vector.extract_strided_slice %0 {offsets = [22, 0], sizes = [1, 128], strides = [1, 1]} : vector<27x128xf32> to vector<1x128xf32>
    %186 = vector.shape_cast %185 : vector<1x128xf32> to vector<128xf32>
    %187 = vector.shape_cast %186 : vector<128xf32> to vector<1x1x1x128xf32>
    %188 = vector.broadcast %184 : vector<1x8x8x1xf32> to vector<1x8x8x128xf32>
    %189 = vector.broadcast %187 : vector<1x1x1x128xf32> to vector<1x8x8x128xf32>
    %190 = arith.mulf %188, %189 : vector<1x8x8x128xf32>
    %191 = arith.addf %183, %190 : vector<1x8x8x128xf32>
    %192 = vector.extract_strided_slice %175 {offsets = [0, 0, 0, 2], sizes = [1, 8, 8, 1], strides = [1, 1, 1, 1]} : vector<1x8x8x3xf32> to vector<1x8x8x1xf32>
    %193 = vector.extract_strided_slice %0 {offsets = [23, 0], sizes = [1, 128], strides = [1, 1]} : vector<27x128xf32> to vector<1x128xf32>
    %194 = vector.shape_cast %193 : vector<1x128xf32> to vector<128xf32>
    %195 = vector.shape_cast %194 : vector<128xf32> to vector<1x1x1x128xf32>
    %196 = vector.broadcast %192 : vector<1x8x8x1xf32> to vector<1x8x8x128xf32>
    %197 = vector.broadcast %195 : vector<1x1x1x128xf32> to vector<1x8x8x128xf32>
    %198 = arith.mulf %196, %197 : vector<1x8x8x128xf32>
    %199 = arith.addf %191, %198 : vector<1x8x8x128xf32>
    %c0_31 = arith.constant 0 : index
    %c2_32 = arith.constant 2 : index
    %c2_33 = arith.constant 2 : index
    %c0_34 = arith.constant 0 : index
    %200 = tpu.strided_load %arg1[%c0_31, %c2_32, %c2_33, %c0_34] {strides = array<i32: 1, 2, 2, 1>} : memref<1x17x17x3xf32, #tpu.memory_space<vmem>>, vector<1x8x8x3xf32>
    %201 = vector.extract_strided_slice %200 {offsets = [0, 0, 0, 0], sizes = [1, 8, 8, 1], strides = [1, 1, 1, 1]} : vector<1x8x8x3xf32> to vector<1x8x8x1xf32>
    %202 = vector.extract_strided_slice %0 {offsets = [24, 0], sizes = [1, 128], strides = [1, 1]} : vector<27x128xf32> to vector<1x128xf32>
    %203 = vector.shape_cast %202 : vector<1x128xf32> to vector<128xf32>
    %204 = vector.shape_cast %203 : vector<128xf32> to vector<1x1x1x128xf32>
    %205 = vector.broadcast %201 : vector<1x8x8x1xf32> to vector<1x8x8x128xf32>
    %206 = vector.broadcast %204 : vector<1x1x1x128xf32> to vector<1x8x8x128xf32>
    %207 = arith.mulf %205, %206 : vector<1x8x8x128xf32>
    %208 = arith.addf %199, %207 : vector<1x8x8x128xf32>
    %209 = vector.extract_strided_slice %200 {offsets = [0, 0, 0, 1], sizes = [1, 8, 8, 1], strides = [1, 1, 1, 1]} : vector<1x8x8x3xf32> to vector<1x8x8x1xf32>
    %210 = vector.extract_strided_slice %0 {offsets = [25, 0], sizes = [1, 128], strides = [1, 1]} : vector<27x128xf32> to vector<1x128xf32>
    %211 = vector.shape_cast %210 : vector<1x128xf32> to vector<128xf32>
    %212 = vector.shape_cast %211 : vector<128xf32> to vector<1x1x1x128xf32>
    %213 = vector.broadcast %209 : vector<1x8x8x1xf32> to vector<1x8x8x128xf32>
    %214 = vector.broadcast %212 : vector<1x1x1x128xf32> to vector<1x8x8x128xf32>
    %215 = arith.mulf %213, %214 : vector<1x8x8x128xf32>
    %216 = arith.addf %208, %215 : vector<1x8x8x128xf32>
    %217 = vector.extract_strided_slice %200 {offsets = [0, 0, 0, 2], sizes = [1, 8, 8, 1], strides = [1, 1, 1, 1]} : vector<1x8x8x3xf32> to vector<1x8x8x1xf32>
    %218 = vector.extract_strided_slice %0 {offsets = [26, 0], sizes = [1, 128], strides = [1, 1]} : vector<27x128xf32> to vector<1x128xf32>
    %219 = vector.shape_cast %218 : vector<1x128xf32> to vector<128xf32>
    %220 = vector.shape_cast %219 : vector<128xf32> to vector<1x1x1x128xf32>
    %221 = vector.broadcast %217 : vector<1x8x8x1xf32> to vector<1x8x8x128xf32>
    %222 = vector.broadcast %220 : vector<1x1x1x128xf32> to vector<1x8x8x128xf32>
    %223 = arith.mulf %221, %222 : vector<1x8x8x128xf32>
    %224 = arith.addf %216, %223 : vector<1x8x8x128xf32>
    %c0_35 = arith.constant 0 : index
    %c0_36 = arith.constant 0 : index
    %225 = vector.load %arg3[%c0_35, %c0_36] : memref<1x128xf32, #tpu.memory_space<vmem>>, vector<1x128xf32>
    %226 = vector.shape_cast %225 : vector<1x128xf32> to vector<1x1x1x128xf32>
    %227 = vector.broadcast %226 : vector<1x1x1x128xf32> to vector<1x8x8x128xf32>
    %228 = arith.mulf %224, %227 : vector<1x8x8x128xf32>
    %c0_37 = arith.constant 0 : index
    %c0_38 = arith.constant 0 : index
    %229 = vector.load %arg4[%c0_37, %c0_38] : memref<1x128xf32, #tpu.memory_space<vmem>>, vector<1x128xf32>
    %230 = vector.shape_cast %229 : vector<1x128xf32> to vector<1x1x1x128xf32>
    %231 = vector.broadcast %230 : vector<1x1x1x128xf32> to vector<1x8x8x128xf32>
    %232 = arith.addf %228, %231 : vector<1x8x8x128xf32>
    %233 = arith.negf %232 : vector<1x8x8x128xf32>
    %234 = math.exp %233 : vector<1x8x8x128xf32>
    %cst = arith.constant 1.000000e+00 : f32
    %235 = vector.broadcast %cst : f32 to vector<1x8x8x128xf32>
    %236 = arith.addf %235, %234 : vector<1x8x8x128xf32>
    %237 = arith.divf %235, %236 : vector<1x8x8x128xf32>
    %238 = arith.mulf %232, %237 : vector<1x8x8x128xf32>
    %c0_39 = arith.constant 0 : index
    %c0_40 = arith.constant 0 : index
    %c0_41 = arith.constant 0 : index
    %c0_42 = arith.constant 0 : index
    %239 = vector.load %arg5[%c0_39, %c0_40, %c0_41, %c0_42] : memref<1x8x8x128xf32, #tpu.memory_space<vmem>>, vector<1x8x8x128xf32>
    tpu.vector_store %arg5[%c0_39, %c0_40, %c0_41, %c0_42], %238 {strides = array<i32>} : memref<1x8x8x128xf32, #tpu.memory_space<vmem>>, vector<1x8x8x128xf32>,
    return
  }
  func.func @transform_0(%arg0: i32) -> (i32, i32, i32, i32) {
    %c0_i32 = arith.constant 0 : i32
    %c0_i32_0 = arith.constant 0 : i32
    %c0_i32_1 = arith.constant 0 : i32
    %c0_i32_2 = arith.constant 0 : i32
    return %arg0, %c0_i32, %c0_i32_0, %c0_i32_1 : i32, i32, i32, i32
  }
  func.func @transform_1(%arg0: i32) -> (i32, i32) {
    %c0_i32 = arith.constant 0 : i32
    %c0_i32_0 = arith.constant 0 : i32
    %c0_i32_1 = arith.constant 0 : i32
    return %c0_i32, %c0_i32_0 : i32, i32
  }
  func.func @transform_2(%arg0: i32) -> (i32, i32) {
    %c0_i32 = arith.constant 0 : i32
    %c0_i32_0 = arith.constant 0 : i32
    %c0_i32_1 = arith.constant 0 : i32
    return %c0_i32, %c0_i32_0 : i32, i32
  }
  func.func @transform_3(%arg0: i32) -> (i32, i32) {
    %c0_i32 = arith.constant 0 : i32
    %c0_i32_0 = arith.constant 0 : i32
    %c0_i32_1 = arith.constant 0 : i32
    return %c0_i32, %c0_i32_0 : i32, i32
  }
  func.func @transform_4(%arg0: i32) -> (i32, i32, i32, i32) {
    %c0_i32 = arith.constant 0 : i32
    %c0_i32_0 = arith.constant 0 : i32
    %c0_i32_1 = arith.constant 0 : i32
    %c0_i32_2 = arith.constant 0 : i32
    return %arg0, %c0_i32, %c0_i32_0, %c0_i32_1 : i32, i32, i32, i32
  }
}

module attributes {stable_mosaic.version = 11 : i64} {
  func.func @_stem_kernel(%arg0: i32, %arg1: memref<1x17x17x3xf32, #tpu.memory_space<vmem>>, %arg2: memref<27x128xf32, #tpu.memory_space<vmem>>, %arg3: memref<1x128xf32, #tpu.memory_space<vmem>>, %arg4: memref<1x128xf32, #tpu.memory_space<vmem>>, %arg5: memref<1x15x15x128xf32, #tpu.memory_space<vmem>>) attributes {dimension_semantics = [#tpu.dimension_semantics<parallel>], iteration_bounds = array<i64: 2>, scalar_prefetch = 0 : i64, scratch_operands = 0 : i64, tpu.core_type = #tpu.core_type<tc>, window_params = [{transform_indices = @transform_0, window_bounds = array<i64: 1, 17, 17, 3>}, {pipeline_mode = #tpu.pipeline_mode<synchronous>, transform_indices = @transform_1, window_bounds = array<i64: 27, 128>}, {pipeline_mode = #tpu.pipeline_mode<synchronous>, transform_indices = @transform_2, window_bounds = array<i64: 1, 128>}, {pipeline_mode = #tpu.pipeline_mode<synchronous>, transform_indices = @transform_3, window_bounds = array<i64: 1, 128>}, {transform_indices = @transform_4, window_bounds = array<i64: 1, 15, 15, 128>}]} {
    %c0 = arith.constant 0 : index
    %c0_0 = arith.constant 0 : index
    %0 = vector.load %arg2[%c0, %c0_0] : memref<27x128xf32, #tpu.memory_space<vmem>>, vector<27x128xf32>
    %c0_1 = arith.constant 0 : index
    %c0_2 = arith.constant 0 : index
    %c0_3 = arith.constant 0 : index
    %c0_4 = arith.constant 0 : index
    %1 = vector.load %arg1[%c0_1, %c0_2, %c0_3, %c0_4] : memref<1x17x17x3xf32, #tpu.memory_space<vmem>>, vector<1x15x15x3xf32>
    %2 = vector.extract_strided_slice %1 {offsets = [0, 0, 0, 0], sizes = [1, 15, 15, 1], strides = [1, 1, 1, 1]} : vector<1x15x15x3xf32> to vector<1x15x15x1xf32>
    %3 = vector.extract_strided_slice %0 {offsets = [0, 0], sizes = [1, 128], strides = [1, 1]} : vector<27x128xf32> to vector<1x128xf32>
    %4 = vector.shape_cast %3 : vector<1x128xf32> to vector<128xf32>
    %5 = vector.shape_cast %4 : vector<128xf32> to vector<1x1x1x128xf32>
    %6 = vector.broadcast %2 : vector<1x15x15x1xf32> to vector<1x15x15x128xf32>
    %7 = vector.broadcast %5 : vector<1x1x1x128xf32> to vector<1x15x15x128xf32>
    %8 = arith.mulf %6, %7 : vector<1x15x15x128xf32>
    %9 = vector.extract_strided_slice %1 {offsets = [0, 0, 0, 1], sizes = [1, 15, 15, 1], strides = [1, 1, 1, 1]} : vector<1x15x15x3xf32> to vector<1x15x15x1xf32>
    %10 = vector.extract_strided_slice %0 {offsets = [1, 0], sizes = [1, 128], strides = [1, 1]} : vector<27x128xf32> to vector<1x128xf32>
    %11 = vector.shape_cast %10 : vector<1x128xf32> to vector<128xf32>
    %12 = vector.shape_cast %11 : vector<128xf32> to vector<1x1x1x128xf32>
    %13 = vector.broadcast %9 : vector<1x15x15x1xf32> to vector<1x15x15x128xf32>
    %14 = vector.broadcast %12 : vector<1x1x1x128xf32> to vector<1x15x15x128xf32>
    %15 = arith.mulf %13, %14 : vector<1x15x15x128xf32>
    %16 = arith.addf %8, %15 : vector<1x15x15x128xf32>
    %17 = vector.extract_strided_slice %1 {offsets = [0, 0, 0, 2], sizes = [1, 15, 15, 1], strides = [1, 1, 1, 1]} : vector<1x15x15x3xf32> to vector<1x15x15x1xf32>
    %18 = vector.extract_strided_slice %0 {offsets = [2, 0], sizes = [1, 128], strides = [1, 1]} : vector<27x128xf32> to vector<1x128xf32>
    %19 = vector.shape_cast %18 : vector<1x128xf32> to vector<128xf32>
    %20 = vector.shape_cast %19 : vector<128xf32> to vector<1x1x1x128xf32>
    %21 = vector.broadcast %17 : vector<1x15x15x1xf32> to vector<1x15x15x128xf32>
    %22 = vector.broadcast %20 : vector<1x1x1x128xf32> to vector<1x15x15x128xf32>
    %23 = arith.mulf %21, %22 : vector<1x15x15x128xf32>
    %24 = arith.addf %16, %23 : vector<1x15x15x128xf32>
    %c0_5 = arith.constant 0 : index
    %c0_6 = arith.constant 0 : index
    %c1 = arith.constant 1 : index
    %c0_7 = arith.constant 0 : index
    %25 = vector.load %arg1[%c0_5, %c0_6, %c1, %c0_7] : memref<1x17x17x3xf32, #tpu.memory_space<vmem>>, vector<1x15x15x3xf32>
    %26 = vector.extract_strided_slice %25 {offsets = [0, 0, 0, 0], sizes = [1, 15, 15, 1], strides = [1, 1, 1, 1]} : vector<1x15x15x3xf32> to vector<1x15x15x1xf32>
    %27 = vector.extract_strided_slice %0 {offsets = [3, 0], sizes = [1, 128], strides = [1, 1]} : vector<27x128xf32> to vector<1x128xf32>
    %28 = vector.shape_cast %27 : vector<1x128xf32> to vector<128xf32>
    %29 = vector.shape_cast %28 : vector<128xf32> to vector<1x1x1x128xf32>
    %30 = vector.broadcast %26 : vector<1x15x15x1xf32> to vector<1x15x15x128xf32>
    %31 = vector.broadcast %29 : vector<1x1x1x128xf32> to vector<1x15x15x128xf32>
    %32 = arith.mulf %30, %31 : vector<1x15x15x128xf32>
    %33 = arith.addf %24, %32 : vector<1x15x15x128xf32>
    %34 = vector.extract_strided_slice %25 {offsets = [0, 0, 0, 1], sizes = [1, 15, 15, 1], strides = [1, 1, 1, 1]} : vector<1x15x15x3xf32> to vector<1x15x15x1xf32>
    %35 = vector.extract_strided_slice %0 {offsets = [4, 0], sizes = [1, 128], strides = [1, 1]} : vector<27x128xf32> to vector<1x128xf32>
    %36 = vector.shape_cast %35 : vector<1x128xf32> to vector<128xf32>
    %37 = vector.shape_cast %36 : vector<128xf32> to vector<1x1x1x128xf32>
    %38 = vector.broadcast %34 : vector<1x15x15x1xf32> to vector<1x15x15x128xf32>
    %39 = vector.broadcast %37 : vector<1x1x1x128xf32> to vector<1x15x15x128xf32>
    %40 = arith.mulf %38, %39 : vector<1x15x15x128xf32>
    %41 = arith.addf %33, %40 : vector<1x15x15x128xf32>
    %42 = vector.extract_strided_slice %25 {offsets = [0, 0, 0, 2], sizes = [1, 15, 15, 1], strides = [1, 1, 1, 1]} : vector<1x15x15x3xf32> to vector<1x15x15x1xf32>
    %43 = vector.extract_strided_slice %0 {offsets = [5, 0], sizes = [1, 128], strides = [1, 1]} : vector<27x128xf32> to vector<1x128xf32>
    %44 = vector.shape_cast %43 : vector<1x128xf32> to vector<128xf32>
    %45 = vector.shape_cast %44 : vector<128xf32> to vector<1x1x1x128xf32>
    %46 = vector.broadcast %42 : vector<1x15x15x1xf32> to vector<1x15x15x128xf32>
    %47 = vector.broadcast %45 : vector<1x1x1x128xf32> to vector<1x15x15x128xf32>
    %48 = arith.mulf %46, %47 : vector<1x15x15x128xf32>
    %49 = arith.addf %41, %48 : vector<1x15x15x128xf32>
    %c0_8 = arith.constant 0 : index
    %c0_9 = arith.constant 0 : index
    %c2 = arith.constant 2 : index
    %c0_10 = arith.constant 0 : index
    %50 = vector.load %arg1[%c0_8, %c0_9, %c2, %c0_10] : memref<1x17x17x3xf32, #tpu.memory_space<vmem>>, vector<1x15x15x3xf32>
    %51 = vector.extract_strided_slice %50 {offsets = [0, 0, 0, 0], sizes = [1, 15, 15, 1], strides = [1, 1, 1, 1]} : vector<1x15x15x3xf32> to vector<1x15x15x1xf32>
    %52 = vector.extract_strided_slice %0 {offsets = [6, 0], sizes = [1, 128], strides = [1, 1]} : vector<27x128xf32> to vector<1x128xf32>
    %53 = vector.shape_cast %52 : vector<1x128xf32> to vector<128xf32>
    %54 = vector.shape_cast %53 : vector<128xf32> to vector<1x1x1x128xf32>
    %55 = vector.broadcast %51 : vector<1x15x15x1xf32> to vector<1x15x15x128xf32>
    %56 = vector.broadcast %54 : vector<1x1x1x128xf32> to vector<1x15x15x128xf32>
    %57 = arith.mulf %55, %56 : vector<1x15x15x128xf32>
    %58 = arith.addf %49, %57 : vector<1x15x15x128xf32>
    %59 = vector.extract_strided_slice %50 {offsets = [0, 0, 0, 1], sizes = [1, 15, 15, 1], strides = [1, 1, 1, 1]} : vector<1x15x15x3xf32> to vector<1x15x15x1xf32>
    %60 = vector.extract_strided_slice %0 {offsets = [7, 0], sizes = [1, 128], strides = [1, 1]} : vector<27x128xf32> to vector<1x128xf32>
    %61 = vector.shape_cast %60 : vector<1x128xf32> to vector<128xf32>
    %62 = vector.shape_cast %61 : vector<128xf32> to vector<1x1x1x128xf32>
    %63 = vector.broadcast %59 : vector<1x15x15x1xf32> to vector<1x15x15x128xf32>
    %64 = vector.broadcast %62 : vector<1x1x1x128xf32> to vector<1x15x15x128xf32>
    %65 = arith.mulf %63, %64 : vector<1x15x15x128xf32>
    %66 = arith.addf %58, %65 : vector<1x15x15x128xf32>
    %67 = vector.extract_strided_slice %50 {offsets = [0, 0, 0, 2], sizes = [1, 15, 15, 1], strides = [1, 1, 1, 1]} : vector<1x15x15x3xf32> to vector<1x15x15x1xf32>
    %68 = vector.extract_strided_slice %0 {offsets = [8, 0], sizes = [1, 128], strides = [1, 1]} : vector<27x128xf32> to vector<1x128xf32>
    %69 = vector.shape_cast %68 : vector<1x128xf32> to vector<128xf32>
    %70 = vector.shape_cast %69 : vector<128xf32> to vector<1x1x1x128xf32>
    %71 = vector.broadcast %67 : vector<1x15x15x1xf32> to vector<1x15x15x128xf32>
    %72 = vector.broadcast %70 : vector<1x1x1x128xf32> to vector<1x15x15x128xf32>
    %73 = arith.mulf %71, %72 : vector<1x15x15x128xf32>
    %74 = arith.addf %66, %73 : vector<1x15x15x128xf32>
    %c0_11 = arith.constant 0 : index
    %c1_12 = arith.constant 1 : index
    %c0_13 = arith.constant 0 : index
    %c0_14 = arith.constant 0 : index
    %75 = vector.load %arg1[%c0_11, %c1_12, %c0_13, %c0_14] : memref<1x17x17x3xf32, #tpu.memory_space<vmem>>, vector<1x15x15x3xf32>
    %76 = vector.extract_strided_slice %75 {offsets = [0, 0, 0, 0], sizes = [1, 15, 15, 1], strides = [1, 1, 1, 1]} : vector<1x15x15x3xf32> to vector<1x15x15x1xf32>
    %77 = vector.extract_strided_slice %0 {offsets = [9, 0], sizes = [1, 128], strides = [1, 1]} : vector<27x128xf32> to vector<1x128xf32>
    %78 = vector.shape_cast %77 : vector<1x128xf32> to vector<128xf32>
    %79 = vector.shape_cast %78 : vector<128xf32> to vector<1x1x1x128xf32>
    %80 = vector.broadcast %76 : vector<1x15x15x1xf32> to vector<1x15x15x128xf32>
    %81 = vector.broadcast %79 : vector<1x1x1x128xf32> to vector<1x15x15x128xf32>
    %82 = arith.mulf %80, %81 : vector<1x15x15x128xf32>
    %83 = arith.addf %74, %82 : vector<1x15x15x128xf32>
    %84 = vector.extract_strided_slice %75 {offsets = [0, 0, 0, 1], sizes = [1, 15, 15, 1], strides = [1, 1, 1, 1]} : vector<1x15x15x3xf32> to vector<1x15x15x1xf32>
    %85 = vector.extract_strided_slice %0 {offsets = [10, 0], sizes = [1, 128], strides = [1, 1]} : vector<27x128xf32> to vector<1x128xf32>
    %86 = vector.shape_cast %85 : vector<1x128xf32> to vector<128xf32>
    %87 = vector.shape_cast %86 : vector<128xf32> to vector<1x1x1x128xf32>
    %88 = vector.broadcast %84 : vector<1x15x15x1xf32> to vector<1x15x15x128xf32>
    %89 = vector.broadcast %87 : vector<1x1x1x128xf32> to vector<1x15x15x128xf32>
    %90 = arith.mulf %88, %89 : vector<1x15x15x128xf32>
    %91 = arith.addf %83, %90 : vector<1x15x15x128xf32>
    %92 = vector.extract_strided_slice %75 {offsets = [0, 0, 0, 2], sizes = [1, 15, 15, 1], strides = [1, 1, 1, 1]} : vector<1x15x15x3xf32> to vector<1x15x15x1xf32>
    %93 = vector.extract_strided_slice %0 {offsets = [11, 0], sizes = [1, 128], strides = [1, 1]} : vector<27x128xf32> to vector<1x128xf32>
    %94 = vector.shape_cast %93 : vector<1x128xf32> to vector<128xf32>
    %95 = vector.shape_cast %94 : vector<128xf32> to vector<1x1x1x128xf32>
    %96 = vector.broadcast %92 : vector<1x15x15x1xf32> to vector<1x15x15x128xf32>
    %97 = vector.broadcast %95 : vector<1x1x1x128xf32> to vector<1x15x15x128xf32>
    %98 = arith.mulf %96, %97 : vector<1x15x15x128xf32>
    %99 = arith.addf %91, %98 : vector<1x15x15x128xf32>
    %c0_15 = arith.constant 0 : index
    %c1_16 = arith.constant 1 : index
    %c1_17 = arith.constant 1 : index
    %c0_18 = arith.constant 0 : index
    %100 = vector.load %arg1[%c0_15, %c1_16, %c1_17, %c0_18] : memref<1x17x17x3xf32, #tpu.memory_space<vmem>>, vector<1x15x15x3xf32>
    %101 = vector.extract_strided_slice %100 {offsets = [0, 0, 0, 0], sizes = [1, 15, 15, 1], strides = [1, 1, 1, 1]} : vector<1x15x15x3xf32> to vector<1x15x15x1xf32>
    %102 = vector.extract_strided_slice %0 {offsets = [12, 0], sizes = [1, 128], strides = [1, 1]} : vector<27x128xf32> to vector<1x128xf32>
    %103 = vector.shape_cast %102 : vector<1x128xf32> to vector<128xf32>
    %104 = vector.shape_cast %103 : vector<128xf32> to vector<1x1x1x128xf32>
    %105 = vector.broadcast %101 : vector<1x15x15x1xf32> to vector<1x15x15x128xf32>
    %106 = vector.broadcast %104 : vector<1x1x1x128xf32> to vector<1x15x15x128xf32>
    %107 = arith.mulf %105, %106 : vector<1x15x15x128xf32>
    %108 = arith.addf %99, %107 : vector<1x15x15x128xf32>
    %109 = vector.extract_strided_slice %100 {offsets = [0, 0, 0, 1], sizes = [1, 15, 15, 1], strides = [1, 1, 1, 1]} : vector<1x15x15x3xf32> to vector<1x15x15x1xf32>
    %110 = vector.extract_strided_slice %0 {offsets = [13, 0], sizes = [1, 128], strides = [1, 1]} : vector<27x128xf32> to vector<1x128xf32>
    %111 = vector.shape_cast %110 : vector<1x128xf32> to vector<128xf32>
    %112 = vector.shape_cast %111 : vector<128xf32> to vector<1x1x1x128xf32>
    %113 = vector.broadcast %109 : vector<1x15x15x1xf32> to vector<1x15x15x128xf32>
    %114 = vector.broadcast %112 : vector<1x1x1x128xf32> to vector<1x15x15x128xf32>
    %115 = arith.mulf %113, %114 : vector<1x15x15x128xf32>
    %116 = arith.addf %108, %115 : vector<1x15x15x128xf32>
    %117 = vector.extract_strided_slice %100 {offsets = [0, 0, 0, 2], sizes = [1, 15, 15, 1], strides = [1, 1, 1, 1]} : vector<1x15x15x3xf32> to vector<1x15x15x1xf32>
    %118 = vector.extract_strided_slice %0 {offsets = [14, 0], sizes = [1, 128], strides = [1, 1]} : vector<27x128xf32> to vector<1x128xf32>
    %119 = vector.shape_cast %118 : vector<1x128xf32> to vector<128xf32>
    %120 = vector.shape_cast %119 : vector<128xf32> to vector<1x1x1x128xf32>
    %121 = vector.broadcast %117 : vector<1x15x15x1xf32> to vector<1x15x15x128xf32>
    %122 = vector.broadcast %120 : vector<1x1x1x128xf32> to vector<1x15x15x128xf32>
    %123 = arith.mulf %121, %122 : vector<1x15x15x128xf32>
    %124 = arith.addf %116, %123 : vector<1x15x15x128xf32>
    %c0_19 = arith.constant 0 : index
    %c1_20 = arith.constant 1 : index
    %c2_21 = arith.constant 2 : index
    %c0_22 = arith.constant 0 : index
    %125 = vector.load %arg1[%c0_19, %c1_20, %c2_21, %c0_22] : memref<1x17x17x3xf32, #tpu.memory_space<vmem>>, vector<1x15x15x3xf32>
    %126 = vector.extract_strided_slice %125 {offsets = [0, 0, 0, 0], sizes = [1, 15, 15, 1], strides = [1, 1, 1, 1]} : vector<1x15x15x3xf32> to vector<1x15x15x1xf32>
    %127 = vector.extract_strided_slice %0 {offsets = [15, 0], sizes = [1, 128], strides = [1, 1]} : vector<27x128xf32> to vector<1x128xf32>
    %128 = vector.shape_cast %127 : vector<1x128xf32> to vector<128xf32>
    %129 = vector.shape_cast %128 : vector<128xf32> to vector<1x1x1x128xf32>
    %130 = vector.broadcast %126 : vector<1x15x15x1xf32> to vector<1x15x15x128xf32>
    %131 = vector.broadcast %129 : vector<1x1x1x128xf32> to vector<1x15x15x128xf32>
    %132 = arith.mulf %130, %131 : vector<1x15x15x128xf32>
    %133 = arith.addf %124, %132 : vector<1x15x15x128xf32>
    %134 = vector.extract_strided_slice %125 {offsets = [0, 0, 0, 1], sizes = [1, 15, 15, 1], strides = [1, 1, 1, 1]} : vector<1x15x15x3xf32> to vector<1x15x15x1xf32>
    %135 = vector.extract_strided_slice %0 {offsets = [16, 0], sizes = [1, 128], strides = [1, 1]} : vector<27x128xf32> to vector<1x128xf32>
    %136 = vector.shape_cast %135 : vector<1x128xf32> to vector<128xf32>
    %137 = vector.shape_cast %136 : vector<128xf32> to vector<1x1x1x128xf32>
    %138 = vector.broadcast %134 : vector<1x15x15x1xf32> to vector<1x15x15x128xf32>
    %139 = vector.broadcast %137 : vector<1x1x1x128xf32> to vector<1x15x15x128xf32>
    %140 = arith.mulf %138, %139 : vector<1x15x15x128xf32>
    %141 = arith.addf %133, %140 : vector<1x15x15x128xf32>
    %142 = vector.extract_strided_slice %125 {offsets = [0, 0, 0, 2], sizes = [1, 15, 15, 1], strides = [1, 1, 1, 1]} : vector<1x15x15x3xf32> to vector<1x15x15x1xf32>
    %143 = vector.extract_strided_slice %0 {offsets = [17, 0], sizes = [1, 128], strides = [1, 1]} : vector<27x128xf32> to vector<1x128xf32>
    %144 = vector.shape_cast %143 : vector<1x128xf32> to vector<128xf32>
    %145 = vector.shape_cast %144 : vector<128xf32> to vector<1x1x1x128xf32>
    %146 = vector.broadcast %142 : vector<1x15x15x1xf32> to vector<1x15x15x128xf32>
    %147 = vector.broadcast %145 : vector<1x1x1x128xf32> to vector<1x15x15x128xf32>
    %148 = arith.mulf %146, %147 : vector<1x15x15x128xf32>
    %149 = arith.addf %141, %148 : vector<1x15x15x128xf32>
    %c0_23 = arith.constant 0 : index
    %c2_24 = arith.constant 2 : index
    %c0_25 = arith.constant 0 : index
    %c0_26 = arith.constant 0 : index
    %150 = vector.load %arg1[%c0_23, %c2_24, %c0_25, %c0_26] : memref<1x17x17x3xf32, #tpu.memory_space<vmem>>, vector<1x15x15x3xf32>
    %151 = vector.extract_strided_slice %150 {offsets = [0, 0, 0, 0], sizes = [1, 15, 15, 1], strides = [1, 1, 1, 1]} : vector<1x15x15x3xf32> to vector<1x15x15x1xf32>
    %152 = vector.extract_strided_slice %0 {offsets = [18, 0], sizes = [1, 128], strides = [1, 1]} : vector<27x128xf32> to vector<1x128xf32>
    %153 = vector.shape_cast %152 : vector<1x128xf32> to vector<128xf32>
    %154 = vector.shape_cast %153 : vector<128xf32> to vector<1x1x1x128xf32>
    %155 = vector.broadcast %151 : vector<1x15x15x1xf32> to vector<1x15x15x128xf32>
    %156 = vector.broadcast %154 : vector<1x1x1x128xf32> to vector<1x15x15x128xf32>
    %157 = arith.mulf %155, %156 : vector<1x15x15x128xf32>
    %158 = arith.addf %149, %157 : vector<1x15x15x128xf32>
    %159 = vector.extract_strided_slice %150 {offsets = [0, 0, 0, 1], sizes = [1, 15, 15, 1], strides = [1, 1, 1, 1]} : vector<1x15x15x3xf32> to vector<1x15x15x1xf32>
    %160 = vector.extract_strided_slice %0 {offsets = [19, 0], sizes = [1, 128], strides = [1, 1]} : vector<27x128xf32> to vector<1x128xf32>
    %161 = vector.shape_cast %160 : vector<1x128xf32> to vector<128xf32>
    %162 = vector.shape_cast %161 : vector<128xf32> to vector<1x1x1x128xf32>
    %163 = vector.broadcast %159 : vector<1x15x15x1xf32> to vector<1x15x15x128xf32>
    %164 = vector.broadcast %162 : vector<1x1x1x128xf32> to vector<1x15x15x128xf32>
    %165 = arith.mulf %163, %164 : vector<1x15x15x128xf32>
    %166 = arith.addf %158, %165 : vector<1x15x15x128xf32>
    %167 = vector.extract_strided_slice %150 {offsets = [0, 0, 0, 2], sizes = [1, 15, 15, 1], strides = [1, 1, 1, 1]} : vector<1x15x15x3xf32> to vector<1x15x15x1xf32>
    %168 = vector.extract_strided_slice %0 {offsets = [20, 0], sizes = [1, 128], strides = [1, 1]} : vector<27x128xf32> to vector<1x128xf32>
    %169 = vector.shape_cast %168 : vector<1x128xf32> to vector<128xf32>
    %170 = vector.shape_cast %169 : vector<128xf32> to vector<1x1x1x128xf32>
    %171 = vector.broadcast %167 : vector<1x15x15x1xf32> to vector<1x15x15x128xf32>
    %172 = vector.broadcast %170 : vector<1x1x1x128xf32> to vector<1x15x15x128xf32>
    %173 = arith.mulf %171, %172 : vector<1x15x15x128xf32>
    %174 = arith.addf %166, %173 : vector<1x15x15x128xf32>
    %c0_27 = arith.constant 0 : index
    %c2_28 = arith.constant 2 : index
    %c1_29 = arith.constant 1 : index
    %c0_30 = arith.constant 0 : index
    %175 = vector.load %arg1[%c0_27, %c2_28, %c1_29, %c0_30] : memref<1x17x17x3xf32, #tpu.memory_space<vmem>>, vector<1x15x15x3xf32>
    %176 = vector.extract_strided_slice %175 {offsets = [0, 0, 0, 0], sizes = [1, 15, 15, 1], strides = [1, 1, 1, 1]} : vector<1x15x15x3xf32> to vector<1x15x15x1xf32>
    %177 = vector.extract_strided_slice %0 {offsets = [21, 0], sizes = [1, 128], strides = [1, 1]} : vector<27x128xf32> to vector<1x128xf32>
    %178 = vector.shape_cast %177 : vector<1x128xf32> to vector<128xf32>
    %179 = vector.shape_cast %178 : vector<128xf32> to vector<1x1x1x128xf32>
    %180 = vector.broadcast %176 : vector<1x15x15x1xf32> to vector<1x15x15x128xf32>
    %181 = vector.broadcast %179 : vector<1x1x1x128xf32> to vector<1x15x15x128xf32>
    %182 = arith.mulf %180, %181 : vector<1x15x15x128xf32>
    %183 = arith.addf %174, %182 : vector<1x15x15x128xf32>
    %184 = vector.extract_strided_slice %175 {offsets = [0, 0, 0, 1], sizes = [1, 15, 15, 1], strides = [1, 1, 1, 1]} : vector<1x15x15x3xf32> to vector<1x15x15x1xf32>
    %185 = vector.extract_strided_slice %0 {offsets = [22, 0], sizes = [1, 128], strides = [1, 1]} : vector<27x128xf32> to vector<1x128xf32>
    %186 = vector.shape_cast %185 : vector<1x128xf32> to vector<128xf32>
    %187 = vector.shape_cast %186 : vector<128xf32> to vector<1x1x1x128xf32>
    %188 = vector.broadcast %184 : vector<1x15x15x1xf32> to vector<1x15x15x128xf32>
    %189 = vector.broadcast %187 : vector<1x1x1x128xf32> to vector<1x15x15x128xf32>
    %190 = arith.mulf %188, %189 : vector<1x15x15x128xf32>
    %191 = arith.addf %183, %190 : vector<1x15x15x128xf32>
    %192 = vector.extract_strided_slice %175 {offsets = [0, 0, 0, 2], sizes = [1, 15, 15, 1], strides = [1, 1, 1, 1]} : vector<1x15x15x3xf32> to vector<1x15x15x1xf32>
    %193 = vector.extract_strided_slice %0 {offsets = [23, 0], sizes = [1, 128], strides = [1, 1]} : vector<27x128xf32> to vector<1x128xf32>
    %194 = vector.shape_cast %193 : vector<1x128xf32> to vector<128xf32>
    %195 = vector.shape_cast %194 : vector<128xf32> to vector<1x1x1x128xf32>
    %196 = vector.broadcast %192 : vector<1x15x15x1xf32> to vector<1x15x15x128xf32>
    %197 = vector.broadcast %195 : vector<1x1x1x128xf32> to vector<1x15x15x128xf32>
    %198 = arith.mulf %196, %197 : vector<1x15x15x128xf32>
    %199 = arith.addf %191, %198 : vector<1x15x15x128xf32>
    %c0_31 = arith.constant 0 : index
    %c2_32 = arith.constant 2 : index
    %c2_33 = arith.constant 2 : index
    %c0_34 = arith.constant 0 : index
    %200 = vector.load %arg1[%c0_31, %c2_32, %c2_33, %c0_34] : memref<1x17x17x3xf32, #tpu.memory_space<vmem>>, vector<1x15x15x3xf32>
    %201 = vector.extract_strided_slice %200 {offsets = [0, 0, 0, 0], sizes = [1, 15, 15, 1], strides = [1, 1, 1, 1]} : vector<1x15x15x3xf32> to vector<1x15x15x1xf32>
    %202 = vector.extract_strided_slice %0 {offsets = [24, 0], sizes = [1, 128], strides = [1, 1]} : vector<27x128xf32> to vector<1x128xf32>
    %203 = vector.shape_cast %202 : vector<1x128xf32> to vector<128xf32>
    %204 = vector.shape_cast %203 : vector<128xf32> to vector<1x1x1x128xf32>
    %205 = vector.broadcast %201 : vector<1x15x15x1xf32> to vector<1x15x15x128xf32>
    %206 = vector.broadcast %204 : vector<1x1x1x128xf32> to vector<1x15x15x128xf32>
    %207 = arith.mulf %205, %206 : vector<1x15x15x128xf32>
    %208 = arith.addf %199, %207 : vector<1x15x15x128xf32>
    %209 = vector.extract_strided_slice %200 {offsets = [0, 0, 0, 1], sizes = [1, 15, 15, 1], strides = [1, 1, 1, 1]} : vector<1x15x15x3xf32> to vector<1x15x15x1xf32>
    %210 = vector.extract_strided_slice %0 {offsets = [25, 0], sizes = [1, 128], strides = [1, 1]} : vector<27x128xf32> to vector<1x128xf32>
    %211 = vector.shape_cast %210 : vector<1x128xf32> to vector<128xf32>
    %212 = vector.shape_cast %211 : vector<128xf32> to vector<1x1x1x128xf32>
    %213 = vector.broadcast %209 : vector<1x15x15x1xf32> to vector<1x15x15x128xf32>
    %214 = vector.broadcast %212 : vector<1x1x1x128xf32> to vector<1x15x15x128xf32>
    %215 = arith.mulf %213, %214 : vector<1x15x15x128xf32>
    %216 = arith.addf %208, %215 : vector<1x15x15x128xf32>
    %217 = vector.extract_strided_slice %200 {offsets = [0, 0, 0, 2], sizes = [1, 15, 15, 1], strides = [1, 1, 1, 1]} : vector<1x15x15x3xf32> to vector<1x15x15x1xf32>
    %218 = vector.extract_strided_slice %0 {offsets = [26, 0], sizes = [1, 128], strides = [1, 1]} : vector<27x128xf32> to vector<1x128xf32>
    %219 = vector.shape_cast %218 : vector<1x128xf32> to vector<128xf32>
    %220 = vector.shape_cast %219 : vector<128xf32> to vector<1x1x1x128xf32>
    %221 = vector.broadcast %217 : vector<1x15x15x1xf32> to vector<1x15x15x128xf32>
    %222 = vector.broadcast %220 : vector<1x1x1x128xf32> to vector<1x15x15x128xf32>
    %223 = arith.mulf %221, %222 : vector<1x15x15x128xf32>
    %224 = arith.addf %216, %223 : vector<1x15x15x128xf32>
    %c0_35 = arith.constant 0 : index
    %c0_36 = arith.constant 0 : index
    %225 = vector.load %arg3[%c0_35, %c0_36] : memref<1x128xf32, #tpu.memory_space<vmem>>, vector<1x128xf32>
    %226 = vector.shape_cast %225 : vector<1x128xf32> to vector<1x1x1x128xf32>
    %227 = vector.broadcast %226 : vector<1x1x1x128xf32> to vector<1x15x15x128xf32>
    %228 = arith.mulf %224, %227 : vector<1x15x15x128xf32>
    %c0_37 = arith.constant 0 : index
    %c0_38 = arith.constant 0 : index
    %229 = vector.load %arg4[%c0_37, %c0_38] : memref<1x128xf32, #tpu.memory_space<vmem>>, vector<1x128xf32>
    %230 = vector.shape_cast %229 : vector<1x128xf32> to vector<1x1x1x128xf32>
    %231 = vector.broadcast %230 : vector<1x1x1x128xf32> to vector<1x15x15x128xf32>
    %232 = arith.addf %228, %231 : vector<1x15x15x128xf32>
    %233 = arith.negf %232 : vector<1x15x15x128xf32>
    %234 = math.exp %233 : vector<1x15x15x128xf32>
    %cst = arith.constant 1.000000e+00 : f32
    %235 = vector.broadcast %cst : f32 to vector<1x15x15x128xf32>
    %236 = arith.addf %235, %234 : vector<1x15x15x128xf32>
    %237 = arith.divf %235, %236 : vector<1x15x15x128xf32>
    %238 = arith.mulf %232, %237 : vector<1x15x15x128xf32>
    %c0_39 = arith.constant 0 : index
    %c0_40 = arith.constant 0 : index
    %c0_41 = arith.constant 0 : index
    %c0_42 = arith.constant 0 : index
    %239 = vector.load %arg5[%c0_39, %c0_40, %c0_41, %c0_42] : memref<1x15x15x128xf32, #tpu.memory_space<vmem>>, vector<1x15x15x128xf32>
    tpu.vector_store %arg5[%c0_39, %c0_40, %c0_41, %c0_42], %238 {strides = array<i32>} : memref<1x15x15x128xf32, #tpu.memory_space<vmem>>, vector<1x15x15x128xf32>,
    return
  }
  func.func @transform_0(%arg0: i32) -> (i32, i32, i32, i32) {
    %c0_i32 = arith.constant 0 : i32
    %c0_i32_0 = arith.constant 0 : i32
    %c0_i32_1 = arith.constant 0 : i32
    %c0_i32_2 = arith.constant 0 : i32
    return %arg0, %c0_i32, %c0_i32_0, %c0_i32_1 : i32, i32, i32, i32
  }
  func.func @transform_1(%arg0: i32) -> (i32, i32) {
    %c0_i32 = arith.constant 0 : i32
    %c0_i32_0 = arith.constant 0 : i32
    %c0_i32_1 = arith.constant 0 : i32
    return %c0_i32, %c0_i32_0 : i32, i32
  }
  func.func @transform_2(%arg0: i32) -> (i32, i32) {
    %c0_i32 = arith.constant 0 : i32
    %c0_i32_0 = arith.constant 0 : i32
    %c0_i32_1 = arith.constant 0 : i32
    return %c0_i32, %c0_i32_0 : i32, i32
  }
  func.func @transform_3(%arg0: i32) -> (i32, i32) {
    %c0_i32 = arith.constant 0 : i32
    %c0_i32_0 = arith.constant 0 : i32
    %c0_i32_1 = arith.constant 0 : i32
    return %c0_i32, %c0_i32_0 : i32, i32
  }
  func.func @transform_4(%arg0: i32) -> (i32, i32, i32, i32) {
    %c0_i32 = arith.constant 0 : i32
    %c0_i32_0 = arith.constant 0 : i32
    %c0_i32_1 = arith.constant 0 : i32
    %c0_i32_2 = arith.constant 0 : i32
    return %arg0, %c0_i32, %c0_i32_0, %c0_i32_1 : i32, i32, i32, i32
  }
}

</mosaic_0001>

<llo_original>
// kernel: tpu_custom_call.1
$region0: #{tpu_custom_call.1}
  #allocation0 [shape = 'u32[]', space=smem, size = 0x4, offset = 0x4, fixed_abs, tag = 'smem constant byte address 0x4 - core index']
  #allocation1 [shape = 'u32[144,128]{1,0:T(1,128)}', space=vmem, size = 0x12000, scoped, tag = 'internal scratch']
  %s0 = inlined_call_operand.vmem [shape: f32[2,17,17,3], index: 0, kind: input, shape index: {}]
  %s1 = inlined_call_operand.vmem [shape: f32[27,128], index: 1, kind: input, shape index: {}]
  %s2 = inlined_call_operand.vmem [shape: f32[1,128], index: 2, kind: input, shape index: {}]
  %s3 = inlined_call_operand.vmem [shape: f32[1,128], index: 3, kind: input, shape index: {}]
  %s4 = inlined_call_operand.hbm [shape: f32[2,8,8,128], index: 4, kind: output, shape index: {}]
  %s5 = sld [smem:[#allocation0]]
  $region49: #{tpu_custom_call.1} parent=0
    _
  %s7 = ssub.s32 1, %s5
  %s8 = scalar_select 0, %s7, %s5
  $region1: #{tpu_custom_call.1} parent=0
    #allocation2 [shape = 'u8[65536]{0}', space=vmem, size = 0x10000, scoped, tag = 'output window, operand 0']
    #allocation3 [shape = 's32[2]{0}', space=sflag, size = 0x8, scoped, tag = 'scoped memory for tpu_custom_call.1']
    %9 = vsyncpa [#allocation3], 0
    %s10 = scalar_lea.sflag [#allocation3], 1
    %11 = vsyncpa %s10, 0
    loop: start=0, step=1, limit=4
    $region2: #{tpu_custom_call.1} parent=1 // loop_pre_header
      _
    $region3: #{tpu_custom_call.1} parent=1 // loop_header
      %s13 = sphi 0, %s17
      %p14 = scmp.ge.s32.totalorder %s13, 4
      %s23 = sphi 0, %s25
      %s26 = sphi 0, %s23
      %s27 = sphi 0, %s26
      %s43 = sphi 0, %s27
      %s47 = sphi 0, %s47
      %s49 = sphi 0, %s47
      %s50 = sphi 0, %s49
      %s64 = sphi 0, %s50
      %s68 = sphi 0, %s68
      %s70 = sphi 0, %s68
      %s71 = sphi 0, %s70
      %s85 = sphi 0, %s71
      %s89 = sphi 0, %s89
      %s91 = sphi 0, %s89
      %s92 = sphi 0, %s91
      %s106 = sphi 0, %s92
      %s112 = sphi 0, %s114
      %s115 = sphi 0, %s112
      %s116 = sphi 0, %s115
      %s132 = sphi 0, %s116
    $region4: #{tpu_custom_call.1} parent=1 // loop_header_branch
      %16 = sbr.rel (%p14) target = $region8
    $region5: #{tpu_custom_call.1} parent=1 // loop_body
      %s18 = ssub.s32 %s13, 1
      %s19 = ssub.s32 %s13, 2
      %s20 = sadd.s32 %s13, 1
      %s21 = ssub.s32 %s13, %s20
      %p22 = scmp.eq.s32.totalorder %s21, 0
      %s24 = sadd.s32 %s23, 1
      %s25 = scalar_select %p22, %s23, %s24
      %p28 = pneg %p22
      %p29 = scmp.eq.s32.totalorder %s13, 1
      %p30 = por %p28, %p29
      %p31 = scmp.ne.s32.totalorder %s23, %s26
      %p32 = scmp.eq.s32.totalorder %s13, 0
      %p33 = por %p31, %p32
      %p34 = scmp.ne.s32.totalorder %s23, %s26
      %p35 = scmp.eq.s32.totalorder %s18, 1
      %p36 = por %p34, %p35
      %p37 = scmp.ne.s32.totalorder %s26, %s27
      %p38 = scmp.eq.s32.totalorder %s18, 0
      %p39 = por %p37, %p38
      %p40 = scmp.ne.s32.totalorder %s26, %s27
      %p41 = scmp.eq.s32.totalorder %s19, 1
      %p42 = por %p40, %p41
      %p44 = scmp.ne.s32.totalorder %s27, %s43
      %p45 = scmp.eq.s32.totalorder %s19, 0
      %p46 = por %p44, %p45
      %s48 = sadd.s32 %s47, 1
      %p51 = scmp.eq.s32.totalorder %s13, 1
      %p52 = scmp.ne.s32.totalorder %s47, %s49
      %p53 = scmp.eq.s32.totalorder %s13, 0
      %p54 = por %p52, %p53
      %p55 = scmp.ne.s32.totalorder %s47, %s49
      %p56 = scmp.eq.s32.totalorder %s18, 1
      %p57 = por %p55, %p56
      %p58 = scmp.ne.s32.totalorder %s49, %s50
      %p59 = scmp.eq.s32.totalorder %s18, 0
      %p60 = por %p58, %p59
      %p61 = scmp.ne.s32.totalorder %s49, %s50
      %p62 = scmp.eq.s32.totalorder %s19, 1
      %p63 = por %p61, %p62
      %p65 = scmp.ne.s32.totalorder %s50, %s64
      %p66 = scmp.eq.s32.totalorder %s19, 0
      %p67 = por %p65, %p66
      %s69 = sadd.s32 %s68, 1
      %p72 = scmp.eq.s32.totalorder %s13, 1
      %p73 = scmp.ne.s32.totalorder %s68, %s70
      %p74 = scmp.eq.s32.totalorder %s13, 0
      %p75 = por %p73, %p74
      %p76 = scmp.ne.s32.totalorder %s68, %s70
      %p77 = scmp.eq.s32.totalorder %s18, 1
      %p78 = por %p76, %p77
      %p79 = scmp.ne.s32.totalorder %s70, %s71
      %p80 = scmp.eq.s32.totalorder %s18, 0
      %p81 = por %p79, %p80
      %p82 = scmp.ne.s32.totalorder %s70, %s71
      %p83 = scmp.eq.s32.totalorder %s19, 1
      %p84 = por %p82, %p83
      %p86 = scmp.ne.s32.totalorder %s71, %s85
      %p87 = scmp.eq.s32.totalorder %s19, 0
      %p88 = por %p86, %p87
      %s90 = sadd.s32 %s89, 1
      %p93 = scmp.eq.s32.totalorder %s13, 1
      %p94 = scmp.ne.s32.totalorder %s89, %s91
      %p95 = scmp.eq.s32.totalorder %s13, 0
      %p96 = por %p94, %p95
      %p97 = scmp.ne.s32.totalorder %s89, %s91
      %p98 = scmp.eq.s32.totalorder %s18, 1
      %p99 = por %p97, %p98
      %p100 = scmp.ne.s32.totalorder %s91, %s92
      %p101 = scmp.eq.s32.totalorder %s18, 0
      %p102 = por %p100, %p101
      %p103 = scmp.ne.s32.totalorder %s91, %s92
      %p104 = scmp.eq.s32.totalorder %s19, 1
      %p105 = por %p103, %p104
      %p107 = scmp.ne.s32.totalorder %s92, %s106
      %p108 = scmp.eq.s32.totalorder %s19, 0
      %p109 = por %p107, %p108
      %s110 = ssub.s32 %s13, %s20
      %p111 = scmp.eq.s32.totalorder %s110, 0
      %s113 = sadd.s32 %s112, 1
      %s114 = scalar_select %p111, %s112, %s113
      %p117 = pneg %p111
      %p118 = scmp.eq.s32.totalorder %s13, 1
      %p119 = por %p117, %p118
      %p120 = scmp.ne.s32.totalorder %s112, %s115
      %p121 = scmp.eq.s32.totalorder %s13, 0
      %p122 = por %p120, %p121
      %p123 = scmp.ne.s32.totalorder %s112, %s115
      %p124 = scmp.eq.s32.totalorder %s18, 1
      %p125 = por %p123, %p124
      %p126 = scmp.ne.s32.totalorder %s115, %s116
      %p127 = scmp.eq.s32.totalorder %s18, 0
      %p128 = por %p126, %p127
      %p129 = scmp.ne.s32.totalorder %s115, %s116
      %p130 = scmp.eq.s32.totalorder %s19, 1
      %p131 = por %p129, %p130
      %p133 = scmp.ne.s32.totalorder %s116, %s132
      %p134 = scmp.eq.s32.totalorder %s19, 0
      %p135 = por %p133, %p134
      %p136 = scmp.le.s32.totalorder 1, %s13
      %p137 = scmp.lt.s32.totalorder %s13, 3
      %p138 = pnand %p136, %p137
      %p139 = pneg %p138
      // Predicated region
      $region9: #{tpu_custom_call.1} parent=5 // pred_check
        _
      $region10: #{tpu_custom_call.1} parent=5 // pred_check_branch
        %141 = sbr.rel (%p138) target = $region12
      $region11: #{tpu_custom_call.1} parent=5 // pred_region
        %s142 = ssub.s32 %s13, 1
        // Predicated region
        $region13: #{tpu_custom_call.1} parent=11 // pred_check
          %p143 = pneg %p60
        $region14: #{tpu_custom_call.1} parent=11 // pred_check_branch
          %145 = sbr.rel (%p143) target = $region16
        $region15: #{tpu_custom_call.1} parent=11 // pred_region
          _
        $region16: #{tpu_custom_call.1} parent=11 // pred_fallthru
          _
        // Predicated region
        $region17: #{tpu_custom_call.1} parent=11 // pred_check
          %p146 = pneg %p81
        $region18: #{tpu_custom_call.1} parent=11 // pred_check_branch
          %148 = sbr.rel (%p146) target = $region20
        $region19: #{tpu_custom_call.1} parent=11 // pred_region
          _
        $region20: #{tpu_custom_call.1} parent=11 // pred_fallthru
          _
        // Predicated region
        $region21: #{tpu_custom_call.1} parent=11 // pred_check
          %p149 = pneg %p102
        $region22: #{tpu_custom_call.1} parent=11 // pred_check_branch
          %151 = sbr.rel (%p149) target = $region24
        $region23: #{tpu_custom_call.1} parent=11 // pred_region
          _
        $region24: #{tpu_custom_call.1} parent=11 // pred_fallthru
          _
      $region12: #{tpu_custom_call.1} parent=5 // pred_fallthru
        _
      %p152 = scmp.lt.s32.totalorder %s13, 2
      // Predicated region
      $region25: #{tpu_custom_call.1} parent=5 // pred_check
        %p153 = pneg %p152
      $region26: #{tpu_custom_call.1} parent=5 // pred_check_branch
        %155 = sbr.rel (%p153) target = $region28
      $region27: #{tpu_custom_call.1} parent=5 // pred_region
        // Predicated region
        $region29: #{tpu_custom_call.1} parent=27 // pred_check
          %p156 = pneg %p33
        $region30: #{tpu_custom_call.1} parent=27 // pred_check_branch
          %158 = sbr.rel (%p156) target = $region32
        $region31: #{tpu_custom_call.1} parent=27 // pred_region
          %p159 = scmp.lt.s32.totalorder %s13, 1
          %s160 = scalar_select %p159, %s13, 1
          %s161 = smul.addr %s160, 51
          %s162 = smul.addr %s161, 8
          %s163 = scalar_lea.vmem %s0, %s162
        $region32: #{tpu_custom_call.1} parent=27 // pred_fallthru
          _
      $region28: #{tpu_custom_call.1} parent=5 // pred_fallthru
        _
      %p164 = scmp.le.s32.totalorder 1, %s13
      %p165 = scmp.lt.s32.totalorder %s13, 3
      %p166 = pnand %p164, %p165
      %p167 = pneg %p166
      // Predicated region
      $region33: #{tpu_custom_call.1} parent=5 // pred_check
        _
      $region34: #{tpu_custom_call.1} parent=5 // pred_check_branch
        %169 = sbr.rel (%p166) target = $region36
      $region35: #{tpu_custom_call.1} parent=5 // pred_region
        %s170 = ssub.s32 %s13, 1
        %p171 = scmp.lt.s32.totalorder %s18, 1
        %s172 = scalar_select %p171, %s18, 1
        %s173 = smul.addr %s172, 51
        %s174 = smul.addr %s173, 8
        %s175 = scalar_lea.vmem %s0, %s174
        %p176 = pneg %p39
        %p177 = pneg %p36
        %p178 = pneg %p60
        %p179 = pneg %p57
        %p180 = pneg %p81
        %p181 = pneg %p78
        %p182 = pneg %p102
        %p183 = pneg %p99
        %p184 = pneg %p128
        %p185 = pneg %p125
        %s186 = sand.u32 %s115, 1
        %s187 = scalar_lea.sflag [#allocation3], %s186
        %s188 = sand.u32 %s115, 1
        %s189 = smul.addr %s188, 64
        %s190 = scalar_lea.vmem [#allocation2], %s189
        %p191 = scmp.lt.s32.totalorder %s18, 1
        %s192 = scalar_select %p191, %s18, 1
        %s193 = smul.addr %s192, 51
        %s194 = smul.addr %s193, 8
        %s195 = scalar_lea.vmem %s0, %s194
        %v196 = vld [vmem:[%s1] sm:$0xff]
        %v197 = vld [vmem:[%s1 + $0x8] sm:$0xff]
        %v198 = vld [vmem:[%s1 + $0x10] sm:$0xff]
        %v199 = vld [vmem:[%s1 + $0x18] sm:$0x7]
        %v200 = vld [vmem:[%s195] ss:$2 sm:$0xff]
        %s201 = scalar_lea.vmem %s195, 48
        %v202 = vld [vmem:[%s201] ss:$2 sm:$0xff]
        %s203 = scalar_lea.vmem %s195, 96
        %v204 = vld [vmem:[%s203] ss:$2 sm:$0xff]
        %s205 = scalar_lea.vmem %s195, 144
        %v206 = vld [vmem:[%s205] ss:$2 sm:$0xff]
        %s207 = scalar_lea.vmem %s195, 192
        %v208 = vld [vmem:[%s207] ss:$2 sm:$0xff]
        %s209 = scalar_lea.vmem %s195, 240
        %v210 = vld [vmem:[%s209] ss:$2 sm:$0xff]
        %s211 = scalar_lea.vmem %s195, 288
        %v212 = vld [vmem:[%s211] ss:$2 sm:$0xff]
        %s213 = scalar_lea.vmem %s195, 336
        %v214 = vld [vmem:[%s213] ss:$2 sm:$0xff]
        %216 = vset.pattern.permute.xlu0 0
        %217 = vperm.xlu0 %216, %v200
        %v218 = vpop.permute.xlu0 %217
        %221 = vset.pattern.permute.xlu0 0
        %222 = vperm.xlu0 %221, %v202
        %v223 = vpop.permute.xlu0 %222
        %226 = vset.pattern.permute.xlu0 0
        %227 = vperm.xlu0 %226, %v204
        %v228 = vpop.permute.xlu0 %227
        %231 = vset.pattern.permute.xlu0 0
        %232 = vperm.xlu0 %231, %v206
        %v233 = vpop.permute.xlu0 %232
        %236 = vset.pattern.permute.xlu0 0
        %237 = vperm.xlu0 %236, %v208
        %v238 = vpop.permute.xlu0 %237
        %241 = vset.pattern.permute.xlu0 0
        %242 = vperm.xlu0 %241, %v210
        %v243 = vpop.permute.xlu0 %242
        %246 = vset.pattern.permute.xlu0 0
        %247 = vperm.xlu0 %246, %v212
        %v248 = vpop.permute.xlu0 %247
        %251 = vset.pattern.permute.xlu0 0
        %252 = vperm.xlu0 %251, %v214
        %v253 = vpop.permute.xlu0 %252
        %v255 = vlaneseq
        %v256 = vshrl.u32 %v255, 7
        %v257 = vsub.s32 0, %v256
        %v258 = vrot.slane %v196, %v257
        %v259 = vmul.f32 %v218, %v258
        %v260 = vmul.f32 %v223, %v258
        %v261 = vmul.f32 %v228, %v258
        %v262 = vmul.f32 %v233, %v258
        %v263 = vmul.f32 %v238, %v258
        %v264 = vmul.f32 %v243, %v258
        %v265 = vmul.f32 %v248, %v258
        %v266 = vmul.f32 %v253, %v258
        %267 = vset.pattern.permute.xlu0 1
        %268 = vperm.xlu0 %267, %v200
        %v269 = vpop.permute.xlu0 %268
        %271 = vset.pattern.permute.xlu0 1
        %272 = vperm.xlu0 %271, %v202
        %v273 = vpop.permute.xlu0 %272
        %275 = vset.pattern.permute.xlu0 1
        %276 = vperm.xlu0 %275, %v204
        %v277 = vpop.permute.xlu0 %276
        %279 = vset.pattern.permute.xlu0 1
        %280 = vperm.xlu0 %279, %v206
        %v281 = vpop.permute.xlu0 %280
        %283 = vset.pattern.permute.xlu0 1
        %284 = vperm.xlu0 %283, %v208
        %v285 = vpop.permute.xlu0 %284
        %287 = vset.pattern.permute.xlu0 1
        %288 = vperm.xlu0 %287, %v210
        %v289 = vpop.permute.xlu0 %288
        %291 = vset.pattern.permute.xlu0 1
        %292 = vperm.xlu0 %291, %v212
        %v293 = vpop.permute.xlu0 %292
        %295 = vset.pattern.permute.xlu0 1
        %296 = vperm.xlu0 %295, %v214
        %v297 = vpop.permute.xlu0 %296
        %v299 = vlaneseq
        %v300 = vshrl.u32 %v299, 7
        %v301 = vsub.s32 1, %v300
        %v302 = vrot.slane %v196, %v301
        %v303 = vmul.f32 %v269, %v302
        %v304 = vmul.f32 %v273, %v302
        %v305 = vmul.f32 %v277, %v302
        %v306 = vmul.f32 %v281, %v302
        %v307 = vmul.f32 %v285, %v302
        %v308 = vmul.f32 %v289, %v302
        %v309 = vmul.f32 %v293, %v302
        %v310 = vmul.f32 %v297, %v302
        %v311 = vadd.f32 %v259, %v303
        %v312 = vadd.f32 %v260, %v304
        %v313 = vadd.f32 %v261, %v305
        %v314 = vadd.f32 %v262, %v306
        %v315 = vadd.f32 %v263, %v307
        %v316 = vadd.f32 %v264, %v308
        %v317 = vadd.f32 %v265, %v309
        %v318 = vadd.f32 %v266, %v310
        %319 = vset.pattern.permute.xlu0 2
        %320 = vperm.xlu0 %319, %v200
        %v321 = vpop.permute.xlu0 %320
        %323 = vset.pattern.permute.xlu0 2
        %324 = vperm.xlu0 %323, %v202
        %v325 = vpop.permute.xlu0 %324
        %327 = vset.pattern.permute.xlu0 2
        %328 = vperm.xlu0 %327, %v204
        %v329 = vpop.permute.xlu0 %328
        %331 = vset.pattern.permute.xlu0 2
        %332 = vperm.xlu0 %331, %v206
        %v333 = vpop.permute.xlu0 %332
        %335 = vset.pattern.permute.xlu0 2
        %336 = vperm.xlu0 %335, %v208
        %v337 = vpop.permute.xlu0 %336
        %339 = vset.pattern.permute.xlu0 2
        %340 = vperm.xlu0 %339, %v210
        %v341 = vpop.permute.xlu0 %340
        %343 = vset.pattern.permute.xlu0 2
        %344 = vperm.xlu0 %343, %v212
        %v345 = vpop.permute.xlu0 %344
        %347 = vset.pattern.permute.xlu0 2
        %348 = vperm.xlu0 %347, %v214
        %v349 = vpop.permute.xlu0 %348
        %v351 = vlaneseq
        %v352 = vshrl.u32 %v351, 7
        %v353 = vsub.s32 2, %v352
        %v354 = vrot.slane %v196, %v353
        %v355 = vmul.f32 %v321, %v354
        %v356 = vmul.f32 %v325, %v354
        %v357 = vmul.f32 %v329, %v354
        %v358 = vmul.f32 %v333, %v354
        %v359 = vmul.f32 %v337, %v354
        %v360 = vmul.f32 %v341, %v354
        %v361 = vmul.f32 %v345, %v354
        %v362 = vmul.f32 %v349, %v354
        %v363 = vadd.f32 %v311, %v355
        %v364 = vadd.f32 %v312, %v356
        %v365 = vadd.f32 %v313, %v357
        %v366 = vadd.f32 %v314, %v358
        %v367 = vadd.f32 %v315, %v359
        %v368 = vadd.f32 %v316, %v360
        %v369 = vadd.f32 %v317, %v361
        %v370 = vadd.f32 %v318, %v362
        %s371 = scalar_lea.vmem %s195, 1
        %v372 = vld [vmem:[%s371] ss:$2 sm:$0xff]
        %s373 = scalar_lea.vmem %s195, 49
        %v374 = vld [vmem:[%s373] ss:$2 sm:$0xff]
        %s375 = scalar_lea.vmem %s195, 97
        %v376 = vld [vmem:[%s375] ss:$2 sm:$0xff]
        %s377 = scalar_lea.vmem %s195, 145
        %v378 = vld [vmem:[%s377] ss:$2 sm:$0xff]
        %s379 = scalar_lea.vmem %s195, 193
        %v380 = vld [vmem:[%s379] ss:$2 sm:$0xff]
        %s381 = scalar_lea.vmem %s195, 241
        %v382 = vld [vmem:[%s381] ss:$2 sm:$0xff]
        %s383 = scalar_lea.vmem %s195, 289
        %v384 = vld [vmem:[%s383] ss:$2 sm:$0xff]
        %s385 = scalar_lea.vmem %s195, 337
        %v386 = vld [vmem:[%s385] ss:$2 sm:$0xff]
        %388 = vset.pattern.permute.xlu0 0
        %389 = vperm.xlu0 %388, %v372
        %v390 = vpop.permute.xlu0 %389
        %393 = vset.pattern.permute.xlu0 0
        %394 = vperm.xlu0 %393, %v374
        %v395 = vpop.permute.xlu0 %394
        %398 = vset.pattern.permute.xlu0 0
        %399 = vperm.xlu0 %398, %v376
        %v400 = vpop.permute.xlu0 %399
        %403 = vset.pattern.permute.xlu0 0
        %404 = vperm.xlu0 %403, %v378
        %v405 = vpop.permute.xlu0 %404
        %408 = vset.pattern.permute.xlu0 0
        %409 = vperm.xlu0 %408, %v380
        %v410 = vpop.permute.xlu0 %409
        %413 = vset.pattern.permute.xlu0 0
        %414 = vperm.xlu0 %413, %v382
        %v415 = vpop.permute.xlu0 %414
        %418 = vset.pattern.permute.xlu0 0
        %419 = vperm.xlu0 %418, %v384
        %v420 = vpop.permute.xlu0 %419
        %423 = vset.pattern.permute.xlu0 0
        %424 = vperm.xlu0 %423, %v386
        %v425 = vpop.permute.xlu0 %424
        %v427 = vlaneseq
        %v428 = vshrl.u32 %v427, 7
        %v429 = vsub.s32 3, %v428
        %v430 = vrot.slane %v196, %v429
        %v431 = vmul.f32 %v390, %v430
        %v432 = vmul.f32 %v395, %v430
        %v433 = vmul.f32 %v400, %v430
        %v434 = vmul.f32 %v405, %v430
        %v435 = vmul.f32 %v410, %v430
        %v436 = vmul.f32 %v415, %v430
        %v437 = vmul.f32 %v420, %v430
        %v438 = vmul.f32 %v425, %v430
        %v439 = vadd.f32 %v363, %v431
        %v440 = vadd.f32 %v364, %v432
        %v441 = vadd.f32 %v365, %v433
        %v442 = vadd.f32 %v366, %v434
        %v443 = vadd.f32 %v367, %v435
        %v444 = vadd.f32 %v368, %v436
        %v445 = vadd.f32 %v369, %v437
        %v446 = vadd.f32 %v370, %v438
        %447 = vset.pattern.permute.xlu0 1
        %448 = vperm.xlu0 %447, %v372
        %v449 = vpop.permute.xlu0 %448
        %451 = vset.pattern.permute.xlu0 1
        %452 = vperm.xlu0 %451, %v374
        %v453 = vpop.permute.xlu0 %452
        %455 = vset.pattern.permute.xlu0 1
        %456 = vperm.xlu0 %455, %v376
        %v457 = vpop.permute.xlu0 %456
        %459 = vset.pattern.permute.xlu0 1
        %460 = vperm.xlu0 %459, %v378
        %v461 = vpop.permute.xlu0 %460
        %463 = vset.pattern.permute.xlu0 1
        %464 = vperm.xlu0 %463, %v380
        %v465 = vpop.permute.xlu0 %464
        %467 = vset.pattern.permute.xlu0 1
        %468 = vperm.xlu0 %467, %v382
        %v469 = vpop.permute.xlu0 %468
        %471 = vset.pattern.permute.xlu0 1
        %472 = vperm.xlu0 %471, %v384
        %v473 = vpop.permute.xlu0 %472
        %475 = vset.pattern.permute.xlu0 1
        %476 = vperm.xlu0 %475, %v386
        %v477 = vpop.permute.xlu0 %476
        %v479 = vlaneseq
        %v480 = vshrl.u32 %v479, 7
        %v481 = vsub.s32 4, %v480
        %v482 = vrot.slane %v196, %v481
        %v483 = vmul.f32 %v449, %v482
        %v484 = vmul.f32 %v453, %v482
        %v485 = vmul.f32 %v457, %v482
        %v486 = vmul.f32 %v461, %v482
        %v487 = vmul.f32 %v465, %v482
        %v488 = vmul.f32 %v469, %v482
        %v489 = vmul.f32 %v473, %v482
        %v490 = vmul.f32 %v477, %v482
        %v491 = vadd.f32 %v439, %v483
        %v492 = vadd.f32 %v440, %v484
        %v493 = vadd.f32 %v441, %v485
        %v494 = vadd.f32 %v442, %v486
        %v495 = vadd.f32 %v443, %v487
        %v496 = vadd.f32 %v444, %v488
        %v497 = vadd.f32 %v445, %v489
        %v498 = vadd.f32 %v446, %v490
        %499 = vset.pattern.permute.xlu0 2
        %500 = vperm.xlu0 %499, %v372
        %v501 = vpop.permute.xlu0 %500
        %503 = vset.pattern.permute.xlu0 2
        %504 = vperm.xlu0 %503, %v374
        %v505 = vpop.permute.xlu0 %504
        %507 = vset.pattern.permute.xlu0 2
        %508 = vperm.xlu0 %507, %v376
        %v509 = vpop.permute.xlu0 %508
        %511 = vset.pattern.permute.xlu0 2
        %512 = vperm.xlu0 %511, %v378
        %v513 = vpop.permute.xlu0 %512
        %515 = vset.pattern.permute.xlu0 2
        %516 = vperm.xlu0 %515, %v380
        %v517 = vpop.permute.xlu0 %516
        %519 = vset.pattern.permute.xlu0 2
        %520 = vperm.xlu0 %519, %v382
        %v521 = vpop.permute.xlu0 %520
        %523 = vset.pattern.permute.xlu0 2
        %524 = vperm.xlu0 %523, %v384
        %v525 = vpop.permute.xlu0 %524
        %527 = vset.pattern.permute.xlu0 2
        %528 = vperm.xlu0 %527, %v386
        %v529 = vpop.permute.xlu0 %528
        %v531 = vlaneseq
        %v532 = vshrl.u32 %v531, 7
        %v533 = vsub.s32 5, %v532
        %v534 = vrot.slane %v196, %v533
        %v535 = vmul.f32 %v501, %v534
        %v536 = vmul.f32 %v505, %v534
        %v537 = vmul.f32 %v509, %v534
        %v538 = vmul.f32 %v513, %v534
        %v539 = vmul.f32 %v517, %v534
        %v540 = vmul.f32 %v521, %v534
        %v541 = vmul.f32 %v525, %v534
        %v542 = vmul.f32 %v529, %v534
        %v543 = vadd.f32 %v491, %v535
        %v544 = vadd.f32 %v492, %v536
        %v545 = vadd.f32 %v493, %v537
        %v546 = vadd.f32 %v494, %v538
        %v547 = vadd.f32 %v495, %v539
        %v548 = vadd.f32 %v496, %v540
        %v549 = vadd.f32 %v497, %v541
        %v550 = vadd.f32 %v498, %v542
        %s551 = scalar_lea.vmem %s195, 2
        %v552 = vld [vmem:[%s551] ss:$2 sm:$0xff]
        %s553 = scalar_lea.vmem %s195, 50
        %v554 = vld [vmem:[%s553] ss:$2 sm:$0xff]
        %s555 = scalar_lea.vmem %s195, 98
        %v556 = vld [vmem:[%s555] ss:$2 sm:$0xff]
        %s557 = scalar_lea.vmem %s195, 146
        %v558 = vld [vmem:[%s557] ss:$2 sm:$0xff]
        %s559 = scalar_lea.vmem %s195, 194
        %v560 = vld [vmem:[%s559] ss:$2 sm:$0xff]
        %s561 = scalar_lea.vmem %s195, 242
        %v562 = vld [vmem:[%s561] ss:$2 sm:$0xff]
        %s563 = scalar_lea.vmem %s195, 290
        %v564 = vld [vmem:[%s563] ss:$2 sm:$0xff]
        %s565 = scalar_lea.vmem %s195, 338
        %v566 = vld [vmem:[%s565] ss:$2 sm:$0xff]
        %568 = vset.pattern.permute.xlu0 0
        %569 = vperm.xlu0 %568, %v552
        %v570 = vpop.permute.xlu0 %569
        %573 = vset.pattern.permute.xlu0 0
        %574 = vperm.xlu0 %573, %v554
        %v575 = vpop.permute.xlu0 %574
        %578 = vset.pattern.permute.xlu0 0
        %579 = vperm.xlu0 %578, %v556
        %v580 = vpop.permute.xlu0 %579
        %583 = vset.pattern.permute.xlu0 0
        %584 = vperm.xlu0 %583, %v558
        %v585 = vpop.permute.xlu0 %584
        %588 = vset.pattern.permute.xlu0 0
        %589 = vperm.xlu0 %588, %v560
        %v590 = vpop.permute.xlu0 %589
        %593 = vset.pattern.permute.xlu0 0
        %594 = vperm.xlu0 %593, %v562
        %v595 = vpop.permute.xlu0 %594
        %598 = vset.pattern.permute.xlu0 0
        %599 = vperm.xlu0 %598, %v564
        %v600 = vpop.permute.xlu0 %599
        %603 = vset.pattern.permute.xlu0 0
        %604 = vperm.xlu0 %603, %v566
        %v605 = vpop.permute.xlu0 %604
        %v607 = vlaneseq
        %v608 = vshrl.u32 %v607, 7
        %v609 = vsub.s32 6, %v608
        %v610 = vrot.slane %v196, %v609
        %v611 = vmul.f32 %v570, %v610
        %v612 = vmul.f32 %v575, %v610
        %v613 = vmul.f32 %v580, %v610
        %v614 = vmul.f32 %v585, %v610
        %v615 = vmul.f32 %v590, %v610
        %v616 = vmul.f32 %v595, %v610
        %v617 = vmul.f32 %v600, %v610
        %v618 = vmul.f32 %v605, %v610
        %v619 = vadd.f32 %v543, %v611
        %v620 = vadd.f32 %v544, %v612
        %v621 = vadd.f32 %v545, %v613
        %v622 = vadd.f32 %v546, %v614
        %v623 = vadd.f32 %v547, %v615
        %v624 = vadd.f32 %v548, %v616
        %v625 = vadd.f32 %v549, %v617
        %v626 = vadd.f32 %v550, %v618
        %627 = vset.pattern.permute.xlu0 1
        %628 = vperm.xlu0 %627, %v552
        %v629 = vpop.permute.xlu0 %628
        %631 = vset.pattern.permute.xlu0 1
        %632 = vperm.xlu0 %631, %v554
        %v633 = vpop.permute.xlu0 %632
        %635 = vset.pattern.permute.xlu0 1
        %636 = vperm.xlu0 %635, %v556
        %v637 = vpop.permute.xlu0 %636
        %639 = vset.pattern.permute.xlu0 1
        %640 = vperm.xlu0 %639, %v558
        %v641 = vpop.permute.xlu0 %640
        %643 = vset.pattern.permute.xlu0 1
        %644 = vperm.xlu0 %643, %v560
        %v645 = vpop.permute.xlu0 %644
        %647 = vset.pattern.permute.xlu0 1
        %648 = vperm.xlu0 %647, %v562
        %v649 = vpop.permute.xlu0 %648
        %651 = vset.pattern.permute.xlu0 1
        %652 = vperm.xlu0 %651, %v564
        %v653 = vpop.permute.xlu0 %652
        %655 = vset.pattern.permute.xlu0 1
        %656 = vperm.xlu0 %655, %v566
        %v657 = vpop.permute.xlu0 %656
        %v659 = vlaneseq
        %v660 = vshrl.u32 %v659, 7
        %v661 = vsub.s32 7, %v660
        %v662 = vrot.slane %v196, %v661
        %v663 = vmul.f32 %v629, %v662
        %v664 = vmul.f32 %v633, %v662
        %v665 = vmul.f32 %v637, %v662
        %v666 = vmul.f32 %v641, %v662
        %v667 = vmul.f32 %v645, %v662
        %v668 = vmul.f32 %v649, %v662
        %v669 = vmul.f32 %v653, %v662
        %v670 = vmul.f32 %v657, %v662
        %v671 = vadd.f32 %v619, %v663
        %v672 = vadd.f32 %v620, %v664
        %v673 = vadd.f32 %v621, %v665
        %v674 = vadd.f32 %v622, %v666
        %v675 = vadd.f32 %v623, %v667
        %v676 = vadd.f32 %v624, %v668
        %v677 = vadd.f32 %v625, %v669
        %v678 = vadd.f32 %v626, %v670
        %679 = vset.pattern.permute.xlu0 2
        %680 = vperm.xlu0 %679, %v552
        %v681 = vpop.permute.xlu0 %680
        %683 = vset.pattern.permute.xlu0 2
        %684 = vperm.xlu0 %683, %v554
        %v685 = vpop.permute.xlu0 %684
        %687 = vset.pattern.permute.xlu0 2
        %688 = vperm.xlu0 %687, %v556
        %v689 = vpop.permute.xlu0 %688
        %691 = vset.pattern.permute.xlu0 2
        %692 = vperm.xlu0 %691, %v558
        %v693 = vpop.permute.xlu0 %692
        %695 = vset.pattern.permute.xlu0 2
        %696 = vperm.xlu0 %695, %v560
        %v697 = vpop.permute.xlu0 %696
        %699 = vset.pattern.permute.xlu0 2
        %700 = vperm.xlu0 %699, %v562
        %v701 = vpop.permute.xlu0 %700
        %703 = vset.pattern.permute.xlu0 2
        %704 = vperm.xlu0 %703, %v564
        %v705 = vpop.permute.xlu0 %704
        %707 = vset.pattern.permute.xlu0 2
        %708 = vperm.xlu0 %707, %v566
        %v709 = vpop.permute.xlu0 %708
        %v711 = vlaneseq
        %v712 = vshrl.u32 %v711, 7
        %v713 = vsub.s32 0, %v712
        %v714 = vrot.slane %v197, %v713
        %v715 = vmul.f32 %v681, %v714
        %v716 = vmul.f32 %v685, %v714
        %v717 = vmul.f32 %v689, %v714
        %v718 = vmul.f32 %v693, %v714
        %v719 = vmul.f32 %v697, %v714
        %v720 = vmul.f32 %v701, %v714
        %v721 = vmul.f32 %v705, %v714
        %v722 = vmul.f32 %v709, %v714
        %v723 = vadd.f32 %v671, %v715
        %v724 = vadd.f32 %v672, %v716
        %v725 = vadd.f32 %v673, %v717
        %v726 = vadd.f32 %v674, %v718
        %v727 = vadd.f32 %v675, %v719
        %v728 = vadd.f32 %v676, %v720
        %v729 = vadd.f32 %v677, %v721
        %v730 = vadd.f32 %v678, %v722
        %s731 = scalar_lea.vmem %s195, 24
        %v732 = vld [vmem:[%s731] ss:$2 sm:$0xff]
        %s733 = scalar_lea.vmem %s731, 48
        %v734 = vld [vmem:[%s733] ss:$2 sm:$0xff]
        %s735 = scalar_lea.vmem %s731, 96
        %v736 = vld [vmem:[%s735] ss:$2 sm:$0xff]
        %s737 = scalar_lea.vmem %s731, 144
        %v738 = vld [vmem:[%s737] ss:$2 sm:$0xff]
        %s739 = scalar_lea.vmem %s731, 192
        %v740 = vld [vmem:[%s739] ss:$2 sm:$0xff]
        %s741 = scalar_lea.vmem %s731, 240
        %v742 = vld [vmem:[%s741] ss:$2 sm:$0xff]
        %s743 = scalar_lea.vmem %s731, 288
        %v744 = vld [vmem:[%s743] ss:$2 sm:$0xff]
        %s745 = scalar_lea.vmem %s731, 336
        %v746 = vld [vmem:[%s745] ss:$2 sm:$0xff]
        %748 = vset.pattern.permute.xlu0 0
        %749 = vperm.xlu0 %748, %v732
        %v750 = vpop.permute.xlu0 %749
        %753 = vset.pattern.permute.xlu0 0
        %754 = vperm.xlu0 %753, %v734
        %v755 = vpop.permute.xlu0 %754
        %758 = vset.pattern.permute.xlu0 0
        %759 = vperm.xlu0 %758, %v736
        %v760 = vpop.permute.xlu0 %759
        %763 = vset.pattern.permute.xlu0 0
        %764 = vperm.xlu0 %763, %v738
        %v765 = vpop.permute.xlu0 %764
        %768 = vset.pattern.permute.xlu0 0
        %769 = vperm.xlu0 %768, %v740
        %v770 = vpop.permute.xlu0 %769
        %773 = vset.pattern.permute.xlu0 0
        %774 = vperm.xlu0 %773, %v742
        %v775 = vpop.permute.xlu0 %774
        %778 = vset.pattern.permute.xlu0 0
        %779 = vperm.xlu0 %778, %v744
        %v780 = vpop.permute.xlu0 %779
        %783 = vset.pattern.permute.xlu0 0
        %784 = vperm.xlu0 %783, %v746
        %v785 = vpop.permute.xlu0 %784
        %v787 = vlaneseq
        %v788 = vshrl.u32 %v787, 7
        %v789 = vsub.s32 1, %v788
        %v790 = vrot.slane %v197, %v789
        %v791 = vmul.f32 %v750, %v790
        %v792 = vmul.f32 %v755, %v790
        %v793 = vmul.f32 %v760, %v790
        %v794 = vmul.f32 %v765, %v790
        %v795 = vmul.f32 %v770, %v790
        %v796 = vmul.f32 %v775, %v790
        %v797 = vmul.f32 %v780, %v790
        %v798 = vmul.f32 %v785, %v790
        %v799 = vadd.f32 %v723, %v791
        %v800 = vadd.f32 %v724, %v792
        %v801 = vadd.f32 %v725, %v793
        %v802 = vadd.f32 %v726, %v794
        %v803 = vadd.f32 %v727, %v795
        %v804 = vadd.f32 %v728, %v796
        %v805 = vadd.f32 %v729, %v797
        %v806 = vadd.f32 %v730, %v798
        %807 = vset.pattern.permute.xlu0 1
        %808 = vperm.xlu0 %807, %v732
        %v809 = vpop.permute.xlu0 %808
        %811 = vset.pattern.permute.xlu0 1
        %812 = vperm.xlu0 %811, %v734
        %v813 = vpop.permute.xlu0 %812
        %815 = vset.pattern.permute.xlu0 1
        %816 = vperm.xlu0 %815, %v736
        %v817 = vpop.permute.xlu0 %816
        %819 = vset.pattern.permute.xlu0 1
        %820 = vperm.xlu0 %819, %v738
        %v821 = vpop.permute.xlu0 %820
        %823 = vset.pattern.permute.xlu0 1
        %824 = vperm.xlu0 %823, %v740
        %v825 = vpop.permute.xlu0 %824
        %827 = vset.pattern.permute.xlu0 1
        %828 = vperm.xlu0 %827, %v742
        %v829 = vpop.permute.xlu0 %828
        %831 = vset.pattern.permute.xlu0 1
        %832 = vperm.xlu0 %831, %v744
        %v833 = vpop.permute.xlu0 %832
        %835 = vset.pattern.permute.xlu0 1
        %836 = vperm.xlu0 %835, %v746
        %v837 = vpop.permute.xlu0 %836
        %v839 = vlaneseq
        %v840 = vshrl.u32 %v839, 7
        %v841 = vsub.s32 2, %v840
        %v842 = vrot.slane %v197, %v841
        %v843 = vmul.f32 %v809, %v842
        %v844 = vmul.f32 %v813, %v842
        %v845 = vmul.f32 %v817, %v842
        %v846 = vmul.f32 %v821, %v842
        %v847 = vmul.f32 %v825, %v842
        %v848 = vmul.f32 %v829, %v842
        %v849 = vmul.f32 %v833, %v842
        %v850 = vmul.f32 %v837, %v842
        %v851 = vadd.f32 %v799, %v843
        %v852 = vadd.f32 %v800, %v844
        %v853 = vadd.f32 %v801, %v845
        %v854 = vadd.f32 %v802, %v846
        %v855 = vadd.f32 %v803, %v847
        %v856 = vadd.f32 %v804, %v848
        %v857 = vadd.f32 %v805, %v849
        %v858 = vadd.f32 %v806, %v850
        %859 = vset.pattern.permute.xlu0 2
        %860 = vperm.xlu0 %859, %v732
        %v861 = vpop.permute.xlu0 %860
        %863 = vset.pattern.permute.xlu0 2
        %864 = vperm.xlu0 %863, %v734
        %v865 = vpop.permute.xlu0 %864
        %867 = vset.pattern.permute.xlu0 2
        %868 = vperm.xlu0 %867, %v736
        %v869 = vpop.permute.xlu0 %868
        %871 = vset.pattern.permute.xlu0 2
        %872 = vperm.xlu0 %871, %v738
        %v873 = vpop.permute.xlu0 %872
        %875 = vset.pattern.permute.xlu0 2
        %876 = vperm.xlu0 %875, %v740
        %v877 = vpop.permute.xlu0 %876
        %879 = vset.pattern.permute.xlu0 2
        %880 = vperm.xlu0 %879, %v742
        %v881 = vpop.permute.xlu0 %880
        %883 = vset.pattern.permute.xlu0 2
        %884 = vperm.xlu0 %883, %v744
        %v885 = vpop.permute.xlu0 %884
        %887 = vset.pattern.permute.xlu0 2
        %888 = vperm.xlu0 %887, %v746
        %v889 = vpop.permute.xlu0 %888
        %v891 = vlaneseq
        %v892 = vshrl.u32 %v891, 7
        %v893 = vsub.s32 3, %v892
        %v894 = vrot.slane %v197, %v893
        %v895 = vmul.f32 %v861, %v894
        %v896 = vmul.f32 %v865, %v894
        %v897 = vmul.f32 %v869, %v894
        %v898 = vmul.f32 %v873, %v894
        %v899 = vmul.f32 %v877, %v894
        %v900 = vmul.f32 %v881, %v894
        %v901 = vmul.f32 %v885, %v894
        %v902 = vmul.f32 %v889, %v894
        %v903 = vadd.f32 %v851, %v895
        %v904 = vadd.f32 %v852, %v896
        %v905 = vadd.f32 %v853, %v897
        %v906 = vadd.f32 %v854, %v898
        %v907 = vadd.f32 %v855, %v899
        %v908 = vadd.f32 %v856, %v900
        %v909 = vadd.f32 %v857, %v901
        %v910 = vadd.f32 %v858, %v902
        %s911 = scalar_lea.vmem %s731, 1
        %v912 = vld [vmem:[%s911] ss:$2 sm:$0xff]
        %s913 = scalar_lea.vmem %s731, 49
        %v914 = vld [vmem:[%s913] ss:$2 sm:$0xff]
        %s915 = scalar_lea.vmem %s731, 97
        %v916 = vld [vmem:[%s915] ss:$2 sm:$0xff]
        %s917 = scalar_lea.vmem %s731, 145
        %v918 = vld [vmem:[%s917] ss:$2 sm:$0xff]
        %s919 = scalar_lea.vmem %s731, 193
        %v920 = vld [vmem:[%s919] ss:$2 sm:$0xff]
        %s921 = scalar_lea.vmem %s731, 241
        %v922 = vld [vmem:[%s921] ss:$2 sm:$0xff]
        %s923 = scalar_lea.vmem %s731, 289
        %v924 = vld [vmem:[%s923] ss:$2 sm:$0xff]
        %s925 = scalar_lea.vmem %s731, 337
        %v926 = vld [vmem:[%s925] ss:$2 sm:$0xff]
        %928 = vset.pattern.permute.xlu0 0
        %929 = vperm.xlu0 %928, %v912
        %v930 = vpop.permute.xlu0 %929
        %933 = vset.pattern.permute.xlu0 0
        %934 = vperm.xlu0 %933, %v914
        %v935 = vpop.permute.xlu0 %934
        %938 = vset.pattern.permute.xlu0 0
        %939 = vperm.xlu0 %938, %v916
        %v940 = vpop.permute.xlu0 %939
        %943 = vset.pattern.permute.xlu0 0
        %944 = vperm.xlu0 %943, %v918
        %v945 = vpop.permute.xlu0 %944
        %948 = vset.pattern.permute.xlu0 0
        %949 = vperm.xlu0 %948, %v920
        %v950 = vpop.permute.xlu0 %949
        %953 = vset.pattern.permute.xlu0 0
        %954 = vperm.xlu0 %953, %v922
        %v955 = vpop.permute.xlu0 %954
        %958 = vset.pattern.permute.xlu0 0
        %959 = vperm.xlu0 %958, %v924
        %v960 = vpop.permute.xlu0 %959
        %963 = vset.pattern.permute.xlu0 0
        %964 = vperm.xlu0 %963, %v926
        %v965 = vpop.permute.xlu0 %964
        %v967 = vlaneseq
        %v968 = vshrl.u32 %v967, 7
        %v969 = vsub.s32 4, %v968
        %v970 = vrot.slane %v197, %v969
        %v971 = vmul.f32 %v930, %v970
        %v972 = vmul.f32 %v935, %v970
        %v973 = vmul.f32 %v940, %v970
        %v974 = vmul.f32 %v945, %v970
        %v975 = vmul.f32 %v950, %v970
        %v976 = vmul.f32 %v955, %v970
        %v977 = vmul.f32 %v960, %v970
        %v978 = vmul.f32 %v965, %v970
        %v979 = vadd.f32 %v903, %v971
        %v980 = vadd.f32 %v904, %v972
        %v981 = vadd.f32 %v905, %v973
        %v982 = vadd.f32 %v906, %v974
        %v983 = vadd.f32 %v907, %v975
        %v984 = vadd.f32 %v908, %v976
        %v985 = vadd.f32 %v909, %v977
        %v986 = vadd.f32 %v910, %v978
        %987 = vset.pattern.permute.xlu0 1
        %988 = vperm.xlu0 %987, %v912
        %v989 = vpop.permute.xlu0 %988
        %991 = vset.pattern.permute.xlu0 1
        %992 = vperm.xlu0 %991, %v914
        %v993 = vpop.permute.xlu0 %992
        %995 = vset.pattern.permute.xlu0 1
        %996 = vperm.xlu0 %995, %v916
        %v997 = vpop.permute.xlu0 %996
        %999 = vset.pattern.permute.xlu0 1
        %1000 = vperm.xlu0 %999, %v918
        %v1001 = vpop.permute.xlu0 %1000
        %1003 = vset.pattern.permute.xlu0 1
        %1004 = vperm.xlu0 %1003, %v920
        %v1005 = vpop.permute.xlu0 %1004
        %1007 = vset.pattern.permute.xlu0 1
        %1008 = vperm.xlu0 %1007, %v922
        %v1009 = vpop.permute.xlu0 %1008
        %1011 = vset.pattern.permute.xlu0 1
        %1012 = vperm.xlu0 %1011, %v924
        %v1013 = vpop.permute.xlu0 %1012
        %1015 = vset.pattern.permute.xlu0 1
        %1016 = vperm.xlu0 %1015, %v926
        %v1017 = vpop.permute.xlu0 %1016
        %v1019 = vlaneseq
        %v1020 = vshrl.u32 %v1019, 7
        %v1021 = vsub.s32 5, %v1020
        %v1022 = vrot.slane %v197, %v1021
        %v1023 = vmul.f32 %v989, %v1022
        %v1024 = vmul.f32 %v993, %v1022
        %v1025 = vmul.f32 %v997, %v1022
        %v1026 = vmul.f32 %v1001, %v1022
        %v1027 = vmul.f32 %v1005, %v1022
        %v1028 = vmul.f32 %v1009, %v1022
        %v1029 = vmul.f32 %v1013, %v1022
        %v1030 = vmul.f32 %v1017, %v1022
        %v1031 = vadd.f32 %v979, %v1023
        %v1032 = vadd.f32 %v980, %v1024
        %v1033 = vadd.f32 %v981, %v1025
        %v1034 = vadd.f32 %v982, %v1026
        %v1035 = vadd.f32 %v983, %v1027
        %v1036 = vadd.f32 %v984, %v1028
        %v1037 = vadd.f32 %v985, %v1029
        %v1038 = vadd.f32 %v986, %v1030
        %1039 = vset.pattern.permute.xlu0 2
        %1040 = vperm.xlu0 %1039, %v912
        %v1041 = vpop.permute.xlu0 %1040
        %1043 = vset.pattern.permute.xlu0 2
        %1044 = vperm.xlu0 %1043, %v914
        %v1045 = vpop.permute.xlu0 %1044
        %1047 = vset.pattern.permute.xlu0 2
        %1048 = vperm.xlu0 %1047, %v916
        %v1049 = vpop.permute.xlu0 %1048
        %1051 = vset.pattern.permute.xlu0 2
        %1052 = vperm.xlu0 %1051, %v918
        %v1053 = vpop.permute.xlu0 %1052
        %1055 = vset.pattern.permute.xlu0 2
        %1056 = vperm.xlu0 %1055, %v920
        %v1057 = vpop.permute.xlu0 %1056
        %1059 = vset.pattern.permute.xlu0 2
        %1060 = vperm.xlu0 %1059, %v922
        %v1061 = vpop.permute.xlu0 %1060
        %1063 = vset.pattern.permute.xlu0 2
        %1064 = vperm.xlu0 %1063, %v924
        %v1065 = vpop.permute.xlu0 %1064
        %1067 = vset.pattern.permute.xlu0 2
        %1068 = vperm.xlu0 %1067, %v926
        %v1069 = vpop.permute.xlu0 %1068
        %v1071 = vlaneseq
        %v1072 = vshrl.u32 %v1071, 7
        %v1073 = vsub.s32 6, %v1072
        %v1074 = vrot.slane %v197, %v1073
        %v1075 = vmul.f32 %v1041, %v1074
        %v1076 = vmul.f32 %v1045, %v1074
        %v1077 = vmul.f32 %v1049, %v1074
        %v1078 = vmul.f32 %v1053, %v1074
        %v1079 = vmul.f32 %v1057, %v1074
        %v1080 = vmul.f32 %v1061, %v1074
        %v1081 = vmul.f32 %v1065, %v1074
        %v1082 = vmul.f32 %v1069, %v1074
        %v1083 = vadd.f32 %v1031, %v1075
        %v1084 = vadd.f32 %v1032, %v1076
        %v1085 = vadd.f32 %v1033, %v1077
        %v1086 = vadd.f32 %v1034, %v1078
        %v1087 = vadd.f32 %v1035, %v1079
        %v1088 = vadd.f32 %v1036, %v1080
        %v1089 = vadd.f32 %v1037, %v1081
        %v1090 = vadd.f32 %v1038, %v1082
        %s1091 = scalar_lea.vmem %s731, 2
        %v1092 = vld [vmem:[%s1091] ss:$2 sm:$0xff]
        %s1093 = scalar_lea.vmem %s731, 50
        %v1094 = vld [vmem:[%s1093] ss:$2 sm:$0xff]
        %s1095 = scalar_lea.vmem %s731, 98
        %v1096 = vld [vmem:[%s1095] ss:$2 sm:$0xff]
        %s1097 = scalar_lea.vmem %s731, 146
        %v1098 = vld [vmem:[%s1097] ss:$2 sm:$0xff]
        %s1099 = scalar_lea.vmem %s731, 194
        %v1100 = vld [vmem:[%s1099] ss:$2 sm:$0xff]
        %s1101 = scalar_lea.vmem %s731, 242
        %v1102 = vld [vmem:[%s1101] ss:$2 sm:$0xff]
        %s1103 = scalar_lea.vmem %s731, 290
        %v1104 = vld [vmem:[%s1103] ss:$2 sm:$0xff]
        %s1105 = scalar_lea.vmem %s731, 338
        %v1106 = vld [vmem:[%s1105] ss:$2 sm:$0xff]
        %1108 = vset.pattern.permute.xlu0 0
        %1109 = vperm.xlu0 %1108, %v1092
        %v1110 = vpop.permute.xlu0 %1109
        %1113 = vset.pattern.permute.xlu0 0
        %1114 = vperm.xlu0 %1113, %v1094
        %v1115 = vpop.permute.xlu0 %1114
        %1118 = vset.pattern.permute.xlu0 0
        %1119 = vperm.xlu0 %1118, %v1096
        %v1120 = vpop.permute.xlu0 %1119
        %1123 = vset.pattern.permute.xlu0 0
        %1124 = vperm.xlu0 %1123, %v1098
        %v1125 = vpop.permute.xlu0 %1124
        %1128 = vset.pattern.permute.xlu0 0
        %1129 = vperm.xlu0 %1128, %v1100
        %v1130 = vpop.permute.xlu0 %1129
        %1133 = vset.pattern.permute.xlu0 0
        %1134 = vperm.xlu0 %1133, %v1102
        %v1135 = vpop.permute.xlu0 %1134
        %1138 = vset.pattern.permute.xlu0 0
        %1139 = vperm.xlu0 %1138, %v1104
        %v1140 = vpop.permute.xlu0 %1139
        %1143 = vset.pattern.permute.xlu0 0
        %1144 = vperm.xlu0 %1143, %v1106
        %v1145 = vpop.permute.xlu0 %1144
        %v1147 = vlaneseq
        %v1148 = vshrl.u32 %v1147, 7
        %v1149 = vsub.s32 7, %v1148
        %v1150 = vrot.slane %v197, %v1149
        %v1151 = vmul.f32 %v1110, %v1150
        %v1152 = vmul.f32 %v1115, %v1150
        %v1153 = vmul.f32 %v1120, %v1150
        %v1154 = vmul.f32 %v1125, %v1150
        %v1155 = vmul.f32 %v1130, %v1150
        %v1156 = vmul.f32 %v1135, %v1150
        %v1157 = vmul.f32 %v1140, %v1150
        %v1158 = vmul.f32 %v1145, %v1150
        %v1159 = vadd.f32 %v1083, %v1151
        %v1160 = vadd.f32 %v1084, %v1152
        %v1161 = vadd.f32 %v1085, %v1153
        %v1162 = vadd.f32 %v1086, %v1154
        %v1163 = vadd.f32 %v1087, %v1155
        %v1164 = vadd.f32 %v1088, %v1156
        %v1165 = vadd.f32 %v1089, %v1157
        %v1166 = vadd.f32 %v1090, %v1158
        %1167 = vset.pattern.permute.xlu0 1
        %1168 = vperm.xlu0 %1167, %v1092
        %v1169 = vpop.permute.xlu0 %1168
        %1171 = vset.pattern.permute.xlu0 1
        %1172 = vperm.xlu0 %1171, %v1094
        %v1173 = vpop.permute.xlu0 %1172
        %1175 = vset.pattern.permute.xlu0 1
        %1176 = vperm.xlu0 %1175, %v1096
        %v1177 = vpop.permute.xlu0 %1176
        %1179 = vset.pattern.permute.xlu0 1
        %1180 = vperm.xlu0 %1179, %v1098
        %v1181 = vpop.permute.xlu0 %1180
        %1183 = vset.pattern.permute.xlu0 1
        %1184 = vperm.xlu0 %1183, %v1100
        %v1185 = vpop.permute.xlu0 %1184
        %1187 = vset.pattern.permute.xlu0 1
        %1188 = vperm.xlu0 %1187, %v1102
        %v1189 = vpop.permute.xlu0 %1188
        %1191 = vset.pattern.permute.xlu0 1
        %1192 = vperm.xlu0 %1191, %v1104
        %v1193 = vpop.permute.xlu0 %1192
        %1195 = vset.pattern.permute.xlu0 1
        %1196 = vperm.xlu0 %1195, %v1106
        %v1197 = vpop.permute.xlu0 %1196
        %v1199 = vlaneseq
        %v1200 = vshrl.u32 %v1199, 7
        %v1201 = vsub.s32 0, %v1200
        %v1202 = vrot.slane %v198, %v1201
        %v1203 = vmul.f32 %v1169, %v1202
        %v1204 = vmul.f32 %v1173, %v1202
        %v1205 = vmul.f32 %v1177, %v1202
        %v1206 = vmul.f32 %v1181, %v1202
        %v1207 = vmul.f32 %v1185, %v1202
        %v1208 = vmul.f32 %v1189, %v1202
        %v1209 = vmul.f32 %v1193, %v1202
        %v1210 = vmul.f32 %v1197, %v1202
        %v1211 = vadd.f32 %v1159, %v1203
        %v1212 = vadd.f32 %v1160, %v1204
        %v1213 = vadd.f32 %v1161, %v1205
        %v1214 = vadd.f32 %v1162, %v1206
        %v1215 = vadd.f32 %v1163, %v1207
        %v1216 = vadd.f32 %v1164, %v1208
        %v1217 = vadd.f32 %v1165, %v1209
        %v1218 = vadd.f32 %v1166, %v1210
        %1219 = vset.pattern.permute.xlu0 2
        %1220 = vperm.xlu0 %1219, %v1092
        %v1221 = vpop.permute.xlu0 %1220
        %1223 = vset.pattern.permute.xlu0 2
        %1224 = vperm.xlu0 %1223, %v1094
        %v1225 = vpop.permute.xlu0 %1224
        %1227 = vset.pattern.permute.xlu0 2
        %1228 = vperm.xlu0 %1227, %v1096
        %v1229 = vpop.permute.xlu0 %1228
        %1231 = vset.pattern.permute.xlu0 2
        %1232 = vperm.xlu0 %1231, %v1098
        %v1233 = vpop.permute.xlu0 %1232
        %1235 = vset.pattern.permute.xlu0 2
        %1236 = vperm.xlu0 %1235, %v1100
        %v1237 = vpop.permute.xlu0 %1236
        %1239 = vset.pattern.permute.xlu0 2
        %1240 = vperm.xlu0 %1239, %v1102
        %v1241 = vpop.permute.xlu0 %1240
        %1243 = vset.pattern.permute.xlu0 2
        %1244 = vperm.xlu0 %1243, %v1104
        %v1245 = vpop.permute.xlu0 %1244
        %1247 = vset.pattern.permute.xlu0 2
        %1248 = vperm.xlu0 %1247, %v1106
        %v1249 = vpop.permute.xlu0 %1248
        %v1251 = vlaneseq
        %v1252 = vshrl.u32 %v1251, 7
        %v1253 = vsub.s32 1, %v1252
        %v1254 = vrot.slane %v198, %v1253
        %v1255 = vmul.f32 %v1221, %v1254
        %v1256 = vmul.f32 %v1225, %v1254
        %v1257 = vmul.f32 %v1229, %v1254
        %v1258 = vmul.f32 %v1233, %v1254
        %v1259 = vmul.f32 %v1237, %v1254
        %v1260 = vmul.f32 %v1241, %v1254
        %v1261 = vmul.f32 %v1245, %v1254
        %v1262 = vmul.f32 %v1249, %v1254
        %v1263 = vadd.f32 %v1211, %v1255
        %v1264 = vadd.f32 %v1212, %v1256
        %v1265 = vadd.f32 %v1213, %v1257
        %v1266 = vadd.f32 %v1214, %v1258
        %v1267 = vadd.f32 %v1215, %v1259
        %v1268 = vadd.f32 %v1216, %v1260
        %v1269 = vadd.f32 %v1217, %v1261
        %v1270 = vadd.f32 %v1218, %v1262
        %s1271 = scalar_lea.vmem %s195, 48
        %v1272 = vld [vmem:[%s1271] ss:$2 sm:$0xff]
        %s1273 = scalar_lea.vmem %s1271, 48
        %v1274 = vld [vmem:[%s1273] ss:$2 sm:$0xff]
        %s1275 = scalar_lea.vmem %s1271, 96
        %v1276 = vld [vmem:[%s1275] ss:$2 sm:$0xff]
        %s1277 = scalar_lea.vmem %s1271, 144
        %v1278 = vld [vmem:[%s1277] ss:$2 sm:$0xff]
        %s1279 = scalar_lea.vmem %s1271, 192
        %v1280 = vld [vmem:[%s1279] ss:$2 sm:$0xff]
        %s1281 = scalar_lea.vmem %s1271, 240
        %v1282 = vld [vmem:[%s1281] ss:$2 sm:$0xff]
        %s1283 = scalar_lea.vmem %s1271, 288
        %v1284 = vld [vmem:[%s1283] ss:$2 sm:$0xff]
        %s1285 = scalar_lea.vmem %s1271, 336
        %v1286 = vld [vmem:[%s1285] ss:$2 sm:$0xff]
        %1288 = vset.pattern.permute.xlu0 0
        %1289 = vperm.xlu0 %1288, %v1272
        %v1290 = vpop.permute.xlu0 %1289
        %1293 = vset.pattern.permute.xlu0 0
        %1294 = vperm.xlu0 %1293, %v1274
        %v1295 = vpop.permute.xlu0 %1294
        %1298 = vset.pattern.permute.xlu0 0
        %1299 = vperm.xlu0 %1298, %v1276
        %v1300 = vpop.permute.xlu0 %1299
        %1303 = vset.pattern.permute.xlu0 0
        %1304 = vperm.xlu0 %1303, %v1278
        %v1305 = vpop.permute.xlu0 %1304
        %1308 = vset.pattern.permute.xlu0 0
        %1309 = vperm.xlu0 %1308, %v1280
        %v1310 = vpop.permute.xlu0 %1309
        %1313 = vset.pattern.permute.xlu0 0
        %1314 = vperm.xlu0 %1313, %v1282
        %v1315 = vpop.permute.xlu0 %1314
        %1318 = vset.pattern.permute.xlu0 0
        %1319 = vperm.xlu0 %1318, %v1284
        %v1320 = vpop.permute.xlu0 %1319
        %1323 = vset.pattern.permute.xlu0 0
        %1324 = vperm.xlu0 %1323, %v1286
        %v1325 = vpop.permute.xlu0 %1324
        %v1327 = vlaneseq
        %v1328 = vshrl.u32 %v1327, 7
        %v1329 = vsub.s32 2, %v1328
        %v1330 = vrot.slane %v198, %v1329
        %v1331 = vmul.f32 %v1290, %v1330
        %v1332 = vmul.f32 %v1295, %v1330
        %v1333 = vmul.f32 %v1300, %v1330
        %v1334 = vmul.f32 %v1305, %v1330
        %v1335 = vmul.f32 %v1310, %v1330
        %v1336 = vmul.f32 %v1315, %v1330
        %v1337 = vmul.f32 %v1320, %v1330
        %v1338 = vmul.f32 %v1325, %v1330
        %v1339 = vadd.f32 %v1263, %v1331
        %v1340 = vadd.f32 %v1264, %v1332
        %v1341 = vadd.f32 %v1265, %v1333
        %v1342 = vadd.f32 %v1266, %v1334
        %v1343 = vadd.f32 %v1267, %v1335
        %v1344 = vadd.f32 %v1268, %v1336
        %v1345 = vadd.f32 %v1269, %v1337
        %v1346 = vadd.f32 %v1270, %v1338
        %1347 = vset.pattern.permute.xlu0 1
        %1348 = vperm.xlu0 %1347, %v1272
        %v1349 = vpop.permute.xlu0 %1348
        %1351 = vset.pattern.permute.xlu0 1
        %1352 = vperm.xlu0 %1351, %v1274
        %v1353 = vpop.permute.xlu0 %1352
        %1355 = vset.pattern.permute.xlu0 1
        %1356 = vperm.xlu0 %1355, %v1276
        %v1357 = vpop.permute.xlu0 %1356
        %1359 = vset.pattern.permute.xlu0 1
        %1360 = vperm.xlu0 %1359, %v1278
        %v1361 = vpop.permute.xlu0 %1360
        %1363 = vset.pattern.permute.xlu0 1
        %1364 = vperm.xlu0 %1363, %v1280
        %v1365 = vpop.permute.xlu0 %1364
        %1367 = vset.pattern.permute.xlu0 1
        %1368 = vperm.xlu0 %1367, %v1282
        %v1369 = vpop.permute.xlu0 %1368
        %1371 = vset.pattern.permute.xlu0 1
        %1372 = vperm.xlu0 %1371, %v1284
        %v1373 = vpop.permute.xlu0 %1372
        %1375 = vset.pattern.permute.xlu0 1
        %1376 = vperm.xlu0 %1375, %v1286
        %v1377 = vpop.permute.xlu0 %1376
        %v1379 = vlaneseq
        %v1380 = vshrl.u32 %v1379, 7
        %v1381 = vsub.s32 3, %v1380
        %v1382 = vrot.slane %v198, %v1381
        %v1383 = vmul.f32 %v1349, %v1382
        %v1384 = vmul.f32 %v1353, %v1382
        %v1385 = vmul.f32 %v1357, %v1382
        %v1386 = vmul.f32 %v1361, %v1382
        %v1387 = vmul.f32 %v1365, %v1382
        %v1388 = vmul.f32 %v1369, %v1382
        %v1389 = vmul.f32 %v1373, %v1382
        %v1390 = vmul.f32 %v1377, %v1382
        %v1391 = vadd.f32 %v1339, %v1383
        %v1392 = vadd.f32 %v1340, %v1384
        %v1393 = vadd.f32 %v1341, %v1385
        %v1394 = vadd.f32 %v1342, %v1386
        %v1395 = vadd.f32 %v1343, %v1387
        %v1396 = vadd.f32 %v1344, %v1388
        %v1397 = vadd.f32 %v1345, %v1389
        %v1398 = vadd.f32 %v1346, %v1390
        %1399 = vset.pattern.permute.xlu0 2
        %1400 = vperm.xlu0 %1399, %v1272
        %v1401 = vpop.permute.xlu0 %1400
        %1403 = vset.pattern.permute.xlu0 2
        %1404 = vperm.xlu0 %1403, %v1274
        %v1405 = vpop.permute.xlu0 %1404
        %1407 = vset.pattern.permute.xlu0 2
        %1408 = vperm.xlu0 %1407, %v1276
        %v1409 = vpop.permute.xlu0 %1408
        %1411 = vset.pattern.permute.xlu0 2
        %1412 = vperm.xlu0 %1411, %v1278
        %v1413 = vpop.permute.xlu0 %1412
        %1415 = vset.pattern.permute.xlu0 2
        %1416 = vperm.xlu0 %1415, %v1280
        %v1417 = vpop.permute.xlu0 %1416
        %1419 = vset.pattern.permute.xlu0 2
        %1420 = vperm.xlu0 %1419, %v1282
        %v1421 = vpop.permute.xlu0 %1420
        %1423 = vset.pattern.permute.xlu0 2
        %1424 = vperm.xlu0 %1423, %v1284
        %v1425 = vpop.permute.xlu0 %1424
        %1427 = vset.pattern.permute.xlu0 2
        %1428 = vperm.xlu0 %1427, %v1286
        %v1429 = vpop.permute.xlu0 %1428
        %v1431 = vlaneseq
        %v1432 = vshrl.u32 %v1431, 7
        %v1433 = vsub.s32 4, %v1432
        %v1434 = vrot.slane %v198, %v1433
        %v1435 = vmul.f32 %v1401, %v1434
        %v1436 = vmul.f32 %v1405, %v1434
        %v1437 = vmul.f32 %v1409, %v1434
        %v1438 = vmul.f32 %v1413, %v1434
        %v1439 = vmul.f32 %v1417, %v1434
        %v1440 = vmul.f32 %v1421, %v1434
        %v1441 = vmul.f32 %v1425, %v1434
        %v1442 = vmul.f32 %v1429, %v1434
        %v1443 = vadd.f32 %v1391, %v1435
        %v1444 = vadd.f32 %v1392, %v1436
        %v1445 = vadd.f32 %v1393, %v1437
        %v1446 = vadd.f32 %v1394, %v1438
        %v1447 = vadd.f32 %v1395, %v1439
        %v1448 = vadd.f32 %v1396, %v1440
        %v1449 = vadd.f32 %v1397, %v1441
        %v1450 = vadd.f32 %v1398, %v1442
        %s1451 = scalar_lea.vmem %s1271, 1
        %v1452 = vld [vmem:[%s1451] ss:$2 sm:$0xff]
        %s1453 = scalar_lea.vmem %s1271, 49
        %v1454 = vld [vmem:[%s1453] ss:$2 sm:$0xff]
        %s1455 = scalar_lea.vmem %s1271, 97
        %v1456 = vld [vmem:[%s1455] ss:$2 sm:$0xff]
        %s1457 = scalar_lea.vmem %s1271, 145
        %v1458 = vld [vmem:[%s1457] ss:$2 sm:$0xff]
        %s1459 = scalar_lea.vmem %s1271, 193
        %v1460 = vld [vmem:[%s1459] ss:$2 sm:$0xff]
        %s1461 = scalar_lea.vmem %s1271, 241
        %v1462 = vld [vmem:[%s1461] ss:$2 sm:$0xff]
        %s1463 = scalar_lea.vmem %s1271, 289
        %v1464 = vld [vmem:[%s1463] ss:$2 sm:$0xff]
        %s1465 = scalar_lea.vmem %s1271, 337
        %v1466 = vld [vmem:[%s1465] ss:$2 sm:$0xff]
        %1468 = vset.pattern.permute.xlu0 0
        %1469 = vperm.xlu0 %1468, %v1452
        %v1470 = vpop.permute.xlu0 %1469
        %1473 = vset.pattern.permute.xlu0 0
        %1474 = vperm.xlu0 %1473, %v1454
        %v1475 = vpop.permute.xlu0 %1474
        %1478 = vset.pattern.permute.xlu0 0
        %1479 = vperm.xlu0 %1478, %v1456
        %v1480 = vpop.permute.xlu0 %1479
        %1483 = vset.pattern.permute.xlu0 0
        %1484 = vperm.xlu0 %1483, %v1458
        %v1485 = vpop.permute.xlu0 %1484
        %1488 = vset.pattern.permute.xlu0 0
        %1489 = vperm.xlu0 %1488, %v1460
        %v1490 = vpop.permute.xlu0 %1489
        %1493 = vset.pattern.permute.xlu0 0
        %1494 = vperm.xlu0 %1493, %v1462
        %v1495 = vpop.permute.xlu0 %1494
        %1498 = vset.pattern.permute.xlu0 0
        %1499 = vperm.xlu0 %1498, %v1464
        %v1500 = vpop.permute.xlu0 %1499
        %1503 = vset.pattern.permute.xlu0 0
        %1504 = vperm.xlu0 %1503, %v1466
        %v1505 = vpop.permute.xlu0 %1504
        %v1507 = vlaneseq
        %v1508 = vshrl.u32 %v1507, 7
        %v1509 = vsub.s32 5, %v1508
        %v1510 = vrot.slane %v198, %v1509
        %v1511 = vmul.f32 %v1470, %v1510
        %v1512 = vmul.f32 %v1475, %v1510
        %v1513 = vmul.f32 %v1480, %v1510
        %v1514 = vmul.f32 %v1485, %v1510
        %v1515 = vmul.f32 %v1490, %v1510
        %v1516 = vmul.f32 %v1495, %v1510
        %v1517 = vmul.f32 %v1500, %v1510
        %v1518 = vmul.f32 %v1505, %v1510
        %v1519 = vadd.f32 %v1443, %v1511
        %v1520 = vadd.f32 %v1444, %v1512
        %v1521 = vadd.f32 %v1445, %v1513
        %v1522 = vadd.f32 %v1446, %v1514
        %v1523 = vadd.f32 %v1447, %v1515
        %v1524 = vadd.f32 %v1448, %v1516
        %v1525 = vadd.f32 %v1449, %v1517
        %v1526 = vadd.f32 %v1450, %v1518
        %1527 = vset.pattern.permute.xlu0 1
        %1528 = vperm.xlu0 %1527, %v1452
        %v1529 = vpop.permute.xlu0 %1528
        %1531 = vset.pattern.permute.xlu0 1
        %1532 = vperm.xlu0 %1531, %v1454
        %v1533 = vpop.permute.xlu0 %1532
        %1535 = vset.pattern.permute.xlu0 1
        %1536 = vperm.xlu0 %1535, %v1456
        %v1537 = vpop.permute.xlu0 %1536
        %1539 = vset.pattern.permute.xlu0 1
        %1540 = vperm.xlu0 %1539, %v1458
        %v1541 = vpop.permute.xlu0 %1540
        %1543 = vset.pattern.permute.xlu0 1
        %1544 = vperm.xlu0 %1543, %v1460
        %v1545 = vpop.permute.xlu0 %1544
        %1547 = vset.pattern.permute.xlu0 1
        %1548 = vperm.xlu0 %1547, %v1462
        %v1549 = vpop.permute.xlu0 %1548
        %1551 = vset.pattern.permute.xlu0 1
        %1552 = vperm.xlu0 %1551, %v1464
        %v1553 = vpop.permute.xlu0 %1552
        %1555 = vset.pattern.permute.xlu0 1
        %1556 = vperm.xlu0 %1555, %v1466
        %v1557 = vpop.permute.xlu0 %1556
        %v1559 = vlaneseq
        %v1560 = vshrl.u32 %v1559, 7
        %v1561 = vsub.s32 6, %v1560
        %v1562 = vrot.slane %v198, %v1561
        %v1563 = vmul.f32 %v1529, %v1562
        %v1564 = vmul.f32 %v1533, %v1562
        %v1565 = vmul.f32 %v1537, %v1562
        %v1566 = vmul.f32 %v1541, %v1562
        %v1567 = vmul.f32 %v1545, %v1562
        %v1568 = vmul.f32 %v1549, %v1562
        %v1569 = vmul.f32 %v1553, %v1562
        %v1570 = vmul.f32 %v1557, %v1562
        %v1571 = vadd.f32 %v1519, %v1563
        %v1572 = vadd.f32 %v1520, %v1564
        %v1573 = vadd.f32 %v1521, %v1565
        %v1574 = vadd.f32 %v1522, %v1566
        %v1575 = vadd.f32 %v1523, %v1567
        %v1576 = vadd.f32 %v1524, %v1568
        %v1577 = vadd.f32 %v1525, %v1569
        %v1578 = vadd.f32 %v1526, %v1570
        %1579 = vset.pattern.permute.xlu0 2
        %1580 = vperm.xlu0 %1579, %v1452
        %v1581 = vpop.permute.xlu0 %1580
        %1583 = vset.pattern.permute.xlu0 2
        %1584 = vperm.xlu0 %1583, %v1454
        %v1585 = vpop.permute.xlu0 %1584
        %1587 = vset.pattern.permute.xlu0 2
        %1588 = vperm.xlu0 %1587, %v1456
        %v1589 = vpop.permute.xlu0 %1588
        %1591 = vset.pattern.permute.xlu0 2
        %1592 = vperm.xlu0 %1591, %v1458
        %v1593 = vpop.permute.xlu0 %1592
        %1595 = vset.pattern.permute.xlu0 2
        %1596 = vperm.xlu0 %1595, %v1460
        %v1597 = vpop.permute.xlu0 %1596
        %1599 = vset.pattern.permute.xlu0 2
        %1600 = vperm.xlu0 %1599, %v1462
        %v1601 = vpop.permute.xlu0 %1600
        %1603 = vset.pattern.permute.xlu0 2
        %1604 = vperm.xlu0 %1603, %v1464
        %v1605 = vpop.permute.xlu0 %1604
        %1607 = vset.pattern.permute.xlu0 2
        %1608 = vperm.xlu0 %1607, %v1466
        %v1609 = vpop.permute.xlu0 %1608
        %v1611 = vlaneseq
        %v1612 = vshrl.u32 %v1611, 7
        %v1613 = vsub.s32 7, %v1612
        %v1614 = vrot.slane %v198, %v1613
        %v1615 = vmul.f32 %v1581, %v1614
        %v1616 = vmul.f32 %v1585, %v1614
        %v1617 = vmul.f32 %v1589, %v1614
        %v1618 = vmul.f32 %v1593, %v1614
        %v1619 = vmul.f32 %v1597, %v1614
        %v1620 = vmul.f32 %v1601, %v1614
        %v1621 = vmul.f32 %v1605, %v1614
        %v1622 = vmul.f32 %v1609, %v1614
        %v1623 = vadd.f32 %v1571, %v1615
        %v1624 = vadd.f32 %v1572, %v1616
        %v1625 = vadd.f32 %v1573, %v1617
        %v1626 = vadd.f32 %v1574, %v1618
        %v1627 = vadd.f32 %v1575, %v1619
        %v1628 = vadd.f32 %v1576, %v1620
        %v1629 = vadd.f32 %v1577, %v1621
        %v1630 = vadd.f32 %v1578, %v1622
        %s1631 = scalar_lea.vmem %s1271, 2
        %v1632 = vld [vmem:[%s1631] ss:$2 sm:$0xff]
        %s1633 = scalar_lea.vmem %s1271, 50
        %v1634 = vld [vmem:[%s1633] ss:$2 sm:$0xff]
        %s1635 = scalar_lea.vmem %s1271, 98
        %v1636 = vld [vmem:[%s1635] ss:$2 sm:$0xff]
        %s1637 = scalar_lea.vmem %s1271, 146
        %v1638 = vld [vmem:[%s1637] ss:$2 sm:$0xff]
        %s1639 = scalar_lea.vmem %s1271, 194
        %v1640 = vld [vmem:[%s1639] ss:$2 sm:$0xff]
        %s1641 = scalar_lea.vmem %s1271, 242
        %v1642 = vld [vmem:[%s1641] ss:$2 sm:$0xff]
        %s1643 = scalar_lea.vmem %s1271, 290
        %v1644 = vld [vmem:[%s1643] ss:$2 sm:$0xff]
        %s1645 = scalar_lea.vmem %s1271, 338
        %v1646 = vld [vmem:[%s1645] ss:$2 sm:$0xff]
        %1648 = vset.pattern.permute.xlu0 0
        %1649 = vperm.xlu0 %1648, %v1632
        %v1650 = vpop.permute.xlu0 %1649
        %1653 = vset.pattern.permute.xlu0 0
        %1654 = vperm.xlu0 %1653, %v1634
        %v1655 = vpop.permute.xlu0 %1654
        %1658 = vset.pattern.permute.xlu0 0
        %1659 = vperm.xlu0 %1658, %v1636
        %v1660 = vpop.permute.xlu0 %1659
        %1663 = vset.pattern.permute.xlu0 0
        %1664 = vperm.xlu0 %1663, %v1638
        %v1665 = vpop.permute.xlu0 %1664
        %1668 = vset.pattern.permute.xlu0 0
        %1669 = vperm.xlu0 %1668, %v1640
        %v1670 = vpop.permute.xlu0 %1669
        %1673 = vset.pattern.permute.xlu0 0
        %1674 = vperm.xlu0 %1673, %v1642
        %v1675 = vpop.permute.xlu0 %1674
        %1678 = vset.pattern.permute.xlu0 0
        %1679 = vperm.xlu0 %1678, %v1644
        %v1680 = vpop.permute.xlu0 %1679
        %1683 = vset.pattern.permute.xlu0 0
        %1684 = vperm.xlu0 %1683, %v1646
        %v1685 = vpop.permute.xlu0 %1684
        %v1687 = vlaneseq
        %v1688 = vshrl.u32 %v1687, 7
        %v1689 = vsub.s32 0, %v1688
        %v1690 = vrot.slane %v199, %v1689
        %v1691 = vmul.f32 %v1650, %v1690
        %v1692 = vmul.f32 %v1655, %v1690
        %v1693 = vmul.f32 %v1660, %v1690
        %v1694 = vmul.f32 %v1665, %v1690
        %v1695 = vmul.f32 %v1670, %v1690
        %v1696 = vmul.f32 %v1675, %v1690
        %v1697 = vmul.f32 %v1680, %v1690
        %v1698 = vmul.f32 %v1685, %v1690
        %v1699 = vadd.f32 %v1623, %v1691
        %v1700 = vadd.f32 %v1624, %v1692
        %v1701 = vadd.f32 %v1625, %v1693
        %v1702 = vadd.f32 %v1626, %v1694
        %v1703 = vadd.f32 %v1627, %v1695
        %v1704 = vadd.f32 %v1628, %v1696
        %v1705 = vadd.f32 %v1629, %v1697
        %v1706 = vadd.f32 %v1630, %v1698
        %1707 = vset.pattern.permute.xlu0 1
        %1708 = vperm.xlu0 %1707, %v1632
        %v1709 = vpop.permute.xlu0 %1708
        %1711 = vset.pattern.permute.xlu0 1
        %1712 = vperm.xlu0 %1711, %v1634
        %v1713 = vpop.permute.xlu0 %1712
        %1715 = vset.pattern.permute.xlu0 1
        %1716 = vperm.xlu0 %1715, %v1636
        %v1717 = vpop.permute.xlu0 %1716
        %1719 = vset.pattern.permute.xlu0 1
        %1720 = vperm.xlu0 %1719, %v1638
        %v1721 = vpop.permute.xlu0 %1720
        %1723 = vset.pattern.permute.xlu0 1
        %1724 = vperm.xlu0 %1723, %v1640
        %v1725 = vpop.permute.xlu0 %1724
        %1727 = vset.pattern.permute.xlu0 1
        %1728 = vperm.xlu0 %1727, %v1642
        %v1729 = vpop.permute.xlu0 %1728
        %1731 = vset.pattern.permute.xlu0 1
        %1732 = vperm.xlu0 %1731, %v1644
        %v1733 = vpop.permute.xlu0 %1732
        %1735 = vset.pattern.permute.xlu0 1
        %1736 = vperm.xlu0 %1735, %v1646
        %v1737 = vpop.permute.xlu0 %1736
        %v1739 = vlaneseq
        %v1740 = vshrl.u32 %v1739, 7
        %v1741 = vsub.s32 1, %v1740
        %v1742 = vrot.slane %v199, %v1741
        %v1743 = vmul.f32 %v1709, %v1742
        %v1744 = vmul.f32 %v1713, %v1742
        %v1745 = vmul.f32 %v1717, %v1742
        %v1746 = vmul.f32 %v1721, %v1742
        %v1747 = vmul.f32 %v1725, %v1742
        %v1748 = vmul.f32 %v1729, %v1742
        %v1749 = vmul.f32 %v1733, %v1742
        %v1750 = vmul.f32 %v1737, %v1742
        %v1751 = vadd.f32 %v1699, %v1743
        %v1752 = vadd.f32 %v1700, %v1744
        %v1753 = vadd.f32 %v1701, %v1745
        %v1754 = vadd.f32 %v1702, %v1746
        %v1755 = vadd.f32 %v1703, %v1747
        %v1756 = vadd.f32 %v1704, %v1748
        %v1757 = vadd.f32 %v1705, %v1749
        %v1758 = vadd.f32 %v1706, %v1750
        %1759 = vset.pattern.permute.xlu0 2
        %1760 = vperm.xlu0 %1759, %v1632
        %v1761 = vpop.permute.xlu0 %1760
        %1763 = vset.pattern.permute.xlu0 2
        %1764 = vperm.xlu0 %1763, %v1634
        %v1765 = vpop.permute.xlu0 %1764
        %1767 = vset.pattern.permute.xlu0 2
        %1768 = vperm.xlu0 %1767, %v1636
        %v1769 = vpop.permute.xlu0 %1768
        %1771 = vset.pattern.permute.xlu0 2
        %1772 = vperm.xlu0 %1771, %v1638
        %v1773 = vpop.permute.xlu0 %1772
        %1775 = vset.pattern.permute.xlu0 2
        %1776 = vperm.xlu0 %1775, %v1640
        %v1777 = vpop.permute.xlu0 %1776
        %1779 = vset.pattern.permute.xlu0 2
        %1780 = vperm.xlu0 %1779, %v1642
        %v1781 = vpop.permute.xlu0 %1780
        %1783 = vset.pattern.permute.xlu0 2
        %1784 = vperm.xlu0 %1783, %v1644
        %v1785 = vpop.permute.xlu0 %1784
        %1787 = vset.pattern.permute.xlu0 2
        %1788 = vperm.xlu0 %1787, %v1646
        %v1789 = vpop.permute.xlu0 %1788
        %v1791 = vlaneseq
        %v1792 = vshrl.u32 %v1791, 7
        %v1793 = vsub.s32 2, %v1792
        %v1794 = vrot.slane %v199, %v1793
        %v1795 = vmul.f32 %v1761, %v1794
        %v1796 = vmul.f32 %v1765, %v1794
        %v1797 = vmul.f32 %v1769, %v1794
        %v1798 = vmul.f32 %v1773, %v1794
        %v1799 = vmul.f32 %v1777, %v1794
        %v1800 = vmul.f32 %v1781, %v1794
        %v1801 = vmul.f32 %v1785, %v1794
        %v1802 = vmul.f32 %v1789, %v1794
        %v1803 = vadd.f32 %v1751, %v1795
        %v1804 = vadd.f32 %v1752, %v1796
        %v1805 = vadd.f32 %v1753, %v1797
        %v1806 = vadd.f32 %v1754, %v1798
        %v1807 = vadd.f32 %v1755, %v1799
        %v1808 = vadd.f32 %v1756, %v1800
        %v1809 = vadd.f32 %v1757, %v1801
        %v1810 = vadd.f32 %v1758, %v1802
        %v1811 = vld [vmem:[%s2] sm:$0x1]
        %v1813 = vlaneseq
        %v1814 = vshrl.u32 %v1813, 7
        %v1815 = vsub.s32 0, %v1814
        %v1816 = vrot.slane %v1811, %v1815
        %v1818 = vmul.f32 %v1803, %v1816
        %v1819 = vmul.f32 %v1804, %v1816
        %v1820 = vmul.f32 %v1805, %v1816
        %v1821 = vmul.f32 %v1806, %v1816
        %v1822 = vmul.f32 %v1807, %v1816
        %v1823 = vmul.f32 %v1808, %v1816
        %v1824 = vmul.f32 %v1809, %v1816
        %v1825 = vmul.f32 %v1810, %v1816
        %v1826 = vld [vmem:[%s3] sm:$0x1]
        %v1828 = vlaneseq
        %v1829 = vshrl.u32 %v1828, 7
        %v1830 = vsub.s32 0, %v1829
        %v1831 = vrot.slane %v1826, %v1830
        %v1833 = vadd.f32 %v1818, %v1831
        %v1834 = vadd.f32 %v1819, %v1831
        %v1835 = vadd.f32 %v1820, %v1831
        %v1836 = vadd.f32 %v1821, %v1831
        %v1837 = vadd.f32 %v1822, %v1831
        %v1838 = vadd.f32 %v1823, %v1831
        %v1839 = vadd.f32 %v1824, %v1831
        %v1840 = vadd.f32 %v1825, %v1831
        %v1841 = vxor.u32 %v1833, 2147483648
        %v1842 = vxor.u32 %v1834, 2147483648
        %v1843 = vxor.u32 %v1835, 2147483648
        %v1844 = vxor.u32 %v1836, 2147483648
        %v1845 = vxor.u32 %v1837, 2147483648
        %v1846 = vxor.u32 %v1838, 2147483648
        %v1847 = vxor.u32 %v1839, 2147483648
        %v1848 = vxor.u32 %v1840, 2147483648
        %v1849 = vmul.f32 %v1841, 1.442695
        %v1850 = vpow.pop %v1849
        %v1851 = vmul.f32 %v1842, 1.442695
        %v1852 = vpow.pop %v1851
        %v1853 = vmul.f32 %v1843, 1.442695
        %v1854 = vpow.pop %v1853
        %v1855 = vmul.f32 %v1844, 1.442695
        %v1856 = vpow.pop %v1855
        %v1857 = vmul.f32 %v1845, 1.442695
        %v1858 = vpow.pop %v1857
        %v1859 = vmul.f32 %v1846, 1.442695
        %v1860 = vpow.pop %v1859
        %v1861 = vmul.f32 %v1847, 1.442695
        %v1862 = vpow.pop %v1861
        %v1863 = vmul.f32 %v1848, 1.442695
        %v1864 = vpow.pop %v1863
        %v1865 = vadd.f32 %v1850, 1.0
        %v1866 = vadd.f32 %v1852, 1.0
        %v1867 = vadd.f32 %v1854, 1.0
        %v1868 = vadd.f32 %v1856, 1.0
        %v1869 = vadd.f32 %v1858, 1.0
        %v1870 = vadd.f32 %v1860, 1.0
        %v1871 = vadd.f32 %v1862, 1.0
        %v1872 = vadd.f32 %v1864, 1.0
        %v1873 = vrcp.pop %v1865
        %v1874 = vmul.f32 1.0, %v1873
        %v1875 = vrcp.pop %v1866
        %v1876 = vmul.f32 1.0, %v1875
        %v1877 = vrcp.pop %v1867
        %v1878 = vmul.f32 1.0, %v1877
        %v1879 = vrcp.pop %v1868
        %v1880 = vmul.f32 1.0, %v1879
        %v1881 = vrcp.pop %v1869
        %v1882 = vmul.f32 1.0, %v1881
        %v1883 = vrcp.pop %v1870
        %v1884 = vmul.f32 1.0, %v1883
        %v1885 = vrcp.pop %v1871
        %v1886 = vmul.f32 1.0, %v1885
        %v1887 = vrcp.pop %v1872
        %v1888 = vmul.f32 1.0, %v1887
        %v1889 = vmul.f32 %v1833, %v1874
        %v1890 = vmul.f32 %v1834, %v1876
        %v1891 = vmul.f32 %v1835, %v1878
        %v1892 = vmul.f32 %v1836, %v1880
        %v1893 = vmul.f32 %v1837, %v1882
        %v1894 = vmul.f32 %v1838, %v1884
        %v1895 = vmul.f32 %v1839, %v1886
        %v1896 = vmul.f32 %v1840, %v1888
        %1897 = vst [vmem:[%s190] sm:$0xff] %v1889
        %1898 = vst [vmem:[%s190 + $0x8] sm:$0xff] %v1890
        %1899 = vst [vmem:[%s190 + $0x10] sm:$0xff] %v1891
        %1900 = vst [vmem:[%s190 + $0x18] sm:$0xff] %v1892
        %1901 = vst [vmem:[%s190 + $0x20] sm:$0xff] %v1893
        %1902 = vst [vmem:[%s190 + $0x28] sm:$0xff] %v1894
        %1903 = vst [vmem:[%s190 + $0x30] sm:$0xff] %v1895
        %1904 = vst [vmem:[%s190 + $0x38] sm:$0xff] %v1896
        %s1905 = sand.u32 %s115, 1
        %s1906 = scalar_lea.sflag [#allocation3], %s1905
        %s1907 = sand.u32 %s115, 1
        %s1908 = smul.addr %s1907, 64
        %s1909 = scalar_lea.vmem [#allocation2], %s1908
        // Predicated region
        $region37: #{tpu_custom_call.1} parent=35 // pred_check
          %p1910 = pneg %p125
        $region38: #{tpu_custom_call.1} parent=35 // pred_check_branch
          %1912 = sbr.rel (%p1910) target = $region40
        $region39: #{tpu_custom_call.1} parent=35 // pred_region
          %s1914 = ssub.s32 1024, 1024
          %1915 = vsyncadd %s1906, %s1914
          %s1916 = smul.addr %s18, 8
          %s1917 = smul.addr %s1916, 128
          %s1918 = scalar_lea.hbm %s4, %s1917
          %s1919 = sshll.u32 %s1909, 4
          %s1920 = int_to_ptr.vmem [resolvable:$true] %s1919
          %1925 = dma.vmem_to_hbm [thread:$0]  %s1920, 1024, %s1918, %s1906, 128, 128, 8
        $region40: #{tpu_custom_call.1} parent=35 // pred_fallthru
          _
      $region36: #{tpu_custom_call.1} parent=5 // pred_fallthru
        _
      %p1926 = scmp.le.s32.totalorder 2, %s13
      // Predicated region
      $region41: #{tpu_custom_call.1} parent=5 // pred_check
        %p1927 = pneg %p1926
      $region42: #{tpu_custom_call.1} parent=5 // pred_check_branch
        %1929 = sbr.rel (%p1927) target = $region44
      $region43: #{tpu_custom_call.1} parent=5 // pred_region
        %s1930 = ssub.s32 %s13, 2
        // Predicated region
        $region45: #{tpu_custom_call.1} parent=43 // pred_check
          %p1931 = pneg %p131
        $region46: #{tpu_custom_call.1} parent=43 // pred_check_branch
          %1933 = sbr.rel (%p1931) target = $region48
        $region47: #{tpu_custom_call.1} parent=43 // pred_region
          %s1934 = sand.u32 %s116, 1
          %s1935 = scalar_lea.sflag [#allocation3], %s1934
          %s1936 = sand.u32 %s116, 1
          %s1937 = smul.addr %s1936, 64
          %s1938 = scalar_lea.vmem [#allocation2], %s1937
          %1939 = dma.done %s1935, 1024
        $region48: #{tpu_custom_call.1} parent=43 // pred_fallthru
          _
      $region44: #{tpu_custom_call.1} parent=5 // pred_fallthru
        _
    $region6: #{tpu_custom_call.1} parent=1 // loop_footer
      %s17 = sadd.s32 1, %s13
    $region7: #{tpu_custom_call.1} parent=1 // loop_footer_branch
      %12 = sbr.rel target = $region3
    $region8: #{tpu_custom_call.1} parent=1 // loop_exit
      _
    %1940 = vsyncpa [#allocation3], 1
    %s1941 = scalar_lea.sflag [#allocation3], 1
    %1942 = vsyncpa %s1941, 1

// kernel: tpu_custom_call.1
$region0: #{tpu_custom_call.1}
  #allocation0 [shape = 'u32[]', space=smem, size = 0x4, offset = 0x4, fixed_abs, tag = 'smem constant byte address 0x4 - core index']
  #allocation1 [shape = 'u32[144,128]{1,0:T(1,128)}', space=vmem, size = 0x12000, scoped, tag = 'internal scratch']
  %s0 = inlined_call_operand.vmem [shape: f32[2,17,17,3], index: 0, kind: input, shape index: {}]
  %s1 = inlined_call_operand.vmem [shape: f32[27,128], index: 1, kind: input, shape index: {}]
  %s2 = inlined_call_operand.vmem [shape: f32[1,128], index: 2, kind: input, shape index: {}]
  %s3 = inlined_call_operand.vmem [shape: f32[1,128], index: 3, kind: input, shape index: {}]
  %s4 = inlined_call_operand.vmem [shape: f32[2,15,15,128], index: 4, kind: output, shape index: {}]
  %s5 = sld [smem:[#allocation0]]
  $region49: #{tpu_custom_call.1} parent=0
    _
  %s7 = ssub.s32 1, %s5
  %s8 = scalar_select 0, %s7, %s5
  loop: start=0, step=1, limit=4
  $region2: #{tpu_custom_call.1} parent=0 // loop_pre_header
    _
  $region3: #{tpu_custom_call.1} parent=0 // loop_header
    %s10 = sphi 0, %s14
    %p11 = scmp.ge.s32.totalorder %s10, 4
    %s20 = sphi 0, %s22
    %s23 = sphi 0, %s20
    %s24 = sphi 0, %s23
    %s40 = sphi 0, %s24
    %s44 = sphi 0, %s44
    %s46 = sphi 0, %s44
    %s47 = sphi 0, %s46
    %s61 = sphi 0, %s47
    %s65 = sphi 0, %s65
    %s67 = sphi 0, %s65
    %s68 = sphi 0, %s67
    %s82 = sphi 0, %s68
    %s86 = sphi 0, %s86
    %s88 = sphi 0, %s86
    %s89 = sphi 0, %s88
    %s103 = sphi 0, %s89
    %s109 = sphi 0, %s111
    %s112 = sphi 0, %s109
    %s113 = sphi 0, %s112
    %s129 = sphi 0, %s113
  $region4: #{tpu_custom_call.1} parent=0 // loop_header_branch
    %13 = sbr.rel (%p11) target = $region8
  $region5: #{tpu_custom_call.1} parent=0 // loop_body
    %s15 = ssub.s32 %s10, 1
    %s16 = ssub.s32 %s10, 2
    %s17 = sadd.s32 %s10, 1
    %s18 = ssub.s32 %s10, %s17
    %p19 = scmp.eq.s32.totalorder %s18, 0
    %s21 = sadd.s32 %s20, 1
    %s22 = scalar_select %p19, %s20, %s21
    %p25 = pneg %p19
    %p26 = scmp.eq.s32.totalorder %s10, 1
    %p27 = por %p25, %p26
    %p28 = scmp.ne.s32.totalorder %s20, %s23
    %p29 = scmp.eq.s32.totalorder %s10, 0
    %p30 = por %p28, %p29
    %p31 = scmp.ne.s32.totalorder %s20, %s23
    %p32 = scmp.eq.s32.totalorder %s15, 1
    %p33 = por %p31, %p32
    %p34 = scmp.ne.s32.totalorder %s23, %s24
    %p35 = scmp.eq.s32.totalorder %s15, 0
    %p36 = por %p34, %p35
    %p37 = scmp.ne.s32.totalorder %s23, %s24
    %p38 = scmp.eq.s32.totalorder %s16, 1
    %p39 = por %p37, %p38
    %p41 = scmp.ne.s32.totalorder %s24, %s40
    %p42 = scmp.eq.s32.totalorder %s16, 0
    %p43 = por %p41, %p42
    %s45 = sadd.s32 %s44, 1
    %p48 = scmp.eq.s32.totalorder %s10, 1
    %p49 = scmp.ne.s32.totalorder %s44, %s46
    %p50 = scmp.eq.s32.totalorder %s10, 0
    %p51 = por %p49, %p50
    %p52 = scmp.ne.s32.totalorder %s44, %s46
    %p53 = scmp.eq.s32.totalorder %s15, 1
    %p54 = por %p52, %p53
    %p55 = scmp.ne.s32.totalorder %s46, %s47
    %p56 = scmp.eq.s32.totalorder %s15, 0
    %p57 = por %p55, %p56
    %p58 = scmp.ne.s32.totalorder %s46, %s47
    %p59 = scmp.eq.s32.totalorder %s16, 1
    %p60 = por %p58, %p59
    %p62 = scmp.ne.s32.totalorder %s47, %s61
    %p63 = scmp.eq.s32.totalorder %s16, 0
    %p64 = por %p62, %p63
    %s66 = sadd.s32 %s65, 1
    %p69 = scmp.eq.s32.totalorder %s10, 1
    %p70 = scmp.ne.s32.totalorder %s65, %s67
    %p71 = scmp.eq.s32.totalorder %s10, 0
    %p72 = por %p70, %p71
    %p73 = scmp.ne.s32.totalorder %s65, %s67
    %p74 = scmp.eq.s32.totalorder %s15, 1
    %p75 = por %p73, %p74
    %p76 = scmp.ne.s32.totalorder %s67, %s68
    %p77 = scmp.eq.s32.totalorder %s15, 0
    %p78 = por %p76, %p77
    %p79 = scmp.ne.s32.totalorder %s67, %s68
    %p80 = scmp.eq.s32.totalorder %s16, 1
    %p81 = por %p79, %p80
    %p83 = scmp.ne.s32.totalorder %s68, %s82
    %p84 = scmp.eq.s32.totalorder %s16, 0
    %p85 = por %p83, %p84
    %s87 = sadd.s32 %s86, 1
    %p90 = scmp.eq.s32.totalorder %s10, 1
    %p91 = scmp.ne.s32.totalorder %s86, %s88
    %p92 = scmp.eq.s32.totalorder %s10, 0
    %p93 = por %p91, %p92
    %p94 = scmp.ne.s32.totalorder %s86, %s88
    %p95 = scmp.eq.s32.totalorder %s15, 1
    %p96 = por %p94, %p95
    %p97 = scmp.ne.s32.totalorder %s88, %s89
    %p98 = scmp.eq.s32.totalorder %s15, 0
    %p99 = por %p97, %p98
    %p100 = scmp.ne.s32.totalorder %s88, %s89
    %p101 = scmp.eq.s32.totalorder %s16, 1
    %p102 = por %p100, %p101
    %p104 = scmp.ne.s32.totalorder %s89, %s103
    %p105 = scmp.eq.s32.totalorder %s16, 0
    %p106 = por %p104, %p105
    %s107 = ssub.s32 %s10, %s17
    %p108 = scmp.eq.s32.totalorder %s107, 0
    %s110 = sadd.s32 %s109, 1
    %s111 = scalar_select %p108, %s109, %s110
    %p114 = pneg %p108
    %p115 = scmp.eq.s32.totalorder %s10, 1
    %p116 = por %p114, %p115
    %p117 = scmp.ne.s32.totalorder %s109, %s112
    %p118 = scmp.eq.s32.totalorder %s10, 0
    %p119 = por %p117, %p118
    %p120 = scmp.ne.s32.totalorder %s109, %s112
    %p121 = scmp.eq.s32.totalorder %s15, 1
    %p122 = por %p120, %p121
    %p123 = scmp.ne.s32.totalorder %s112, %s113
    %p124 = scmp.eq.s32.totalorder %s15, 0
    %p125 = por %p123, %p124
    %p126 = scmp.ne.s32.totalorder %s112, %s113
    %p127 = scmp.eq.s32.totalorder %s16, 1
    %p128 = por %p126, %p127
    %p130 = scmp.ne.s32.totalorder %s113, %s129
    %p131 = scmp.eq.s32.totalorder %s16, 0
    %p132 = por %p130, %p131
    %p133 = scmp.le.s32.totalorder 1, %s10
    %p134 = scmp.lt.s32.totalorder %s10, 3
    %p135 = pnand %p133, %p134
    %p136 = pneg %p135
    // Predicated region
    $region9: #{tpu_custom_call.1} parent=5 // pred_check
      _
    $region10: #{tpu_custom_call.1} parent=5 // pred_check_branch
      %138 = sbr.rel (%p135) target = $region12
    $region11: #{tpu_custom_call.1} parent=5 // pred_region
      %s139 = ssub.s32 %s10, 1
      // Predicated region
      $region13: #{tpu_custom_call.1} parent=11 // pred_check
        %p140 = pneg %p57
      $region14: #{tpu_custom_call.1} parent=11 // pred_check_branch
        %142 = sbr.rel (%p140) target = $region16
      $region15: #{tpu_custom_call.1} parent=11 // pred_region
        _
      $region16: #{tpu_custom_call.1} parent=11 // pred_fallthru
        _
      // Predicated region
      $region17: #{tpu_custom_call.1} parent=11 // pred_check
        %p143 = pneg %p78
      $region18: #{tpu_custom_call.1} parent=11 // pred_check_branch
        %145 = sbr.rel (%p143) target = $region20
      $region19: #{tpu_custom_call.1} parent=11 // pred_region
        _
      $region20: #{tpu_custom_call.1} parent=11 // pred_fallthru
        _
      // Predicated region
      $region21: #{tpu_custom_call.1} parent=11 // pred_check
        %p146 = pneg %p99
      $region22: #{tpu_custom_call.1} parent=11 // pred_check_branch
        %148 = sbr.rel (%p146) target = $region24
      $region23: #{tpu_custom_call.1} parent=11 // pred_region
        _
      $region24: #{tpu_custom_call.1} parent=11 // pred_fallthru
        _
    $region12: #{tpu_custom_call.1} parent=5 // pred_fallthru
      _
    %p149 = scmp.lt.s32.totalorder %s10, 2
    // Predicated region
    $region25: #{tpu_custom_call.1} parent=5 // pred_check
      %p150 = pneg %p149
    $region26: #{tpu_custom_call.1} parent=5 // pred_check_branch
      %152 = sbr.rel (%p150) target = $region28
    $region27: #{tpu_custom_call.1} parent=5 // pred_region
      // Predicated region
      $region29: #{tpu_custom_call.1} parent=27 // pred_check
        %p153 = pneg %p30
      $region30: #{tpu_custom_call.1} parent=27 // pred_check_branch
        %155 = sbr.rel (%p153) target = $region32
      $region31: #{tpu_custom_call.1} parent=27 // pred_region
        %p156 = scmp.lt.s32.totalorder %s10, 1
        %s157 = scalar_select %p156, %s10, 1
        %s158 = smul.addr %s157, 51
        %s159 = smul.addr %s158, 8
        %s160 = scalar_lea.vmem %s0, %s159
      $region32: #{tpu_custom_call.1} parent=27 // pred_fallthru
        _
    $region28: #{tpu_custom_call.1} parent=5 // pred_fallthru
      _
    %p161 = scmp.le.s32.totalorder 1, %s10
    %p162 = scmp.lt.s32.totalorder %s10, 3
    %p163 = pnand %p161, %p162
    %p164 = pneg %p163
    // Predicated region
    $region33: #{tpu_custom_call.1} parent=5 // pred_check
      _
    $region34: #{tpu_custom_call.1} parent=5 // pred_check_branch
      %166 = sbr.rel (%p163) target = $region36
    $region35: #{tpu_custom_call.1} parent=5 // pred_region
      %s167 = ssub.s32 %s10, 1
      %p168 = scmp.lt.s32.totalorder %s15, 1
      %s169 = scalar_select %p168, %s15, 1
      %s170 = smul.addr %s169, 51
      %s171 = smul.addr %s170, 8
      %s172 = scalar_lea.vmem %s0, %s171
      %p173 = pneg %p36
      %p174 = pneg %p33
      %p175 = pneg %p57
      %p176 = pneg %p54
      %p177 = pneg %p78
      %p178 = pneg %p75
      %p179 = pneg %p99
      %p180 = pneg %p96
      %p181 = pneg %p125
      %p182 = pneg %p122
      %p183 = scmp.lt.s32.totalorder %s15, 1
      %s184 = scalar_select %p183, %s15, 1
      %s185 = smul.addr %s184, 30
      %s186 = smul.addr %s185, 8
      %s187 = scalar_lea.vmem %s4, %s186
      %p188 = scmp.lt.s32.totalorder %s15, 1
      %s189 = scalar_select %p188, %s15, 1
      %s190 = smul.addr %s189, 51
      %s191 = smul.addr %s190, 8
      %s192 = scalar_lea.vmem %s0, %s191
      %p193 = scmp.lt.s32.totalorder %s15, 1
      %s194 = scalar_select %p193, %s15, 1
      %s195 = smul.addr %s194, 30
      %s196 = smul.addr %s195, 8
      %s197 = scalar_lea.vmem %s4, %s196
      %v198 = vld [vmem:[%s1] sm:$0xff]
      %v199 = vld [vmem:[%s1 + $0x8] sm:$0xff]
      %v200 = vld [vmem:[%s1 + $0x10] sm:$0xff]
      %v201 = vld [vmem:[%s1 + $0x18] sm:$0x7]
      %v202 = vld [vmem:[%s192] sm:$0xff]
      %v203 = vld [vmem:[%s192 + $0x8] sm:$0x7f]
      %v204 = vld [vmem:[%s192 + $0x18] sm:$0xff]
      %v205 = vld [vmem:[%s192 + $0x20] sm:$0x7f]
      %v206 = vld [vmem:[%s192 + $0x30] sm:$0xff]
      %v207 = vld [vmem:[%s192 + $0x38] sm:$0x7f]
      %v208 = vld [vmem:[%s192 + $0x48] sm:$0xff]
      %v209 = vld [vmem:[%s192 + $0x50] sm:$0x7f]
      %v210 = vld [vmem:[%s192 + $0x60] sm:$0xff]
      %v211 = vld [vmem:[%s192 + $0x68] sm:$0x7f]
      %v212 = vld [vmem:[%s192 + $0x78] sm:$0xff]
      %v213 = vld [vmem:[%s192 + $0x80] sm:$0x7f]
      %v214 = vld [vmem:[%s192 + $0x90] sm:$0xff]
      %v215 = vld [vmem:[%s192 + $0x98] sm:$0x7f]
      %v216 = vld [vmem:[%s192 + $0xa8] sm:$0xff]
      %v217 = vld [vmem:[%s192 + $0xb0] sm:$0x7f]
      %v218 = vld [vmem:[%s192 + $0xc0] sm:$0xff]
      %v219 = vld [vmem:[%s192 + $0xc8] sm:$0x7f]
      %v220 = vld [vmem:[%s192 + $0xd8] sm:$0xff]
      %v221 = vld [vmem:[%s192 + $0xe0] sm:$0x7f]
      %v222 = vld [vmem:[%s192 + $0xf0] sm:$0xff]
      %v223 = vld [vmem:[%s192 + $0xf8] sm:$0x7f]
      %v224 = vld [vmem:[%s192 + $0x108] sm:$0xff]
      %v225 = vld [vmem:[%s192 + $0x110] sm:$0x7f]
      %v226 = vld [vmem:[%s192 + $0x120] sm:$0xff]
      %v227 = vld [vmem:[%s192 + $0x128] sm:$0x7f]
      %v228 = vld [vmem:[%s192 + $0x138] sm:$0xff]
      %v229 = vld [vmem:[%s192 + $0x140] sm:$0x7f]
      %v230 = vld [vmem:[%s192 + $0x150] sm:$0xff]
      %v231 = vld [vmem:[%s192 + $0x158] sm:$0x7f]
      %233 = vset.pattern.permute.xlu0 0
      %234 = vperm.xlu0 %233, %v202
      %v235 = vpop.permute.xlu0 %234
      %238 = vset.pattern.permute.xlu0 0
      %239 = vperm.xlu0 %238, %v203
      %v240 = vpop.permute.xlu0 %239
      %243 = vset.pattern.permute.xlu0 0
      %244 = vperm.xlu0 %243, %v204
      %v245 = vpop.permute.xlu0 %244
      %248 = vset.pattern.permute.xlu0 0
      %249 = vperm.xlu0 %248, %v205
      %v250 = vpop.permute.xlu0 %249
      %253 = vset.pattern.permute.xlu0 0
      %254 = vperm.xlu0 %253, %v206
      %v255 = vpop.permute.xlu0 %254
      %258 = vset.pattern.permute.xlu0 0
      %259 = vperm.xlu0 %258, %v207
      %v260 = vpop.permute.xlu0 %259
      %263 = vset.pattern.permute.xlu0 0
      %264 = vperm.xlu0 %263, %v208
      %v265 = vpop.permute.xlu0 %264
      %268 = vset.pattern.permute.xlu0 0
      %269 = vperm.xlu0 %268, %v209
      %v270 = vpop.permute.xlu0 %269
      %273 = vset.pattern.permute.xlu0 0
      %274 = vperm.xlu0 %273, %v210
      %v275 = vpop.permute.xlu0 %274
      %278 = vset.pattern.permute.xlu0 0
      %279 = vperm.xlu0 %278, %v211
      %v280 = vpop.permute.xlu0 %279
      %283 = vset.pattern.permute.xlu0 0
      %284 = vperm.xlu0 %283, %v212
      %v285 = vpop.permute.xlu0 %284
      %288 = vset.pattern.permute.xlu0 0
      %289 = vperm.xlu0 %288, %v213
      %v290 = vpop.permute.xlu0 %289
      %293 = vset.pattern.permute.xlu0 0
      %294 = vperm.xlu0 %293, %v214
      %v295 = vpop.permute.xlu0 %294
      %298 = vset.pattern.permute.xlu0 0
      %299 = vperm.xlu0 %298, %v215
      %v300 = vpop.permute.xlu0 %299
      %303 = vset.pattern.permute.xlu0 0
      %304 = vperm.xlu0 %303, %v216
      %v305 = vpop.permute.xlu0 %304
      %308 = vset.pattern.permute.xlu0 0
      %309 = vperm.xlu0 %308, %v217
      %v310 = vpop.permute.xlu0 %309
      %313 = vset.pattern.permute.xlu0 0
      %314 = vperm.xlu0 %313, %v218
      %v315 = vpop.permute.xlu0 %314
      %318 = vset.pattern.permute.xlu0 0
      %319 = vperm.xlu0 %318, %v219
      %v320 = vpop.permute.xlu0 %319
      %323 = vset.pattern.permute.xlu0 0
      %324 = vperm.xlu0 %323, %v220
      %v325 = vpop.permute.xlu0 %324
      %328 = vset.pattern.permute.xlu0 0
      %329 = vperm.xlu0 %328, %v221
      %v330 = vpop.permute.xlu0 %329
      %333 = vset.pattern.permute.xlu0 0
      %334 = vperm.xlu0 %333, %v222
      %v335 = vpop.permute.xlu0 %334
      %338 = vset.pattern.permute.xlu0 0
      %339 = vperm.xlu0 %338, %v223
      %v340 = vpop.permute.xlu0 %339
      %343 = vset.pattern.permute.xlu0 0
      %344 = vperm.xlu0 %343, %v224
      %v345 = vpop.permute.xlu0 %344
      %348 = vset.pattern.permute.xlu0 0
      %349 = vperm.xlu0 %348, %v225
      %v350 = vpop.permute.xlu0 %349
      %353 = vset.pattern.permute.xlu0 0
      %354 = vperm.xlu0 %353, %v226
      %v355 = vpop.permute.xlu0 %354
      %358 = vset.pattern.permute.xlu0 0
      %359 = vperm.xlu0 %358, %v227
      %v360 = vpop.permute.xlu0 %359
      %363 = vset.pattern.permute.xlu0 0
      %364 = vperm.xlu0 %363, %v228
      %v365 = vpop.permute.xlu0 %364
      %368 = vset.pattern.permute.xlu0 0
      %369 = vperm.xlu0 %368, %v229
      %v370 = vpop.permute.xlu0 %369
      %373 = vset.pattern.permute.xlu0 0
      %374 = vperm.xlu0 %373, %v230
      %v375 = vpop.permute.xlu0 %374
      %378 = vset.pattern.permute.xlu0 0
      %379 = vperm.xlu0 %378, %v231
      %v380 = vpop.permute.xlu0 %379
      %v382 = vlaneseq
      %v383 = vshrl.u32 %v382, 7
      %v384 = vsub.s32 0, %v383
      %v385 = vrot.slane %v198, %v384
      %v386 = vmul.f32 %v235, %v385
      %v387 = vmul.f32 %v240, %v385
      %v388 = vmul.f32 %v245, %v385
      %v389 = vmul.f32 %v250, %v385
      %v390 = vmul.f32 %v255, %v385
      %v391 = vmul.f32 %v260, %v385
      %v392 = vmul.f32 %v265, %v385
      %v393 = vmul.f32 %v270, %v385
      %v394 = vmul.f32 %v275, %v385
      %v395 = vmul.f32 %v280, %v385
      %v396 = vmul.f32 %v285, %v385
      %v397 = vmul.f32 %v290, %v385
      %v398 = vmul.f32 %v295, %v385
      %v399 = vmul.f32 %v300, %v385
      %v400 = vmul.f32 %v305, %v385
      %v401 = vmul.f32 %v310, %v385
      %v402 = vmul.f32 %v315, %v385
      %v403 = vmul.f32 %v320, %v385
      %v404 = vmul.f32 %v325, %v385
      %v405 = vmul.f32 %v330, %v385
      %v406 = vmul.f32 %v335, %v385
      %v407 = vmul.f32 %v340, %v385
      %v408 = vmul.f32 %v345, %v385
      %v409 = vmul.f32 %v350, %v385
      %v410 = vmul.f32 %v355, %v385
      %v411 = vmul.f32 %v360, %v385
      %v412 = vmul.f32 %v365, %v385
      %v413 = vmul.f32 %v370, %v385
      %v414 = vmul.f32 %v375, %v385
      %v415 = vmul.f32 %v380, %v385
      %416 = vset.pattern.permute.xlu0 1
      %417 = vperm.xlu0 %416, %v202
      %v418 = vpop.permute.xlu0 %417
      %420 = vset.pattern.permute.xlu0 1
      %421 = vperm.xlu0 %420, %v203
      %v422 = vpop.permute.xlu0 %421
      %424 = vset.pattern.permute.xlu0 1
      %425 = vperm.xlu0 %424, %v204
      %v426 = vpop.permute.xlu0 %425
      %428 = vset.pattern.permute.xlu0 1
      %429 = vperm.xlu0 %428, %v205
      %v430 = vpop.permute.xlu0 %429
      %432 = vset.pattern.permute.xlu0 1
      %433 = vperm.xlu0 %432, %v206
      %v434 = vpop.permute.xlu0 %433
      %436 = vset.pattern.permute.xlu0 1
      %437 = vperm.xlu0 %436, %v207
      %v438 = vpop.permute.xlu0 %437
      %440 = vset.pattern.permute.xlu0 1
      %441 = vperm.xlu0 %440, %v208
      %v442 = vpop.permute.xlu0 %441
      %444 = vset.pattern.permute.xlu0 1
      %445 = vperm.xlu0 %444, %v209
      %v446 = vpop.permute.xlu0 %445
      %448 = vset.pattern.permute.xlu0 1
      %449 = vperm.xlu0 %448, %v210
      %v450 = vpop.permute.xlu0 %449
      %452 = vset.pattern.permute.xlu0 1
      %453 = vperm.xlu0 %452, %v211
      %v454 = vpop.permute.xlu0 %453
      %456 = vset.pattern.permute.xlu0 1
      %457 = vperm.xlu0 %456, %v212
      %v458 = vpop.permute.xlu0 %457
      %460 = vset.pattern.permute.xlu0 1
      %461 = vperm.xlu0 %460, %v213
      %v462 = vpop.permute.xlu0 %461
      %464 = vset.pattern.permute.xlu0 1
      %465 = vperm.xlu0 %464, %v214
      %v466 = vpop.permute.xlu0 %465
      %468 = vset.pattern.permute.xlu0 1
      %469 = vperm.xlu0 %468, %v215
      %v470 = vpop.permute.xlu0 %469
      %472 = vset.pattern.permute.xlu0 1
      %473 = vperm.xlu0 %472, %v216
      %v474 = vpop.permute.xlu0 %473
      %476 = vset.pattern.permute.xlu0 1
      %477 = vperm.xlu0 %476, %v217
      %v478 = vpop.permute.xlu0 %477
      %480 = vset.pattern.permute.xlu0 1
      %481 = vperm.xlu0 %480, %v218
      %v482 = vpop.permute.xlu0 %481
      %484 = vset.pattern.permute.xlu0 1
      %485 = vperm.xlu0 %484, %v219
      %v486 = vpop.permute.xlu0 %485
      %488 = vset.pattern.permute.xlu0 1
      %489 = vperm.xlu0 %488, %v220
      %v490 = vpop.permute.xlu0 %489
      %492 = vset.pattern.permute.xlu0 1
      %493 = vperm.xlu0 %492, %v221
      %v494 = vpop.permute.xlu0 %493
      %496 = vset.pattern.permute.xlu0 1
      %497 = vperm.xlu0 %496, %v222
      %v498 = vpop.permute.xlu0 %497
      %500 = vset.pattern.permute.xlu0 1
      %501 = vperm.xlu0 %500, %v223
      %v502 = vpop.permute.xlu0 %501
      %504 = vset.pattern.permute.xlu0 1
      %505 = vperm.xlu0 %504, %v224
      %v506 = vpop.permute.xlu0 %505
      %508 = vset.pattern.permute.xlu0 1
      %509 = vperm.xlu0 %508, %v225
      %v510 = vpop.permute.xlu0 %509
      %512 = vset.pattern.permute.xlu0 1
      %513 = vperm.xlu0 %512, %v226
      %v514 = vpop.permute.xlu0 %513
      %516 = vset.pattern.permute.xlu0 1
      %517 = vperm.xlu0 %516, %v227
      %v518 = vpop.permute.xlu0 %517
      %520 = vset.pattern.permute.xlu0 1
      %521 = vperm.xlu0 %520, %v228
      %v522 = vpop.permute.xlu0 %521
      %524 = vset.pattern.permute.xlu0 1
      %525 = vperm.xlu0 %524, %v229
      %v526 = vpop.permute.xlu0 %525
      %528 = vset.pattern.permute.xlu0 1
      %529 = vperm.xlu0 %528, %v230
      %v530 = vpop.permute.xlu0 %529
      %532 = vset.pattern.permute.xlu0 1
      %533 = vperm.xlu0 %532, %v231
      %v534 = vpop.permute.xlu0 %533
      %v536 = vlaneseq
      %v537 = vshrl.u32 %v536, 7
      %v538 = vsub.s32 1, %v537
      %v539 = vrot.slane %v198, %v538
      %v540 = vmul.f32 %v418, %v539
      %v541 = vmul.f32 %v422, %v539
      %v542 = vmul.f32 %v426, %v539
      %v543 = vmul.f32 %v430, %v539
      %v544 = vmul.f32 %v434, %v539
      %v545 = vmul.f32 %v438, %v539
      %v546 = vmul.f32 %v442, %v539
      %v547 = vmul.f32 %v446, %v539
      %v548 = vmul.f32 %v450, %v539
      %v549 = vmul.f32 %v454, %v539
      %v550 = vmul.f32 %v458, %v539
      %v551 = vmul.f32 %v462, %v539
      %v552 = vmul.f32 %v466, %v539
      %v553 = vmul.f32 %v470, %v539
      %v554 = vmul.f32 %v474, %v539
      %v555 = vmul.f32 %v478, %v539
      %v556 = vmul.f32 %v482, %v539
      %v557 = vmul.f32 %v486, %v539
      %v558 = vmul.f32 %v490, %v539
      %v559 = vmul.f32 %v494, %v539
      %v560 = vmul.f32 %v498, %v539
      %v561 = vmul.f32 %v502, %v539
      %v562 = vmul.f32 %v506, %v539
      %v563 = vmul.f32 %v510, %v539
      %v564 = vmul.f32 %v514, %v539
      %v565 = vmul.f32 %v518, %v539
      %v566 = vmul.f32 %v522, %v539
      %v567 = vmul.f32 %v526, %v539
      %v568 = vmul.f32 %v530, %v539
      %v569 = vmul.f32 %v534, %v539
      %v570 = vadd.f32 %v386, %v540
      %v571 = vadd.f32 %v387, %v541
      %v572 = vadd.f32 %v388, %v542
      %v573 = vadd.f32 %v389, %v543
      %v574 = vadd.f32 %v390, %v544
      %v575 = vadd.f32 %v391, %v545
      %v576 = vadd.f32 %v392, %v546
      %v577 = vadd.f32 %v393, %v547
      %v578 = vadd.f32 %v394, %v548
      %v579 = vadd.f32 %v395, %v549
      %v580 = vadd.f32 %v396, %v550
      %v581 = vadd.f32 %v397, %v551
      %v582 = vadd.f32 %v398, %v552
      %v583 = vadd.f32 %v399, %v553
      %v584 = vadd.f32 %v400, %v554
      %v585 = vadd.f32 %v401, %v555
      %v586 = vadd.f32 %v402, %v556
      %v587 = vadd.f32 %v403, %v557
      %v588 = vadd.f32 %v404, %v558
      %v589 = vadd.f32 %v405, %v559
      %v590 = vadd.f32 %v406, %v560
      %v591 = vadd.f32 %v407, %v561
      %v592 = vadd.f32 %v408, %v562
      %v593 = vadd.f32 %v409, %v563
      %v594 = vadd.f32 %v410, %v564
      %v595 = vadd.f32 %v411, %v565
      %v596 = vadd.f32 %v412, %v566
      %v597 = vadd.f32 %v413, %v567
      %v598 = vadd.f32 %v414, %v568
      %v599 = vadd.f32 %v415, %v569
      %600 = vset.pattern.permute.xlu0 2
      %601 = vperm.xlu0 %600, %v202
      %v602 = vpop.permute.xlu0 %601
      %604 = vset.pattern.permute.xlu0 2
      %605 = vperm.xlu0 %604, %v203
      %v606 = vpop.permute.xlu0 %605
      %608 = vset.pattern.permute.xlu0 2
      %609 = vperm.xlu0 %608, %v204
      %v610 = vpop.permute.xlu0 %609
      %612 = vset.pattern.permute.xlu0 2
      %613 = vperm.xlu0 %612, %v205
      %v614 = vpop.permute.xlu0 %613
      %616 = vset.pattern.permute.xlu0 2
      %617 = vperm.xlu0 %616, %v206
      %v618 = vpop.permute.xlu0 %617
      %620 = vset.pattern.permute.xlu0 2
      %621 = vperm.xlu0 %620, %v207
      %v622 = vpop.permute.xlu0 %621
      %624 = vset.pattern.permute.xlu0 2
      %625 = vperm.xlu0 %624, %v208
      %v626 = vpop.permute.xlu0 %625
      %628 = vset.pattern.permute.xlu0 2
      %629 = vperm.xlu0 %628, %v209
      %v630 = vpop.permute.xlu0 %629
      %632 = vset.pattern.permute.xlu0 2
      %633 = vperm.xlu0 %632, %v210
      %v634 = vpop.permute.xlu0 %633
      %636 = vset.pattern.permute.xlu0 2
      %637 = vperm.xlu0 %636, %v211
      %v638 = vpop.permute.xlu0 %637
      %640 = vset.pattern.permute.xlu0 2
      %641 = vperm.xlu0 %640, %v212
      %v642 = vpop.permute.xlu0 %641
      %644 = vset.pattern.permute.xlu0 2
      %645 = vperm.xlu0 %644, %v213
      %v646 = vpop.permute.xlu0 %645
      %648 = vset.pattern.permute.xlu0 2
      %649 = vperm.xlu0 %648, %v214
      %v650 = vpop.permute.xlu0 %649
      %652 = vset.pattern.permute.xlu0 2
      %653 = vperm.xlu0 %652, %v215
      %v654 = vpop.permute.xlu0 %653
      %656 = vset.pattern.permute.xlu0 2
      %657 = vperm.xlu0 %656, %v216
      %v658 = vpop.permute.xlu0 %657
      %660 = vset.pattern.permute.xlu0 2
      %661 = vperm.xlu0 %660, %v217
      %v662 = vpop.permute.xlu0 %661
      %664 = vset.pattern.permute.xlu0 2
      %665 = vperm.xlu0 %664, %v218
      %v666 = vpop.permute.xlu0 %665
      %668 = vset.pattern.permute.xlu0 2
      %669 = vperm.xlu0 %668, %v219
      %v670 = vpop.permute.xlu0 %669
      %672 = vset.pattern.permute.xlu0 2
      %673 = vperm.xlu0 %672, %v220
      %v674 = vpop.permute.xlu0 %673
      %676 = vset.pattern.permute.xlu0 2
      %677 = vperm.xlu0 %676, %v221
      %v678 = vpop.permute.xlu0 %677
      %680 = vset.pattern.permute.xlu0 2
      %681 = vperm.xlu0 %680, %v222
      %v682 = vpop.permute.xlu0 %681
      %684 = vset.pattern.permute.xlu0 2
      %685 = vperm.xlu0 %684, %v223
      %v686 = vpop.permute.xlu0 %685
      %688 = vset.pattern.permute.xlu0 2
      %689 = vperm.xlu0 %688, %v224
      %v690 = vpop.permute.xlu0 %689
      %692 = vset.pattern.permute.xlu0 2
      %693 = vperm.xlu0 %692, %v225
      %v694 = vpop.permute.xlu0 %693
      %696 = vset.pattern.permute.xlu0 2
      %697 = vperm.xlu0 %696, %v226
      %v698 = vpop.permute.xlu0 %697
      %700 = vset.pattern.permute.xlu0 2
      %701 = vperm.xlu0 %700, %v227
      %v702 = vpop.permute.xlu0 %701
      %704 = vset.pattern.permute.xlu0 2
      %705 = vperm.xlu0 %704, %v228
      %v706 = vpop.permute.xlu0 %705
      %708 = vset.pattern.permute.xlu0 2
      %709 = vperm.xlu0 %708, %v229
      %v710 = vpop.permute.xlu0 %709
      %712 = vset.pattern.permute.xlu0 2
      %713 = vperm.xlu0 %712, %v230
      %v714 = vpop.permute.xlu0 %713
      %716 = vset.pattern.permute.xlu0 2
      %717 = vperm.xlu0 %716, %v231
      %v718 = vpop.permute.xlu0 %717
      %v720 = vlaneseq
      %v721 = vshrl.u32 %v720, 7
      %v722 = vsub.s32 2, %v721
      %v723 = vrot.slane %v198, %v722
      %v724 = vmul.f32 %v602, %v723
      %v725 = vmul.f32 %v606, %v723
      %v726 = vmul.f32 %v610, %v723
      %v727 = vmul.f32 %v614, %v723
      %v728 = vmul.f32 %v618, %v723
      %v729 = vmul.f32 %v622, %v723
      %v730 = vmul.f32 %v626, %v723
      %v731 = vmul.f32 %v630, %v723
      %v732 = vmul.f32 %v634, %v723
      %v733 = vmul.f32 %v638, %v723
      %v734 = vmul.f32 %v642, %v723
      %v735 = vmul.f32 %v646, %v723
      %v736 = vmul.f32 %v650, %v723
      %v737 = vmul.f32 %v654, %v723
      %v738 = vmul.f32 %v658, %v723
      %v739 = vmul.f32 %v662, %v723
      %v740 = vmul.f32 %v666, %v723
      %v741 = vmul.f32 %v670, %v723
      %v742 = vmul.f32 %v674, %v723
      %v743 = vmul.f32 %v678, %v723
      %v744 = vmul.f32 %v682, %v723
      %v745 = vmul.f32 %v686, %v723
      %v746 = vmul.f32 %v690, %v723
      %v747 = vmul.f32 %v694, %v723
      %v748 = vmul.f32 %v698, %v723
      %v749 = vmul.f32 %v702, %v723
      %v750 = vmul.f32 %v706, %v723
      %v751 = vmul.f32 %v710, %v723
      %v752 = vmul.f32 %v714, %v723
      %v753 = vmul.f32 %v718, %v723
      %v754 = vadd.f32 %v570, %v724
      %v755 = vadd.f32 %v571, %v725
      %v756 = vadd.f32 %v572, %v726
      %v757 = vadd.f32 %v573, %v727
      %v758 = vadd.f32 %v574, %v728
      %v759 = vadd.f32 %v575, %v729
      %v760 = vadd.f32 %v576, %v730
      %v761 = vadd.f32 %v577, %v731
      %v762 = vadd.f32 %v578, %v732
      %v763 = vadd.f32 %v579, %v733
      %v764 = vadd.f32 %v580, %v734
      %v765 = vadd.f32 %v581, %v735
      %v766 = vadd.f32 %v582, %v736
      %v767 = vadd.f32 %v583, %v737
      %v768 = vadd.f32 %v584, %v738
      %v769 = vadd.f32 %v585, %v739
      %v770 = vadd.f32 %v586, %v740
      %v771 = vadd.f32 %v587, %v741
      %v772 = vadd.f32 %v588, %v742
      %v773 = vadd.f32 %v589, %v743
      %v774 = vadd.f32 %v590, %v744
      %v775 = vadd.f32 %v591, %v745
      %v776 = vadd.f32 %v592, %v746
      %v777 = vadd.f32 %v593, %v747
      %v778 = vadd.f32 %v594, %v748
      %v779 = vadd.f32 %v595, %v749
      %v780 = vadd.f32 %v596, %v750
      %v781 = vadd.f32 %v597, %v751
      %v782 = vadd.f32 %v598, %v752
      %v783 = vadd.f32 %v599, %v753
      %v784 = vld [vmem:[%s192 + $0x1] sm:$0xff]
      %v785 = vld [vmem:[%s192 + $0x9] sm:$0x7f]
      %v786 = vld [vmem:[%s192 + $0x19] sm:$0xff]
      %v787 = vld [vmem:[%s192 + $0x21] sm:$0x7f]
      %v788 = vld [vmem:[%s192 + $0x31] sm:$0xff]
      %v789 = vld [vmem:[%s192 + $0x39] sm:$0x7f]
      %v790 = vld [vmem:[%s192 + $0x49] sm:$0xff]
      %v791 = vld [vmem:[%s192 + $0x51] sm:$0x7f]
      %v792 = vld [vmem:[%s192 + $0x61] sm:$0xff]
      %v793 = vld [vmem:[%s192 + $0x69] sm:$0x7f]
      %v794 = vld [vmem:[%s192 + $0x79] sm:$0xff]
      %v795 = vld [vmem:[%s192 + $0x81] sm:$0x7f]
      %v796 = vld [vmem:[%s192 + $0x91] sm:$0xff]
      %v797 = vld [vmem:[%s192 + $0x99] sm:$0x7f]
      %v798 = vld [vmem:[%s192 + $0xa9] sm:$0xff]
      %v799 = vld [vmem:[%s192 + $0xb1] sm:$0x7f]
      %v800 = vld [vmem:[%s192 + $0xc1] sm:$0xff]
      %v801 = vld [vmem:[%s192 + $0xc9] sm:$0x7f]
      %v802 = vld [vmem:[%s192 + $0xd9] sm:$0xff]
      %v803 = vld [vmem:[%s192 + $0xe1] sm:$0x7f]
      %v804 = vld [vmem:[%s192 + $0xf1] sm:$0xff]
      %v805 = vld [vmem:[%s192 + $0xf9] sm:$0x7f]
      %v806 = vld [vmem:[%s192 + $0x109] sm:$0xff]
      %v807 = vld [vmem:[%s192 + $0x111] sm:$0x7f]
      %v808 = vld [vmem:[%s192 + $0x121] sm:$0xff]
      %v809 = vld [vmem:[%s192 + $0x129] sm:$0x7f]
      %v810 = vld [vmem:[%s192 + $0x139] sm:$0xff]
      %v811 = vld [vmem:[%s192 + $0x141] sm:$0x7f]
      %v812 = vld [vmem:[%s192 + $0x151] sm:$0xff]
      %v813 = vld [vmem:[%s192 + $0x159] sm:$0x7f]
      %815 = vset.pattern.permute.xlu0 0
      %816 = vperm.xlu0 %815, %v784
      %v817 = vpop.permute.xlu0 %816
      %820 = vset.pattern.permute.xlu0 0
      %821 = vperm.xlu0 %820, %v785
      %v822 = vpop.permute.xlu0 %821
      %825 = vset.pattern.permute.xlu0 0
      %826 = vperm.xlu0 %825, %v786
      %v827 = vpop.permute.xlu0 %826
      %830 = vset.pattern.permute.xlu0 0
      %831 = vperm.xlu0 %830, %v787
      %v832 = vpop.permute.xlu0 %831
      %835 = vset.pattern.permute.xlu0 0
      %836 = vperm.xlu0 %835, %v788
      %v837 = vpop.permute.xlu0 %836
      %840 = vset.pattern.permute.xlu0 0
      %841 = vperm.xlu0 %840, %v789
      %v842 = vpop.permute.xlu0 %841
      %845 = vset.pattern.permute.xlu0 0
      %846 = vperm.xlu0 %845, %v790
      %v847 = vpop.permute.xlu0 %846
      %850 = vset.pattern.permute.xlu0 0
      %851 = vperm.xlu0 %850, %v791
      %v852 = vpop.permute.xlu0 %851
      %855 = vset.pattern.permute.xlu0 0
      %856 = vperm.xlu0 %855, %v792
      %v857 = vpop.permute.xlu0 %856
      %860 = vset.pattern.permute.xlu0 0
      %861 = vperm.xlu0 %860, %v793
      %v862 = vpop.permute.xlu0 %861
      %865 = vset.pattern.permute.xlu0 0
      %866 = vperm.xlu0 %865, %v794
      %v867 = vpop.permute.xlu0 %866
      %870 = vset.pattern.permute.xlu0 0
      %871 = vperm.xlu0 %870, %v795
      %v872 = vpop.permute.xlu0 %871
      %875 = vset.pattern.permute.xlu0 0
      %876 = vperm.xlu0 %875, %v796
      %v877 = vpop.permute.xlu0 %876
      %880 = vset.pattern.permute.xlu0 0
      %881 = vperm.xlu0 %880, %v797
      %v882 = vpop.permute.xlu0 %881
      %885 = vset.pattern.permute.xlu0 0
      %886 = vperm.xlu0 %885, %v798
      %v887 = vpop.permute.xlu0 %886
      %890 = vset.pattern.permute.xlu0 0
      %891 = vperm.xlu0 %890, %v799
      %v892 = vpop.permute.xlu0 %891
      %895 = vset.pattern.permute.xlu0 0
      %896 = vperm.xlu0 %895, %v800
      %v897 = vpop.permute.xlu0 %896
      %900 = vset.pattern.permute.xlu0 0
      %901 = vperm.xlu0 %900, %v801
      %v902 = vpop.permute.xlu0 %901
      %905 = vset.pattern.permute.xlu0 0
      %906 = vperm.xlu0 %905, %v802
      %v907 = vpop.permute.xlu0 %906
      %910 = vset.pattern.permute.xlu0 0
      %911 = vperm.xlu0 %910, %v803
      %v912 = vpop.permute.xlu0 %911
      %915 = vset.pattern.permute.xlu0 0
      %916 = vperm.xlu0 %915, %v804
      %v917 = vpop.permute.xlu0 %916
      %920 = vset.pattern.permute.xlu0 0
      %921 = vperm.xlu0 %920, %v805
      %v922 = vpop.permute.xlu0 %921
      %925 = vset.pattern.permute.xlu0 0
      %926 = vperm.xlu0 %925, %v806
      %v927 = vpop.permute.xlu0 %926
      %930 = vset.pattern.permute.xlu0 0
      %931 = vperm.xlu0 %930, %v807
      %v932 = vpop.permute.xlu0 %931
      %935 = vset.pattern.permute.xlu0 0
      %936 = vperm.xlu0 %935, %v808
      %v937 = vpop.permute.xlu0 %936
      %940 = vset.pattern.permute.xlu0 0
      %941 = vperm.xlu0 %940, %v809
      %v942 = vpop.permute.xlu0 %941
      %945 = vset.pattern.permute.xlu0 0
      %946 = vperm.xlu0 %945, %v810
      %v947 = vpop.permute.xlu0 %946
      %950 = vset.pattern.permute.xlu0 0
      %951 = vperm.xlu0 %950, %v811
      %v952 = vpop.permute.xlu0 %951
      %955 = vset.pattern.permute.xlu0 0
      %956 = vperm.xlu0 %955, %v812
      %v957 = vpop.permute.xlu0 %956
      %960 = vset.pattern.permute.xlu0 0
      %961 = vperm.xlu0 %960, %v813
      %v962 = vpop.permute.xlu0 %961
      %v964 = vlaneseq
      %v965 = vshrl.u32 %v964, 7
      %v966 = vsub.s32 3, %v965
      %v967 = vrot.slane %v198, %v966
      %v968 = vmul.f32 %v817, %v967
      %v969 = vmul.f32 %v822, %v967
      %v970 = vmul.f32 %v827, %v967
      %v971 = vmul.f32 %v832, %v967
      %v972 = vmul.f32 %v837, %v967
      %v973 = vmul.f32 %v842, %v967
      %v974 = vmul.f32 %v847, %v967
      %v975 = vmul.f32 %v852, %v967
      %v976 = vmul.f32 %v857, %v967
      %v977 = vmul.f32 %v862, %v967
      %v978 = vmul.f32 %v867, %v967
      %v979 = vmul.f32 %v872, %v967
      %v980 = vmul.f32 %v877, %v967
      %v981 = vmul.f32 %v882, %v967
      %v982 = vmul.f32 %v887, %v967
      %v983 = vmul.f32 %v892, %v967
      %v984 = vmul.f32 %v897, %v967
      %v985 = vmul.f32 %v902, %v967
      %v986 = vmul.f32 %v907, %v967
      %v987 = vmul.f32 %v912, %v967
      %v988 = vmul.f32 %v917, %v967
      %v989 = vmul.f32 %v922, %v967
      %v990 = vmul.f32 %v927, %v967
      %v991 = vmul.f32 %v932, %v967
      %v992 = vmul.f32 %v937, %v967
      %v993 = vmul.f32 %v942, %v967
      %v994 = vmul.f32 %v947, %v967
      %v995 = vmul.f32 %v952, %v967
      %v996 = vmul.f32 %v957, %v967
      %v997 = vmul.f32 %v962, %v967
      %v998 = vadd.f32 %v754, %v968
      %v999 = vadd.f32 %v755, %v969
      %v1000 = vadd.f32 %v756, %v970
      %v1001 = vadd.f32 %v757, %v971
      %v1002 = vadd.f32 %v758, %v972
      %v1003 = vadd.f32 %v759, %v973
      %v1004 = vadd.f32 %v760, %v974
      %v1005 = vadd.f32 %v761, %v975
      %v1006 = vadd.f32 %v762, %v976
      %v1007 = vadd.f32 %v763, %v977
      %v1008 = vadd.f32 %v764, %v978
      %v1009 = vadd.f32 %v765, %v979
      %v1010 = vadd.f32 %v766, %v980
      %v1011 = vadd.f32 %v767, %v981
      %v1012 = vadd.f32 %v768, %v982
      %v1013 = vadd.f32 %v769, %v983
      %v1014 = vadd.f32 %v770, %v984
      %v1015 = vadd.f32 %v771, %v985
      %v1016 = vadd.f32 %v772, %v986
      %v1017 = vadd.f32 %v773, %v987
      %v1018 = vadd.f32 %v774, %v988
      %v1019 = vadd.f32 %v775, %v989
      %v1020 = vadd.f32 %v776, %v990
      %v1021 = vadd.f32 %v777, %v991
      %v1022 = vadd.f32 %v778, %v992
      %v1023 = vadd.f32 %v779, %v993
      %v1024 = vadd.f32 %v780, %v994
      %v1025 = vadd.f32 %v781, %v995
      %v1026 = vadd.f32 %v782, %v996
      %v1027 = vadd.f32 %v783, %v997
      %1028 = vset.pattern.permute.xlu0 1
      %1029 = vperm.xlu0 %1028, %v784
      %v1030 = vpop.permute.xlu0 %1029
      %1032 = vset.pattern.permute.xlu0 1
      %1033 = vperm.xlu0 %1032, %v785
      %v1034 = vpop.permute.xlu0 %1033
      %1036 = vset.pattern.permute.xlu0 1
      %1037 = vperm.xlu0 %1036, %v786
      %v1038 = vpop.permute.xlu0 %1037
      %1040 = vset.pattern.permute.xlu0 1
      %1041 = vperm.xlu0 %1040, %v787
      %v1042 = vpop.permute.xlu0 %1041
      %1044 = vset.pattern.permute.xlu0 1
      %1045 = vperm.xlu0 %1044, %v788
      %v1046 = vpop.permute.xlu0 %1045
      %1048 = vset.pattern.permute.xlu0 1
      %1049 = vperm.xlu0 %1048, %v789
      %v1050 = vpop.permute.xlu0 %1049
      %1052 = vset.pattern.permute.xlu0 1
      %1053 = vperm.xlu0 %1052, %v790
      %v1054 = vpop.permute.xlu0 %1053
      %1056 = vset.pattern.permute.xlu0 1
      %1057 = vperm.xlu0 %1056, %v791
      %v1058 = vpop.permute.xlu0 %1057
      %1060 = vset.pattern.permute.xlu0 1
      %1061 = vperm.xlu0 %1060, %v792
      %v1062 = vpop.permute.xlu0 %1061
      %1064 = vset.pattern.permute.xlu0 1
      %1065 = vperm.xlu0 %1064, %v793
      %v1066 = vpop.permute.xlu0 %1065
      %1068 = vset.pattern.permute.xlu0 1
      %1069 = vperm.xlu0 %1068, %v794
      %v1070 = vpop.permute.xlu0 %1069
      %1072 = vset.pattern.permute.xlu0 1
      %1073 = vperm.xlu0 %1072, %v795
      %v1074 = vpop.permute.xlu0 %1073
      %1076 = vset.pattern.permute.xlu0 1
      %1077 = vperm.xlu0 %1076, %v796
      %v1078 = vpop.permute.xlu0 %1077
      %1080 = vset.pattern.permute.xlu0 1
      %1081 = vperm.xlu0 %1080, %v797
      %v1082 = vpop.permute.xlu0 %1081
      %1084 = vset.pattern.permute.xlu0 1
      %1085 = vperm.xlu0 %1084, %v798
      %v1086 = vpop.permute.xlu0 %1085
      %1088 = vset.pattern.permute.xlu0 1
      %1089 = vperm.xlu0 %1088, %v799
      %v1090 = vpop.permute.xlu0 %1089
      %1092 = vset.pattern.permute.xlu0 1
      %1093 = vperm.xlu0 %1092, %v800
      %v1094 = vpop.permute.xlu0 %1093
      %1096 = vset.pattern.permute.xlu0 1
      %1097 = vperm.xlu0 %1096, %v801
      %v1098 = vpop.permute.xlu0 %1097
      %1100 = vset.pattern.permute.xlu0 1
      %1101 = vperm.xlu0 %1100, %v802
      %v1102 = vpop.permute.xlu0 %1101
      %1104 = vset.pattern.permute.xlu0 1
      %1105 = vperm.xlu0 %1104, %v803
      %v1106 = vpop.permute.xlu0 %1105
      %1108 = vset.pattern.permute.xlu0 1
      %1109 = vperm.xlu0 %1108, %v804
      %v1110 = vpop.permute.xlu0 %1109
      %1112 = vset.pattern.permute.xlu0 1
      %1113 = vperm.xlu0 %1112, %v805
      %v1114 = vpop.permute.xlu0 %1113
      %1116 = vset.pattern.permute.xlu0 1
      %1117 = vperm.xlu0 %1116, %v806
      %v1118 = vpop.permute.xlu0 %1117
      %1120 = vset.pattern.permute.xlu0 1
      %1121 = vperm.xlu0 %1120, %v807
      %v1122 = vpop.permute.xlu0 %1121
      %1124 = vset.pattern.permute.xlu0 1
      %1125 = vperm.xlu0 %1124, %v808
      %v1126 = vpop.permute.xlu0 %1125
      %1128 = vset.pattern.permute.xlu0 1
      %1129 = vperm.xlu0 %1128, %v809
      %v1130 = vpop.permute.xlu0 %1129
      %1132 = vset.pattern.permute.xlu0 1
      %1133 = vperm.xlu0 %1132, %v810
      %v1134 = vpop.permute.xlu0 %1133
      %1136 = vset.pattern.permute.xlu0 1
      %1137 = vperm.xlu0 %1136, %v811
      %v1138 = vpop.permute.xlu0 %1137
      %1140 = vset.pattern.permute.xlu0 1
      %1141 = vperm.xlu0 %1140, %v812
      %v1142 = vpop.permute.xlu0 %1141
      %1144 = vset.pattern.permute.xlu0 1
      %1145 = vperm.xlu0 %1144, %v813
      %v1146 = vpop.permute.xlu0 %1145
      %v1148 = vlaneseq
      %v1149 = vshrl.u32 %v1148, 7
      %v1150 = vsub.s32 4, %v1149
      %v1151 = vrot.slane %v198, %v1150
      %v1152 = vmul.f32 %v1030, %v1151
      %v1153 = vmul.f32 %v1034, %v1151
      %v1154 = vmul.f32 %v1038, %v1151
      %v1155 = vmul.f32 %v1042, %v1151
      %v1156 = vmul.f32 %v1046, %v1151
      %v1157 = vmul.f32 %v1050, %v1151
      %v1158 = vmul.f32 %v1054, %v1151
      %v1159 = vmul.f32 %v1058, %v1151
      %v1160 = vmul.f32 %v1062, %v1151
      %v1161 = vmul.f32 %v1066, %v1151
      %v1162 = vmul.f32 %v1070, %v1151
      %v1163 = vmul.f32 %v1074, %v1151
      %v1164 = vmul.f32 %v1078, %v1151
      %v1165 = vmul.f32 %v1082, %v1151
      %v1166 = vmul.f32 %v1086, %v1151
      %v1167 = vmul.f32 %v1090, %v1151
      %v1168 = vmul.f32 %v1094, %v1151
      %v1169 = vmul.f32 %v1098, %v1151
      %v1170 = vmul.f32 %v1102, %v1151
      %v1171 = vmul.f32 %v1106, %v1151
      %v1172 = vmul.f32 %v1110, %v1151
      %v1173 = vmul.f32 %v1114, %v1151
      %v1174 = vmul.f32 %v1118, %v1151
      %v1175 = vmul.f32 %v1122, %v1151
      %v1176 = vmul.f32 %v1126, %v1151
      %v1177 = vmul.f32 %v1130, %v1151
      %v1178 = vmul.f32 %v1134, %v1151
      %v1179 = vmul.f32 %v1138, %v1151
      %v1180 = vmul.f32 %v1142, %v1151
      %v1181 = vmul.f32 %v1146, %v1151
      %v1182 = vadd.f32 %v998, %v1152
      %v1183 = vadd.f32 %v999, %v1153
      %v1184 = vadd.f32 %v1000, %v1154
      %v1185 = vadd.f32 %v1001, %v1155
      %v1186 = vadd.f32 %v1002, %v1156
      %v1187 = vadd.f32 %v1003, %v1157
      %v1188 = vadd.f32 %v1004, %v1158
      %v1189 = vadd.f32 %v1005, %v1159
      %v1190 = vadd.f32 %v1006, %v1160
      %v1191 = vadd.f32 %v1007, %v1161
      %v1192 = vadd.f32 %v1008, %v1162
      %v1193 = vadd.f32 %v1009, %v1163
      %v1194 = vadd.f32 %v1010, %v1164
      %v1195 = vadd.f32 %v1011, %v1165
      %v1196 = vadd.f32 %v1012, %v1166
      %v1197 = vadd.f32 %v1013, %v1167
      %v1198 = vadd.f32 %v1014, %v1168
      %v1199 = vadd.f32 %v1015, %v1169
      %v1200 = vadd.f32 %v1016, %v1170
      %v1201 = vadd.f32 %v1017, %v1171
      %v1202 = vadd.f32 %v1018, %v1172
      %v1203 = vadd.f32 %v1019, %v1173
      %v1204 = vadd.f32 %v1020, %v1174
      %v1205 = vadd.f32 %v1021, %v1175
      %v1206 = vadd.f32 %v1022, %v1176
      %v1207 = vadd.f32 %v1023, %v1177
      %v1208 = vadd.f32 %v1024, %v1178
      %v1209 = vadd.f32 %v1025, %v1179
      %v1210 = vadd.f32 %v1026, %v1180
      %v1211 = vadd.f32 %v1027, %v1181
      %1212 = vset.pattern.permute.xlu0 2
      %1213 = vperm.xlu0 %1212, %v784
      %v1214 = vpop.permute.xlu0 %1213
      %1216 = vset.pattern.permute.xlu0 2
      %1217 = vperm.xlu0 %1216, %v785
      %v1218 = vpop.permute.xlu0 %1217
      %1220 = vset.pattern.permute.xlu0 2
      %1221 = vperm.xlu0 %1220, %v786
      %v1222 = vpop.permute.xlu0 %1221
      %1224 = vset.pattern.permute.xlu0 2
      %1225 = vperm.xlu0 %1224, %v787
      %v1226 = vpop.permute.xlu0 %1225
      %1228 = vset.pattern.permute.xlu0 2
      %1229 = vperm.xlu0 %1228, %v788
      %v1230 = vpop.permute.xlu0 %1229
      %1232 = vset.pattern.permute.xlu0 2
      %1233 = vperm.xlu0 %1232, %v789
      %v1234 = vpop.permute.xlu0 %1233
      %1236 = vset.pattern.permute.xlu0 2
      %1237 = vperm.xlu0 %1236, %v790
      %v1238 = vpop.permute.xlu0 %1237
      %1240 = vset.pattern.permute.xlu0 2
      %1241 = vperm.xlu0 %1240, %v791
      %v1242 = vpop.permute.xlu0 %1241
      %1244 = vset.pattern.permute.xlu0 2
      %1245 = vperm.xlu0 %1244, %v792
      %v1246 = vpop.permute.xlu0 %1245
      %1248 = vset.pattern.permute.xlu0 2
      %1249 = vperm.xlu0 %1248, %v793
      %v1250 = vpop.permute.xlu0 %1249
      %1252 = vset.pattern.permute.xlu0 2
      %1253 = vperm.xlu0 %1252, %v794
      %v1254 = vpop.permute.xlu0 %1253
      %1256 = vset.pattern.permute.xlu0 2
      %1257 = vperm.xlu0 %1256, %v795
      %v1258 = vpop.permute.xlu0 %1257
      %1260 = vset.pattern.permute.xlu0 2
      %1261 = vperm.xlu0 %1260, %v796
      %v1262 = vpop.permute.xlu0 %1261
      %1264 = vset.pattern.permute.xlu0 2
      %1265 = vperm.xlu0 %1264, %v797
      %v1266 = vpop.permute.xlu0 %1265
      %1268 = vset.pattern.permute.xlu0 2
      %1269 = vperm.xlu0 %1268, %v798
      %v1270 = vpop.permute.xlu0 %1269
      %1272 = vset.pattern.permute.xlu0 2
      %1273 = vperm.xlu0 %1272, %v799
      %v1274 = vpop.permute.xlu0 %1273
      %1276 = vset.pattern.permute.xlu0 2
      %1277 = vperm.xlu0 %1276, %v800
      %v1278 = vpop.permute.xlu0 %1277
      %1280 = vset.pattern.permute.xlu0 2
      %1281 = vperm.xlu0 %1280, %v801
      %v1282 = vpop.permute.xlu0 %1281
      %1284 = vset.pattern.permute.xlu0 2
      %1285 = vperm.xlu0 %1284, %v802
      %v1286 = vpop.permute.xlu0 %1285
      %1288 = vset.pattern.permute.xlu0 2
      %1289 = vperm.xlu0 %1288, %v803
      %v1290 = vpop.permute.xlu0 %1289
      %1292 = vset.pattern.permute.xlu0 2
      %1293 = vperm.xlu0 %1292, %v804
      %v1294 = vpop.permute.xlu0 %1293
      %1296 = vset.pattern.permute.xlu0 2
      %1297 = vperm.xlu0 %1296, %v805
      %v1298 = vpop.permute.xlu0 %1297
      %1300 = vset.pattern.permute.xlu0 2
      %1301 = vperm.xlu0 %1300, %v806
      %v1302 = vpop.permute.xlu0 %1301
      %1304 = vset.pattern.permute.xlu0 2
      %1305 = vperm.xlu0 %1304, %v807
      %v1306 = vpop.permute.xlu0 %1305
      %1308 = vset.pattern.permute.xlu0 2
      %1309 = vperm.xlu0 %1308, %v808
      %v1310 = vpop.permute.xlu0 %1309
      %1312 = vset.pattern.permute.xlu0 2
      %1313 = vperm.xlu0 %1312, %v809
      %v1314 = vpop.permute.xlu0 %1313
      %1316 = vset.pattern.permute.xlu0 2
      %1317 = vperm.xlu0 %1316, %v810
      %v1318 = vpop.permute.xlu0 %1317
      %1320 = vset.pattern.permute.xlu0 2
      %1321 = vperm.xlu0 %1320, %v811
      %v1322 = vpop.permute.xlu0 %1321
      %1324 = vset.pattern.permute.xlu0 2
      %1325 = vperm.xlu0 %1324, %v812
      %v1326 = vpop.permute.xlu0 %1325
      %1328 = vset.pattern.permute.xlu0 2
      %1329 = vperm.xlu0 %1328, %v813
      %v1330 = vpop.permute.xlu0 %1329
      %v1332 = vlaneseq
      %v1333 = vshrl.u32 %v1332, 7
      %v1334 = vsub.s32 5, %v1333
      %v1335 = vrot.slane %v198, %v1334
      %v1336 = vmul.f32 %v1214, %v1335
      %v1337 = vmul.f32 %v1218, %v1335
      %v1338 = vmul.f32 %v1222, %v1335
      %v1339 = vmul.f32 %v1226, %v1335
      %v1340 = vmul.f32 %v1230, %v1335
      %v1341 = vmul.f32 %v1234, %v1335
      %v1342 = vmul.f32 %v1238, %v1335
      %v1343 = vmul.f32 %v1242, %v1335
      %v1344 = vmul.f32 %v1246, %v1335
      %v1345 = vmul.f32 %v1250, %v1335
      %v1346 = vmul.f32 %v1254, %v1335
      %v1347 = vmul.f32 %v1258, %v1335
      %v1348 = vmul.f32 %v1262, %v1335
      %v1349 = vmul.f32 %v1266, %v1335
      %v1350 = vmul.f32 %v1270, %v1335
      %v1351 = vmul.f32 %v1274, %v1335
      %v1352 = vmul.f32 %v1278, %v1335
      %v1353 = vmul.f32 %v1282, %v1335
      %v1354 = vmul.f32 %v1286, %v1335
      %v1355 = vmul.f32 %v1290, %v1335
      %v1356 = vmul.f32 %v1294, %v1335
      %v1357 = vmul.f32 %v1298, %v1335
      %v1358 = vmul.f32 %v1302, %v1335
      %v1359 = vmul.f32 %v1306, %v1335
      %v1360 = vmul.f32 %v1310, %v1335
      %v1361 = vmul.f32 %v1314, %v1335
      %v1362 = vmul.f32 %v1318, %v1335
      %v1363 = vmul.f32 %v1322, %v1335
      %v1364 = vmul.f32 %v1326, %v1335
      %v1365 = vmul.f32 %v1330, %v1335
      %v1366 = vadd.f32 %v1182, %v1336
      %v1367 = vadd.f32 %v1183, %v1337
      %v1368 = vadd.f32 %v1184, %v1338
      %v1369 = vadd.f32 %v1185, %v1339
      %v1370 = vadd.f32 %v1186, %v1340
      %v1371 = vadd.f32 %v1187, %v1341
      %v1372 = vadd.f32 %v1188, %v1342
      %v1373 = vadd.f32 %v1189, %v1343
      %v1374 = vadd.f32 %v1190, %v1344
      %v1375 = vadd.f32 %v1191, %v1345
      %v1376 = vadd.f32 %v1192, %v1346
      %v1377 = vadd.f32 %v1193, %v1347
      %v1378 = vadd.f32 %v1194, %v1348
      %v1379 = vadd.f32 %v1195, %v1349
      %v1380 = vadd.f32 %v1196, %v1350
      %v1381 = vadd.f32 %v1197, %v1351
      %v1382 = vadd.f32 %v1198, %v1352
      %v1383 = vadd.f32 %v1199, %v1353
      %v1384 = vadd.f32 %v1200, %v1354
      %v1385 = vadd.f32 %v1201, %v1355
      %v1386 = vadd.f32 %v1202, %v1356
      %v1387 = vadd.f32 %v1203, %v1357
      %v1388 = vadd.f32 %v1204, %v1358
      %v1389 = vadd.f32 %v1205, %v1359
      %v1390 = vadd.f32 %v1206, %v1360
      %v1391 = vadd.f32 %v1207, %v1361
      %v1392 = vadd.f32 %v1208, %v1362
      %v1393 = vadd.f32 %v1209, %v1363
      %v1394 = vadd.f32 %v1210, %v1364
      %v1395 = vadd.f32 %v1211, %v1365
      %v1396 = vld [vmem:[%s192 + $0x2] sm:$0xff]
      %v1397 = vld [vmem:[%s192 + $0xa] sm:$0x7f]
      %v1398 = vld [vmem:[%s192 + $0x1a] sm:$0xff]
      %v1399 = vld [vmem:[%s192 + $0x22] sm:$0x7f]
      %v1400 = vld [vmem:[%s192 + $0x32] sm:$0xff]
      %v1401 = vld [vmem:[%s192 + $0x3a] sm:$0x7f]
      %v1402 = vld [vmem:[%s192 + $0x4a] sm:$0xff]
      %v1403 = vld [vmem:[%s192 + $0x52] sm:$0x7f]
      %v1404 = vld [vmem:[%s192 + $0x62] sm:$0xff]
      %v1405 = vld [vmem:[%s192 + $0x6a] sm:$0x7f]
      %v1406 = vld [vmem:[%s192 + $0x7a] sm:$0xff]
      %v1407 = vld [vmem:[%s192 + $0x82] sm:$0x7f]
      %v1408 = vld [vmem:[%s192 + $0x92] sm:$0xff]
      %v1409 = vld [vmem:[%s192 + $0x9a] sm:$0x7f]
      %v1410 = vld [vmem:[%s192 + $0xaa] sm:$0xff]
      %v1411 = vld [vmem:[%s192 + $0xb2] sm:$0x7f]
      %v1412 = vld [vmem:[%s192 + $0xc2] sm:$0xff]
      %v1413 = vld [vmem:[%s192 + $0xca] sm:$0x7f]
      %v1414 = vld [vmem:[%s192 + $0xda] sm:$0xff]
      %v1415 = vld [vmem:[%s192 + $0xe2] sm:$0x7f]
      %v1416 = vld [vmem:[%s192 + $0xf2] sm:$0xff]
      %v1417 = vld [vmem:[%s192 + $0xfa] sm:$0x7f]
      %v1418 = vld [vmem:[%s192 + $0x10a] sm:$0xff]
      %v1419 = vld [vmem:[%s192 + $0x112] sm:$0x7f]
      %v1420 = vld [vmem:[%s192 + $0x122] sm:$0xff]
      %v1421 = vld [vmem:[%s192 + $0x12a] sm:$0x7f]
      %v1422 = vld [vmem:[%s192 + $0x13a] sm:$0xff]
      %v1423 = vld [vmem:[%s192 + $0x142] sm:$0x7f]
      %v1424 = vld [vmem:[%s192 + $0x152] sm:$0xff]
      %v1425 = vld [vmem:[%s192 + $0x15a] sm:$0x7f]
      %1427 = vset.pattern.permute.xlu0 0
      %1428 = vperm.xlu0 %1427, %v1396
      %v1429 = vpop.permute.xlu0 %1428
      %1432 = vset.pattern.permute.xlu0 0
      %1433 = vperm.xlu0 %1432, %v1397
      %v1434 = vpop.permute.xlu0 %1433
      %1437 = vset.pattern.permute.xlu0 0
      %1438 = vperm.xlu0 %1437, %v1398
      %v1439 = vpop.permute.xlu0 %1438
      %1442 = vset.pattern.permute.xlu0 0
      %1443 = vperm.xlu0 %1442, %v1399
      %v1444 = vpop.permute.xlu0 %1443
      %1447 = vset.pattern.permute.xlu0 0
      %1448 = vperm.xlu0 %1447, %v1400
      %v1449 = vpop.permute.xlu0 %1448
      %1452 = vset.pattern.permute.xlu0 0
      %1453 = vperm.xlu0 %1452, %v1401
      %v1454 = vpop.permute.xlu0 %1453
      %1457 = vset.pattern.permute.xlu0 0
      %1458 = vperm.xlu0 %1457, %v1402
      %v1459 = vpop.permute.xlu0 %1458
      %1462 = vset.pattern.permute.xlu0 0
      %1463 = vperm.xlu0 %1462, %v1403
      %v1464 = vpop.permute.xlu0 %1463
      %1467 = vset.pattern.permute.xlu0 0
      %1468 = vperm.xlu0 %1467, %v1404
      %v1469 = vpop.permute.xlu0 %1468
      %1472 = vset.pattern.permute.xlu0 0
      %1473 = vperm.xlu0 %1472, %v1405
      %v1474 = vpop.permute.xlu0 %1473
      %1477 = vset.pattern.permute.xlu0 0
      %1478 = vperm.xlu0 %1477, %v1406
      %v1479 = vpop.permute.xlu0 %1478
      %1482 = vset.pattern.permute.xlu0 0
      %1483 = vperm.xlu0 %1482, %v1407
      %v1484 = vpop.permute.xlu0 %1483
      %1487 = vset.pattern.permute.xlu0 0
      %1488 = vperm.xlu0 %1487, %v1408
      %v1489 = vpop.permute.xlu0 %1488
      %1492 = vset.pattern.permute.xlu0 0
      %1493 = vperm.xlu0 %1492, %v1409
      %v1494 = vpop.permute.xlu0 %1493
      %1497 = vset.pattern.permute.xlu0 0
      %1498 = vperm.xlu0 %1497, %v1410
      %v1499 = vpop.permute.xlu0 %1498
      %1502 = vset.pattern.permute.xlu0 0
      %1503 = vperm.xlu0 %1502, %v1411
      %v1504 = vpop.permute.xlu0 %1503
      %1507 = vset.pattern.permute.xlu0 0
      %1508 = vperm.xlu0 %1507, %v1412
      %v1509 = vpop.permute.xlu0 %1508
      %1512 = vset.pattern.permute.xlu0 0
      %1513 = vperm.xlu0 %1512, %v1413
      %v1514 = vpop.permute.xlu0 %1513
      %1517 = vset.pattern.permute.xlu0 0
      %1518 = vperm.xlu0 %1517, %v1414
      %v1519 = vpop.permute.xlu0 %1518
      %1522 = vset.pattern.permute.xlu0 0
      %1523 = vperm.xlu0 %1522, %v1415
      %v1524 = vpop.permute.xlu0 %1523
      %1527 = vset.pattern.permute.xlu0 0
      %1528 = vperm.xlu0 %1527, %v1416
      %v1529 = vpop.permute.xlu0 %1528
      %1532 = vset.pattern.permute.xlu0 0
      %1533 = vperm.xlu0 %1532, %v1417
      %v1534 = vpop.permute.xlu0 %1533
      %1537 = vset.pattern.permute.xlu0 0
      %1538 = vperm.xlu0 %1537, %v1418
      %v1539 = vpop.permute.xlu0 %1538
      %1542 = vset.pattern.permute.xlu0 0
      %1543 = vperm.xlu0 %1542, %v1419
      %v1544 = vpop.permute.xlu0 %1543
      %1547 = vset.pattern.permute.xlu0 0
      %1548 = vperm.xlu0 %1547, %v1420
      %v1549 = vpop.permute.xlu0 %1548
      %1552 = vset.pattern.permute.xlu0 0
      %1553 = vperm.xlu0 %1552, %v1421
      %v1554 = vpop.permute.xlu0 %1553
      %1557 = vset.pattern.permute.xlu0 0
      %1558 = vperm.xlu0 %1557, %v1422
      %v1559 = vpop.permute.xlu0 %1558
      %1562 = vset.pattern.permute.xlu0 0
      %1563 = vperm.xlu0 %1562, %v1423
      %v1564 = vpop.permute.xlu0 %1563
      %1567 = vset.pattern.permute.xlu0 0
      %1568 = vperm.xlu0 %1567, %v1424
      %v1569 = vpop.permute.xlu0 %1568
      %1572 = vset.pattern.permute.xlu0 0
      %1573 = vperm.xlu0 %1572, %v1425
      %v1574 = vpop.permute.xlu0 %1573
      %v1576 = vlaneseq
      %v1577 = vshrl.u32 %v1576, 7
      %v1578 = vsub.s32 6, %v1577
      %v1579 = vrot.slane %v198, %v1578
      %v1580 = vmul.f32 %v1429, %v1579
      %v1581 = vmul.f32 %v1434, %v1579
      %v1582 = vmul.f32 %v1439, %v1579
      %v1583 = vmul.f32 %v1444, %v1579
      %v1584 = vmul.f32 %v1449, %v1579
      %v1585 = vmul.f32 %v1454, %v1579
      %v1586 = vmul.f32 %v1459, %v1579
      %v1587 = vmul.f32 %v1464, %v1579
      %v1588 = vmul.f32 %v1469, %v1579
      %v1589 = vmul.f32 %v1474, %v1579
      %v1590 = vmul.f32 %v1479, %v1579
      %v1591 = vmul.f32 %v1484, %v1579
      %v1592 = vmul.f32 %v1489, %v1579
      %v1593 = vmul.f32 %v1494, %v1579
      %v1594 = vmul.f32 %v1499, %v1579
      %v1595 = vmul.f32 %v1504, %v1579
      %v1596 = vmul.f32 %v1509, %v1579
      %v1597 = vmul.f32 %v1514, %v1579
      %v1598 = vmul.f32 %v1519, %v1579
      %v1599 = vmul.f32 %v1524, %v1579
      %v1600 = vmul.f32 %v1529, %v1579
      %v1601 = vmul.f32 %v1534, %v1579
      %v1602 = vmul.f32 %v1539, %v1579
      %v1603 = vmul.f32 %v1544, %v1579
      %v1604 = vmul.f32 %v1549, %v1579
      %v1605 = vmul.f32 %v1554, %v1579
      %v1606 = vmul.f32 %v1559, %v1579
      %v1607 = vmul.f32 %v1564, %v1579
      %v1608 = vmul.f32 %v1569, %v1579
      %v1609 = vmul.f32 %v1574, %v1579
      %v1610 = vadd.f32 %v1366, %v1580
      %v1611 = vadd.f32 %v1367, %v1581
      %v1612 = vadd.f32 %v1368, %v1582
      %v1613 = vadd.f32 %v1369, %v1583
      %v1614 = vadd.f32 %v1370, %v1584
      %v1615 = vadd.f32 %v1371, %v1585
      %v1616 = vadd.f32 %v1372, %v1586
      %v1617 = vadd.f32 %v1373, %v1587
      %v1618 = vadd.f32 %v1374, %v1588
      %v1619 = vadd.f32 %v1375, %v1589
      %v1620 = vadd.f32 %v1376, %v1590
      %v1621 = vadd.f32 %v1377, %v1591
      %v1622 = vadd.f32 %v1378, %v1592
      %v1623 = vadd.f32 %v1379, %v1593
      %v1624 = vadd.f32 %v1380, %v1594
      %v1625 = vadd.f32 %v1381, %v1595
      %v1626 = vadd.f32 %v1382, %v1596
      %v1627 = vadd.f32 %v1383, %v1597
      %v1628 = vadd.f32 %v1384, %v1598
      %v1629 = vadd.f32 %v1385, %v1599
      %v1630 = vadd.f32 %v1386, %v1600
      %v1631 = vadd.f32 %v1387, %v1601
      %v1632 = vadd.f32 %v1388, %v1602
      %v1633 = vadd.f32 %v1389, %v1603
      %v1634 = vadd.f32 %v1390, %v1604
      %v1635 = vadd.f32 %v1391, %v1605
      %v1636 = vadd.f32 %v1392, %v1606
      %v1637 = vadd.f32 %v1393, %v1607
      %v1638 = vadd.f32 %v1394, %v1608
      %v1639 = vadd.f32 %v1395, %v1609
      %1640 = vset.pattern.permute.xlu0 1
      %1641 = vperm.xlu0 %1640, %v1396
      %v1642 = vpop.permute.xlu0 %1641
      %1644 = vset.pattern.permute.xlu0 1
      %1645 = vperm.xlu0 %1644, %v1397
      %v1646 = vpop.permute.xlu0 %1645
      %1648 = vset.pattern.permute.xlu0 1
      %1649 = vperm.xlu0 %1648, %v1398
      %v1650 = vpop.permute.xlu0 %1649
      %1652 = vset.pattern.permute.xlu0 1
      %1653 = vperm.xlu0 %1652, %v1399
      %v1654 = vpop.permute.xlu0 %1653
      %1656 = vset.pattern.permute.xlu0 1
      %1657 = vperm.xlu0 %1656, %v1400
      %v1658 = vpop.permute.xlu0 %1657
      %1660 = vset.pattern.permute.xlu0 1
      %1661 = vperm.xlu0 %1660, %v1401
      %v1662 = vpop.permute.xlu0 %1661
      %1664 = vset.pattern.permute.xlu0 1
      %1665 = vperm.xlu0 %1664, %v1402
      %v1666 = vpop.permute.xlu0 %1665
      %1668 = vset.pattern.permute.xlu0 1
      %1669 = vperm.xlu0 %1668, %v1403
      %v1670 = vpop.permute.xlu0 %1669
      %1672 = vset.pattern.permute.xlu0 1
      %1673 = vperm.xlu0 %1672, %v1404
      %v1674 = vpop.permute.xlu0 %1673
      %1676 = vset.pattern.permute.xlu0 1
      %1677 = vperm.xlu0 %1676, %v1405
      %v1678 = vpop.permute.xlu0 %1677
      %1680 = vset.pattern.permute.xlu0 1
      %1681 = vperm.xlu0 %1680, %v1406
      %v1682 = vpop.permute.xlu0 %1681
      %1684 = vset.pattern.permute.xlu0 1
      %1685 = vperm.xlu0 %1684, %v1407
      %v1686 = vpop.permute.xlu0 %1685
      %1688 = vset.pattern.permute.xlu0 1
      %1689 = vperm.xlu0 %1688, %v1408
      %v1690 = vpop.permute.xlu0 %1689
      %1692 = vset.pattern.permute.xlu0 1
      %1693 = vperm.xlu0 %1692, %v1409
      %v1694 = vpop.permute.xlu0 %1693
      %1696 = vset.pattern.permute.xlu0 1
      %1697 = vperm.xlu0 %1696, %v1410
      %v1698 = vpop.permute.xlu0 %1697
      %1700 = vset.pattern.permute.xlu0 1
      %1701 = vperm.xlu0 %1700, %v1411
      %v1702 = vpop.permute.xlu0 %1701
      %1704 = vset.pattern.permute.xlu0 1
      %1705 = vperm.xlu0 %1704, %v1412
      %v1706 = vpop.permute.xlu0 %1705
      %1708 = vset.pattern.permute.xlu0 1
      %1709 = vperm.xlu0 %1708, %v1413
      %v1710 = vpop.permute.xlu0 %1709
      %1712 = vset.pattern.permute.xlu0 1
      %1713 = vperm.xlu0 %1712, %v1414
      %v1714 = vpop.permute.xlu0 %1713
      %1716 = vset.pattern.permute.xlu0 1
      %1717 = vperm.xlu0 %1716, %v1415
      %v1718 = vpop.permute.xlu0 %1717
      %1720 = vset.pattern.permute.xlu0 1
      %1721 = vperm.xlu0 %1720, %v1416
      %v1722 = vpop.permute.xlu0 %1721
      %1724 = vset.pattern.permute.xlu0 1
      %1725 = vperm.xlu0 %1724, %v1417
      %v1726 = vpop.permute.xlu0 %1725
      %1728 = vset.pattern.permute.xlu0 1
      %1729 = vperm.xlu0 %1728, %v1418
      %v1730 = vpop.permute.xlu0 %1729
      %1732 = vset.pattern.permute.xlu0 1
      %1733 = vperm.xlu0 %1732, %v1419
      %v1734 = vpop.permute.xlu0 %1733
      %1736 = vset.pattern.permute.xlu0 1
      %1737 = vperm.xlu0 %1736, %v1420
      %v1738 = vpop.permute.xlu0 %1737
      %1740 = vset.pattern.permute.xlu0 1
      %1741 = vperm.xlu0 %1740, %v1421
      %v1742 = vpop.permute.xlu0 %1741
      %1744 = vset.pattern.permute.xlu0 1
      %1745 = vperm.xlu0 %1744, %v1422
      %v1746 = vpop.permute.xlu0 %1745
      %1748 = vset.pattern.permute.xlu0 1
      %1749 = vperm.xlu0 %1748, %v1423
      %v1750 = vpop.permute.xlu0 %1749
      %1752 = vset.pattern.permute.xlu0 1
      %1753 = vperm.xlu0 %1752, %v1424
      %v1754 = vpop.permute.xlu0 %1753
      %1756 = vset.pattern.permute.xlu0 1
      %1757 = vperm.xlu0 %1756, %v1425
      %v1758 = vpop.permute.xlu0 %1757
      %v1760 = vlaneseq
      %v1761 = vshrl.u32 %v1760, 7
      %v1762 = vsub.s32 7, %v1761
      %v1763 = vrot.slane %v198, %v1762
      %v1764 = vmul.f32 %v1642, %v1763
      %v1765 = vmul.f32 %v1646, %v1763
      %v1766 = vmul.f32 %v1650, %v1763
      %v1767 = vmul.f32 %v1654, %v1763
      %v1768 = vmul.f32 %v1658, %v1763
      %v1769 = vmul.f32 %v1662, %v1763
      %v1770 = vmul.f32 %v1666, %v1763
      %v1771 = vmul.f32 %v1670, %v1763
      %v1772 = vmul.f32 %v1674, %v1763
      %v1773 = vmul.f32 %v1678, %v1763
      %v1774 = vmul.f32 %v1682, %v1763
      %v1775 = vmul.f32 %v1686, %v1763
      %v1776 = vmul.f32 %v1690, %v1763
      %v1777 = vmul.f32 %v1694, %v1763
      %v1778 = vmul.f32 %v1698, %v1763
      %v1779 = vmul.f32 %v1702, %v1763
      %v1780 = vmul.f32 %v1706, %v1763
      %v1781 = vmul.f32 %v1710, %v1763
      %v1782 = vmul.f32 %v1714, %v1763
      %v1783 = vmul.f32 %v1718, %v1763
      %v1784 = vmul.f32 %v1722, %v1763
      %v1785 = vmul.f32 %v1726, %v1763
      %v1786 = vmul.f32 %v1730, %v1763
      %v1787 = vmul.f32 %v1734, %v1763
      %v1788 = vmul.f32 %v1738, %v1763
      %v1789 = vmul.f32 %v1742, %v1763
      %v1790 = vmul.f32 %v1746, %v1763
      %v1791 = vmul.f32 %v1750, %v1763
      %v1792 = vmul.f32 %v1754, %v1763
      %v1793 = vmul.f32 %v1758, %v1763
      %v1794 = vadd.f32 %v1610, %v1764
      %v1795 = vadd.f32 %v1611, %v1765
      %v1796 = vadd.f32 %v1612, %v1766
      %v1797 = vadd.f32 %v1613, %v1767
      %v1798 = vadd.f32 %v1614, %v1768
      %v1799 = vadd.f32 %v1615, %v1769
      %v1800 = vadd.f32 %v1616, %v1770
      %v1801 = vadd.f32 %v1617, %v1771
      %v1802 = vadd.f32 %v1618, %v1772
      %v1803 = vadd.f32 %v1619, %v1773
      %v1804 = vadd.f32 %v1620, %v1774
      %v1805 = vadd.f32 %v1621, %v1775
      %v1806 = vadd.f32 %v1622, %v1776
      %v1807 = vadd.f32 %v1623, %v1777
      %v1808 = vadd.f32 %v1624, %v1778
      %v1809 = vadd.f32 %v1625, %v1779
      %v1810 = vadd.f32 %v1626, %v1780
      %v1811 = vadd.f32 %v1627, %v1781
      %v1812 = vadd.f32 %v1628, %v1782
      %v1813 = vadd.f32 %v1629, %v1783
      %v1814 = vadd.f32 %v1630, %v1784
      %v1815 = vadd.f32 %v1631, %v1785
      %v1816 = vadd.f32 %v1632, %v1786
      %v1817 = vadd.f32 %v1633, %v1787
      %v1818 = vadd.f32 %v1634, %v1788
      %v1819 = vadd.f32 %v1635, %v1789
      %v1820 = vadd.f32 %v1636, %v1790
      %v1821 = vadd.f32 %v1637, %v1791
      %v1822 = vadd.f32 %v1638, %v1792
      %v1823 = vadd.f32 %v1639, %v1793
      %1824 = vset.pattern.permute.xlu0 2
      %1825 = vperm.xlu0 %1824, %v1396
      %v1826 = vpop.permute.xlu0 %1825
      %1828 = vset.pattern.permute.xlu0 2
      %1829 = vperm.xlu0 %1828, %v1397
      %v1830 = vpop.permute.xlu0 %1829
      %1832 = vset.pattern.permute.xlu0 2
      %1833 = vperm.xlu0 %1832, %v1398
      %v1834 = vpop.permute.xlu0 %1833
      %1836 = vset.pattern.permute.xlu0 2
      %1837 = vperm.xlu0 %1836, %v1399
      %v1838 = vpop.permute.xlu0 %1837
      %1840 = vset.pattern.permute.xlu0 2
      %1841 = vperm.xlu0 %1840, %v1400
      %v1842 = vpop.permute.xlu0 %1841
      %1844 = vset.pattern.permute.xlu0 2
      %1845 = vperm.xlu0 %1844, %v1401
      %v1846 = vpop.permute.xlu0 %1845
      %1848 = vset.pattern.permute.xlu0 2
      %1849 = vperm.xlu0 %1848, %v1402
      %v1850 = vpop.permute.xlu0 %1849
      %1852 = vset.pattern.permute.xlu0 2
      %1853 = vperm.xlu0 %1852, %v1403
      %v1854 = vpop.permute.xlu0 %1853
      %1856 = vset.pattern.permute.xlu0 2
      %1857 = vperm.xlu0 %1856, %v1404
      %v1858 = vpop.permute.xlu0 %1857
      %1860 = vset.pattern.permute.xlu0 2
      %1861 = vperm.xlu0 %1860, %v1405
      %v1862 = vpop.permute.xlu0 %1861
      %1864 = vset.pattern.permute.xlu0 2
      %1865 = vperm.xlu0 %1864, %v1406
      %v1866 = vpop.permute.xlu0 %1865
      %1868 = vset.pattern.permute.xlu0 2
      %1869 = vperm.xlu0 %1868, %v1407
      %v1870 = vpop.permute.xlu0 %1869
      %1872 = vset.pattern.permute.xlu0 2
      %1873 = vperm.xlu0 %1872, %v1408
      %v1874 = vpop.permute.xlu0 %1873
      %1876 = vset.pattern.permute.xlu0 2
      %1877 = vperm.xlu0 %1876, %v1409
      %v1878 = vpop.permute.xlu0 %1877
      %1880 = vset.pattern.permute.xlu0 2
      %1881 = vperm.xlu0 %1880, %v1410
      %v1882 = vpop.permute.xlu0 %1881
      %1884 = vset.pattern.permute.xlu0 2
      %1885 = vperm.xlu0 %1884, %v1411
      %v1886 = vpop.permute.xlu0 %1885
      %1888 = vset.pattern.permute.xlu0 2
      %1889 = vperm.xlu0 %1888, %v1412
      %v1890 = vpop.permute.xlu0 %1889
      %1892 = vset.pattern.permute.xlu0 2
      %1893 = vperm.xlu0 %1892, %v1413
      %v1894 = vpop.permute.xlu0 %1893
      %1896 = vset.pattern.permute.xlu0 2
      %1897 = vperm.xlu0 %1896, %v1414
      %v1898 = vpop.permute.xlu0 %1897
      %1900 = vset.pattern.permute.xlu0 2
      %1901 = vperm.xlu0 %1900, %v1415
      %v1902 = vpop.permute.xlu0 %1901
      %1904 = vset.pattern.permute.xlu0 2
      %1905 = vperm.xlu0 %1904, %v1416
      %v1906 = vpop.permute.xlu0 %1905
      %1908 = vset.pattern.permute.xlu0 2
      %1909 = vperm.xlu0 %1908, %v1417
      %v1910 = vpop.permute.xlu0 %1909
      %1912 = vset.pattern.permute.xlu0 2
      %1913 = vperm.xlu0 %1912, %v1418
      %v1914 = vpop.permute.xlu0 %1913
      %1916 = vset.pattern.permute.xlu0 2
      %1917 = vperm.xlu0 %1916, %v1419
      %v1918 = vpop.permute.xlu0 %1917
      %1920 = vset.pattern.permute.xlu0 2
      %1921 = vperm.xlu0 %1920, %v1420
      %v1922 = vpop.permute.xlu0 %1921
      %1924 = vset.pattern.permute.xlu0 2
      %1925 = vperm.xlu0 %1924, %v1421
      %v1926 = vpop.permute.xlu0 %1925
      %1928 = vset.pattern.permute.xlu0 2
      %1929 = vperm.xlu0 %1928, %v1422
      %v1930 = vpop.permute.xlu0 %1929
      %1932 = vset.pattern.permute.xlu0 2
      %1933 = vperm.xlu0 %1932, %v1423
      %v1934 = vpop.permute.xlu0 %1933
      %1936 = vset.pattern.permute.xlu0 2
      %1937 = vperm.xlu0 %1936, %v1424
      %v1938 = vpop.permute.xlu0 %1937
      %1940 = vset.pattern.permute.xlu0 2
      %1941 = vperm.xlu0 %1940, %v1425
      %v1942 = vpop.permute.xlu0 %1941
      %v1944 = vlaneseq
      %v1945 = vshrl.u32 %v1944, 7
      %v1946 = vsub.s32 0, %v1945
      %v1947 = vrot.slane %v199, %v1946
      %v1948 = vmul.f32 %v1826, %v1947
      %v1949 = vmul.f32 %v1830, %v1947
      %v1950 = vmul.f32 %v1834, %v1947
      %v1951 = vmul.f32 %v1838, %v1947
      %v1952 = vmul.f32 %v1842, %v1947
      %v1953 = vmul.f32 %v1846, %v1947
      %v1954 = vmul.f32 %v1850, %v1947
      %v1955 = vmul.f32 %v1854, %v1947
      %v1956 = vmul.f32 %v1858, %v1947
      %v1957 = vmul.f32 %v1862, %v1947
      %v1958 = vmul.f32 %v1866, %v1947
      %v1959 = vmul.f32 %v1870, %v1947
      %v1960 = vmul.f32 %v1874, %v1947
      %v1961 = vmul.f32 %v1878, %v1947
      %v1962 = vmul.f32 %v1882, %v1947
      %v1963 = vmul.f32 %v1886, %v1947
      %v1964 = vmul.f32 %v1890, %v1947
      %v1965 = vmul.f32 %v1894, %v1947
      %v1966 = vmul.f32 %v1898, %v1947
      %v1967 = vmul.f32 %v1902, %v1947
      %v1968 = vmul.f32 %v1906, %v1947
      %v1969 = vmul.f32 %v1910, %v1947
      %v1970 = vmul.f32 %v1914, %v1947
      %v1971 = vmul.f32 %v1918, %v1947
      %v1972 = vmul.f32 %v1922, %v1947
      %v1973 = vmul.f32 %v1926, %v1947
      %v1974 = vmul.f32 %v1930, %v1947
      %v1975 = vmul.f32 %v1934, %v1947
      %v1976 = vmul.f32 %v1938, %v1947
      %v1977 = vmul.f32 %v1942, %v1947
      %v1978 = vadd.f32 %v1794, %v1948
      %v1979 = vadd.f32 %v1795, %v1949
      %v1980 = vadd.f32 %v1796, %v1950
      %v1981 = vadd.f32 %v1797, %v1951
      %v1982 = vadd.f32 %v1798, %v1952
      %v1983 = vadd.f32 %v1799, %v1953
      %v1984 = vadd.f32 %v1800, %v1954
      %v1985 = vadd.f32 %v1801, %v1955
      %v1986 = vadd.f32 %v1802, %v1956
      %v1987 = vadd.f32 %v1803, %v1957
      %v1988 = vadd.f32 %v1804, %v1958
      %v1989 = vadd.f32 %v1805, %v1959
      %v1990 = vadd.f32 %v1806, %v1960
      %v1991 = vadd.f32 %v1807, %v1961
      %v1992 = vadd.f32 %v1808, %v1962
      %v1993 = vadd.f32 %v1809, %v1963
      %v1994 = vadd.f32 %v1810, %v1964
      %v1995 = vadd.f32 %v1811, %v1965
      %v1996 = vadd.f32 %v1812, %v1966
      %v1997 = vadd.f32 %v1813, %v1967
      %v1998 = vadd.f32 %v1814, %v1968
      %v1999 = vadd.f32 %v1815, %v1969
      %v2000 = vadd.f32 %v1816, %v1970
      %v2001 = vadd.f32 %v1817, %v1971
      %v2002 = vadd.f32 %v1818, %v1972
      %v2003 = vadd.f32 %v1819, %v1973
      %v2004 = vadd.f32 %v1820, %v1974
      %v2005 = vadd.f32 %v1821, %v1975
      %v2006 = vadd.f32 %v1822, %v1976
      %v2007 = vadd.f32 %v1823, %v1977
      %s2008 = scalar_lea.vmem %s192, 24
      %v2009 = vld [vmem:[%s2008] sm:$0xff]
      %v2010 = vld [vmem:[%s2008 + $0x8] sm:$0x7f]
      %v2011 = vld [vmem:[%s2008 + $0x18] sm:$0xff]
      %v2012 = vld [vmem:[%s2008 + $0x20] sm:$0x7f]
      %v2013 = vld [vmem:[%s2008 + $0x30] sm:$0xff]
      %v2014 = vld [vmem:[%s2008 + $0x38] sm:$0x7f]
      %v2015 = vld [vmem:[%s2008 + $0x48] sm:$0xff]
      %v2016 = vld [vmem:[%s2008 + $0x50] sm:$0x7f]
      %v2017 = vld [vmem:[%s2008 + $0x60] sm:$0xff]
      %v2018 = vld [vmem:[%s2008 + $0x68] sm:$0x7f]
      %v2019 = vld [vmem:[%s2008 + $0x78] sm:$0xff]
      %v2020 = vld [vmem:[%s2008 + $0x80] sm:$0x7f]
      %v2021 = vld [vmem:[%s2008 + $0x90] sm:$0xff]
      %v2022 = vld [vmem:[%s2008 + $0x98] sm:$0x7f]
      %v2023 = vld [vmem:[%s2008 + $0xa8] sm:$0xff]
      %v2024 = vld [vmem:[%s2008 + $0xb0] sm:$0x7f]
      %v2025 = vld [vmem:[%s2008 + $0xc0] sm:$0xff]
      %v2026 = vld [vmem:[%s2008 + $0xc8] sm:$0x7f]
      %v2027 = vld [vmem:[%s2008 + $0xd8] sm:$0xff]
      %v2028 = vld [vmem:[%s2008 + $0xe0] sm:$0x7f]
      %v2029 = vld [vmem:[%s2008 + $0xf0] sm:$0xff]
      %v2030 = vld [vmem:[%s2008 + $0xf8] sm:$0x7f]
      %v2031 = vld [vmem:[%s2008 + $0x108] sm:$0xff]
      %v2032 = vld [vmem:[%s2008 + $0x110] sm:$0x7f]
      %v2033 = vld [vmem:[%s2008 + $0x120] sm:$0xff]
      %v2034 = vld [vmem:[%s2008 + $0x128] sm:$0x7f]
      %v2035 = vld [vmem:[%s2008 + $0x138] sm:$0xff]
      %v2036 = vld [vmem:[%s2008 + $0x140] sm:$0x7f]
      %v2037 = vld [vmem:[%s2008 + $0x150] sm:$0xff]
      %v2038 = vld [vmem:[%s2008 + $0x158] sm:$0x7f]
      %2040 = vset.pattern.permute.xlu0 0
      %2041 = vperm.xlu0 %2040, %v2009
      %v2042 = vpop.permute.xlu0 %2041
      %2045 = vset.pattern.permute.xlu0 0
      %2046 = vperm.xlu0 %2045, %v2010
      %v2047 = vpop.permute.xlu0 %2046
      %2050 = vset.pattern.permute.xlu0 0
      %2051 = vperm.xlu0 %2050, %v2011
      %v2052 = vpop.permute.xlu0 %2051
      %2055 = vset.pattern.permute.xlu0 0
      %2056 = vperm.xlu0 %2055, %v2012
      %v2057 = vpop.permute.xlu0 %2056
      %2060 = vset.pattern.permute.xlu0 0
      %2061 = vperm.xlu0 %2060, %v2013
      %v2062 = vpop.permute.xlu0 %2061
      %2065 = vset.pattern.permute.xlu0 0
      %2066 = vperm.xlu0 %2065, %v2014
      %v2067 = vpop.permute.xlu0 %2066
      %2070 = vset.pattern.permute.xlu0 0
      %2071 = vperm.xlu0 %2070, %v2015
      %v2072 = vpop.permute.xlu0 %2071
      %2075 = vset.pattern.permute.xlu0 0
      %2076 = vperm.xlu0 %2075, %v2016
      %v2077 = vpop.permute.xlu0 %2076
      %2080 = vset.pattern.permute.xlu0 0
      %2081 = vperm.xlu0 %2080, %v2017
      %v2082 = vpop.permute.xlu0 %2081
      %2085 = vset.pattern.permute.xlu0 0
      %2086 = vperm.xlu0 %2085, %v2018
      %v2087 = vpop.permute.xlu0 %2086
      %2090 = vset.pattern.permute.xlu0 0
      %2091 = vperm.xlu0 %2090, %v2019
      %v2092 = vpop.permute.xlu0 %2091
      %2095 = vset.pattern.permute.xlu0 0
      %2096 = vperm.xlu0 %2095, %v2020
      %v2097 = vpop.permute.xlu0 %2096
      %2100 = vset.pattern.permute.xlu0 0
      %2101 = vperm.xlu0 %2100, %v2021
      %v2102 = vpop.permute.xlu0 %2101
      %2105 = vset.pattern.permute.xlu0 0
      %2106 = vperm.xlu0 %2105, %v2022
      %v2107 = vpop.permute.xlu0 %2106
      %2110 = vset.pattern.permute.xlu0 0
      %2111 = vperm.xlu0 %2110, %v2023
      %v2112 = vpop.permute.xlu0 %2111
      %2115 = vset.pattern.permute.xlu0 0
      %2116 = vperm.xlu0 %2115, %v2024
      %v2117 = vpop.permute.xlu0 %2116
      %2120 = vset.pattern.permute.xlu0 0
      %2121 = vperm.xlu0 %2120, %v2025
      %v2122 = vpop.permute.xlu0 %2121
      %2125 = vset.pattern.permute.xlu0 0
      %2126 = vperm.xlu0 %2125, %v2026
      %v2127 = vpop.permute.xlu0 %2126
      %2130 = vset.pattern.permute.xlu0 0
      %2131 = vperm.xlu0 %2130, %v2027
      %v2132 = vpop.permute.xlu0 %2131
      %2135 = vset.pattern.permute.xlu0 0
      %2136 = vperm.xlu0 %2135, %v2028
      %v2137 = vpop.permute.xlu0 %2136
      %2140 = vset.pattern.permute.xlu0 0
      %2141 = vperm.xlu0 %2140, %v2029
      %v2142 = vpop.permute.xlu0 %2141
      %2145 = vset.pattern.permute.xlu0 0
      %2146 = vperm.xlu0 %2145, %v2030
      %v2147 = vpop.permute.xlu0 %2146
      %2150 = vset.pattern.permute.xlu0 0
      %2151 = vperm.xlu0 %2150, %v2031
      %v2152 = vpop.permute.xlu0 %2151
      %2155 = vset.pattern.permute.xlu0 0
      %2156 = vperm.xlu0 %2155, %v2032
      %v2157 = vpop.permute.xlu0 %2156
      %2160 = vset.pattern.permute.xlu0 0
      %2161 = vperm.xlu0 %2160, %v2033
      %v2162 = vpop.permute.xlu0 %2161
      %2165 = vset.pattern.permute.xlu0 0
      %2166 = vperm.xlu0 %2165, %v2034
      %v2167 = vpop.permute.xlu0 %2166
      %2170 = vset.pattern.permute.xlu0 0
      %2171 = vperm.xlu0 %2170, %v2035
      %v2172 = vpop.permute.xlu0 %2171
      %2175 = vset.pattern.permute.xlu0 0
      %2176 = vperm.xlu0 %2175, %v2036
      %v2177 = vpop.permute.xlu0 %2176
      %2180 = vset.pattern.permute.xlu0 0
      %2181 = vperm.xlu0 %2180, %v2037
      %v2182 = vpop.permute.xlu0 %2181
      %2185 = vset.pattern.permute.xlu0 0
      %2186 = vperm.xlu0 %2185, %v2038
      %v2187 = vpop.permute.xlu0 %2186
      %v2189 = vlaneseq
      %v2190 = vshrl.u32 %v2189, 7
      %v2191 = vsub.s32 1, %v2190
      %v2192 = vrot.slane %v199, %v2191
      %v2193 = vmul.f32 %v2042, %v2192
      %v2194 = vmul.f32 %v2047, %v2192
      %v2195 = vmul.f32 %v2052, %v2192
      %v2196 = vmul.f32 %v2057, %v2192
      %v2197 = vmul.f32 %v2062, %v2192
      %v2198 = vmul.f32 %v2067, %v2192
      %v2199 = vmul.f32 %v2072, %v2192
      %v2200 = vmul.f32 %v2077, %v2192
      %v2201 = vmul.f32 %v2082, %v2192
      %v2202 = vmul.f32 %v2087, %v2192
      %v2203 = vmul.f32 %v2092, %v2192
      %v2204 = vmul.f32 %v2097, %v2192
      %v2205 = vmul.f32 %v2102, %v2192
      %v2206 = vmul.f32 %v2107, %v2192
      %v2207 = vmul.f32 %v2112, %v2192
      %v2208 = vmul.f32 %v2117, %v2192
      %v2209 = vmul.f32 %v2122, %v2192
      %v2210 = vmul.f32 %v2127, %v2192
      %v2211 = vmul.f32 %v2132, %v2192
      %v2212 = vmul.f32 %v2137, %v2192
      %v2213 = vmul.f32 %v2142, %v2192
      %v2214 = vmul.f32 %v2147, %v2192
      %v2215 = vmul.f32 %v2152, %v2192
      %v2216 = vmul.f32 %v2157, %v2192
      %v2217 = vmul.f32 %v2162, %v2192
      %v2218 = vmul.f32 %v2167, %v2192
      %v2219 = vmul.f32 %v2172, %v2192
      %v2220 = vmul.f32 %v2177, %v2192
      %v2221 = vmul.f32 %v2182, %v2192
      %v2222 = vmul.f32 %v2187, %v2192
      %v2223 = vadd.f32 %v1978, %v2193
      %v2224 = vadd.f32 %v1979, %v2194
      %v2225 = vadd.f32 %v1980, %v2195
      %v2226 = vadd.f32 %v1981, %v2196
      %v2227 = vadd.f32 %v1982, %v2197
      %v2228 = vadd.f32 %v1983, %v2198
      %v2229 = vadd.f32 %v1984, %v2199
      %v2230 = vadd.f32 %v1985, %v2200
      %v2231 = vadd.f32 %v1986, %v2201
      %v2232 = vadd.f32 %v1987, %v2202
      %v2233 = vadd.f32 %v1988, %v2203
      %v2234 = vadd.f32 %v1989, %v2204
      %v2235 = vadd.f32 %v1990, %v2205
      %v2236 = vadd.f32 %v1991, %v2206
      %v2237 = vadd.f32 %v1992, %v2207
      %v2238 = vadd.f32 %v1993, %v2208
      %v2239 = vadd.f32 %v1994, %v2209
      %v2240 = vadd.f32 %v1995, %v2210
      %v2241 = vadd.f32 %v1996, %v2211
      %v2242 = vadd.f32 %v1997, %v2212
      %v2243 = vadd.f32 %v1998, %v2213
      %v2244 = vadd.f32 %v1999, %v2214
      %v2245 = vadd.f32 %v2000, %v2215
      %v2246 = vadd.f32 %v2001, %v2216
      %v2247 = vadd.f32 %v2002, %v2217
      %v2248 = vadd.f32 %v2003, %v2218
      %v2249 = vadd.f32 %v2004, %v2219
      %v2250 = vadd.f32 %v2005, %v2220
      %v2251 = vadd.f32 %v2006, %v2221
      %v2252 = vadd.f32 %v2007, %v2222
      %2253 = vset.pattern.permute.xlu0 1
      %2254 = vperm.xlu0 %2253, %v2009
      %v2255 = vpop.permute.xlu0 %2254
      %2257 = vset.pattern.permute.xlu0 1
      %2258 = vperm.xlu0 %2257, %v2010
      %v2259 = vpop.permute.xlu0 %2258
      %2261 = vset.pattern.permute.xlu0 1
      %2262 = vperm.xlu0 %2261, %v2011
      %v2263 = vpop.permute.xlu0 %2262
      %2265 = vset.pattern.permute.xlu0 1
      %2266 = vperm.xlu0 %2265, %v2012
      %v2267 = vpop.permute.xlu0 %2266
      %2269 = vset.pattern.permute.xlu0 1
      %2270 = vperm.xlu0 %2269, %v2013
      %v2271 = vpop.permute.xlu0 %2270
      %2273 = vset.pattern.permute.xlu0 1
      %2274 = vperm.xlu0 %2273, %v2014
      %v2275 = vpop.permute.xlu0 %2274
      %2277 = vset.pattern.permute.xlu0 1
      %2278 = vperm.xlu0 %2277, %v2015
      %v2279 = vpop.permute.xlu0 %2278
      %2281 = vset.pattern.permute.xlu0 1
      %2282 = vperm.xlu0 %2281, %v2016
      %v2283 = vpop.permute.xlu0 %2282
      %2285 = vset.pattern.permute.xlu0 1
      %2286 = vperm.xlu0 %2285, %v2017
      %v2287 = vpop.permute.xlu0 %2286
      %2289 = vset.pattern.permute.xlu0 1
      %2290 = vperm.xlu0 %2289, %v2018
      %v2291 = vpop.permute.xlu0 %2290
      %2293 = vset.pattern.permute.xlu0 1
      %2294 = vperm.xlu0 %2293, %v2019
      %v2295 = vpop.permute.xlu0 %2294
      %2297 = vset.pattern.permute.xlu0 1
      %2298 = vperm.xlu0 %2297, %v2020
      %v2299 = vpop.permute.xlu0 %2298
      %2301 = vset.pattern.permute.xlu0 1
      %2302 = vperm.xlu0 %2301, %v2021
      %v2303 = vpop.permute.xlu0 %2302
      %2305 = vset.pattern.permute.xlu0 1
      %2306 = vperm.xlu0 %2305, %v2022
      %v2307 = vpop.permute.xlu0 %2306
      %2309 = vset.pattern.permute.xlu0 1
      %2310 = vperm.xlu0 %2309, %v2023
      %v2311 = vpop.permute.xlu0 %2310
      %2313 = vset.pattern.permute.xlu0 1
      %2314 = vperm.xlu0 %2313, %v2024
      %v2315 = vpop.permute.xlu0 %2314
      %2317 = vset.pattern.permute.xlu0 1
      %2318 = vperm.xlu0 %2317, %v2025
      %v2319 = vpop.permute.xlu0 %2318
      %2321 = vset.pattern.permute.xlu0 1
      %2322 = vperm.xlu0 %2321, %v2026
      %v2323 = vpop.permute.xlu0 %2322
      %2325 = vset.pattern.permute.xlu0 1
      %2326 = vperm.xlu0 %2325, %v2027
      %v2327 = vpop.permute.xlu0 %2326
      %2329 = vset.pattern.permute.xlu0 1
      %2330 = vperm.xlu0 %2329, %v2028
      %v2331 = vpop.permute.xlu0 %2330
      %2333 = vset.pattern.permute.xlu0 1
      %2334 = vperm.xlu0 %2333, %v2029
      %v2335 = vpop.permute.xlu0 %2334
      %2337 = vset.pattern.permute.xlu0 1
      %2338 = vperm.xlu0 %2337, %v2030
      %v2339 = vpop.permute.xlu0 %2338
      %2341 = vset.pattern.permute.xlu0 1
      %2342 = vperm.xlu0 %2341, %v2031
      %v2343 = vpop.permute.xlu0 %2342
      %2345 = vset.pattern.permute.xlu0 1
      %2346 = vperm.xlu0 %2345, %v2032
      %v2347 = vpop.permute.xlu0 %2346
      %2349 = vset.pattern.permute.xlu0 1
      %2350 = vperm.xlu0 %2349, %v2033
      %v2351 = vpop.permute.xlu0 %2350
      %2353 = vset.pattern.permute.xlu0 1
      %2354 = vperm.xlu0 %2353, %v2034
      %v2355 = vpop.permute.xlu0 %2354
      %2357 = vset.pattern.permute.xlu0 1
      %2358 = vperm.xlu0 %2357, %v2035
      %v2359 = vpop.permute.xlu0 %2358
      %2361 = vset.pattern.permute.xlu0 1
      %2362 = vperm.xlu0 %2361, %v2036
      %v2363 = vpop.permute.xlu0 %2362
      %2365 = vset.pattern.permute.xlu0 1
      %2366 = vperm.xlu0 %2365, %v2037
      %v2367 = vpop.permute.xlu0 %2366
      %2369 = vset.pattern.permute.xlu0 1
      %2370 = vperm.xlu0 %2369, %v2038
      %v2371 = vpop.permute.xlu0 %2370
      %v2373 = vlaneseq
      %v2374 = vshrl.u32 %v2373, 7
      %v2375 = vsub.s32 2, %v2374
      %v2376 = vrot.slane %v199, %v2375
      %v2377 = vmul.f32 %v2255, %v2376
      %v2378 = vmul.f32 %v2259, %v2376
      %v2379 = vmul.f32 %v2263, %v2376
      %v2380 = vmul.f32 %v2267, %v2376
      %v2381 = vmul.f32 %v2271, %v2376
      %v2382 = vmul.f32 %v2275, %v2376
      %v2383 = vmul.f32 %v2279, %v2376
      %v2384 = vmul.f32 %v2283, %v2376
      %v2385 = vmul.f32 %v2287, %v2376
      %v2386 = vmul.f32 %v2291, %v2376
      %v2387 = vmul.f32 %v2295, %v2376
      %v2388 = vmul.f32 %v2299, %v2376
      %v2389 = vmul.f32 %v2303, %v2376
      %v2390 = vmul.f32 %v2307, %v2376
      %v2391 = vmul.f32 %v2311, %v2376
      %v2392 = vmul.f32 %v2315, %v2376
      %v2393 = vmul.f32 %v2319, %v2376
      %v2394 = vmul.f32 %v2323, %v2376
      %v2395 = vmul.f32 %v2327, %v2376
      %v2396 = vmul.f32 %v2331, %v2376
      %v2397 = vmul.f32 %v2335, %v2376
      %v2398 = vmul.f32 %v2339, %v2376
      %v2399 = vmul.f32 %v2343, %v2376
      %v2400 = vmul.f32 %v2347, %v2376
      %v2401 = vmul.f32 %v2351, %v2376
      %v2402 = vmul.f32 %v2355, %v2376
      %v2403 = vmul.f32 %v2359, %v2376
      %v2404 = vmul.f32 %v2363, %v2376
      %v2405 = vmul.f32 %v2367, %v2376
      %v2406 = vmul.f32 %v2371, %v2376
      %v2407 = vadd.f32 %v2223, %v2377
      %v2408 = vadd.f32 %v2224, %v2378
      %v2409 = vadd.f32 %v2225, %v2379
      %v2410 = vadd.f32 %v2226, %v2380
      %v2411 = vadd.f32 %v2227, %v2381
      %v2412 = vadd.f32 %v2228, %v2382
      %v2413 = vadd.f32 %v2229, %v2383
      %v2414 = vadd.f32 %v2230, %v2384
      %v2415 = vadd.f32 %v2231, %v2385
      %v2416 = vadd.f32 %v2232, %v2386
      %v2417 = vadd.f32 %v2233, %v2387
      %v2418 = vadd.f32 %v2234, %v2388
      %v2419 = vadd.f32 %v2235, %v2389
      %v2420 = vadd.f32 %v2236, %v2390
      %v2421 = vadd.f32 %v2237, %v2391
      %v2422 = vadd.f32 %v2238, %v2392
      %v2423 = vadd.f32 %v2239, %v2393
      %v2424 = vadd.f32 %v2240, %v2394
      %v2425 = vadd.f32 %v2241, %v2395
      %v2426 = vadd.f32 %v2242, %v2396
      %v2427 = vadd.f32 %v2243, %v2397
      %v2428 = vadd.f32 %v2244, %v2398
      %v2429 = vadd.f32 %v2245, %v2399
      %v2430 = vadd.f32 %v2246, %v2400
      %v2431 = vadd.f32 %v2247, %v2401
      %v2432 = vadd.f32 %v2248, %v2402
      %v2433 = vadd.f32 %v2249, %v2403
      %v2434 = vadd.f32 %v2250, %v2404
      %v2435 = vadd.f32 %v2251, %v2405
      %v2436 = vadd.f32 %v2252, %v2406
      %2437 = vset.pattern.permute.xlu0 2
      %2438 = vperm.xlu0 %2437, %v2009
      %v2439 = vpop.permute.xlu0 %2438
      %2441 = vset.pattern.permute.xlu0 2
      %2442 = vperm.xlu0 %2441, %v2010
      %v2443 = vpop.permute.xlu0 %2442
      %2445 = vset.pattern.permute.xlu0 2
      %2446 = vperm.xlu0 %2445, %v2011
      %v2447 = vpop.permute.xlu0 %2446
      %2449 = vset.pattern.permute.xlu0 2
      %2450 = vperm.xlu0 %2449, %v2012
      %v2451 = vpop.permute.xlu0 %2450
      %2453 = vset.pattern.permute.xlu0 2
      %2454 = vperm.xlu0 %2453, %v2013
      %v2455 = vpop.permute.xlu0 %2454
      %2457 = vset.pattern.permute.xlu0 2
      %2458 = vperm.xlu0 %2457, %v2014
      %v2459 = vpop.permute.xlu0 %2458
      %2461 = vset.pattern.permute.xlu0 2
      %2462 = vperm.xlu0 %2461, %v2015
      %v2463 = vpop.permute.xlu0 %2462
      %2465 = vset.pattern.permute.xlu0 2
      %2466 = vperm.xlu0 %2465, %v2016
      %v2467 = vpop.permute.xlu0 %2466
      %2469 = vset.pattern.permute.xlu0 2
      %2470 = vperm.xlu0 %2469, %v2017
      %v2471 = vpop.permute.xlu0 %2470
      %2473 = vset.pattern.permute.xlu0 2
      %2474 = vperm.xlu0 %2473, %v2018
      %v2475 = vpop.permute.xlu0 %2474
      %2477 = vset.pattern.permute.xlu0 2
      %2478 = vperm.xlu0 %2477, %v2019
      %v2479 = vpop.permute.xlu0 %2478
      %2481 = vset.pattern.permute.xlu0 2
      %2482 = vperm.xlu0 %2481, %v2020
      %v2483 = vpop.permute.xlu0 %2482
      %2485 = vset.pattern.permute.xlu0 2
      %2486 = vperm.xlu0 %2485, %v2021
      %v2487 = vpop.permute.xlu0 %2486
      %2489 = vset.pattern.permute.xlu0 2
      %2490 = vperm.xlu0 %2489, %v2022
      %v2491 = vpop.permute.xlu0 %2490
      %2493 = vset.pattern.permute.xlu0 2
      %2494 = vperm.xlu0 %2493, %v2023
      %v2495 = vpop.permute.xlu0 %2494
      %2497 = vset.pattern.permute.xlu0 2
      %2498 = vperm.xlu0 %2497, %v2024
      %v2499 = vpop.permute.xlu0 %2498
      %2501 = vset.pattern.permute.xlu0 2
      %2502 = vperm.xlu0 %2501, %v2025
      %v2503 = vpop.permute.xlu0 %2502
      %2505 = vset.pattern.permute.xlu0 2
      %2506 = vperm.xlu0 %2505, %v2026
      %v2507 = vpop.permute.xlu0 %2506
      %2509 = vset.pattern.permute.xlu0 2
      %2510 = vperm.xlu0 %2509, %v2027
      %v2511 = vpop.permute.xlu0 %2510
      %2513 = vset.pattern.permute.xlu0 2
      %2514 = vperm.xlu0 %2513, %v2028
      %v2515 = vpop.permute.xlu0 %2514
      %2517 = vset.pattern.permute.xlu0 2
      %2518 = vperm.xlu0 %2517, %v2029
      %v2519 = vpop.permute.xlu0 %2518
      %2521 = vset.pattern.permute.xlu0 2
      %2522 = vperm.xlu0 %2521, %v2030
      %v2523 = vpop.permute.xlu0 %2522
      %2525 = vset.pattern.permute.xlu0 2
      %2526 = vperm.xlu0 %2525, %v2031
      %v2527 = vpop.permute.xlu0 %2526
      %2529 = vset.pattern.permute.xlu0 2
      %2530 = vperm.xlu0 %2529, %v2032
      %v2531 = vpop.permute.xlu0 %2530
      %2533 = vset.pattern.permute.xlu0 2
      %2534 = vperm.xlu0 %2533, %v2033
      %v2535 = vpop.permute.xlu0 %2534
      %2537 = vset.pattern.permute.xlu0 2
      %2538 = vperm.xlu0 %2537, %v2034
      %v2539 = vpop.permute.xlu0 %2538
      %2541 = vset.pattern.permute.xlu0 2
      %2542 = vperm.xlu0 %2541, %v2035
      %v2543 = vpop.permute.xlu0 %2542
      %2545 = vset.pattern.permute.xlu0 2
      %2546 = vperm.xlu0 %2545, %v2036
      %v2547 = vpop.permute.xlu0 %2546
      %2549 = vset.pattern.permute.xlu0 2
      %2550 = vperm.xlu0 %2549, %v2037
      %v2551 = vpop.permute.xlu0 %2550
      %2553 = vset.pattern.permute.xlu0 2
      %2554 = vperm.xlu0 %2553, %v2038
      %v2555 = vpop.permute.xlu0 %2554
      %v2557 = vlaneseq
      %v2558 = vshrl.u32 %v2557, 7
      %v2559 = vsub.s32 3, %v2558
      %v2560 = vrot.slane %v199, %v2559
      %v2561 = vmul.f32 %v2439, %v2560
      %v2562 = vmul.f32 %v2443, %v2560
      %v2563 = vmul.f32 %v2447, %v2560
      %v2564 = vmul.f32 %v2451, %v2560
      %v2565 = vmul.f32 %v2455, %v2560
      %v2566 = vmul.f32 %v2459, %v2560
      %v2567 = vmul.f32 %v2463, %v2560
      %v2568 = vmul.f32 %v2467, %v2560
      %v2569 = vmul.f32 %v2471, %v2560
      %v2570 = vmul.f32 %v2475, %v2560
      %v2571 = vmul.f32 %v2479, %v2560
      %v2572 = vmul.f32 %v2483, %v2560
      %v2573 = vmul.f32 %v2487, %v2560
      %v2574 = vmul.f32 %v2491, %v2560
      %v2575 = vmul.f32 %v2495, %v2560
      %v2576 = vmul.f32 %v2499, %v2560
      %v2577 = vmul.f32 %v2503, %v2560
      %v2578 = vmul.f32 %v2507, %v2560
      %v2579 = vmul.f32 %v2511, %v2560
      %v2580 = vmul.f32 %v2515, %v2560
      %v2581 = vmul.f32 %v2519, %v2560
      %v2582 = vmul.f32 %v2523, %v2560
      %v2583 = vmul.f32 %v2527, %v2560
      %v2584 = vmul.f32 %v2531, %v2560
      %v2585 = vmul.f32 %v2535, %v2560
      %v2586 = vmul.f32 %v2539, %v2560
      %v2587 = vmul.f32 %v2543, %v2560
      %v2588 = vmul.f32 %v2547, %v2560
      %v2589 = vmul.f32 %v2551, %v2560
      %v2590 = vmul.f32 %v2555, %v2560
      %v2591 = vadd.f32 %v2407, %v2561
      %v2592 = vadd.f32 %v2408, %v2562
      %v2593 = vadd.f32 %v2409, %v2563
      %v2594 = vadd.f32 %v2410, %v2564
      %v2595 = vadd.f32 %v2411, %v2565
      %v2596 = vadd.f32 %v2412, %v2566
      %v2597 = vadd.f32 %v2413, %v2567
      %v2598 = vadd.f32 %v2414, %v2568
      %v2599 = vadd.f32 %v2415, %v2569
      %v2600 = vadd.f32 %v2416, %v2570
      %v2601 = vadd.f32 %v2417, %v2571
      %v2602 = vadd.f32 %v2418, %v2572
      %v2603 = vadd.f32 %v2419, %v2573
      %v2604 = vadd.f32 %v2420, %v2574
      %v2605 = vadd.f32 %v2421, %v2575
      %v2606 = vadd.f32 %v2422, %v2576
      %v2607 = vadd.f32 %v2423, %v2577
      %v2608 = vadd.f32 %v2424, %v2578
      %v2609 = vadd.f32 %v2425, %v2579
      %v2610 = vadd.f32 %v2426, %v2580
      %v2611 = vadd.f32 %v2427, %v2581
      %v2612 = vadd.f32 %v2428, %v2582
      %v2613 = vadd.f32 %v2429, %v2583
      %v2614 = vadd.f32 %v2430, %v2584
      %v2615 = vadd.f32 %v2431, %v2585
      %v2616 = vadd.f32 %v2432, %v2586
      %v2617 = vadd.f32 %v2433, %v2587
      %v2618 = vadd.f32 %v2434, %v2588
      %v2619 = vadd.f32 %v2435, %v2589
      %v2620 = vadd.f32 %v2436, %v2590
      %v2621 = vld [vmem:[%s2008 + $0x1] sm:$0xff]
      %v2622 = vld [vmem:[%s2008 + $0x9] sm:$0x7f]
      %v2623 = vld [vmem:[%s2008 + $0x19] sm:$0xff]
      %v2624 = vld [vmem:[%s2008 + $0x21] sm:$0x7f]
      %v2625 = vld [vmem:[%s2008 + $0x31] sm:$0xff]
      %v2626 = vld [vmem:[%s2008 + $0x39] sm:$0x7f]
      %v2627 = vld [vmem:[%s2008 + $0x49] sm:$0xff]
      %v2628 = vld [vmem:[%s2008 + $0x51] sm:$0x7f]
      %v2629 = vld [vmem:[%s2008 + $0x61] sm:$0xff]
      %v2630 = vld [vmem:[%s2008 + $0x69] sm:$0x7f]
      %v2631 = vld [vmem:[%s2008 + $0x79] sm:$0xff]
      %v2632 = vld [vmem:[%s2008 + $0x81] sm:$0x7f]
      %v2633 = vld [vmem:[%s2008 + $0x91] sm:$0xff]
      %v2634 = vld [vmem:[%s2008 + $0x99] sm:$0x7f]
      %v2635 = vld [vmem:[%s2008 + $0xa9] sm:$0xff]
      %v2636 = vld [vmem:[%s2008 + $0xb1] sm:$0x7f]
      %v2637 = vld [vmem:[%s2008 + $0xc1] sm:$0xff]
      %v2638 = vld [vmem:[%s2008 + $0xc9] sm:$0x7f]
      %v2639 = vld [vmem:[%s2008 + $0xd9] sm:$0xff]
      %v2640 = vld [vmem:[%s2008 + $0xe1] sm:$0x7f]
      %v2641 = vld [vmem:[%s2008 + $0xf1] sm:$0xff]
      %v2642 = vld [vmem:[%s2008 + $0xf9] sm:$0x7f]
      %v2643 = vld [vmem:[%s2008 + $0x109] sm:$0xff]
      %v2644 = vld [vmem:[%s2008 + $0x111] sm:$0x7f]
      %v2645 = vld [vmem:[%s2008 + $0x121] sm:$0xff]
      %v2646 = vld [vmem:[%s2008 + $0x129] sm:$0x7f]
      %v2647 = vld [vmem:[%s2008 + $0x139] sm:$0xff]
      %v2648 = vld [vmem:[%s2008 + $0x141] sm:$0x7f]
      %v2649 = vld [vmem:[%s2008 + $0x151] sm:$0xff]
      %v2650 = vld [vmem:[%s2008 + $0x159] sm:$0x7f]
      %2652 = vset.pattern.permute.xlu0 0
      %2653 = vperm.xlu0 %2652, %v2621
      %v2654 = vpop.permute.xlu0 %2653
      %2657 = vset.pattern.permute.xlu0 0
      %2658 = vperm.xlu0 %2657, %v2622
      %v2659 = vpop.permute.xlu0 %2658
      %2662 = vset.pattern.permute.xlu0 0
      %2663 = vperm.xlu0 %2662, %v2623
      %v2664 = vpop.permute.xlu0 %2663
      %2667 = vset.pattern.permute.xlu0 0
      %2668 = vperm.xlu0 %2667, %v2624
      %v2669 = vpop.permute.xlu0 %2668
      %2672 = vset.pattern.permute.xlu0 0
      %2673 = vperm.xlu0 %2672, %v2625
      %v2674 = vpop.permute.xlu0 %2673
      %2677 = vset.pattern.permute.xlu0 0
      %2678 = vperm.xlu0 %2677, %v2626
      %v2679 = vpop.permute.xlu0 %2678
      %2682 = vset.pattern.permute.xlu0 0
      %2683 = vperm.xlu0 %2682, %v2627
      %v2684 = vpop.permute.xlu0 %2683
      %2687 = vset.pattern.permute.xlu0 0
      %2688 = vperm.xlu0 %2687, %v2628
      %v2689 = vpop.permute.xlu0 %2688
      %2692 = vset.pattern.permute.xlu0 0
      %2693 = vperm.xlu0 %2692, %v2629
      %v2694 = vpop.permute.xlu0 %2693
      %2697 = vset.pattern.permute.xlu0 0
      %2698 = vperm.xlu0 %2697, %v2630
      %v2699 = vpop.permute.xlu0 %2698
      %2702 = vset.pattern.permute.xlu0 0
      %2703 = vperm.xlu0 %2702, %v2631
      %v2704 = vpop.permute.xlu0 %2703
      %2707 = vset.pattern.permute.xlu0 0
      %2708 = vperm.xlu0 %2707, %v2632
      %v2709 = vpop.permute.xlu0 %2708
      %2712 = vset.pattern.permute.xlu0 0
      %2713 = vperm.xlu0 %2712, %v2633
      %v2714 = vpop.permute.xlu0 %2713
      %2717 = vset.pattern.permute.xlu0 0
      %2718 = vperm.xlu0 %2717, %v2634
      %v2719 = vpop.permute.xlu0 %2718
      %2722 = vset.pattern.permute.xlu0 0
      %2723 = vperm.xlu0 %2722, %v2635
      %v2724 = vpop.permute.xlu0 %2723
      %2727 = vset.pattern.permute.xlu0 0
      %2728 = vperm.xlu0 %2727, %v2636
      %v2729 = vpop.permute.xlu0 %2728
      %2732 = vset.pattern.permute.xlu0 0
      %2733 = vperm.xlu0 %2732, %v2637
      %v2734 = vpop.permute.xlu0 %2733
      %2737 = vset.pattern.permute.xlu0 0
      %2738 = vperm.xlu0 %2737, %v2638
      %v2739 = vpop.permute.xlu0 %2738
      %2742 = vset.pattern.permute.xlu0 0
      %2743 = vperm.xlu0 %2742, %v2639
      %v2744 = vpop.permute.xlu0 %2743
      %2747 = vset.pattern.permute.xlu0 0
      %2748 = vperm.xlu0 %2747, %v2640
      %v2749 = vpop.permute.xlu0 %2748
      %2752 = vset.pattern.permute.xlu0 0
      %2753 = vperm.xlu0 %2752, %v2641
      %v2754 = vpop.permute.xlu0 %2753
      %2757 = vset.pattern.permute.xlu0 0
      %2758 = vperm.xlu0 %2757, %v2642
      %v2759 = vpop.permute.xlu0 %2758
      %2762 = vset.pattern.permute.xlu0 0
      %2763 = vperm.xlu0 %2762, %v2643
      %v2764 = vpop.permute.xlu0 %2763
      %2767 = vset.pattern.permute.xlu0 0
      %2768 = vperm.xlu0 %2767, %v2644
      %v2769 = vpop.permute.xlu0 %2768
      %2772 = vset.pattern.permute.xlu0 0
      %2773 = vperm.xlu0 %2772, %v2645
      %v2774 = vpop.permute.xlu0 %2773
      %2777 = vset.pattern.permute.xlu0 0
      %2778 = vperm.xlu0 %2777, %v2646
      %v2779 = vpop.permute.xlu0 %2778
      %2782 = vset.pattern.permute.xlu0 0
      %2783 = vperm.xlu0 %2782, %v2647
      %v2784 = vpop.permute.xlu0 %2783
      %2787 = vset.pattern.permute.xlu0 0
      %2788 = vperm.xlu0 %2787, %v2648
      %v2789 = vpop.permute.xlu0 %2788
      %2792 = vset.pattern.permute.xlu0 0
      %2793 = vperm.xlu0 %2792, %v2649
      %v2794 = vpop.permute.xlu0 %2793
      %2797 = vset.pattern.permute.xlu0 0
      %2798 = vperm.xlu0 %2797, %v2650
      %v2799 = vpop.permute.xlu0 %2798
      %v2801 = vlaneseq
      %v2802 = vshrl.u32 %v2801, 7
      %v2803 = vsub.s32 4, %v2802
      %v2804 = vrot.slane %v199, %v2803
      %v2805 = vmul.f32 %v2654, %v2804
      %v2806 = vmul.f32 %v2659, %v2804
      %v2807 = vmul.f32 %v2664, %v2804
      %v2808 = vmul.f32 %v2669, %v2804
      %v2809 = vmul.f32 %v2674, %v2804
      %v2810 = vmul.f32 %v2679, %v2804
      %v2811 = vmul.f32 %v2684, %v2804
      %v2812 = vmul.f32 %v2689, %v2804
      %v2813 = vmul.f32 %v2694, %v2804
      %v2814 = vmul.f32 %v2699, %v2804
      %v2815 = vmul.f32 %v2704, %v2804
      %v2816 = vmul.f32 %v2709, %v2804
      %v2817 = vmul.f32 %v2714, %v2804
      %v2818 = vmul.f32 %v2719, %v2804
      %v2819 = vmul.f32 %v2724, %v2804
      %v2820 = vmul.f32 %v2729, %v2804
      %v2821 = vmul.f32 %v2734, %v2804
      %v2822 = vmul.f32 %v2739, %v2804
      %v2823 = vmul.f32 %v2744, %v2804
      %v2824 = vmul.f32 %v2749, %v2804
      %v2825 = vmul.f32 %v2754, %v2804
      %v2826 = vmul.f32 %v2759, %v2804
      %v2827 = vmul.f32 %v2764, %v2804
      %v2828 = vmul.f32 %v2769, %v2804
      %v2829 = vmul.f32 %v2774, %v2804
      %v2830 = vmul.f32 %v2779, %v2804
      %v2831 = vmul.f32 %v2784, %v2804
      %v2832 = vmul.f32 %v2789, %v2804
      %v2833 = vmul.f32 %v2794, %v2804
      %v2834 = vmul.f32 %v2799, %v2804
      %v2835 = vadd.f32 %v2591, %v2805
      %v2836 = vadd.f32 %v2592, %v2806
      %v2837 = vadd.f32 %v2593, %v2807
      %v2838 = vadd.f32 %v2594, %v2808
      %v2839 = vadd.f32 %v2595, %v2809
      %v2840 = vadd.f32 %v2596, %v2810
      %v2841 = vadd.f32 %v2597, %v2811
      %v2842 = vadd.f32 %v2598, %v2812
      %v2843 = vadd.f32 %v2599, %v2813
      %v2844 = vadd.f32 %v2600, %v2814
      %v2845 = vadd.f32 %v2601, %v2815
      %v2846 = vadd.f32 %v2602, %v2816
      %v2847 = vadd.f32 %v2603, %v2817
      %v2848 = vadd.f32 %v2604, %v2818
      %v2849 = vadd.f32 %v2605, %v2819
      %v2850 = vadd.f32 %v2606, %v2820
      %v2851 = vadd.f32 %v2607, %v2821
      %v2852 = vadd.f32 %v2608, %v2822
      %v2853 = vadd.f32 %v2609, %v2823
      %v2854 = vadd.f32 %v2610, %v2824
      %v2855 = vadd.f32 %v2611, %v2825
      %v2856 = vadd.f32 %v2612, %v2826
      %v2857 = vadd.f32 %v2613, %v2827
      %v2858 = vadd.f32 %v2614, %v2828
      %v2859 = vadd.f32 %v2615, %v2829
      %v2860 = vadd.f32 %v2616, %v2830
      %v2861 = vadd.f32 %v2617, %v2831
      %v2862 = vadd.f32 %v2618, %v2832
      %v2863 = vadd.f32 %v2619, %v2833
      %v2864 = vadd.f32 %v2620, %v2834
      %2865 = vset.pattern.permute.xlu0 1
      %2866 = vperm.xlu0 %2865, %v2621
      %v2867 = vpop.permute.xlu0 %2866
      %2869 = vset.pattern.permute.xlu0 1
      %2870 = vperm.xlu0 %2869, %v2622
      %v2871 = vpop.permute.xlu0 %2870
      %2873 = vset.pattern.permute.xlu0 1
      %2874 = vperm.xlu0 %2873, %v2623
      %v2875 = vpop.permute.xlu0 %2874
      %2877 = vset.pattern.permute.xlu0 1
      %2878 = vperm.xlu0 %2877, %v2624
      %v2879 = vpop.permute.xlu0 %2878
      %2881 = vset.pattern.permute.xlu0 1
      %2882 = vperm.xlu0 %2881, %v2625
      %v2883 = vpop.permute.xlu0 %2882
      %2885 = vset.pattern.permute.xlu0 1
      %2886 = vperm.xlu0 %2885, %v2626
      %v2887 = vpop.permute.xlu0 %2886
      %2889 = vset.pattern.permute.xlu0 1
      %2890 = vperm.xlu0 %2889, %v2627
      %v2891 = vpop.permute.xlu0 %2890
      %2893 = vset.pattern.permute.xlu0 1
      %2894 = vperm.xlu0 %2893, %v2628
      %v2895 = vpop.permute.xlu0 %2894
      %2897 = vset.pattern.permute.xlu0 1
      %2898 = vperm.xlu0 %2897, %v2629
      %v2899 = vpop.permute.xlu0 %2898
      %2901 = vset.pattern.permute.xlu0 1
      %2902 = vperm.xlu0 %2901, %v2630
      %v2903 = vpop.permute.xlu0 %2902
      %2905 = vset.pattern.permute.xlu0 1
      %2906 = vperm.xlu0 %2905, %v2631
      %v2907 = vpop.permute.xlu0 %2906
      %2909 = vset.pattern.permute.xlu0 1
      %2910 = vperm.xlu0 %2909, %v2632
      %v2911 = vpop.permute.xlu0 %2910
      %2913 = vset.pattern.permute.xlu0 1
      %2914 = vperm.xlu0 %2913, %v2633
      %v2915 = vpop.permute.xlu0 %2914
      %2917 = vset.pattern.permute.xlu0 1
      %2918 = vperm.xlu0 %2917, %v2634
      %v2919 = vpop.permute.xlu0 %2918
      %2921 = vset.pattern.permute.xlu0 1
      %2922 = vperm.xlu0 %2921, %v2635
      %v2923 = vpop.permute.xlu0 %2922
      %2925 = vset.pattern.permute.xlu0 1
      %2926 = vperm.xlu0 %2925, %v2636
      %v2927 = vpop.permute.xlu0 %2926
      %2929 = vset.pattern.permute.xlu0 1
      %2930 = vperm.xlu0 %2929, %v2637
      %v2931 = vpop.permute.xlu0 %2930
      %2933 = vset.pattern.permute.xlu0 1
      %2934 = vperm.xlu0 %2933, %v2638
      %v2935 = vpop.permute.xlu0 %2934
      %2937 = vset.pattern.permute.xlu0 1
      %2938 = vperm.xlu0 %2937, %v2639
      %v2939 = vpop.permute.xlu0 %2938
      %2941 = vset.pattern.permute.xlu0 1
      %2942 = vperm.xlu0 %2941, %v2640
      %v2943 = vpop.permute.xlu0 %2942
      %2945 = vset.pattern.permute.xlu0 1
      %2946 = vperm.xlu0 %2945, %v2641
      %v2947 = vpop.permute.xlu0 %2946
      %2949 = vset.pattern.permute.xlu0 1
      %2950 = vperm.xlu0 %2949, %v2642
      %v2951 = vpop.permute.xlu0 %2950
      %2953 = vset.pattern.permute.xlu0 1
      %2954 = vperm.xlu0 %2953, %v2643
      %v2955 = vpop.permute.xlu0 %2954
      %2957 = vset.pattern.permute.xlu0 1
      %2958 = vperm.xlu0 %2957, %v2644
      %v2959 = vpop.permute.xlu0 %2958
      %2961 = vset.pattern.permute.xlu0 1
      %2962 = vperm.xlu0 %2961, %v2645
      %v2963 = vpop.permute.xlu0 %2962
      %2965 = vset.pattern.permute.xlu0 1
      %2966 = vperm.xlu0 %2965, %v2646
      %v2967 = vpop.permute.xlu0 %2966
      %2969 = vset.pattern.permute.xlu0 1
      %2970 = vperm.xlu0 %2969, %v2647
      %v2971 = vpop.permute.xlu0 %2970
      %2973 = vset.pattern.permute.xlu0 1
      %2974 = vperm.xlu0 %2973, %v2648
      %v2975 = vpop.permute.xlu0 %2974
      %2977 = vset.pattern.permute.xlu0 1
      %2978 = vperm.xlu0 %2977, %v2649
      %v2979 = vpop.permute.xlu0 %2978
      %2981 = vset.pattern.permute.xlu0 1
      %2982 = vperm.xlu0 %2981, %v2650
      %v2983 = vpop.permute.xlu0 %2982
      %v2985 = vlaneseq
      %v2986 = vshrl.u32 %v2985, 7
      %v2987 = vsub.s32 5, %v2986
      %v2988 = vrot.slane %v199, %v2987
      %v2989 = vmul.f32 %v2867, %v2988
      %v2990 = vmul.f32 %v2871, %v2988
      %v2991 = vmul.f32 %v2875, %v2988
      %v2992 = vmul.f32 %v2879, %v2988
      %v2993 = vmul.f32 %v2883, %v2988
      %v2994 = vmul.f32 %v2887, %v2988
      %v2995 = vmul.f32 %v2891, %v2988
      %v2996 = vmul.f32 %v2895, %v2988
      %v2997 = vmul.f32 %v2899, %v2988
      %v2998 = vmul.f32 %v2903, %v2988
      %v2999 = vmul.f32 %v2907, %v2988
      %v3000 = vmul.f32 %v2911, %v2988
      %v3001 = vmul.f32 %v2915, %v2988
      %v3002 = vmul.f32 %v2919, %v2988
      %v3003 = vmul.f32 %v2923, %v2988
      %v3004 = vmul.f32 %v2927, %v2988
      %v3005 = vmul.f32 %v2931, %v2988
      %v3006 = vmul.f32 %v2935, %v2988
      %v3007 = vmul.f32 %v2939, %v2988
      %v3008 = vmul.f32 %v2943, %v2988
      %v3009 = vmul.f32 %v2947, %v2988
      %v3010 = vmul.f32 %v2951, %v2988
      %v3011 = vmul.f32 %v2955, %v2988
      %v3012 = vmul.f32 %v2959, %v2988
      %v3013 = vmul.f32 %v2963, %v2988
      %v3014 = vmul.f32 %v2967, %v2988
      %v3015 = vmul.f32 %v2971, %v2988
      %v3016 = vmul.f32 %v2975, %v2988
      %v3017 = vmul.f32 %v2979, %v2988
      %v3018 = vmul.f32 %v2983, %v2988
      %v3019 = vadd.f32 %v2835, %v2989
      %v3020 = vadd.f32 %v2836, %v2990
      %v3021 = vadd.f32 %v2837, %v2991
      %v3022 = vadd.f32 %v2838, %v2992
      %v3023 = vadd.f32 %v2839, %v2993
      %v3024 = vadd.f32 %v2840, %v2994
      %v3025 = vadd.f32 %v2841, %v2995
      %v3026 = vadd.f32 %v2842, %v2996
      %v3027 = vadd.f32 %v2843, %v2997
      %v3028 = vadd.f32 %v2844, %v2998
      %v3029 = vadd.f32 %v2845, %v2999
      %v3030 = vadd.f32 %v2846, %v3000
      %v3031 = vadd.f32 %v2847, %v3001
      %v3032 = vadd.f32 %v2848, %v3002
      %v3033 = vadd.f32 %v2849, %v3003
      %v3034 = vadd.f32 %v2850, %v3004
      %v3035 = vadd.f32 %v2851, %v3005
      %v3036 = vadd.f32 %v2852, %v3006
      %v3037 = vadd.f32 %v2853, %v3007
      %v3038 = vadd.f32 %v2854, %v3008
      %v3039 = vadd.f32 %v2855, %v3009
      %v3040 = vadd.f32 %v2856, %v3010
      %v3041 = vadd.f32 %v2857, %v3011
      %v3042 = vadd.f32 %v2858, %v3012
      %v3043 = vadd.f32 %v2859, %v3013
      %v3044 = vadd.f32 %v2860, %v3014
      %v3045 = vadd.f32 %v2861, %v3015
      %v3046 = vadd.f32 %v2862, %v3016
      %v3047 = vadd.f32 %v2863, %v3017
      %v3048 = vadd.f32 %v2864, %v3018
      %3049 = vset.pattern.permute.xlu0 2
      %3050 = vperm.xlu0 %3049, %v2621
      %v3051 = vpop.permute.xlu0 %3050
      %3053 = vset.pattern.permute.xlu0 2
      %3054 = vperm.xlu0 %3053, %v2622
      %v3055 = vpop.permute.xlu0 %3054
      %3057 = vset.pattern.permute.xlu0 2
      %3058 = vperm.xlu0 %3057, %v2623
      %v3059 = vpop.permute.xlu0 %3058
      %3061 = vset.pattern.permute.xlu0 2
      %3062 = vperm.xlu0 %3061, %v2624
      %v3063 = vpop.permute.xlu0 %3062
      %3065 = vset.pattern.permute.xlu0 2
      %3066 = vperm.xlu0 %3065, %v2625
      %v3067 = vpop.permute.xlu0 %3066
      %3069 = vset.pattern.permute.xlu0 2
      %3070 = vperm.xlu0 %3069, %v2626
      %v3071 = vpop.permute.xlu0 %3070
      %3073 = vset.pattern.permute.xlu0 2
      %3074 = vperm.xlu0 %3073, %v2627
      %v3075 = vpop.permute.xlu0 %3074
      %3077 = vset.pattern.permute.xlu0 2
      %3078 = vperm.xlu0 %3077, %v2628
      %v3079 = vpop.permute.xlu0 %3078
      %3081 = vset.pattern.permute.xlu0 2
      %3082 = vperm.xlu0 %3081, %v2629
      %v3083 = vpop.permute.xlu0 %3082
      %3085 = vset.pattern.permute.xlu0 2
      %3086 = vperm.xlu0 %3085, %v2630
      %v3087 = vpop.permute.xlu0 %3086
      %3089 = vset.pattern.permute.xlu0 2
      %3090 = vperm.xlu0 %3089, %v2631
      %v3091 = vpop.permute.xlu0 %3090
      %3093 = vset.pattern.permute.xlu0 2
      %3094 = vperm.xlu0 %3093, %v2632
      %v3095 = vpop.permute.xlu0 %3094
      %3097 = vset.pattern.permute.xlu0 2
      %3098 = vperm.xlu0 %3097, %v2633
      %v3099 = vpop.permute.xlu0 %3098
      %3101 = vset.pattern.permute.xlu0 2
      %3102 = vperm.xlu0 %3101, %v2634
      %v3103 = vpop.permute.xlu0 %3102
      %3105 = vset.pattern.permute.xlu0 2
      %3106 = vperm.xlu0 %3105, %v2635
      %v3107 = vpop.permute.xlu0 %3106
      %3109 = vset.pattern.permute.xlu0 2
      %3110 = vperm.xlu0 %3109, %v2636
      %v3111 = vpop.permute.xlu0 %3110
      %3113 = vset.pattern.permute.xlu0 2
      %3114 = vperm.xlu0 %3113, %v2637
      %v3115 = vpop.permute.xlu0 %3114
      %3117 = vset.pattern.permute.xlu0 2
      %3118 = vperm.xlu0 %3117, %v2638
      %v3119 = vpop.permute.xlu0 %3118
      %3121 = vset.pattern.permute.xlu0 2
      %3122 = vperm.xlu0 %3121, %v2639
      %v3123 = vpop.permute.xlu0 %3122
      %3125 = vset.pattern.permute.xlu0 2
      %3126 = vperm.xlu0 %3125, %v2640
      %v3127 = vpop.permute.xlu0 %3126
      %3129 = vset.pattern.permute.xlu0 2
      %3130 = vperm.xlu0 %3129, %v2641
      %v3131 = vpop.permute.xlu0 %3130
      %3133 = vset.pattern.permute.xlu0 2
      %3134 = vperm.xlu0 %3133, %v2642
      %v3135 = vpop.permute.xlu0 %3134
      %3137 = vset.pattern.permute.xlu0 2
      %3138 = vperm.xlu0 %3137, %v2643
      %v3139 = vpop.permute.xlu0 %3138
      %3141 = vset.pattern.permute.xlu0 2
      %3142 = vperm.xlu0 %3141, %v2644
      %v3143 = vpop.permute.xlu0 %3142
      %3145 = vset.pattern.permute.xlu0 2
      %3146 = vperm.xlu0 %3145, %v2645
      %v3147 = vpop.permute.xlu0 %3146
      %3149 = vset.pattern.permute.xlu0 2
      %3150 = vperm.xlu0 %3149, %v2646
      %v3151 = vpop.permute.xlu0 %3150
      %3153 = vset.pattern.permute.xlu0 2
      %3154 = vperm.xlu0 %3153, %v2647
      %v3155 = vpop.permute.xlu0 %3154
      %3157 = vset.pattern.permute.xlu0 2
      %3158 = vperm.xlu0 %3157, %v2648
      %v3159 = vpop.permute.xlu0 %3158
      %3161 = vset.pattern.permute.xlu0 2
      %3162 = vperm.xlu0 %3161, %v2649
      %v3163 = vpop.permute.xlu0 %3162
      %3165 = vset.pattern.permute.xlu0 2
      %3166 = vperm.xlu0 %3165, %v2650
      %v3167 = vpop.permute.xlu0 %3166
      %v3169 = vlaneseq
      %v3170 = vshrl.u32 %v3169, 7
      %v3171 = vsub.s32 6, %v3170
      %v3172 = vrot.slane %v199, %v3171
      %v3173 = vmul.f32 %v3051, %v3172
      %v3174 = vmul.f32 %v3055, %v3172
      %v3175 = vmul.f32 %v3059, %v3172
      %v3176 = vmul.f32 %v3063, %v3172
      %v3177 = vmul.f32 %v3067, %v3172
      %v3178 = vmul.f32 %v3071, %v3172
      %v3179 = vmul.f32 %v3075, %v3172
      %v3180 = vmul.f32 %v3079, %v3172
      %v3181 = vmul.f32 %v3083, %v3172
      %v3182 = vmul.f32 %v3087, %v3172
      %v3183 = vmul.f32 %v3091, %v3172
      %v3184 = vmul.f32 %v3095, %v3172
      %v3185 = vmul.f32 %v3099, %v3172
      %v3186 = vmul.f32 %v3103, %v3172
      %v3187 = vmul.f32 %v3107, %v3172
      %v3188 = vmul.f32 %v3111, %v3172
      %v3189 = vmul.f32 %v3115, %v3172
      %v3190 = vmul.f32 %v3119, %v3172
      %v3191 = vmul.f32 %v3123, %v3172
      %v3192 = vmul.f32 %v3127, %v3172
      %v3193 = vmul.f32 %v3131, %v3172
      %v3194 = vmul.f32 %v3135, %v3172
      %v3195 = vmul.f32 %v3139, %v3172
      %v3196 = vmul.f32 %v3143, %v3172
      %v3197 = vmul.f32 %v3147, %v3172
      %v3198 = vmul.f32 %v3151, %v3172
      %v3199 = vmul.f32 %v3155, %v3172
      %v3200 = vmul.f32 %v3159, %v3172
      %v3201 = vmul.f32 %v3163, %v3172
      %v3202 = vmul.f32 %v3167, %v3172
      %v3203 = vadd.f32 %v3019, %v3173
      %v3204 = vadd.f32 %v3020, %v3174
      %v3205 = vadd.f32 %v3021, %v3175
      %v3206 = vadd.f32 %v3022, %v3176
      %v3207 = vadd.f32 %v3023, %v3177
      %v3208 = vadd.f32 %v3024, %v3178
      %v3209 = vadd.f32 %v3025, %v3179
      %v3210 = vadd.f32 %v3026, %v3180
      %v3211 = vadd.f32 %v3027, %v3181
      %v3212 = vadd.f32 %v3028, %v3182
      %v3213 = vadd.f32 %v3029, %v3183
      %v3214 = vadd.f32 %v3030, %v3184
      %v3215 = vadd.f32 %v3031, %v3185
      %v3216 = vadd.f32 %v3032, %v3186
      %v3217 = vadd.f32 %v3033, %v3187
      %v3218 = vadd.f32 %v3034, %v3188
      %v3219 = vadd.f32 %v3035, %v3189
      %v3220 = vadd.f32 %v3036, %v3190
      %v3221 = vadd.f32 %v3037, %v3191
      %v3222 = vadd.f32 %v3038, %v3192
      %v3223 = vadd.f32 %v3039, %v3193
      %v3224 = vadd.f32 %v3040, %v3194
      %v3225 = vadd.f32 %v3041, %v3195
      %v3226 = vadd.f32 %v3042, %v3196
      %v3227 = vadd.f32 %v3043, %v3197
      %v3228 = vadd.f32 %v3044, %v3198
      %v3229 = vadd.f32 %v3045, %v3199
      %v3230 = vadd.f32 %v3046, %v3200
      %v3231 = vadd.f32 %v3047, %v3201
      %v3232 = vadd.f32 %v3048, %v3202
      %v3233 = vld [vmem:[%s2008 + $0x2] sm:$0xff]
      %v3234 = vld [vmem:[%s2008 + $0xa] sm:$0x7f]
      %v3235 = vld [vmem:[%s2008 + $0x1a] sm:$0xff]
      %v3236 = vld [vmem:[%s2008 + $0x22] sm:$0x7f]
      %v3237 = vld [vmem:[%s2008 + $0x32] sm:$0xff]
      %v3238 = vld [vmem:[%s2008 + $0x3a] sm:$0x7f]
      %v3239 = vld [vmem:[%s2008 + $0x4a] sm:$0xff]
      %v3240 = vld [vmem:[%s2008 + $0x52] sm:$0x7f]
      %v3241 = vld [vmem:[%s2008 + $0x62] sm:$0xff]
      %v3242 = vld [vmem:[%s2008 + $0x6a] sm:$0x7f]
      %v3243 = vld [vmem:[%s2008 + $0x7a] sm:$0xff]
      %v3244 = vld [vmem:[%s2008 + $0x82] sm:$0x7f]
      %v3245 = vld [vmem:[%s2008 + $0x92] sm:$0xff]
      %v3246 = vld [vmem:[%s2008 + $0x9a] sm:$0x7f]
      %v3247 = vld [vmem:[%s2008 + $0xaa] sm:$0xff]
      %v3248 = vld [vmem:[%s2008 + $0xb2] sm:$0x7f]
      %v3249 = vld [vmem:[%s2008 + $0xc2] sm:$0xff]
      %v3250 = vld [vmem:[%s2008 + $0xca] sm:$0x7f]
      %v3251 = vld [vmem:[%s2008 + $0xda] sm:$0xff]
      %v3252 = vld [vmem:[%s2008 + $0xe2] sm:$0x7f]
      %v3253 = vld [vmem:[%s2008 + $0xf2] sm:$0xff]
      %v3254 = vld [vmem:[%s2008 + $0xfa] sm:$0x7f]
      %v3255 = vld [vmem:[%s2008 + $0x10a] sm:$0xff]
      %v3256 = vld [vmem:[%s2008 + $0x112] sm:$0x7f]
      %v3257 = vld [vmem:[%s2008 + $0x122] sm:$0xff]
      %v3258 = vld [vmem:[%s2008 + $0x12a] sm:$0x7f]
      %v3259 = vld [vmem:[%s2008 + $0x13a] sm:$0xff]
      %v3260 = vld [vmem:[%s2008 + $0x142] sm:$0x7f]
      %v3261 = vld [vmem:[%s2008 + $0x152] sm:$0xff]
      %v3262 = vld [vmem:[%s2008 + $0x15a] sm:$0x7f]
      %3264 = vset.pattern.permute.xlu0 0
      %3265 = vperm.xlu0 %3264, %v3233
      %v3266 = vpop.permute.xlu0 %3265
      %3269 = vset.pattern.permute.xlu0 0
      %3270 = vperm.xlu0 %3269, %v3234
      %v3271 = vpop.permute.xlu0 %3270
      %3274 = vset.pattern.permute.xlu0 0
      %3275 = vperm.xlu0 %3274, %v3235
      %v3276 = vpop.permute.xlu0 %3275
      %3279 = vset.pattern.permute.xlu0 0
      %3280 = vperm.xlu0 %3279, %v3236
      %v3281 = vpop.permute.xlu0 %3280
      %3284 = vset.pattern.permute.xlu0 0
      %3285 = vperm.xlu0 %3284, %v3237
      %v3286 = vpop.permute.xlu0 %3285
      %3289 = vset.pattern.permute.xlu0 0
      %3290 = vperm.xlu0 %3289, %v3238
      %v3291 = vpop.permute.xlu0 %3290
      %3294 = vset.pattern.permute.xlu0 0
      %3295 = vperm.xlu0 %3294, %v3239
      %v3296 = vpop.permute.xlu0 %3295
      %3299 = vset.pattern.permute.xlu0 0
      %3300 = vperm.xlu0 %3299, %v3240
      %v3301 = vpop.permute.xlu0 %3300
      %3304 = vset.pattern.permute.xlu0 0
      %3305 = vperm.xlu0 %3304, %v3241
      %v3306 = vpop.permute.xlu0 %3305
      %3309 = vset.pattern.permute.xlu0 0
      %3310 = vperm.xlu0 %3309, %v3242
      %v3311 = vpop.permute.xlu0 %3310
      %3314 = vset.pattern.permute.xlu0 0
      %3315 = vperm.xlu0 %3314, %v3243
      %v3316 = vpop.permute.xlu0 %3315
      %3319 = vset.pattern.permute.xlu0 0
      %3320 = vperm.xlu0 %3319, %v3244
      %v3321 = vpop.permute.xlu0 %3320
      %3324 = vset.pattern.permute.xlu0 0
      %3325 = vperm.xlu0 %3324, %v3245
      %v3326 = vpop.permute.xlu0 %3325
      %3329 = vset.pattern.permute.xlu0 0
      %3330 = vperm.xlu0 %3329, %v3246
      %v3331 = vpop.permute.xlu0 %3330
      %3334 = vset.pattern.permute.xlu0 0
      %3335 = vperm.xlu0 %3334, %v3247
      %v3336 = vpop.permute.xlu0 %3335
      %3339 = vset.pattern.permute.xlu0 0
      %3340 = vperm.xlu0 %3339, %v3248
      %v3341 = vpop.permute.xlu0 %3340
      %3344 = vset.pattern.permute.xlu0 0
      %3345 = vperm.xlu0 %3344, %v3249
      %v3346 = vpop.permute.xlu0 %3345
      %3349 = vset.pattern.permute.xlu0 0
      %3350 = vperm.xlu0 %3349, %v3250
      %v3351 = vpop.permute.xlu0 %3350
      %3354 = vset.pattern.permute.xlu0 0
      %3355 = vperm.xlu0 %3354, %v3251
      %v3356 = vpop.permute.xlu0 %3355
      %3359 = vset.pattern.permute.xlu0 0
      %3360 = vperm.xlu0 %3359, %v3252
      %v3361 = vpop.permute.xlu0 %3360
      %3364 = vset.pattern.permute.xlu0 0
      %3365 = vperm.xlu0 %3364, %v3253
      %v3366 = vpop.permute.xlu0 %3365
      %3369 = vset.pattern.permute.xlu0 0
      %3370 = vperm.xlu0 %3369, %v3254
      %v3371 = vpop.permute.xlu0 %3370
      %3374 = vset.pattern.permute.xlu0 0
      %3375 = vperm.xlu0 %3374, %v3255
      %v3376 = vpop.permute.xlu0 %3375
      %3379 = vset.pattern.permute.xlu0 0
      %3380 = vperm.xlu0 %3379, %v3256
      %v3381 = vpop.permute.xlu0 %3380
      %3384 = vset.pattern.permute.xlu0 0
      %3385 = vperm.xlu0 %3384, %v3257
      %v3386 = vpop.permute.xlu0 %3385
      %3389 = vset.pattern.permute.xlu0 0
      %3390 = vperm.xlu0 %3389, %v3258
      %v3391 = vpop.permute.xlu0 %3390
      %3394 = vset.pattern.permute.xlu0 0
      %3395 = vperm.xlu0 %3394, %v3259
      %v3396 = vpop.permute.xlu0 %3395
      %3399 = vset.pattern.permute.xlu0 0
      %3400 = vperm.xlu0 %3399, %v3260
      %v3401 = vpop.permute.xlu0 %3400
      %3404 = vset.pattern.permute.xlu0 0
      %3405 = vperm.xlu0 %3404, %v3261
      %v3406 = vpop.permute.xlu0 %3405
      %3409 = vset.pattern.permute.xlu0 0
      %3410 = vperm.xlu0 %3409, %v3262
      %v3411 = vpop.permute.xlu0 %3410
      %v3413 = vlaneseq
      %v3414 = vshrl.u32 %v3413, 7
      %v3415 = vsub.s32 7, %v3414
      %v3416 = vrot.slane %v199, %v3415
      %v3417 = vmul.f32 %v3266, %v3416
      %v3418 = vmul.f32 %v3271, %v3416
      %v3419 = vmul.f32 %v3276, %v3416
      %v3420 = vmul.f32 %v3281, %v3416
      %v3421 = vmul.f32 %v3286, %v3416
      %v3422 = vmul.f32 %v3291, %v3416
      %v3423 = vmul.f32 %v3296, %v3416
      %v3424 = vmul.f32 %v3301, %v3416
      %v3425 = vmul.f32 %v3306, %v3416
      %v3426 = vmul.f32 %v3311, %v3416
      %v3427 = vmul.f32 %v3316, %v3416
      %v3428 = vmul.f32 %v3321, %v3416
      %v3429 = vmul.f32 %v3326, %v3416
      %v3430 = vmul.f32 %v3331, %v3416
      %v3431 = vmul.f32 %v3336, %v3416
      %v3432 = vmul.f32 %v3341, %v3416
      %v3433 = vmul.f32 %v3346, %v3416
      %v3434 = vmul.f32 %v3351, %v3416
      %v3435 = vmul.f32 %v3356, %v3416
      %v3436 = vmul.f32 %v3361, %v3416
      %v3437 = vmul.f32 %v3366, %v3416
      %v3438 = vmul.f32 %v3371, %v3416
      %v3439 = vmul.f32 %v3376, %v3416
      %v3440 = vmul.f32 %v3381, %v3416
      %v3441 = vmul.f32 %v3386, %v3416
      %v3442 = vmul.f32 %v3391, %v3416
      %v3443 = vmul.f32 %v3396, %v3416
      %v3444 = vmul.f32 %v3401, %v3416
      %v3445 = vmul.f32 %v3406, %v3416
      %v3446 = vmul.f32 %v3411, %v3416
      %v3447 = vadd.f32 %v3203, %v3417
      %v3448 = vadd.f32 %v3204, %v3418
      %v3449 = vadd.f32 %v3205, %v3419
      %v3450 = vadd.f32 %v3206, %v3420
      %v3451 = vadd.f32 %v3207, %v3421
      %v3452 = vadd.f32 %v3208, %v3422
      %v3453 = vadd.f32 %v3209, %v3423
      %v3454 = vadd.f32 %v3210, %v3424
      %v3455 = vadd.f32 %v3211, %v3425
      %v3456 = vadd.f32 %v3212, %v3426
      %v3457 = vadd.f32 %v3213, %v3427
      %v3458 = vadd.f32 %v3214, %v3428
      %v3459 = vadd.f32 %v3215, %v3429
      %v3460 = vadd.f32 %v3216, %v3430
      %v3461 = vadd.f32 %v3217, %v3431
      %v3462 = vadd.f32 %v3218, %v3432
      %v3463 = vadd.f32 %v3219, %v3433
      %v3464 = vadd.f32 %v3220, %v3434
      %v3465 = vadd.f32 %v3221, %v3435
      %v3466 = vadd.f32 %v3222, %v3436
      %v3467 = vadd.f32 %v3223, %v3437
      %v3468 = vadd.f32 %v3224, %v3438
      %v3469 = vadd.f32 %v3225, %v3439
      %v3470 = vadd.f32 %v3226, %v3440
      %v3471 = vadd.f32 %v3227, %v3441
      %v3472 = vadd.f32 %v3228, %v3442
      %v3473 = vadd.f32 %v3229, %v3443
      %v3474 = vadd.f32 %v3230, %v3444
      %v3475 = vadd.f32 %v3231, %v3445
      %v3476 = vadd.f32 %v3232, %v3446
      %3477 = vset.pattern.permute.xlu0 1
      %3478 = vperm.xlu0 %3477, %v3233
      %v3479 = vpop.permute.xlu0 %3478
      %3481 = vset.pattern.permute.xlu0 1
      %3482 = vperm.xlu0 %3481, %v3234
      %v3483 = vpop.permute.xlu0 %3482
      %3485 = vset.pattern.permute.xlu0 1
      %3486 = vperm.xlu0 %3485, %v3235
      %v3487 = vpop.permute.xlu0 %3486
      %3489 = vset.pattern.permute.xlu0 1
      %3490 = vperm.xlu0 %3489, %v3236
      %v3491 = vpop.permute.xlu0 %3490
      %3493 = vset.pattern.permute.xlu0 1
      %3494 = vperm.xlu0 %3493, %v3237
      %v3495 = vpop.permute.xlu0 %3494
      %3497 = vset.pattern.permute.xlu0 1
      %3498 = vperm.xlu0 %3497, %v3238
      %v3499 = vpop.permute.xlu0 %3498
      %3501 = vset.pattern.permute.xlu0 1
      %3502 = vperm.xlu0 %3501, %v3239
      %v3503 = vpop.permute.xlu0 %3502
      %3505 = vset.pattern.permute.xlu0 1
      %3506 = vperm.xlu0 %3505, %v3240
      %v3507 = vpop.permute.xlu0 %3506
      %3509 = vset.pattern.permute.xlu0 1
      %3510 = vperm.xlu0 %3509, %v3241
      %v3511 = vpop.permute.xlu0 %3510
      %3513 = vset.pattern.permute.xlu0 1
      %3514 = vperm.xlu0 %3513, %v3242
      %v3515 = vpop.permute.xlu0 %3514
      %3517 = vset.pattern.permute.xlu0 1
      %3518 = vperm.xlu0 %3517, %v3243
      %v3519 = vpop.permute.xlu0 %3518
      %3521 = vset.pattern.permute.xlu0 1
      %3522 = vperm.xlu0 %3521, %v3244
      %v3523 = vpop.permute.xlu0 %3522
      %3525 = vset.pattern.permute.xlu0 1
      %3526 = vperm.xlu0 %3525, %v3245
      %v3527 = vpop.permute.xlu0 %3526
      %3529 = vset.pattern.permute.xlu0 1
      %3530 = vperm.xlu0 %3529, %v3246
      %v3531 = vpop.permute.xlu0 %3530
      %3533 = vset.pattern.permute.xlu0 1
      %3534 = vperm.xlu0 %3533, %v3247
      %v3535 = vpop.permute.xlu0 %3534
      %3537 = vset.pattern.permute.xlu0 1
      %3538 = vperm.xlu0 %3537, %v3248
      %v3539 = vpop.permute.xlu0 %3538
      %3541 = vset.pattern.permute.xlu0 1
      %3542 = vperm.xlu0 %3541, %v3249
      %v3543 = vpop.permute.xlu0 %3542
      %3545 = vset.pattern.permute.xlu0 1
      %3546 = vperm.xlu0 %3545, %v3250
      %v3547 = vpop.permute.xlu0 %3546
      %3549 = vset.pattern.permute.xlu0 1
      %3550 = vperm.xlu0 %3549, %v3251
      %v3551 = vpop.permute.xlu0 %3550
      %3553 = vset.pattern.permute.xlu0 1
      %3554 = vperm.xlu0 %3553, %v3252
      %v3555 = vpop.permute.xlu0 %3554
      %3557 = vset.pattern.permute.xlu0 1
      %3558 = vperm.xlu0 %3557, %v3253
      %v3559 = vpop.permute.xlu0 %3558
      %3561 = vset.pattern.permute.xlu0 1
      %3562 = vperm.xlu0 %3561, %v3254
      %v3563 = vpop.permute.xlu0 %3562
      %3565 = vset.pattern.permute.xlu0 1
      %3566 = vperm.xlu0 %3565, %v3255
      %v3567 = vpop.permute.xlu0 %3566
      %3569 = vset.pattern.permute.xlu0 1
      %3570 = vperm.xlu0 %3569, %v3256
      %v3571 = vpop.permute.xlu0 %3570
      %3573 = vset.pattern.permute.xlu0 1
      %3574 = vperm.xlu0 %3573, %v3257
      %v3575 = vpop.permute.xlu0 %3574
      %3577 = vset.pattern.permute.xlu0 1
      %3578 = vperm.xlu0 %3577, %v3258
      %v3579 = vpop.permute.xlu0 %3578
      %3581 = vset.pattern.permute.xlu0 1
      %3582 = vperm.xlu0 %3581, %v3259
      %v3583 = vpop.permute.xlu0 %3582
      %3585 = vset.pattern.permute.xlu0 1
      %3586 = vperm.xlu0 %3585, %v3260
      %v3587 = vpop.permute.xlu0 %3586
      %3589 = vset.pattern.permute.xlu0 1
      %3590 = vperm.xlu0 %3589, %v3261
      %v3591 = vpop.permute.xlu0 %3590
      %3593 = vset.pattern.permute.xlu0 1
      %3594 = vperm.xlu0 %3593, %v3262
      %v3595 = vpop.permute.xlu0 %3594
      %v3597 = vlaneseq
      %v3598 = vshrl.u32 %v3597, 7
      %v3599 = vsub.s32 0, %v3598
      %v3600 = vrot.slane %v200, %v3599
      %v3601 = vmul.f32 %v3479, %v3600
      %v3602 = vmul.f32 %v3483, %v3600
      %v3603 = vmul.f32 %v3487, %v3600
      %v3604 = vmul.f32 %v3491, %v3600
      %v3605 = vmul.f32 %v3495, %v3600
      %v3606 = vmul.f32 %v3499, %v3600
      %v3607 = vmul.f32 %v3503, %v3600
      %v3608 = vmul.f32 %v3507, %v3600
      %v3609 = vmul.f32 %v3511, %v3600
      %v3610 = vmul.f32 %v3515, %v3600
      %v3611 = vmul.f32 %v3519, %v3600
      %v3612 = vmul.f32 %v3523, %v3600
      %v3613 = vmul.f32 %v3527, %v3600
      %v3614 = vmul.f32 %v3531, %v3600
      %v3615 = vmul.f32 %v3535, %v3600
      %v3616 = vmul.f32 %v3539, %v3600
      %v3617 = vmul.f32 %v3543, %v3600
      %v3618 = vmul.f32 %v3547, %v3600
      %v3619 = vmul.f32 %v3551, %v3600
      %v3620 = vmul.f32 %v3555, %v3600
      %v3621 = vmul.f32 %v3559, %v3600
      %v3622 = vmul.f32 %v3563, %v3600
      %v3623 = vmul.f32 %v3567, %v3600
      %v3624 = vmul.f32 %v3571, %v3600
      %v3625 = vmul.f32 %v3575, %v3600
      %v3626 = vmul.f32 %v3579, %v3600
      %v3627 = vmul.f32 %v3583, %v3600
      %v3628 = vmul.f32 %v3587, %v3600
      %v3629 = vmul.f32 %v3591, %v3600
      %v3630 = vmul.f32 %v3595, %v3600
      %v3631 = vadd.f32 %v3447, %v3601
      %v3632 = vadd.f32 %v3448, %v3602
      %v3633 = vadd.f32 %v3449, %v3603
      %v3634 = vadd.f32 %v3450, %v3604
      %v3635 = vadd.f32 %v3451, %v3605
      %v3636 = vadd.f32 %v3452, %v3606
      %v3637 = vadd.f32 %v3453, %v3607
      %v3638 = vadd.f32 %v3454, %v3608
      %v3639 = vadd.f32 %v3455, %v3609
      %v3640 = vadd.f32 %v3456, %v3610
      %v3641 = vadd.f32 %v3457, %v3611
      %v3642 = vadd.f32 %v3458, %v3612
      %v3643 = vadd.f32 %v3459, %v3613
      %v3644 = vadd.f32 %v3460, %v3614
      %v3645 = vadd.f32 %v3461, %v3615
      %v3646 = vadd.f32 %v3462, %v3616
      %v3647 = vadd.f32 %v3463, %v3617
      %v3648 = vadd.f32 %v3464, %v3618
      %v3649 = vadd.f32 %v3465, %v3619
      %v3650 = vadd.f32 %v3466, %v3620
      %v3651 = vadd.f32 %v3467, %v3621
      %v3652 = vadd.f32 %v3468, %v3622
      %v3653 = vadd.f32 %v3469, %v3623
      %v3654 = vadd.f32 %v3470, %v3624
      %v3655 = vadd.f32 %v3471, %v3625
      %v3656 = vadd.f32 %v3472, %v3626
      %v3657 = vadd.f32 %v3473, %v3627
      %v3658 = vadd.f32 %v3474, %v3628
      %v3659 = vadd.f32 %v3475, %v3629
      %v3660 = vadd.f32 %v3476, %v3630
      %3661 = vset.pattern.permute.xlu0 2
      %3662 = vperm.xlu0 %3661, %v3233
      %v3663 = vpop.permute.xlu0 %3662
      %3665 = vset.pattern.permute.xlu0 2
      %3666 = vperm.xlu0 %3665, %v3234
      %v3667 = vpop.permute.xlu0 %3666
      %3669 = vset.pattern.permute.xlu0 2
      %3670 = vperm.xlu0 %3669, %v3235
      %v3671 = vpop.permute.xlu0 %3670
      %3673 = vset.pattern.permute.xlu0 2
      %3674 = vperm.xlu0 %3673, %v3236
      %v3675 = vpop.permute.xlu0 %3674
      %3677 = vset.pattern.permute.xlu0 2
      %3678 = vperm.xlu0 %3677, %v3237
      %v3679 = vpop.permute.xlu0 %3678
      %3681 = vset.pattern.permute.xlu0 2
      %3682 = vperm.xlu0 %3681, %v3238
      %v3683 = vpop.permute.xlu0 %3682
      %3685 = vset.pattern.permute.xlu0 2
      %3686 = vperm.xlu0 %3685, %v3239
      %v3687 = vpop.permute.xlu0 %3686
      %3689 = vset.pattern.permute.xlu0 2
      %3690 = vperm.xlu0 %3689, %v3240
      %v3691 = vpop.permute.xlu0 %3690
      %3693 = vset.pattern.permute.xlu0 2
      %3694 = vperm.xlu0 %3693, %v3241
      %v3695 = vpop.permute.xlu0 %3694
      %3697 = vset.pattern.permute.xlu0 2
      %3698 = vperm.xlu0 %3697, %v3242
      %v3699 = vpop.permute.xlu0 %3698
      %3701 = vset.pattern.permute.xlu0 2
      %3702 = vperm.xlu0 %3701, %v3243
      %v3703 = vpop.permute.xlu0 %3702
      %3705 = vset.pattern.permute.xlu0 2
      %3706 = vperm.xlu0 %3705, %v3244
      %v3707 = vpop.permute.xlu0 %3706
      %3709 = vset.pattern.permute.xlu0 2
      %3710 = vperm.xlu0 %3709, %v3245
      %v3711 = vpop.permute.xlu0 %3710
      %3713 = vset.pattern.permute.xlu0 2
      %3714 = vperm.xlu0 %3713, %v3246
      %v3715 = vpop.permute.xlu0 %3714
      %3717 = vset.pattern.permute.xlu0 2
      %3718 = vperm.xlu0 %3717, %v3247
      %v3719 = vpop.permute.xlu0 %3718
      %3721 = vset.pattern.permute.xlu0 2
      %3722 = vperm.xlu0 %3721, %v3248
      %v3723 = vpop.permute.xlu0 %3722
      %3725 = vset.pattern.permute.xlu0 2
      %3726 = vperm.xlu0 %3725, %v3249
      %v3727 = vpop.permute.xlu0 %3726
      %3729 = vset.pattern.permute.xlu0 2
      %3730 = vperm.xlu0 %3729, %v3250
      %v3731 = vpop.permute.xlu0 %3730
      %3733 = vset.pattern.permute.xlu0 2
      %3734 = vperm.xlu0 %3733, %v3251
      %v3735 = vpop.permute.xlu0 %3734
      %3737 = vset.pattern.permute.xlu0 2
      %3738 = vperm.xlu0 %3737, %v3252
      %v3739 = vpop.permute.xlu0 %3738
      %3741 = vset.pattern.permute.xlu0 2
      %3742 = vperm.xlu0 %3741, %v3253
      %v3743 = vpop.permute.xlu0 %3742
      %3745 = vset.pattern.permute.xlu0 2
      %3746 = vperm.xlu0 %3745, %v3254
      %v3747 = vpop.permute.xlu0 %3746
      %3749 = vset.pattern.permute.xlu0 2
      %3750 = vperm.xlu0 %3749, %v3255
      %v3751 = vpop.permute.xlu0 %3750
      %3753 = vset.pattern.permute.xlu0 2
      %3754 = vperm.xlu0 %3753, %v3256
      %v3755 = vpop.permute.xlu0 %3754
      %3757 = vset.pattern.permute.xlu0 2
      %3758 = vperm.xlu0 %3757, %v3257
      %v3759 = vpop.permute.xlu0 %3758
      %3761 = vset.pattern.permute.xlu0 2
      %3762 = vperm.xlu0 %3761, %v3258
      %v3763 = vpop.permute.xlu0 %3762
      %3765 = vset.pattern.permute.xlu0 2
      %3766 = vperm.xlu0 %3765, %v3259
      %v3767 = vpop.permute.xlu0 %3766
      %3769 = vset.pattern.permute.xlu0 2
      %3770 = vperm.xlu0 %3769, %v3260
      %v3771 = vpop.permute.xlu0 %3770
      %3773 = vset.pattern.permute.xlu0 2
      %3774 = vperm.xlu0 %3773, %v3261
      %v3775 = vpop.permute.xlu0 %3774
      %3777 = vset.pattern.permute.xlu0 2
      %3778 = vperm.xlu0 %3777, %v3262
      %v3779 = vpop.permute.xlu0 %3778
      %v3781 = vlaneseq
      %v3782 = vshrl.u32 %v3781, 7
      %v3783 = vsub.s32 1, %v3782
      %v3784 = vrot.slane %v200, %v3783
      %v3785 = vmul.f32 %v3663, %v3784
      %v3786 = vmul.f32 %v3667, %v3784
      %v3787 = vmul.f32 %v3671, %v3784
      %v3788 = vmul.f32 %v3675, %v3784
      %v3789 = vmul.f32 %v3679, %v3784
      %v3790 = vmul.f32 %v3683, %v3784
      %v3791 = vmul.f32 %v3687, %v3784
      %v3792 = vmul.f32 %v3691, %v3784
      %v3793 = vmul.f32 %v3695, %v3784
      %v3794 = vmul.f32 %v3699, %v3784
      %v3795 = vmul.f32 %v3703, %v3784
      %v3796 = vmul.f32 %v3707, %v3784
      %v3797 = vmul.f32 %v3711, %v3784
      %v3798 = vmul.f32 %v3715, %v3784
      %v3799 = vmul.f32 %v3719, %v3784
      %v3800 = vmul.f32 %v3723, %v3784
      %v3801 = vmul.f32 %v3727, %v3784
      %v3802 = vmul.f32 %v3731, %v3784
      %v3803 = vmul.f32 %v3735, %v3784
      %v3804 = vmul.f32 %v3739, %v3784
      %v3805 = vmul.f32 %v3743, %v3784
      %v3806 = vmul.f32 %v3747, %v3784
      %v3807 = vmul.f32 %v3751, %v3784
      %v3808 = vmul.f32 %v3755, %v3784
      %v3809 = vmul.f32 %v3759, %v3784
      %v3810 = vmul.f32 %v3763, %v3784
      %v3811 = vmul.f32 %v3767, %v3784
      %v3812 = vmul.f32 %v3771, %v3784
      %v3813 = vmul.f32 %v3775, %v3784
      %v3814 = vmul.f32 %v3779, %v3784
      %v3815 = vadd.f32 %v3631, %v3785
      %v3816 = vadd.f32 %v3632, %v3786
      %v3817 = vadd.f32 %v3633, %v3787
      %v3818 = vadd.f32 %v3634, %v3788
      %v3819 = vadd.f32 %v3635, %v3789
      %v3820 = vadd.f32 %v3636, %v3790
      %v3821 = vadd.f32 %v3637, %v3791
      %v3822 = vadd.f32 %v3638, %v3792
      %v3823 = vadd.f32 %v3639, %v3793
      %v3824 = vadd.f32 %v3640, %v3794
      %v3825 = vadd.f32 %v3641, %v3795
      %v3826 = vadd.f32 %v3642, %v3796
      %v3827 = vadd.f32 %v3643, %v3797
      %v3828 = vadd.f32 %v3644, %v3798
      %v3829 = vadd.f32 %v3645, %v3799
      %v3830 = vadd.f32 %v3646, %v3800
      %v3831 = vadd.f32 %v3647, %v3801
      %v3832 = vadd.f32 %v3648, %v3802
      %v3833 = vadd.f32 %v3649, %v3803
      %v3834 = vadd.f32 %v3650, %v3804
      %v3835 = vadd.f32 %v3651, %v3805
      %v3836 = vadd.f32 %v3652, %v3806
      %v3837 = vadd.f32 %v3653, %v3807
      %v3838 = vadd.f32 %v3654, %v3808
      %v3839 = vadd.f32 %v3655, %v3809
      %v3840 = vadd.f32 %v3656, %v3810
      %v3841 = vadd.f32 %v3657, %v3811
      %v3842 = vadd.f32 %v3658, %v3812
      %v3843 = vadd.f32 %v3659, %v3813
      %v3844 = vadd.f32 %v3660, %v3814
      %s3845 = scalar_lea.vmem %s192, 48
      %v3846 = vld [vmem:[%s3845] sm:$0xff]
      %v3847 = vld [vmem:[%s3845 + $0x8] sm:$0x7f]
      %v3848 = vld [vmem:[%s3845 + $0x18] sm:$0xff]
      %v3849 = vld [vmem:[%s3845 + $0x20] sm:$0x7f]
      %v3850 = vld [vmem:[%s3845 + $0x30] sm:$0xff]
      %v3851 = vld [vmem:[%s3845 + $0x38] sm:$0x7f]
      %v3852 = vld [vmem:[%s3845 + $0x48] sm:$0xff]
      %v3853 = vld [vmem:[%s3845 + $0x50] sm:$0x7f]
      %v3854 = vld [vmem:[%s3845 + $0x60] sm:$0xff]
      %v3855 = vld [vmem:[%s3845 + $0x68] sm:$0x7f]
      %v3856 = vld [vmem:[%s3845 + $0x78] sm:$0xff]
      %v3857 = vld [vmem:[%s3845 + $0x80] sm:$0x7f]
      %v3858 = vld [vmem:[%s3845 + $0x90] sm:$0xff]
      %v3859 = vld [vmem:[%s3845 + $0x98] sm:$0x7f]
      %v3860 = vld [vmem:[%s3845 + $0xa8] sm:$0xff]
      %v3861 = vld [vmem:[%s3845 + $0xb0] sm:$0x7f]
      %v3862 = vld [vmem:[%s3845 + $0xc0] sm:$0xff]
      %v3863 = vld [vmem:[%s3845 + $0xc8] sm:$0x7f]
      %v3864 = vld [vmem:[%s3845 + $0xd8] sm:$0xff]
      %v3865 = vld [vmem:[%s3845 + $0xe0] sm:$0x7f]
      %v3866 = vld [vmem:[%s3845 + $0xf0] sm:$0xff]
      %v3867 = vld [vmem:[%s3845 + $0xf8] sm:$0x7f]
      %v3868 = vld [vmem:[%s3845 + $0x108] sm:$0xff]
      %v3869 = vld [vmem:[%s3845 + $0x110] sm:$0x7f]
      %v3870 = vld [vmem:[%s3845 + $0x120] sm:$0xff]
      %v3871 = vld [vmem:[%s3845 + $0x128] sm:$0x7f]
      %v3872 = vld [vmem:[%s3845 + $0x138] sm:$0xff]
      %v3873 = vld [vmem:[%s3845 + $0x140] sm:$0x7f]
      %v3874 = vld [vmem:[%s3845 + $0x150] sm:$0xff]
      %v3875 = vld [vmem:[%s3845 + $0x158] sm:$0x7f]
      %3877 = vset.pattern.permute.xlu0 0
      %3878 = vperm.xlu0 %3877, %v3846
      %v3879 = vpop.permute.xlu0 %3878
      %3882 = vset.pattern.permute.xlu0 0
      %3883 = vperm.xlu0 %3882, %v3847
      %v3884 = vpop.permute.xlu0 %3883
      %3887 = vset.pattern.permute.xlu0 0
      %3888 = vperm.xlu0 %3887, %v3848
      %v3889 = vpop.permute.xlu0 %3888
      %3892 = vset.pattern.permute.xlu0 0
      %3893 = vperm.xlu0 %3892, %v3849
      %v3894 = vpop.permute.xlu0 %3893
      %3897 = vset.pattern.permute.xlu0 0
      %3898 = vperm.xlu0 %3897, %v3850
      %v3899 = vpop.permute.xlu0 %3898
      %3902 = vset.pattern.permute.xlu0 0
      %3903 = vperm.xlu0 %3902, %v3851
      %v3904 = vpop.permute.xlu0 %3903
      %3907 = vset.pattern.permute.xlu0 0
      %3908 = vperm.xlu0 %3907, %v3852
      %v3909 = vpop.permute.xlu0 %3908
      %3912 = vset.pattern.permute.xlu0 0
      %3913 = vperm.xlu0 %3912, %v3853
      %v3914 = vpop.permute.xlu0 %3913
      %3917 = vset.pattern.permute.xlu0 0
      %3918 = vperm.xlu0 %3917, %v3854
      %v3919 = vpop.permute.xlu0 %3918
      %3922 = vset.pattern.permute.xlu0 0
      %3923 = vperm.xlu0 %3922, %v3855
      %v3924 = vpop.permute.xlu0 %3923
      %3927 = vset.pattern.permute.xlu0 0
      %3928 = vperm.xlu0 %3927, %v3856
      %v3929 = vpop.permute.xlu0 %3928
      %3932 = vset.pattern.permute.xlu0 0
      %3933 = vperm.xlu0 %3932, %v3857
      %v3934 = vpop.permute.xlu0 %3933
      %3937 = vset.pattern.permute.xlu0 0
      %3938 = vperm.xlu0 %3937, %v3858
      %v3939 = vpop.permute.xlu0 %3938
      %3942 = vset.pattern.permute.xlu0 0
      %3943 = vperm.xlu0 %3942, %v3859
      %v3944 = vpop.permute.xlu0 %3943
      %3947 = vset.pattern.permute.xlu0 0
      %3948 = vperm.xlu0 %3947, %v3860
      %v3949 = vpop.permute.xlu0 %3948
      %3952 = vset.pattern.permute.xlu0 0
      %3953 = vperm.xlu0 %3952, %v3861
      %v3954 = vpop.permute.xlu0 %3953
      %3957 = vset.pattern.permute.xlu0 0
      %3958 = vperm.xlu0 %3957, %v3862
      %v3959 = vpop.permute.xlu0 %3958
      %3962 = vset.pattern.permute.xlu0 0
      %3963 = vperm.xlu0 %3962, %v3863
      %v3964 = vpop.permute.xlu0 %3963
      %3967 = vset.pattern.permute.xlu0 0
      %3968 = vperm.xlu0 %3967, %v3864
      %v3969 = vpop.permute.xlu0 %3968
      %3972 = vset.pattern.permute.xlu0 0
      %3973 = vperm.xlu0 %3972, %v3865
      %v3974 = vpop.permute.xlu0 %3973
      %3977 = vset.pattern.permute.xlu0 0
      %3978 = vperm.xlu0 %3977, %v3866
      %v3979 = vpop.permute.xlu0 %3978
      %3982 = vset.pattern.permute.xlu0 0
      %3983 = vperm.xlu0 %3982, %v3867
      %v3984 = vpop.permute.xlu0 %3983
      %3987 = vset.pattern.permute.xlu0 0
      %3988 = vperm.xlu0 %3987, %v3868
      %v3989 = vpop.permute.xlu0 %3988
      %3992 = vset.pattern.permute.xlu0 0
      %3993 = vperm.xlu0 %3992, %v3869
      %v3994 = vpop.permute.xlu0 %3993
      %3997 = vset.pattern.permute.xlu0 0
      %3998 = vperm.xlu0 %3997, %v3870
      %v3999 = vpop.permute.xlu0 %3998
      %4002 = vset.pattern.permute.xlu0 0
      %4003 = vperm.xlu0 %4002, %v3871
      %v4004 = vpop.permute.xlu0 %4003
      %4007 = vset.pattern.permute.xlu0 0
      %4008 = vperm.xlu0 %4007, %v3872
      %v4009 = vpop.permute.xlu0 %4008
      %4012 = vset.pattern.permute.xlu0 0
      %4013 = vperm.xlu0 %4012, %v3873
      %v4014 = vpop.permute.xlu0 %4013
      %4017 = vset.pattern.permute.xlu0 0
      %4018 = vperm.xlu0 %4017, %v3874
      %v4019 = vpop.permute.xlu0 %4018
      %4022 = vset.pattern.permute.xlu0 0
      %4023 = vperm.xlu0 %4022, %v3875
      %v4024 = vpop.permute.xlu0 %4023
      %v4026 = vlaneseq
      %v4027 = vshrl.u32 %v4026, 7
      %v4028 = vsub.s32 2, %v4027
      %v4029 = vrot.slane %v200, %v4028
      %v4030 = vmul.f32 %v3879, %v4029
      %v4031 = vmul.f32 %v3884, %v4029
      %v4032 = vmul.f32 %v3889, %v4029
      %v4033 = vmul.f32 %v3894, %v4029
      %v4034 = vmul.f32 %v3899, %v4029
      %v4035 = vmul.f32 %v3904, %v4029
      %v4036 = vmul.f32 %v3909, %v4029
      %v4037 = vmul.f32 %v3914, %v4029
      %v4038 = vmul.f32 %v3919, %v4029
      %v4039 = vmul.f32 %v3924, %v4029
      %v4040 = vmul.f32 %v3929, %v4029
      %v4041 = vmul.f32 %v3934, %v4029
      %v4042 = vmul.f32 %v3939, %v4029
      %v4043 = vmul.f32 %v3944, %v4029
      %v4044 = vmul.f32 %v3949, %v4029
      %v4045 = vmul.f32 %v3954, %v4029
      %v4046 = vmul.f32 %v3959, %v4029
      %v4047 = vmul.f32 %v3964, %v4029
      %v4048 = vmul.f32 %v3969, %v4029
      %v4049 = vmul.f32 %v3974, %v4029
      %v4050 = vmul.f32 %v3979, %v4029
      %v4051 = vmul.f32 %v3984, %v4029
      %v4052 = vmul.f32 %v3989, %v4029
      %v4053 = vmul.f32 %v3994, %v4029
      %v4054 = vmul.f32 %v3999, %v4029
      %v4055 = vmul.f32 %v4004, %v4029
      %v4056 = vmul.f32 %v4009, %v4029
      %v4057 = vmul.f32 %v4014, %v4029
      %v4058 = vmul.f32 %v4019, %v4029
      %v4059 = vmul.f32 %v4024, %v4029
      %v4060 = vadd.f32 %v3815, %v4030
      %v4061 = vadd.f32 %v3816, %v4031
      %v4062 = vadd.f32 %v3817, %v4032
      %v4063 = vadd.f32 %v3818, %v4033
      %v4064 = vadd.f32 %v3819, %v4034
      %v4065 = vadd.f32 %v3820, %v4035
      %v4066 = vadd.f32 %v3821, %v4036
      %v4067 = vadd.f32 %v3822, %v4037
      %v4068 = vadd.f32 %v3823, %v4038
      %v4069 = vadd.f32 %v3824, %v4039
      %v4070 = vadd.f32 %v3825, %v4040
      %v4071 = vadd.f32 %v3826, %v4041
      %v4072 = vadd.f32 %v3827, %v4042
      %v4073 = vadd.f32 %v3828, %v4043
      %v4074 = vadd.f32 %v3829, %v4044
      %v4075 = vadd.f32 %v3830, %v4045
      %v4076 = vadd.f32 %v3831, %v4046
      %v4077 = vadd.f32 %v3832, %v4047
      %v4078 = vadd.f32 %v3833, %v4048
      %v4079 = vadd.f32 %v3834, %v4049
      %v4080 = vadd.f32 %v3835, %v4050
      %v4081 = vadd.f32 %v3836, %v4051
      %v4082 = vadd.f32 %v3837, %v4052
      %v4083 = vadd.f32 %v3838, %v4053
      %v4084 = vadd.f32 %v3839, %v4054
      %v4085 = vadd.f32 %v3840, %v4055
      %v4086 = vadd.f32 %v3841, %v4056
      %v4087 = vadd.f32 %v3842, %v4057
      %v4088 = vadd.f32 %v3843, %v4058
      %v4089 = vadd.f32 %v3844, %v4059
      %4090 = vset.pattern.permute.xlu0 1
      %4091 = vperm.xlu0 %4090, %v3846
      %v4092 = vpop.permute.xlu0 %4091
      %4094 = vset.pattern.permute.xlu0 1
      %4095 = vperm.xlu0 %4094, %v3847
      %v4096 = vpop.permute.xlu0 %4095
      %4098 = vset.pattern.permute.xlu0 1
      %4099 = vperm.xlu0 %4098, %v3848
      %v4100 = vpop.permute.xlu0 %4099
      %4102 = vset.pattern.permute.xlu0 1
      %4103 = vperm.xlu0 %4102, %v3849
      %v4104 = vpop.permute.xlu0 %4103
      %4106 = vset.pattern.permute.xlu0 1
      %4107 = vperm.xlu0 %4106, %v3850
      %v4108 = vpop.permute.xlu0 %4107
      %4110 = vset.pattern.permute.xlu0 1
      %4111 = vperm.xlu0 %4110, %v3851
      %v4112 = vpop.permute.xlu0 %4111
      %4114 = vset.pattern.permute.xlu0 1
      %4115 = vperm.xlu0 %4114, %v3852
      %v4116 = vpop.permute.xlu0 %4115
      %4118 = vset.pattern.permute.xlu0 1
      %4119 = vperm.xlu0 %4118, %v3853
      %v4120 = vpop.permute.xlu0 %4119
      %4122 = vset.pattern.permute.xlu0 1
      %4123 = vperm.xlu0 %4122, %v3854
      %v4124 = vpop.permute.xlu0 %4123
      %4126 = vset.pattern.permute.xlu0 1
      %4127 = vperm.xlu0 %4126, %v3855
      %v4128 = vpop.permute.xlu0 %4127
      %4130 = vset.pattern.permute.xlu0 1
      %4131 = vperm.xlu0 %4130, %v3856
      %v4132 = vpop.permute.xlu0 %4131
      %4134 = vset.pattern.permute.xlu0 1
      %4135 = vperm.xlu0 %4134, %v3857
      %v4136 = vpop.permute.xlu0 %4135
      %4138 = vset.pattern.permute.xlu0 1
      %4139 = vperm.xlu0 %4138, %v3858
      %v4140 = vpop.permute.xlu0 %4139
      %4142 = vset.pattern.permute.xlu0 1
      %4143 = vperm.xlu0 %4142, %v3859
      %v4144 = vpop.permute.xlu0 %4143
      %4146 = vset.pattern.permute.xlu0 1
      %4147 = vperm.xlu0 %4146, %v3860
      %v4148 = vpop.permute.xlu0 %4147
      %4150 = vset.pattern.permute.xlu0 1
      %4151 = vperm.xlu0 %4150, %v3861
      %v4152 = vpop.permute.xlu0 %4151
      %4154 = vset.pattern.permute.xlu0 1
      %4155 = vperm.xlu0 %4154, %v3862
      %v4156 = vpop.permute.xlu0 %4155
      %4158 = vset.pattern.permute.xlu0 1
      %4159 = vperm.xlu0 %4158, %v3863
      %v4160 = vpop.permute.xlu0 %4159
      %4162 = vset.pattern.permute.xlu0 1
      %4163 = vperm.xlu0 %4162, %v3864
      %v4164 = vpop.permute.xlu0 %4163
      %4166 = vset.pattern.permute.xlu0 1
      %4167 = vperm.xlu0 %4166, %v3865
      %v4168 = vpop.permute.xlu0 %4167
      %4170 = vset.pattern.permute.xlu0 1
      %4171 = vperm.xlu0 %4170, %v3866
      %v4172 = vpop.permute.xlu0 %4171
      %4174 = vset.pattern.permute.xlu0 1
      %4175 = vperm.xlu0 %4174, %v3867
      %v4176 = vpop.permute.xlu0 %4175
      %4178 = vset.pattern.permute.xlu0 1
      %4179 = vperm.xlu0 %4178, %v3868
      %v4180 = vpop.permute.xlu0 %4179
      %4182 = vset.pattern.permute.xlu0 1
      %4183 = vperm.xlu0 %4182, %v3869
      %v4184 = vpop.permute.xlu0 %4183
      %4186 = vset.pattern.permute.xlu0 1
      %4187 = vperm.xlu0 %4186, %v3870
      %v4188 = vpop.permute.xlu0 %4187
      %4190 = vset.pattern.permute.xlu0 1
      %4191 = vperm.xlu0 %4190, %v3871
      %v4192 = vpop.permute.xlu0 %4191
      %4194 = vset.pattern.permute.xlu0 1
      %4195 = vperm.xlu0 %4194, %v3872
      %v4196 = vpop.permute.xlu0 %4195
      %4198 = vset.pattern.permute.xlu0 1
      %4199 = vperm.xlu0 %4198, %v3873
      %v4200 = vpop.permute.xlu0 %4199
      %4202 = vset.pattern.permute.xlu0 1
      %4203 = vperm.xlu0 %4202, %v3874
      %v4204 = vpop.permute.xlu0 %4203
      %4206 = vset.pattern.permute.xlu0 1
      %4207 = vperm.xlu0 %4206, %v3875
      %v4208 = vpop.permute.xlu0 %4207
      %v4210 = vlaneseq
      %v4211 = vshrl.u32 %v4210, 7
      %v4212 = vsub.s32 3, %v4211
      %v4213 = vrot.slane %v200, %v4212
      %v4214 = vmul.f32 %v4092, %v4213
      %v4215 = vmul.f32 %v4096, %v4213
      %v4216 = vmul.f32 %v4100, %v4213
      %v4217 = vmul.f32 %v4104, %v4213
      %v4218 = vmul.f32 %v4108, %v4213
      %v4219 = vmul.f32 %v4112, %v4213
      %v4220 = vmul.f32 %v4116, %v4213
      %v4221 = vmul.f32 %v4120, %v4213
      %v4222 = vmul.f32 %v4124, %v4213
      %v4223 = vmul.f32 %v4128, %v4213
      %v4224 = vmul.f32 %v4132, %v4213
      %v4225 = vmul.f32 %v4136, %v4213
      %v4226 = vmul.f32 %v4140, %v4213
      %v4227 = vmul.f32 %v4144, %v4213
      %v4228 = vmul.f32 %v4148, %v4213
      %v4229 = vmul.f32 %v4152, %v4213
      %v4230 = vmul.f32 %v4156, %v4213
      %v4231 = vmul.f32 %v4160, %v4213
      %v4232 = vmul.f32 %v4164, %v4213
      %v4233 = vmul.f32 %v4168, %v4213
      %v4234 = vmul.f32 %v4172, %v4213
      %v4235 = vmul.f32 %v4176, %v4213
      %v4236 = vmul.f32 %v4180, %v4213
      %v4237 = vmul.f32 %v4184, %v4213
      %v4238 = vmul.f32 %v4188, %v4213
      %v4239 = vmul.f32 %v4192, %v4213
      %v4240 = vmul.f32 %v4196, %v4213
      %v4241 = vmul.f32 %v4200, %v4213
      %v4242 = vmul.f32 %v4204, %v4213
      %v4243 = vmul.f32 %v4208, %v4213
      %v4244 = vadd.f32 %v4060, %v4214
      %v4245 = vadd.f32 %v4061, %v4215
      %v4246 = vadd.f32 %v4062, %v4216
      %v4247 = vadd.f32 %v4063, %v4217
      %v4248 = vadd.f32 %v4064, %v4218
      %v4249 = vadd.f32 %v4065, %v4219
      %v4250 = vadd.f32 %v4066, %v4220
      %v4251 = vadd.f32 %v4067, %v4221
      %v4252 = vadd.f32 %v4068, %v4222
      %v4253 = vadd.f32 %v4069, %v4223
      %v4254 = vadd.f32 %v4070, %v4224
      %v4255 = vadd.f32 %v4071, %v4225
      %v4256 = vadd.f32 %v4072, %v4226
      %v4257 = vadd.f32 %v4073, %v4227
      %v4258 = vadd.f32 %v4074, %v4228
      %v4259 = vadd.f32 %v4075, %v4229
      %v4260 = vadd.f32 %v4076, %v4230
      %v4261 = vadd.f32 %v4077, %v4231
      %v4262 = vadd.f32 %v4078, %v4232
      %v4263 = vadd.f32 %v4079, %v4233
      %v4264 = vadd.f32 %v4080, %v4234
      %v4265 = vadd.f32 %v4081, %v4235
      %v4266 = vadd.f32 %v4082, %v4236
      %v4267 = vadd.f32 %v4083, %v4237
      %v4268 = vadd.f32 %v4084, %v4238
      %v4269 = vadd.f32 %v4085, %v4239
      %v4270 = vadd.f32 %v4086, %v4240
      %v4271 = vadd.f32 %v4087, %v4241
      %v4272 = vadd.f32 %v4088, %v4242
      %v4273 = vadd.f32 %v4089, %v4243
      %4274 = vset.pattern.permute.xlu0 2
      %4275 = vperm.xlu0 %4274, %v3846
      %v4276 = vpop.permute.xlu0 %4275
      %4278 = vset.pattern.permute.xlu0 2
      %4279 = vperm.xlu0 %4278, %v3847
      %v4280 = vpop.permute.xlu0 %4279
      %4282 = vset.pattern.permute.xlu0 2
      %4283 = vperm.xlu0 %4282, %v3848
      %v4284 = vpop.permute.xlu0 %4283
      %4286 = vset.pattern.permute.xlu0 2
      %4287 = vperm.xlu0 %4286, %v3849
      %v4288 = vpop.permute.xlu0 %4287
      %4290 = vset.pattern.permute.xlu0 2
      %4291 = vperm.xlu0 %4290, %v3850
      %v4292 = vpop.permute.xlu0 %4291
      %4294 = vset.pattern.permute.xlu0 2
      %4295 = vperm.xlu0 %4294, %v3851
      %v4296 = vpop.permute.xlu0 %4295
      %4298 = vset.pattern.permute.xlu0 2
      %4299 = vperm.xlu0 %4298, %v3852
      %v4300 = vpop.permute.xlu0 %4299
      %4302 = vset.pattern.permute.xlu0 2
      %4303 = vperm.xlu0 %4302, %v3853
      %v4304 = vpop.permute.xlu0 %4303
      %4306 = vset.pattern.permute.xlu0 2
      %4307 = vperm.xlu0 %4306, %v3854
      %v4308 = vpop.permute.xlu0 %4307
      %4310 = vset.pattern.permute.xlu0 2
      %4311 = vperm.xlu0 %4310, %v3855
      %v4312 = vpop.permute.xlu0 %4311
      %4314 = vset.pattern.permute.xlu0 2
      %4315 = vperm.xlu0 %4314, %v3856
      %v4316 = vpop.permute.xlu0 %4315
      %4318 = vset.pattern.permute.xlu0 2
      %4319 = vperm.xlu0 %4318, %v3857
      %v4320 = vpop.permute.xlu0 %4319
      %4322 = vset.pattern.permute.xlu0 2
      %4323 = vperm.xlu0 %4322, %v3858
      %v4324 = vpop.permute.xlu0 %4323
      %4326 = vset.pattern.permute.xlu0 2
      %4327 = vperm.xlu0 %4326, %v3859
      %v4328 = vpop.permute.xlu0 %4327
      %4330 = vset.pattern.permute.xlu0 2
      %4331 = vperm.xlu0 %4330, %v3860
      %v4332 = vpop.permute.xlu0 %4331
      %4334 = vset.pattern.permute.xlu0 2
      %4335 = vperm.xlu0 %4334, %v3861
      %v4336 = vpop.permute.xlu0 %4335
      %4338 = vset.pattern.permute.xlu0 2
      %4339 = vperm.xlu0 %4338, %v3862
      %v4340 = vpop.permute.xlu0 %4339
      %4342 = vset.pattern.permute.xlu0 2
      %4343 = vperm.xlu0 %4342, %v3863
      %v4344 = vpop.permute.xlu0 %4343
      %4346 = vset.pattern.permute.xlu0 2
      %4347 = vperm.xlu0 %4346, %v3864
      %v4348 = vpop.permute.xlu0 %4347
      %4350 = vset.pattern.permute.xlu0 2
      %4351 = vperm.xlu0 %4350, %v3865
      %v4352 = vpop.permute.xlu0 %4351
      %4354 = vset.pattern.permute.xlu0 2
      %4355 = vperm.xlu0 %4354, %v3866
      %v4356 = vpop.permute.xlu0 %4355
      %4358 = vset.pattern.permute.xlu0 2
      %4359 = vperm.xlu0 %4358, %v3867
      %v4360 = vpop.permute.xlu0 %4359
      %4362 = vset.pattern.permute.xlu0 2
      %4363 = vperm.xlu0 %4362, %v3868
      %v4364 = vpop.permute.xlu0 %4363
      %4366 = vset.pattern.permute.xlu0 2
      %4367 = vperm.xlu0 %4366, %v3869
      %v4368 = vpop.permute.xlu0 %4367
      %4370 = vset.pattern.permute.xlu0 2
      %4371 = vperm.xlu0 %4370, %v3870
      %v4372 = vpop.permute.xlu0 %4371
      %4374 = vset.pattern.permute.xlu0 2
      %4375 = vperm.xlu0 %4374, %v3871
      %v4376 = vpop.permute.xlu0 %4375
      %4378 = vset.pattern.permute.xlu0 2
      %4379 = vperm.xlu0 %4378, %v3872
      %v4380 = vpop.permute.xlu0 %4379
      %4382 = vset.pattern.permute.xlu0 2
      %4383 = vperm.xlu0 %4382, %v3873
      %v4384 = vpop.permute.xlu0 %4383
      %4386 = vset.pattern.permute.xlu0 2
      %4387 = vperm.xlu0 %4386, %v3874
      %v4388 = vpop.permute.xlu0 %4387
      %4390 = vset.pattern.permute.xlu0 2
      %4391 = vperm.xlu0 %4390, %v3875
      %v4392 = vpop.permute.xlu0 %4391
      %v4394 = vlaneseq
      %v4395 = vshrl.u32 %v4394, 7
      %v4396 = vsub.s32 4, %v4395
      %v4397 = vrot.slane %v200, %v4396
      %v4398 = vmul.f32 %v4276, %v4397
      %v4399 = vmul.f32 %v4280, %v4397
      %v4400 = vmul.f32 %v4284, %v4397
      %v4401 = vmul.f32 %v4288, %v4397
      %v4402 = vmul.f32 %v4292, %v4397
      %v4403 = vmul.f32 %v4296, %v4397
      %v4404 = vmul.f32 %v4300, %v4397
      %v4405 = vmul.f32 %v4304, %v4397
      %v4406 = vmul.f32 %v4308, %v4397
      %v4407 = vmul.f32 %v4312, %v4397
      %v4408 = vmul.f32 %v4316, %v4397
      %v4409 = vmul.f32 %v4320, %v4397
      %v4410 = vmul.f32 %v4324, %v4397
      %v4411 = vmul.f32 %v4328, %v4397
      %v4412 = vmul.f32 %v4332, %v4397
      %v4413 = vmul.f32 %v4336, %v4397
      %v4414 = vmul.f32 %v4340, %v4397
      %v4415 = vmul.f32 %v4344, %v4397
      %v4416 = vmul.f32 %v4348, %v4397
      %v4417 = vmul.f32 %v4352, %v4397
      %v4418 = vmul.f32 %v4356, %v4397
      %v4419 = vmul.f32 %v4360, %v4397
      %v4420 = vmul.f32 %v4364, %v4397
      %v4421 = vmul.f32 %v4368, %v4397
      %v4422 = vmul.f32 %v4372, %v4397
      %v4423 = vmul.f32 %v4376, %v4397
      %v4424 = vmul.f32 %v4380, %v4397
      %v4425 = vmul.f32 %v4384, %v4397
      %v4426 = vmul.f32 %v4388, %v4397
      %v4427 = vmul.f32 %v4392, %v4397
      %v4428 = vadd.f32 %v4244, %v4398
      %v4429 = vadd.f32 %v4245, %v4399
      %v4430 = vadd.f32 %v4246, %v4400
      %v4431 = vadd.f32 %v4247, %v4401
      %v4432 = vadd.f32 %v4248, %v4402
      %v4433 = vadd.f32 %v4249, %v4403
      %v4434 = vadd.f32 %v4250, %v4404
      %v4435 = vadd.f32 %v4251, %v4405
      %v4436 = vadd.f32 %v4252, %v4406
      %v4437 = vadd.f32 %v4253, %v4407
      %v4438 = vadd.f32 %v4254, %v4408
      %v4439 = vadd.f32 %v4255, %v4409
      %v4440 = vadd.f32 %v4256, %v4410
      %v4441 = vadd.f32 %v4257, %v4411
      %v4442 = vadd.f32 %v4258, %v4412
      %v4443 = vadd.f32 %v4259, %v4413
      %v4444 = vadd.f32 %v4260, %v4414
      %v4445 = vadd.f32 %v4261, %v4415
      %v4446 = vadd.f32 %v4262, %v4416
      %v4447 = vadd.f32 %v4263, %v4417
      %v4448 = vadd.f32 %v4264, %v4418
      %v4449 = vadd.f32 %v4265, %v4419
      %v4450 = vadd.f32 %v4266, %v4420
      %v4451 = vadd.f32 %v4267, %v4421
      %v4452 = vadd.f32 %v4268, %v4422
      %v4453 = vadd.f32 %v4269, %v4423
      %v4454 = vadd.f32 %v4270, %v4424
      %v4455 = vadd.f32 %v4271, %v4425
      %v4456 = vadd.f32 %v4272, %v4426
      %v4457 = vadd.f32 %v4273, %v4427
      %v4458 = vld [vmem:[%s3845 + $0x1] sm:$0xff]
      %v4459 = vld [vmem:[%s3845 + $0x9] sm:$0x7f]
      %v4460 = vld [vmem:[%s3845 + $0x19] sm:$0xff]
      %v4461 = vld [vmem:[%s3845 + $0x21] sm:$0x7f]
      %v4462 = vld [vmem:[%s3845 + $0x31] sm:$0xff]
      %v4463 = vld [vmem:[%s3845 + $0x39] sm:$0x7f]
      %v4464 = vld [vmem:[%s3845 + $0x49] sm:$0xff]
      %v4465 = vld [vmem:[%s3845 + $0x51] sm:$0x7f]
      %v4466 = vld [vmem:[%s3845 + $0x61] sm:$0xff]
      %v4467 = vld [vmem:[%s3845 + $0x69] sm:$0x7f]
      %v4468 = vld [vmem:[%s3845 + $0x79] sm:$0xff]
      %v4469 = vld [vmem:[%s3845 + $0x81] sm:$0x7f]
      %v4470 = vld [vmem:[%s3845 + $0x91] sm:$0xff]
      %v4471 = vld [vmem:[%s3845 + $0x99] sm:$0x7f]
      %v4472 = vld [vmem:[%s3845 + $0xa9] sm:$0xff]
      %v4473 = vld [vmem:[%s3845 + $0xb1] sm:$0x7f]
      %v4474 = vld [vmem:[%s3845 + $0xc1] sm:$0xff]
      %v4475 = vld [vmem:[%s3845 + $0xc9] sm:$0x7f]
      %v4476 = vld [vmem:[%s3845 + $0xd9] sm:$0xff]
      %v4477 = vld [vmem:[%s3845 + $0xe1] sm:$0x7f]
      %v4478 = vld [vmem:[%s3845 + $0xf1] sm:$0xff]
      %v4479 = vld [vmem:[%s3845 + $0xf9] sm:$0x7f]
      %v4480 = vld [vmem:[%s3845 + $0x109] sm:$0xff]
      %v4481 = vld [vmem:[%s3845 + $0x111] sm:$0x7f]
      %v4482 = vld [vmem:[%s3845 + $0x121] sm:$0xff]
      %v4483 = vld [vmem:[%s3845 + $0x129] sm:$0x7f]
      %v4484 = vld [vmem:[%s3845 + $0x139] sm:$0xff]
      %v4485 = vld [vmem:[%s3845 + $0x141] sm:$0x7f]
      %v4486 = vld [vmem:[%s3845 + $0x151] sm:$0xff]
      %v4487 = vld [vmem:[%s3845 + $0x159] sm:$0x7f]
      %4489 = vset.pattern.permute.xlu0 0
      %4490 = vperm.xlu0 %4489, %v4458
      %v4491 = vpop.permute.xlu0 %4490
      %4494 = vset.pattern.permute.xlu0 0
      %4495 = vperm.xlu0 %4494, %v4459
      %v4496 = vpop.permute.xlu0 %4495
      %4499 = vset.pattern.permute.xlu0 0
      %4500 = vperm.xlu0 %4499, %v4460
      %v4501 = vpop.permute.xlu0 %4500
      %4504 = vset.pattern.permute.xlu0 0
      %4505 = vperm.xlu0 %4504, %v4461
      %v4506 = vpop.permute.xlu0 %4505
      %4509 = vset.pattern.permute.xlu0 0
      %4510 = vperm.xlu0 %4509, %v4462
      %v4511 = vpop.permute.xlu0 %4510
      %4514 = vset.pattern.permute.xlu0 0
      %4515 = vperm.xlu0 %4514, %v4463
      %v4516 = vpop.permute.xlu0 %4515
      %4519 = vset.pattern.permute.xlu0 0
      %4520 = vperm.xlu0 %4519, %v4464
      %v4521 = vpop.permute.xlu0 %4520
      %4524 = vset.pattern.permute.xlu0 0
      %4525 = vperm.xlu0 %4524, %v4465
      %v4526 = vpop.permute.xlu0 %4525
      %4529 = vset.pattern.permute.xlu0 0
      %4530 = vperm.xlu0 %4529, %v4466
      %v4531 = vpop.permute.xlu0 %4530
      %4534 = vset.pattern.permute.xlu0 0
      %4535 = vperm.xlu0 %4534, %v4467
      %v4536 = vpop.permute.xlu0 %4535
      %4539 = vset.pattern.permute.xlu0 0
      %4540 = vperm.xlu0 %4539, %v4468
      %v4541 = vpop.permute.xlu0 %4540
      %4544 = vset.pattern.permute.xlu0 0
      %4545 = vperm.xlu0 %4544, %v4469
      %v4546 = vpop.permute.xlu0 %4545
      %4549 = vset.pattern.permute.xlu0 0
      %4550 = vperm.xlu0 %4549, %v4470
      %v4551 = vpop.permute.xlu0 %4550
      %4554 = vset.pattern.permute.xlu0 0
      %4555 = vperm.xlu0 %4554, %v4471
      %v4556 = vpop.permute.xlu0 %4555
      %4559 = vset.pattern.permute.xlu0 0
      %4560 = vperm.xlu0 %4559, %v4472
      %v4561 = vpop.permute.xlu0 %4560
      %4564 = vset.pattern.permute.xlu0 0
      %4565 = vperm.xlu0 %4564, %v4473
      %v4566 = vpop.permute.xlu0 %4565
      %4569 = vset.pattern.permute.xlu0 0
      %4570 = vperm.xlu0 %4569, %v4474
      %v4571 = vpop.permute.xlu0 %4570
      %4574 = vset.pattern.permute.xlu0 0
      %4575 = vperm.xlu0 %4574, %v4475
      %v4576 = vpop.permute.xlu0 %4575
      %4579 = vset.pattern.permute.xlu0 0
      %4580 = vperm.xlu0 %4579, %v4476
      %v4581 = vpop.permute.xlu0 %4580
      %4584 = vset.pattern.permute.xlu0 0
      %4585 = vperm.xlu0 %4584, %v4477
      %v4586 = vpop.permute.xlu0 %4585
      %4589 = vset.pattern.permute.xlu0 0
      %4590 = vperm.xlu0 %4589, %v4478
      %v4591 = vpop.permute.xlu0 %4590
      %4594 = vset.pattern.permute.xlu0 0
      %4595 = vperm.xlu0 %4594, %v4479
      %v4596 = vpop.permute.xlu0 %4595
      %4599 = vset.pattern.permute.xlu0 0
      %4600 = vperm.xlu0 %4599, %v4480
      %v4601 = vpop.permute.xlu0 %4600
      %4604 = vset.pattern.permute.xlu0 0
      %4605 = vperm.xlu0 %4604, %v4481
      %v4606 = vpop.permute.xlu0 %4605
      %4609 = vset.pattern.permute.xlu0 0
      %4610 = vperm.xlu0 %4609, %v4482
      %v4611 = vpop.permute.xlu0 %4610
      %4614 = vset.pattern.permute.xlu0 0
      %4615 = vperm.xlu0 %4614, %v4483
      %v4616 = vpop.permute.xlu0 %4615
      %4619 = vset.pattern.permute.xlu0 0
      %4620 = vperm.xlu0 %4619, %v4484
      %v4621 = vpop.permute.xlu0 %4620
      %4624 = vset.pattern.permute.xlu0 0
      %4625 = vperm.xlu0 %4624, %v4485
      %v4626 = vpop.permute.xlu0 %4625
      %4629 = vset.pattern.permute.xlu0 0
      %4630 = vperm.xlu0 %4629, %v4486
      %v4631 = vpop.permute.xlu0 %4630
      %4634 = vset.pattern.permute.xlu0 0
      %4635 = vperm.xlu0 %4634, %v4487
      %v4636 = vpop.permute.xlu0 %4635
      %v4638 = vlaneseq
      %v4639 = vshrl.u32 %v4638, 7
      %v4640 = vsub.s32 5, %v4639
      %v4641 = vrot.slane %v200, %v4640
      %v4642 = vmul.f32 %v4491, %v4641
      %v4643 = vmul.f32 %v4496, %v4641
      %v4644 = vmul.f32 %v4501, %v4641
      %v4645 = vmul.f32 %v4506, %v4641
      %v4646 = vmul.f32 %v4511, %v4641
      %v4647 = vmul.f32 %v4516, %v4641
      %v4648 = vmul.f32 %v4521, %v4641
      %v4649 = vmul.f32 %v4526, %v4641
      %v4650 = vmul.f32 %v4531, %v4641
      %v4651 = vmul.f32 %v4536, %v4641
      %v4652 = vmul.f32 %v4541, %v4641
      %v4653 = vmul.f32 %v4546, %v4641
      %v4654 = vmul.f32 %v4551, %v4641
      %v4655 = vmul.f32 %v4556, %v4641
      %v4656 = vmul.f32 %v4561, %v4641
      %v4657 = vmul.f32 %v4566, %v4641
      %v4658 = vmul.f32 %v4571, %v4641
      %v4659 = vmul.f32 %v4576, %v4641
      %v4660 = vmul.f32 %v4581, %v4641
      %v4661 = vmul.f32 %v4586, %v4641
      %v4662 = vmul.f32 %v4591, %v4641
      %v4663 = vmul.f32 %v4596, %v4641
      %v4664 = vmul.f32 %v4601, %v4641
      %v4665 = vmul.f32 %v4606, %v4641
      %v4666 = vmul.f32 %v4611, %v4641
      %v4667 = vmul.f32 %v4616, %v4641
      %v4668 = vmul.f32 %v4621, %v4641
      %v4669 = vmul.f32 %v4626, %v4641
      %v4670 = vmul.f32 %v4631, %v4641
      %v4671 = vmul.f32 %v4636, %v4641
      %v4672 = vadd.f32 %v4428, %v4642
      %v4673 = vadd.f32 %v4429, %v4643
      %v4674 = vadd.f32 %v4430, %v4644
      %v4675 = vadd.f32 %v4431, %v4645
      %v4676 = vadd.f32 %v4432, %v4646
      %v4677 = vadd.f32 %v4433, %v4647
      %v4678 = vadd.f32 %v4434, %v4648
      %v4679 = vadd.f32 %v4435, %v4649
      %v4680 = vadd.f32 %v4436, %v4650
      %v4681 = vadd.f32 %v4437, %v4651
      %v4682 = vadd.f32 %v4438, %v4652
      %v4683 = vadd.f32 %v4439, %v4653
      %v4684 = vadd.f32 %v4440, %v4654
      %v4685 = vadd.f32 %v4441, %v4655
      %v4686 = vadd.f32 %v4442, %v4656
      %v4687 = vadd.f32 %v4443, %v4657
      %v4688 = vadd.f32 %v4444, %v4658
      %v4689 = vadd.f32 %v4445, %v4659
      %v4690 = vadd.f32 %v4446, %v4660
      %v4691 = vadd.f32 %v4447, %v4661
      %v4692 = vadd.f32 %v4448, %v4662
      %v4693 = vadd.f32 %v4449, %v4663
      %v4694 = vadd.f32 %v4450, %v4664
      %v4695 = vadd.f32 %v4451, %v4665
      %v4696 = vadd.f32 %v4452, %v4666
      %v4697 = vadd.f32 %v4453, %v4667
      %v4698 = vadd.f32 %v4454, %v4668
      %v4699 = vadd.f32 %v4455, %v4669
      %v4700 = vadd.f32 %v4456, %v4670
      %v4701 = vadd.f32 %v4457, %v4671
      %4702 = vset.pattern.permute.xlu0 1
      %4703 = vperm.xlu0 %4702, %v4458
      %v4704 = vpop.permute.xlu0 %4703
      %4706 = vset.pattern.permute.xlu0 1
      %4707 = vperm.xlu0 %4706, %v4459
      %v4708 = vpop.permute.xlu0 %4707
      %4710 = vset.pattern.permute.xlu0 1
      %4711 = vperm.xlu0 %4710, %v4460
      %v4712 = vpop.permute.xlu0 %4711
      %4714 = vset.pattern.permute.xlu0 1
      %4715 = vperm.xlu0 %4714, %v4461
      %v4716 = vpop.permute.xlu0 %4715
      %4718 = vset.pattern.permute.xlu0 1
      %4719 = vperm.xlu0 %4718, %v4462
      %v4720 = vpop.permute.xlu0 %4719
      %4722 = vset.pattern.permute.xlu0 1
      %4723 = vperm.xlu0 %4722, %v4463
      %v4724 = vpop.permute.xlu0 %4723
      %4726 = vset.pattern.permute.xlu0 1
      %4727 = vperm.xlu0 %4726, %v4464
      %v4728 = vpop.permute.xlu0 %4727
      %4730 = vset.pattern.permute.xlu0 1
      %4731 = vperm.xlu0 %4730, %v4465
      %v4732 = vpop.permute.xlu0 %4731
      %4734 = vset.pattern.permute.xlu0 1
      %4735 = vperm.xlu0 %4734, %v4466
      %v4736 = vpop.permute.xlu0 %4735
      %4738 = vset.pattern.permute.xlu0 1
      %4739 = vperm.xlu0 %4738, %v4467
      %v4740 = vpop.permute.xlu0 %4739
      %4742 = vset.pattern.permute.xlu0 1
      %4743 = vperm.xlu0 %4742, %v4468
      %v4744 = vpop.permute.xlu0 %4743
      %4746 = vset.pattern.permute.xlu0 1
      %4747 = vperm.xlu0 %4746, %v4469
      %v4748 = vpop.permute.xlu0 %4747
      %4750 = vset.pattern.permute.xlu0 1
      %4751 = vperm.xlu0 %4750, %v4470
      %v4752 = vpop.permute.xlu0 %4751
      %4754 = vset.pattern.permute.xlu0 1
      %4755 = vperm.xlu0 %4754, %v4471
      %v4756 = vpop.permute.xlu0 %4755
      %4758 = vset.pattern.permute.xlu0 1
      %4759 = vperm.xlu0 %4758, %v4472
      %v4760 = vpop.permute.xlu0 %4759
      %4762 = vset.pattern.permute.xlu0 1
      %4763 = vperm.xlu0 %4762, %v4473
      %v4764 = vpop.permute.xlu0 %4763
      %4766 = vset.pattern.permute.xlu0 1
      %4767 = vperm.xlu0 %4766, %v4474
      %v4768 = vpop.permute.xlu0 %4767
      %4770 = vset.pattern.permute.xlu0 1
      %4771 = vperm.xlu0 %4770, %v4475
      %v4772 = vpop.permute.xlu0 %4771
      %4774 = vset.pattern.permute.xlu0 1
      %4775 = vperm.xlu0 %4774, %v4476
      %v4776 = vpop.permute.xlu0 %4775
      %4778 = vset.pattern.permute.xlu0 1
      %4779 = vperm.xlu0 %4778, %v4477
      %v4780 = vpop.permute.xlu0 %4779
      %4782 = vset.pattern.permute.xlu0 1
      %4783 = vperm.xlu0 %4782, %v4478
      %v4784 = vpop.permute.xlu0 %4783
      %4786 = vset.pattern.permute.xlu0 1
      %4787 = vperm.xlu0 %4786, %v4479
      %v4788 = vpop.permute.xlu0 %4787
      %4790 = vset.pattern.permute.xlu0 1
      %4791 = vperm.xlu0 %4790, %v4480
      %v4792 = vpop.permute.xlu0 %4791
      %4794 = vset.pattern.permute.xlu0 1
      %4795 = vperm.xlu0 %4794, %v4481
      %v4796 = vpop.permute.xlu0 %4795
      %4798 = vset.pattern.permute.xlu0 1
      %4799 = vperm.xlu0 %4798, %v4482
      %v4800 = vpop.permute.xlu0 %4799
      %4802 = vset.pattern.permute.xlu0 1
      %4803 = vperm.xlu0 %4802, %v4483
      %v4804 = vpop.permute.xlu0 %4803
      %4806 = vset.pattern.permute.xlu0 1
      %4807 = vperm.xlu0 %4806, %v4484
      %v4808 = vpop.permute.xlu0 %4807
      %4810 = vset.pattern.permute.xlu0 1
      %4811 = vperm.xlu0 %4810, %v4485
      %v4812 = vpop.permute.xlu0 %4811
      %4814 = vset.pattern.permute.xlu0 1
      %4815 = vperm.xlu0 %4814, %v4486
      %v4816 = vpop.permute.xlu0 %4815
      %4818 = vset.pattern.permute.xlu0 1
      %4819 = vperm.xlu0 %4818, %v4487
      %v4820 = vpop.permute.xlu0 %4819
      %v4822 = vlaneseq
      %v4823 = vshrl.u32 %v4822, 7
      %v4824 = vsub.s32 6, %v4823
      %v4825 = vrot.slane %v200, %v4824
      %v4826 = vmul.f32 %v4704, %v4825
      %v4827 = vmul.f32 %v4708, %v4825
      %v4828 = vmul.f32 %v4712, %v4825
      %v4829 = vmul.f32 %v4716, %v4825
      %v4830 = vmul.f32 %v4720, %v4825
      %v4831 = vmul.f32 %v4724, %v4825
      %v4832 = vmul.f32 %v4728, %v4825
      %v4833 = vmul.f32 %v4732, %v4825
      %v4834 = vmul.f32 %v4736, %v4825
      %v4835 = vmul.f32 %v4740, %v4825
      %v4836 = vmul.f32 %v4744, %v4825
      %v4837 = vmul.f32 %v4748, %v4825
      %v4838 = vmul.f32 %v4752, %v4825
      %v4839 = vmul.f32 %v4756, %v4825
      %v4840 = vmul.f32 %v4760, %v4825
      %v4841 = vmul.f32 %v4764, %v4825
      %v4842 = vmul.f32 %v4768, %v4825
      %v4843 = vmul.f32 %v4772, %v4825
      %v4844 = vmul.f32 %v4776, %v4825
      %v4845 = vmul.f32 %v4780, %v4825
      %v4846 = vmul.f32 %v4784, %v4825
      %v4847 = vmul.f32 %v4788, %v4825
      %v4848 = vmul.f32 %v4792, %v4825
      %v4849 = vmul.f32 %v4796, %v4825
      %v4850 = vmul.f32 %v4800, %v4825
      %v4851 = vmul.f32 %v4804, %v4825
      %v4852 = vmul.f32 %v4808, %v4825
      %v4853 = vmul.f32 %v4812, %v4825
      %v4854 = vmul.f32 %v4816, %v4825
      %v4855 = vmul.f32 %v4820, %v4825
      %v4856 = vadd.f32 %v4672, %v4826
      %v4857 = vadd.f32 %v4673, %v4827
      %v4858 = vadd.f32 %v4674, %v4828
      %v4859 = vadd.f32 %v4675, %v4829
      %v4860 = vadd.f32 %v4676, %v4830
      %v4861 = vadd.f32 %v4677, %v4831
      %v4862 = vadd.f32 %v4678, %v4832
      %v4863 = vadd.f32 %v4679, %v4833
      %v4864 = vadd.f32 %v4680, %v4834
      %v4865 = vadd.f32 %v4681, %v4835
      %v4866 = vadd.f32 %v4682, %v4836
      %v4867 = vadd.f32 %v4683, %v4837
      %v4868 = vadd.f32 %v4684, %v4838
      %v4869 = vadd.f32 %v4685, %v4839
      %v4870 = vadd.f32 %v4686, %v4840
      %v4871 = vadd.f32 %v4687, %v4841
      %v4872 = vadd.f32 %v4688, %v4842
      %v4873 = vadd.f32 %v4689, %v4843
      %v4874 = vadd.f32 %v4690, %v4844
      %v4875 = vadd.f32 %v4691, %v4845
      %v4876 = vadd.f32 %v4692, %v4846
      %v4877 = vadd.f32 %v4693, %v4847
      %v4878 = vadd.f32 %v4694, %v4848
      %v4879 = vadd.f32 %v4695, %v4849
      %v4880 = vadd.f32 %v4696, %v4850
      %v4881 = vadd.f32 %v4697, %v4851
      %v4882 = vadd.f32 %v4698, %v4852
      %v4883 = vadd.f32 %v4699, %v4853
      %v4884 = vadd.f32 %v4700, %v4854
      %v4885 = vadd.f32 %v4701, %v4855
      %4886 = vset.pattern.permute.xlu0 2
      %4887 = vperm.xlu0 %4886, %v4458
      %v4888 = vpop.permute.xlu0 %4887
      %4890 = vset.pattern.permute.xlu0 2
      %4891 = vperm.xlu0 %4890, %v4459
      %v4892 = vpop.permute.xlu0 %4891
      %4894 = vset.pattern.permute.xlu0 2
      %4895 = vperm.xlu0 %4894, %v4460
      %v4896 = vpop.permute.xlu0 %4895
      %4898 = vset.pattern.permute.xlu0 2
      %4899 = vperm.xlu0 %4898, %v4461
      %v4900 = vpop.permute.xlu0 %4899
      %4902 = vset.pattern.permute.xlu0 2
      %4903 = vperm.xlu0 %4902, %v4462
      %v4904 = vpop.permute.xlu0 %4903
      %4906 = vset.pattern.permute.xlu0 2
      %4907 = vperm.xlu0 %4906, %v4463
      %v4908 = vpop.permute.xlu0 %4907
      %4910 = vset.pattern.permute.xlu0 2
      %4911 = vperm.xlu0 %4910, %v4464
      %v4912 = vpop.permute.xlu0 %4911
      %4914 = vset.pattern.permute.xlu0 2
      %4915 = vperm.xlu0 %4914, %v4465
      %v4916 = vpop.permute.xlu0 %4915
      %4918 = vset.pattern.permute.xlu0 2
      %4919 = vperm.xlu0 %4918, %v4466
      %v4920 = vpop.permute.xlu0 %4919
      %4922 = vset.pattern.permute.xlu0 2
      %4923 = vperm.xlu0 %4922, %v4467
      %v4924 = vpop.permute.xlu0 %4923
      %4926 = vset.pattern.permute.xlu0 2
      %4927 = vperm.xlu0 %4926, %v4468
      %v4928 = vpop.permute.xlu0 %4927
      %4930 = vset.pattern.permute.xlu0 2
      %4931 = vperm.xlu0 %4930, %v4469
      %v4932 = vpop.permute.xlu0 %4931
      %4934 = vset.pattern.permute.xlu0 2
      %4935 = vperm.xlu0 %4934, %v4470
      %v4936 = vpop.permute.xlu0 %4935
      %4938 = vset.pattern.permute.xlu0 2
      %4939 = vperm.xlu0 %4938, %v4471
      %v4940 = vpop.permute.xlu0 %4939
      %4942 = vset.pattern.permute.xlu0 2
      %4943 = vperm.xlu0 %4942, %v4472
      %v4944 = vpop.permute.xlu0 %4943
      %4946 = vset.pattern.permute.xlu0 2
      %4947 = vperm.xlu0 %4946, %v4473
      %v4948 = vpop.permute.xlu0 %4947
      %4950 = vset.pattern.permute.xlu0 2
      %4951 = vperm.xlu0 %4950, %v4474
      %v4952 = vpop.permute.xlu0 %4951
      %4954 = vset.pattern.permute.xlu0 2
      %4955 = vperm.xlu0 %4954, %v4475
      %v4956 = vpop.permute.xlu0 %4955
      %4958 = vset.pattern.permute.xlu0 2
      %4959 = vperm.xlu0 %4958, %v4476
      %v4960 = vpop.permute.xlu0 %4959
      %4962 = vset.pattern.permute.xlu0 2
      %4963 = vperm.xlu0 %4962, %v4477
      %v4964 = vpop.permute.xlu0 %4963
      %4966 = vset.pattern.permute.xlu0 2
      %4967 = vperm.xlu0 %4966, %v4478
      %v4968 = vpop.permute.xlu0 %4967
      %4970 = vset.pattern.permute.xlu0 2
      %4971 = vperm.xlu0 %4970, %v4479
      %v4972 = vpop.permute.xlu0 %4971
      %4974 = vset.pattern.permute.xlu0 2
      %4975 = vperm.xlu0 %4974, %v4480
      %v4976 = vpop.permute.xlu0 %4975
      %4978 = vset.pattern.permute.xlu0 2
      %4979 = vperm.xlu0 %4978, %v4481
      %v4980 = vpop.permute.xlu0 %4979
      %4982 = vset.pattern.permute.xlu0 2
      %4983 = vperm.xlu0 %4982, %v4482
      %v4984 = vpop.permute.xlu0 %4983
      %4986 = vset.pattern.permute.xlu0 2
      %4987 = vperm.xlu0 %4986, %v4483
      %v4988 = vpop.permute.xlu0 %4987
      %4990 = vset.pattern.permute.xlu0 2
      %4991 = vperm.xlu0 %4990, %v4484
      %v4992 = vpop.permute.xlu0 %4991
      %4994 = vset.pattern.permute.xlu0 2
      %4995 = vperm.xlu0 %4994, %v4485
      %v4996 = vpop.permute.xlu0 %4995
      %4998 = vset.pattern.permute.xlu0 2
      %4999 = vperm.xlu0 %4998, %v4486
      %v5000 = vpop.permute.xlu0 %4999
      %5002 = vset.pattern.permute.xlu0 2
      %5003 = vperm.xlu0 %5002, %v4487
      %v5004 = vpop.permute.xlu0 %5003
      %v5006 = vlaneseq
      %v5007 = vshrl.u32 %v5006, 7
      %v5008 = vsub.s32 7, %v5007
      %v5009 = vrot.slane %v200, %v5008
      %v5010 = vmul.f32 %v4888, %v5009
      %v5011 = vmul.f32 %v4892, %v5009
      %v5012 = vmul.f32 %v4896, %v5009
      %v5013 = vmul.f32 %v4900, %v5009
      %v5014 = vmul.f32 %v4904, %v5009
      %v5015 = vmul.f32 %v4908, %v5009
      %v5016 = vmul.f32 %v4912, %v5009
      %v5017 = vmul.f32 %v4916, %v5009
      %v5018 = vmul.f32 %v4920, %v5009
      %v5019 = vmul.f32 %v4924, %v5009
      %v5020 = vmul.f32 %v4928, %v5009
      %v5021 = vmul.f32 %v4932, %v5009
      %v5022 = vmul.f32 %v4936, %v5009
      %v5023 = vmul.f32 %v4940, %v5009
      %v5024 = vmul.f32 %v4944, %v5009
      %v5025 = vmul.f32 %v4948, %v5009
      %v5026 = vmul.f32 %v4952, %v5009
      %v5027 = vmul.f32 %v4956, %v5009
      %v5028 = vmul.f32 %v4960, %v5009
      %v5029 = vmul.f32 %v4964, %v5009
      %v5030 = vmul.f32 %v4968, %v5009
      %v5031 = vmul.f32 %v4972, %v5009
      %v5032 = vmul.f32 %v4976, %v5009
      %v5033 = vmul.f32 %v4980, %v5009
      %v5034 = vmul.f32 %v4984, %v5009
      %v5035 = vmul.f32 %v4988, %v5009
      %v5036 = vmul.f32 %v4992, %v5009
      %v5037 = vmul.f32 %v4996, %v5009
      %v5038 = vmul.f32 %v5000, %v5009
      %v5039 = vmul.f32 %v5004, %v5009
      %v5040 = vadd.f32 %v4856, %v5010
      %v5041 = vadd.f32 %v4857, %v5011
      %v5042 = vadd.f32 %v4858, %v5012
      %v5043 = vadd.f32 %v4859, %v5013
      %v5044 = vadd.f32 %v4860, %v5014
      %v5045 = vadd.f32 %v4861, %v5015
      %v5046 = vadd.f32 %v4862, %v5016
      %v5047 = vadd.f32 %v4863, %v5017
      %v5048 = vadd.f32 %v4864, %v5018
      %v5049 = vadd.f32 %v4865, %v5019
      %v5050 = vadd.f32 %v4866, %v5020
      %v5051 = vadd.f32 %v4867, %v5021
      %v5052 = vadd.f32 %v4868, %v5022
      %v5053 = vadd.f32 %v4869, %v5023
      %v5054 = vadd.f32 %v4870, %v5024
      %v5055 = vadd.f32 %v4871, %v5025
      %v5056 = vadd.f32 %v4872, %v5026
      %v5057 = vadd.f32 %v4873, %v5027
      %v5058 = vadd.f32 %v4874, %v5028
      %v5059 = vadd.f32 %v4875, %v5029
      %v5060 = vadd.f32 %v4876, %v5030
      %v5061 = vadd.f32 %v4877, %v5031
      %v5062 = vadd.f32 %v4878, %v5032
      %v5063 = vadd.f32 %v4879, %v5033
      %v5064 = vadd.f32 %v4880, %v5034
      %v5065 = vadd.f32 %v4881, %v5035
      %v5066 = vadd.f32 %v4882, %v5036
      %v5067 = vadd.f32 %v4883, %v5037
      %v5068 = vadd.f32 %v4884, %v5038
      %v5069 = vadd.f32 %v4885, %v5039
      %v5070 = vld [vmem:[%s3845 + $0x2] sm:$0xff]
      %v5071 = vld [vmem:[%s3845 + $0xa] sm:$0x7f]
      %v5072 = vld [vmem:[%s3845 + $0x1a] sm:$0xff]
      %v5073 = vld [vmem:[%s3845 + $0x22] sm:$0x7f]
      %v5074 = vld [vmem:[%s3845 + $0x32] sm:$0xff]
      %v5075 = vld [vmem:[%s3845 + $0x3a] sm:$0x7f]
      %v5076 = vld [vmem:[%s3845 + $0x4a] sm:$0xff]
      %v5077 = vld [vmem:[%s3845 + $0x52] sm:$0x7f]
      %v5078 = vld [vmem:[%s3845 + $0x62] sm:$0xff]
      %v5079 = vld [vmem:[%s3845 + $0x6a] sm:$0x7f]
      %v5080 = vld [vmem:[%s3845 + $0x7a] sm:$0xff]
      %v5081 = vld [vmem:[%s3845 + $0x82] sm:$0x7f]
      %v5082 = vld [vmem:[%s3845 + $0x92] sm:$0xff]
      %v5083 = vld [vmem:[%s3845 + $0x9a] sm:$0x7f]
      %v5084 = vld [vmem:[%s3845 + $0xaa] sm:$0xff]
      %v5085 = vld [vmem:[%s3845 + $0xb2] sm:$0x7f]
      %v5086 = vld [vmem:[%s3845 + $0xc2] sm:$0xff]
      %v5087 = vld [vmem:[%s3845 + $0xca] sm:$0x7f]
      %v5088 = vld [vmem:[%s3845 + $0xda] sm:$0xff]
      %v5089 = vld [vmem:[%s3845 + $0xe2] sm:$0x7f]
      %v5090 = vld [vmem:[%s3845 + $0xf2] sm:$0xff]
      %v5091 = vld [vmem:[%s3845 + $0xfa] sm:$0x7f]
      %v5092 = vld [vmem:[%s3845 + $0x10a] sm:$0xff]
      %v5093 = vld [vmem:[%s3845 + $0x112] sm:$0x7f]
      %v5094 = vld [vmem:[%s3845 + $0x122] sm:$0xff]
      %v5095 = vld [vmem:[%s3845 + $0x12a] sm:$0x7f]
      %v5096 = vld [vmem:[%s3845 + $0x13a] sm:$0xff]
      %v5097 = vld [vmem:[%s3845 + $0x142] sm:$0x7f]
      %v5098 = vld [vmem:[%s3845 + $0x152] sm:$0xff]
      %v5099 = vld [vmem:[%s3845 + $0x15a] sm:$0x7f]
      %5101 = vset.pattern.permute.xlu0 0
      %5102 = vperm.xlu0 %5101, %v5070
      %v5103 = vpop.permute.xlu0 %5102
      %5106 = vset.pattern.permute.xlu0 0
      %5107 = vperm.xlu0 %5106, %v5071
      %v5108 = vpop.permute.xlu0 %5107
      %5111 = vset.pattern.permute.xlu0 0
      %5112 = vperm.xlu0 %5111, %v5072
      %v5113 = vpop.permute.xlu0 %5112
      %5116 = vset.pattern.permute.xlu0 0
      %5117 = vperm.xlu0 %5116, %v5073
      %v5118 = vpop.permute.xlu0 %5117
      %5121 = vset.pattern.permute.xlu0 0
      %5122 = vperm.xlu0 %5121, %v5074
      %v5123 = vpop.permute.xlu0 %5122
      %5126 = vset.pattern.permute.xlu0 0
      %5127 = vperm.xlu0 %5126, %v5075
      %v5128 = vpop.permute.xlu0 %5127
      %5131 = vset.pattern.permute.xlu0 0
      %5132 = vperm.xlu0 %5131, %v5076
      %v5133 = vpop.permute.xlu0 %5132
      %5136 = vset.pattern.permute.xlu0 0
      %5137 = vperm.xlu0 %5136, %v5077
      %v5138 = vpop.permute.xlu0 %5137
      %5141 = vset.pattern.permute.xlu0 0
      %5142 = vperm.xlu0 %5141, %v5078
      %v5143 = vpop.permute.xlu0 %5142
      %5146 = vset.pattern.permute.xlu0 0
      %5147 = vperm.xlu0 %5146, %v5079
      %v5148 = vpop.permute.xlu0 %5147
      %5151 = vset.pattern.permute.xlu0 0
      %5152 = vperm.xlu0 %5151, %v5080
      %v5153 = vpop.permute.xlu0 %5152
      %5156 = vset.pattern.permute.xlu0 0
      %5157 = vperm.xlu0 %5156, %v5081
      %v5158 = vpop.permute.xlu0 %5157
      %5161 = vset.pattern.permute.xlu0 0
      %5162 = vperm.xlu0 %5161, %v5082
      %v5163 = vpop.permute.xlu0 %5162
      %5166 = vset.pattern.permute.xlu0 0
      %5167 = vperm.xlu0 %5166, %v5083
      %v5168 = vpop.permute.xlu0 %5167
      %5171 = vset.pattern.permute.xlu0 0
      %5172 = vperm.xlu0 %5171, %v5084
      %v5173 = vpop.permute.xlu0 %5172
      %5176 = vset.pattern.permute.xlu0 0
      %5177 = vperm.xlu0 %5176, %v5085
      %v5178 = vpop.permute.xlu0 %5177
      %5181 = vset.pattern.permute.xlu0 0
      %5182 = vperm.xlu0 %5181, %v5086
      %v5183 = vpop.permute.xlu0 %5182
      %5186 = vset.pattern.permute.xlu0 0
      %5187 = vperm.xlu0 %5186, %v5087
      %v5188 = vpop.permute.xlu0 %5187
      %5191 = vset.pattern.permute.xlu0 0
      %5192 = vperm.xlu0 %5191, %v5088
      %v5193 = vpop.permute.xlu0 %5192
      %5196 = vset.pattern.permute.xlu0 0
      %5197 = vperm.xlu0 %5196, %v5089
      %v5198 = vpop.permute.xlu0 %5197
      %5201 = vset.pattern.permute.xlu0 0
      %5202 = vperm.xlu0 %5201, %v5090
      %v5203 = vpop.permute.xlu0 %5202
      %5206 = vset.pattern.permute.xlu0 0
      %5207 = vperm.xlu0 %5206, %v5091
      %v5208 = vpop.permute.xlu0 %5207
      %5211 = vset.pattern.permute.xlu0 0
      %5212 = vperm.xlu0 %5211, %v5092
      %v5213 = vpop.permute.xlu0 %5212
      %5216 = vset.pattern.permute.xlu0 0
      %5217 = vperm.xlu0 %5216, %v5093
      %v5218 = vpop.permute.xlu0 %5217
      %5221 = vset.pattern.permute.xlu0 0
      %5222 = vperm.xlu0 %5221, %v5094
      %v5223 = vpop.permute.xlu0 %5222
      %5226 = vset.pattern.permute.xlu0 0
      %5227 = vperm.xlu0 %5226, %v5095
      %v5228 = vpop.permute.xlu0 %5227
      %5231 = vset.pattern.permute.xlu0 0
      %5232 = vperm.xlu0 %5231, %v5096
      %v5233 = vpop.permute.xlu0 %5232
      %5236 = vset.pattern.permute.xlu0 0
      %5237 = vperm.xlu0 %5236, %v5097
      %v5238 = vpop.permute.xlu0 %5237
      %5241 = vset.pattern.permute.xlu0 0
      %5242 = vperm.xlu0 %5241, %v5098
      %v5243 = vpop.permute.xlu0 %5242
      %5246 = vset.pattern.permute.xlu0 0
      %5247 = vperm.xlu0 %5246, %v5099
      %v5248 = vpop.permute.xlu0 %5247
      %v5250 = vlaneseq
      %v5251 = vshrl.u32 %v5250, 7
      %v5252 = vsub.s32 0, %v5251
      %v5253 = vrot.slane %v201, %v5252
      %v5254 = vmul.f32 %v5103, %v5253
      %v5255 = vmul.f32 %v5108, %v5253
      %v5256 = vmul.f32 %v5113, %v5253
      %v5257 = vmul.f32 %v5118, %v5253
      %v5258 = vmul.f32 %v5123, %v5253
      %v5259 = vmul.f32 %v5128, %v5253
      %v5260 = vmul.f32 %v5133, %v5253
      %v5261 = vmul.f32 %v5138, %v5253
      %v5262 = vmul.f32 %v5143, %v5253
      %v5263 = vmul.f32 %v5148, %v5253
      %v5264 = vmul.f32 %v5153, %v5253
      %v5265 = vmul.f32 %v5158, %v5253
      %v5266 = vmul.f32 %v5163, %v5253
      %v5267 = vmul.f32 %v5168, %v5253
      %v5268 = vmul.f32 %v5173, %v5253
      %v5269 = vmul.f32 %v5178, %v5253
      %v5270 = vmul.f32 %v5183, %v5253
      %v5271 = vmul.f32 %v5188, %v5253
      %v5272 = vmul.f32 %v5193, %v5253
      %v5273 = vmul.f32 %v5198, %v5253
      %v5274 = vmul.f32 %v5203, %v5253
      %v5275 = vmul.f32 %v5208, %v5253
      %v5276 = vmul.f32 %v5213, %v5253
      %v5277 = vmul.f32 %v5218, %v5253
      %v5278 = vmul.f32 %v5223, %v5253
      %v5279 = vmul.f32 %v5228, %v5253
      %v5280 = vmul.f32 %v5233, %v5253
      %v5281 = vmul.f32 %v5238, %v5253
      %v5282 = vmul.f32 %v5243, %v5253
      %v5283 = vmul.f32 %v5248, %v5253
      %v5284 = vadd.f32 %v5040, %v5254
      %v5285 = vadd.f32 %v5041, %v5255
      %v5286 = vadd.f32 %v5042, %v5256
      %v5287 = vadd.f32 %v5043, %v5257
      %v5288 = vadd.f32 %v5044, %v5258
      %v5289 = vadd.f32 %v5045, %v5259
      %v5290 = vadd.f32 %v5046, %v5260
      %v5291 = vadd.f32 %v5047, %v5261
      %v5292 = vadd.f32 %v5048, %v5262
      %v5293 = vadd.f32 %v5049, %v5263
      %v5294 = vadd.f32 %v5050, %v5264
      %v5295 = vadd.f32 %v5051, %v5265
      %v5296 = vadd.f32 %v5052, %v5266
      %v5297 = vadd.f32 %v5053, %v5267
      %v5298 = vadd.f32 %v5054, %v5268
      %v5299 = vadd.f32 %v5055, %v5269
      %v5300 = vadd.f32 %v5056, %v5270
      %v5301 = vadd.f32 %v5057, %v5271
      %v5302 = vadd.f32 %v5058, %v5272
      %v5303 = vadd.f32 %v5059, %v5273
      %v5304 = vadd.f32 %v5060, %v5274
      %v5305 = vadd.f32 %v5061, %v5275
      %v5306 = vadd.f32 %v5062, %v5276
      %v5307 = vadd.f32 %v5063, %v5277
      %v5308 = vadd.f32 %v5064, %v5278
      %v5309 = vadd.f32 %v5065, %v5279
      %v5310 = vadd.f32 %v5066, %v5280
      %v5311 = vadd.f32 %v5067, %v5281
      %v5312 = vadd.f32 %v5068, %v5282
      %v5313 = vadd.f32 %v5069, %v5283
      %5314 = vset.pattern.permute.xlu0 1
      %5315 = vperm.xlu0 %5314, %v5070
      %v5316 = vpop.permute.xlu0 %5315
      %5318 = vset.pattern.permute.xlu0 1
      %5319 = vperm.xlu0 %5318, %v5071
      %v5320 = vpop.permute.xlu0 %5319
      %5322 = vset.pattern.permute.xlu0 1
      %5323 = vperm.xlu0 %5322, %v5072
      %v5324 = vpop.permute.xlu0 %5323
      %5326 = vset.pattern.permute.xlu0 1
      %5327 = vperm.xlu0 %5326, %v5073
      %v5328 = vpop.permute.xlu0 %5327
      %5330 = vset.pattern.permute.xlu0 1
      %5331 = vperm.xlu0 %5330, %v5074
      %v5332 = vpop.permute.xlu0 %5331
      %5334 = vset.pattern.permute.xlu0 1
      %5335 = vperm.xlu0 %5334, %v5075
      %v5336 = vpop.permute.xlu0 %5335
      %5338 = vset.pattern.permute.xlu0 1
      %5339 = vperm.xlu0 %5338, %v5076
      %v5340 = vpop.permute.xlu0 %5339
      %5342 = vset.pattern.permute.xlu0 1
      %5343 = vperm.xlu0 %5342, %v5077
      %v5344 = vpop.permute.xlu0 %5343
      %5346 = vset.pattern.permute.xlu0 1
      %5347 = vperm.xlu0 %5346, %v5078
      %v5348 = vpop.permute.xlu0 %5347
      %5350 = vset.pattern.permute.xlu0 1
      %5351 = vperm.xlu0 %5350, %v5079
      %v5352 = vpop.permute.xlu0 %5351
      %5354 = vset.pattern.permute.xlu0 1
      %5355 = vperm.xlu0 %5354, %v5080
      %v5356 = vpop.permute.xlu0 %5355
      %5358 = vset.pattern.permute.xlu0 1
      %5359 = vperm.xlu0 %5358, %v5081
      %v5360 = vpop.permute.xlu0 %5359
      %5362 = vset.pattern.permute.xlu0 1
      %5363 = vperm.xlu0 %5362, %v5082
      %v5364 = vpop.permute.xlu0 %5363
      %5366 = vset.pattern.permute.xlu0 1
      %5367 = vperm.xlu0 %5366, %v5083
      %v5368 = vpop.permute.xlu0 %5367
      %5370 = vset.pattern.permute.xlu0 1
      %5371 = vperm.xlu0 %5370, %v5084
      %v5372 = vpop.permute.xlu0 %5371
      %5374 = vset.pattern.permute.xlu0 1
      %5375 = vperm.xlu0 %5374, %v5085
      %v5376 = vpop.permute.xlu0 %5375
      %5378 = vset.pattern.permute.xlu0 1
      %5379 = vperm.xlu0 %5378, %v5086
      %v5380 = vpop.permute.xlu0 %5379
      %5382 = vset.pattern.permute.xlu0 1
      %5383 = vperm.xlu0 %5382, %v5087
      %v5384 = vpop.permute.xlu0 %5383
      %5386 = vset.pattern.permute.xlu0 1
      %5387 = vperm.xlu0 %5386, %v5088
      %v5388 = vpop.permute.xlu0 %5387
      %5390 = vset.pattern.permute.xlu0 1
      %5391 = vperm.xlu0 %5390, %v5089
      %v5392 = vpop.permute.xlu0 %5391
      %5394 = vset.pattern.permute.xlu0 1
      %5395 = vperm.xlu0 %5394, %v5090
      %v5396 = vpop.permute.xlu0 %5395
      %5398 = vset.pattern.permute.xlu0 1
      %5399 = vperm.xlu0 %5398, %v5091
      %v5400 = vpop.permute.xlu0 %5399
      %5402 = vset.pattern.permute.xlu0 1
      %5403 = vperm.xlu0 %5402, %v5092
      %v5404 = vpop.permute.xlu0 %5403
      %5406 = vset.pattern.permute.xlu0 1
      %5407 = vperm.xlu0 %5406, %v5093
      %v5408 = vpop.permute.xlu0 %5407
      %5410 = vset.pattern.permute.xlu0 1
      %5411 = vperm.xlu0 %5410, %v5094
      %v5412 = vpop.permute.xlu0 %5411
      %5414 = vset.pattern.permute.xlu0 1
      %5415 = vperm.xlu0 %5414, %v5095
      %v5416 = vpop.permute.xlu0 %5415
      %5418 = vset.pattern.permute.xlu0 1
      %5419 = vperm.xlu0 %5418, %v5096
      %v5420 = vpop.permute.xlu0 %5419
      %5422 = vset.pattern.permute.xlu0 1
      %5423 = vperm.xlu0 %5422, %v5097
      %v5424 = vpop.permute.xlu0 %5423
      %5426 = vset.pattern.permute.xlu0 1
      %5427 = vperm.xlu0 %5426, %v5098
      %v5428 = vpop.permute.xlu0 %5427
      %5430 = vset.pattern.permute.xlu0 1
      %5431 = vperm.xlu0 %5430, %v5099
      %v5432 = vpop.permute.xlu0 %5431
      %v5434 = vlaneseq
      %v5435 = vshrl.u32 %v5434, 7
      %v5436 = vsub.s32 1, %v5435
      %v5437 = vrot.slane %v201, %v5436
      %v5438 = vmul.f32 %v5316, %v5437
      %v5439 = vmul.f32 %v5320, %v5437
      %v5440 = vmul.f32 %v5324, %v5437
      %v5441 = vmul.f32 %v5328, %v5437
      %v5442 = vmul.f32 %v5332, %v5437
      %v5443 = vmul.f32 %v5336, %v5437
      %v5444 = vmul.f32 %v5340, %v5437
      %v5445 = vmul.f32 %v5344, %v5437
      %v5446 = vmul.f32 %v5348, %v5437
      %v5447 = vmul.f32 %v5352, %v5437
      %v5448 = vmul.f32 %v5356, %v5437
      %v5449 = vmul.f32 %v5360, %v5437
      %v5450 = vmul.f32 %v5364, %v5437
      %v5451 = vmul.f32 %v5368, %v5437
      %v5452 = vmul.f32 %v5372, %v5437
      %v5453 = vmul.f32 %v5376, %v5437
      %v5454 = vmul.f32 %v5380, %v5437
      %v5455 = vmul.f32 %v5384, %v5437
      %v5456 = vmul.f32 %v5388, %v5437
      %v5457 = vmul.f32 %v5392, %v5437
      %v5458 = vmul.f32 %v5396, %v5437
      %v5459 = vmul.f32 %v5400, %v5437
      %v5460 = vmul.f32 %v5404, %v5437
      %v5461 = vmul.f32 %v5408, %v5437
      %v5462 = vmul.f32 %v5412, %v5437
      %v5463 = vmul.f32 %v5416, %v5437
      %v5464 = vmul.f32 %v5420, %v5437
      %v5465 = vmul.f32 %v5424, %v5437
      %v5466 = vmul.f32 %v5428, %v5437
      %v5467 = vmul.f32 %v5432, %v5437
      %v5468 = vadd.f32 %v5284, %v5438
      %v5469 = vadd.f32 %v5285, %v5439
      %v5470 = vadd.f32 %v5286, %v5440
      %v5471 = vadd.f32 %v5287, %v5441
      %v5472 = vadd.f32 %v5288, %v5442
      %v5473 = vadd.f32 %v5289, %v5443
      %v5474 = vadd.f32 %v5290, %v5444
      %v5475 = vadd.f32 %v5291, %v5445
      %v5476 = vadd.f32 %v5292, %v5446
      %v5477 = vadd.f32 %v5293, %v5447
      %v5478 = vadd.f32 %v5294, %v5448
      %v5479 = vadd.f32 %v5295, %v5449
      %v5480 = vadd.f32 %v5296, %v5450
      %v5481 = vadd.f32 %v5297, %v5451
      %v5482 = vadd.f32 %v5298, %v5452
      %v5483 = vadd.f32 %v5299, %v5453
      %v5484 = vadd.f32 %v5300, %v5454
      %v5485 = vadd.f32 %v5301, %v5455
      %v5486 = vadd.f32 %v5302, %v5456
      %v5487 = vadd.f32 %v5303, %v5457
      %v5488 = vadd.f32 %v5304, %v5458
      %v5489 = vadd.f32 %v5305, %v5459
      %v5490 = vadd.f32 %v5306, %v5460
      %v5491 = vadd.f32 %v5307, %v5461
      %v5492 = vadd.f32 %v5308, %v5462
      %v5493 = vadd.f32 %v5309, %v5463
      %v5494 = vadd.f32 %v5310, %v5464
      %v5495 = vadd.f32 %v5311, %v5465
      %v5496 = vadd.f32 %v5312, %v5466
      %v5497 = vadd.f32 %v5313, %v5467
      %5498 = vset.pattern.permute.xlu0 2
      %5499 = vperm.xlu0 %5498, %v5070
      %v5500 = vpop.permute.xlu0 %5499
      %5502 = vset.pattern.permute.xlu0 2
      %5503 = vperm.xlu0 %5502, %v5071
      %v5504 = vpop.permute.xlu0 %5503
      %5506 = vset.pattern.permute.xlu0 2
      %5507 = vperm.xlu0 %5506, %v5072
      %v5508 = vpop.permute.xlu0 %5507
      %5510 = vset.pattern.permute.xlu0 2
      %5511 = vperm.xlu0 %5510, %v5073
      %v5512 = vpop.permute.xlu0 %5511
      %5514 = vset.pattern.permute.xlu0 2
      %5515 = vperm.xlu0 %5514, %v5074
      %v5516 = vpop.permute.xlu0 %5515
      %5518 = vset.pattern.permute.xlu0 2
      %5519 = vperm.xlu0 %5518, %v5075
      %v5520 = vpop.permute.xlu0 %5519
      %5522 = vset.pattern.permute.xlu0 2
      %5523 = vperm.xlu0 %5522, %v5076
      %v5524 = vpop.permute.xlu0 %5523
      %5526 = vset.pattern.permute.xlu0 2
      %5527 = vperm.xlu0 %5526, %v5077
      %v5528 = vpop.permute.xlu0 %5527
      %5530 = vset.pattern.permute.xlu0 2
      %5531 = vperm.xlu0 %5530, %v5078
      %v5532 = vpop.permute.xlu0 %5531
      %5534 = vset.pattern.permute.xlu0 2
      %5535 = vperm.xlu0 %5534, %v5079
      %v5536 = vpop.permute.xlu0 %5535
      %5538 = vset.pattern.permute.xlu0 2
      %5539 = vperm.xlu0 %5538, %v5080
      %v5540 = vpop.permute.xlu0 %5539
      %5542 = vset.pattern.permute.xlu0 2
      %5543 = vperm.xlu0 %5542, %v5081
      %v5544 = vpop.permute.xlu0 %5543
      %5546 = vset.pattern.permute.xlu0 2
      %5547 = vperm.xlu0 %5546, %v5082
      %v5548 = vpop.permute.xlu0 %5547
      %5550 = vset.pattern.permute.xlu0 2
      %5551 = vperm.xlu0 %5550, %v5083
      %v5552 = vpop.permute.xlu0 %5551
      %5554 = vset.pattern.permute.xlu0 2
      %5555 = vperm.xlu0 %5554, %v5084
      %v5556 = vpop.permute.xlu0 %5555
      %5558 = vset.pattern.permute.xlu0 2
      %5559 = vperm.xlu0 %5558, %v5085
      %v5560 = vpop.permute.xlu0 %5559
      %5562 = vset.pattern.permute.xlu0 2
      %5563 = vperm.xlu0 %5562, %v5086
      %v5564 = vpop.permute.xlu0 %5563
      %5566 = vset.pattern.permute.xlu0 2
      %5567 = vperm.xlu0 %5566, %v5087
      %v5568 = vpop.permute.xlu0 %5567
      %5570 = vset.pattern.permute.xlu0 2
      %5571 = vperm.xlu0 %5570, %v5088
      %v5572 = vpop.permute.xlu0 %5571
      %5574 = vset.pattern.permute.xlu0 2
      %5575 = vperm.xlu0 %5574, %v5089
      %v5576 = vpop.permute.xlu0 %5575
      %5578 = vset.pattern.permute.xlu0 2
      %5579 = vperm.xlu0 %5578, %v5090
      %v5580 = vpop.permute.xlu0 %5579
      %5582 = vset.pattern.permute.xlu0 2
      %5583 = vperm.xlu0 %5582, %v5091
      %v5584 = vpop.permute.xlu0 %5583
      %5586 = vset.pattern.permute.xlu0 2
      %5587 = vperm.xlu0 %5586, %v5092
      %v5588 = vpop.permute.xlu0 %5587
      %5590 = vset.pattern.permute.xlu0 2
      %5591 = vperm.xlu0 %5590, %v5093
      %v5592 = vpop.permute.xlu0 %5591
      %5594 = vset.pattern.permute.xlu0 2
      %5595 = vperm.xlu0 %5594, %v5094
      %v5596 = vpop.permute.xlu0 %5595
      %5598 = vset.pattern.permute.xlu0 2
      %5599 = vperm.xlu0 %5598, %v5095
      %v5600 = vpop.permute.xlu0 %5599
      %5602 = vset.pattern.permute.xlu0 2
      %5603 = vperm.xlu0 %5602, %v5096
      %v5604 = vpop.permute.xlu0 %5603
      %5606 = vset.pattern.permute.xlu0 2
      %5607 = vperm.xlu0 %5606, %v5097
      %v5608 = vpop.permute.xlu0 %5607
      %5610 = vset.pattern.permute.xlu0 2
      %5611 = vperm.xlu0 %5610, %v5098
      %v5612 = vpop.permute.xlu0 %5611
      %5614 = vset.pattern.permute.xlu0 2
      %5615 = vperm.xlu0 %5614, %v5099
      %v5616 = vpop.permute.xlu0 %5615
      %v5618 = vlaneseq
      %v5619 = vshrl.u32 %v5618, 7
      %v5620 = vsub.s32 2, %v5619
      %v5621 = vrot.slane %v201, %v5620
      %v5622 = vmul.f32 %v5500, %v5621
      %v5623 = vmul.f32 %v5504, %v5621
      %v5624 = vmul.f32 %v5508, %v5621
      %v5625 = vmul.f32 %v5512, %v5621
      %v5626 = vmul.f32 %v5516, %v5621
      %v5627 = vmul.f32 %v5520, %v5621
      %v5628 = vmul.f32 %v5524, %v5621
      %v5629 = vmul.f32 %v5528, %v5621
      %v5630 = vmul.f32 %v5532, %v5621
      %v5631 = vmul.f32 %v5536, %v5621
      %v5632 = vmul.f32 %v5540, %v5621
      %v5633 = vmul.f32 %v5544, %v5621
      %v5634 = vmul.f32 %v5548, %v5621
      %v5635 = vmul.f32 %v5552, %v5621
      %v5636 = vmul.f32 %v5556, %v5621
      %v5637 = vmul.f32 %v5560, %v5621
      %v5638 = vmul.f32 %v5564, %v5621
      %v5639 = vmul.f32 %v5568, %v5621
      %v5640 = vmul.f32 %v5572, %v5621
      %v5641 = vmul.f32 %v5576, %v5621
      %v5642 = vmul.f32 %v5580, %v5621
      %v5643 = vmul.f32 %v5584, %v5621
      %v5644 = vmul.f32 %v5588, %v5621
      %v5645 = vmul.f32 %v5592, %v5621
      %v5646 = vmul.f32 %v5596, %v5621
      %v5647 = vmul.f32 %v5600, %v5621
      %v5648 = vmul.f32 %v5604, %v5621
      %v5649 = vmul.f32 %v5608, %v5621
      %v5650 = vmul.f32 %v5612, %v5621
      %v5651 = vmul.f32 %v5616, %v5621
      %v5652 = vadd.f32 %v5468, %v5622
      %v5653 = vadd.f32 %v5469, %v5623
      %v5654 = vadd.f32 %v5470, %v5624
      %v5655 = vadd.f32 %v5471, %v5625
      %v5656 = vadd.f32 %v5472, %v5626
      %v5657 = vadd.f32 %v5473, %v5627
      %v5658 = vadd.f32 %v5474, %v5628
      %v5659 = vadd.f32 %v5475, %v5629
      %v5660 = vadd.f32 %v5476, %v5630
      %v5661 = vadd.f32 %v5477, %v5631
      %v5662 = vadd.f32 %v5478, %v5632
      %v5663 = vadd.f32 %v5479, %v5633
      %v5664 = vadd.f32 %v5480, %v5634
      %v5665 = vadd.f32 %v5481, %v5635
      %v5666 = vadd.f32 %v5482, %v5636
      %v5667 = vadd.f32 %v5483, %v5637
      %v5668 = vadd.f32 %v5484, %v5638
      %v5669 = vadd.f32 %v5485, %v5639
      %v5670 = vadd.f32 %v5486, %v5640
      %v5671 = vadd.f32 %v5487, %v5641
      %v5672 = vadd.f32 %v5488, %v5642
      %v5673 = vadd.f32 %v5489, %v5643
      %v5674 = vadd.f32 %v5490, %v5644
      %v5675 = vadd.f32 %v5491, %v5645
      %v5676 = vadd.f32 %v5492, %v5646
      %v5677 = vadd.f32 %v5493, %v5647
      %v5678 = vadd.f32 %v5494, %v5648
      %v5679 = vadd.f32 %v5495, %v5649
      %v5680 = vadd.f32 %v5496, %v5650
      %v5681 = vadd.f32 %v5497, %v5651
      %v5682 = vld [vmem:[%s2] sm:$0x1]
      %v5684 = vlaneseq
      %v5685 = vshrl.u32 %v5684, 7
      %v5686 = vsub.s32 0, %v5685
      %v5687 = vrot.slane %v5682, %v5686
      %v5689 = vmul.f32 %v5652, %v5687
      %v5690 = vmul.f32 %v5653, %v5687
      %v5691 = vmul.f32 %v5654, %v5687
      %v5692 = vmul.f32 %v5655, %v5687
      %v5693 = vmul.f32 %v5656, %v5687
      %v5694 = vmul.f32 %v5657, %v5687
      %v5695 = vmul.f32 %v5658, %v5687
      %v5696 = vmul.f32 %v5659, %v5687
      %v5697 = vmul.f32 %v5660, %v5687
      %v5698 = vmul.f32 %v5661, %v5687
      %v5699 = vmul.f32 %v5662, %v5687
      %v5700 = vmul.f32 %v5663, %v5687
      %v5701 = vmul.f32 %v5664, %v5687
      %v5702 = vmul.f32 %v5665, %v5687
      %v5703 = vmul.f32 %v5666, %v5687
      %v5704 = vmul.f32 %v5667, %v5687
      %v5705 = vmul.f32 %v5668, %v5687
      %v5706 = vmul.f32 %v5669, %v5687
      %v5707 = vmul.f32 %v5670, %v5687
      %v5708 = vmul.f32 %v5671, %v5687
      %v5709 = vmul.f32 %v5672, %v5687
      %v5710 = vmul.f32 %v5673, %v5687
      %v5711 = vmul.f32 %v5674, %v5687
      %v5712 = vmul.f32 %v5675, %v5687
      %v5713 = vmul.f32 %v5676, %v5687
      %v5714 = vmul.f32 %v5677, %v5687
      %v5715 = vmul.f32 %v5678, %v5687
      %v5716 = vmul.f32 %v5679, %v5687
      %v5717 = vmul.f32 %v5680, %v5687
      %v5718 = vmul.f32 %v5681, %v5687
      %v5719 = vld [vmem:[%s3] sm:$0x1]
      %v5721 = vlaneseq
      %v5722 = vshrl.u32 %v5721, 7
      %v5723 = vsub.s32 0, %v5722
      %v5724 = vrot.slane %v5719, %v5723
      %v5726 = vadd.f32 %v5689, %v5724
      %v5727 = vadd.f32 %v5690, %v5724
      %v5728 = vadd.f32 %v5691, %v5724
      %v5729 = vadd.f32 %v5692, %v5724
      %v5730 = vadd.f32 %v5693, %v5724
      %v5731 = vadd.f32 %v5694, %v5724
      %v5732 = vadd.f32 %v5695, %v5724
      %v5733 = vadd.f32 %v5696, %v5724
      %v5734 = vadd.f32 %v5697, %v5724
      %v5735 = vadd.f32 %v5698, %v5724
      %v5736 = vadd.f32 %v5699, %v5724
      %v5737 = vadd.f32 %v5700, %v5724
      %v5738 = vadd.f32 %v5701, %v5724
      %v5739 = vadd.f32 %v5702, %v5724
      %v5740 = vadd.f32 %v5703, %v5724
      %v5741 = vadd.f32 %v5704, %v5724
      %v5742 = vadd.f32 %v5705, %v5724
      %v5743 = vadd.f32 %v5706, %v5724
      %v5744 = vadd.f32 %v5707, %v5724
      %v5745 = vadd.f32 %v5708, %v5724
      %v5746 = vadd.f32 %v5709, %v5724
      %v5747 = vadd.f32 %v5710, %v5724
      %v5748 = vadd.f32 %v5711, %v5724
      %v5749 = vadd.f32 %v5712, %v5724
      %v5750 = vadd.f32 %v5713, %v5724
      %v5751 = vadd.f32 %v5714, %v5724
      %v5752 = vadd.f32 %v5715, %v5724
      %v5753 = vadd.f32 %v5716, %v5724
      %v5754 = vadd.f32 %v5717, %v5724
      %v5755 = vadd.f32 %v5718, %v5724
      %v5756 = vxor.u32 %v5726, 2147483648
      %v5757 = vxor.u32 %v5727, 2147483648
      %v5758 = vxor.u32 %v5728, 2147483648
      %v5759 = vxor.u32 %v5729, 2147483648
      %v5760 = vxor.u32 %v5730, 2147483648
      %v5761 = vxor.u32 %v5731, 2147483648
      %v5762 = vxor.u32 %v5732, 2147483648
      %v5763 = vxor.u32 %v5733, 2147483648
      %v5764 = vxor.u32 %v5734, 2147483648
      %v5765 = vxor.u32 %v5735, 2147483648
      %v5766 = vxor.u32 %v5736, 2147483648
      %v5767 = vxor.u32 %v5737, 2147483648
      %v5768 = vxor.u32 %v5738, 2147483648
      %v5769 = vxor.u32 %v5739, 2147483648
      %v5770 = vxor.u32 %v5740, 2147483648
      %v5771 = vxor.u32 %v5741, 2147483648
      %v5772 = vxor.u32 %v5742, 2147483648
      %v5773 = vxor.u32 %v5743, 2147483648
      %v5774 = vxor.u32 %v5744, 2147483648
      %v5775 = vxor.u32 %v5745, 2147483648
      %v5776 = vxor.u32 %v5746, 2147483648
      %v5777 = vxor.u32 %v5747, 2147483648
      %v5778 = vxor.u32 %v5748, 2147483648
      %v5779 = vxor.u32 %v5749, 2147483648
      %v5780 = vxor.u32 %v5750, 2147483648
      %v5781 = vxor.u32 %v5751, 2147483648
      %v5782 = vxor.u32 %v5752, 2147483648
      %v5783 = vxor.u32 %v5753, 2147483648
      %v5784 = vxor.u32 %v5754, 2147483648
      %v5785 = vxor.u32 %v5755, 2147483648
      %v5786 = vmul.f32 %v5756, 1.442695
      %v5787 = vpow.pop %v5786
      %v5788 = vmul.f32 %v5757, 1.442695
      %v5789 = vpow.pop %v5788
      %v5790 = vmul.f32 %v5758, 1.442695
      %v5791 = vpow.pop %v5790
      %v5792 = vmul.f32 %v5759, 1.442695
      %v5793 = vpow.pop %v5792
      %v5794 = vmul.f32 %v5760, 1.442695
      %v5795 = vpow.pop %v5794
      %v5796 = vmul.f32 %v5761, 1.442695
      %v5797 = vpow.pop %v5796
      %v5798 = vmul.f32 %v5762, 1.442695
      %v5799 = vpow.pop %v5798
      %v5800 = vmul.f32 %v5763, 1.442695
      %v5801 = vpow.pop %v5800
      %v5802 = vmul.f32 %v5764, 1.442695
      %v5803 = vpow.pop %v5802
      %v5804 = vmul.f32 %v5765, 1.442695
      %v5805 = vpow.pop %v5804
      %v5806 = vmul.f32 %v5766, 1.442695
      %v5807 = vpow.pop %v5806
      %v5808 = vmul.f32 %v5767, 1.442695
      %v5809 = vpow.pop %v5808
      %v5810 = vmul.f32 %v5768, 1.442695
      %v5811 = vpow.pop %v5810
      %v5812 = vmul.f32 %v5769, 1.442695
      %v5813 = vpow.pop %v5812
      %v5814 = vmul.f32 %v5770, 1.442695
      %v5815 = vpow.pop %v5814
      %v5816 = vmul.f32 %v5771, 1.442695
      %v5817 = vpow.pop %v5816
      %v5818 = vmul.f32 %v5772, 1.442695
      %v5819 = vpow.pop %v5818
      %v5820 = vmul.f32 %v5773, 1.442695
      %v5821 = vpow.pop %v5820
      %v5822 = vmul.f32 %v5774, 1.442695
      %v5823 = vpow.pop %v5822
      %v5824 = vmul.f32 %v5775, 1.442695
      %v5825 = vpow.pop %v5824
      %v5826 = vmul.f32 %v5776, 1.442695
      %v5827 = vpow.pop %v5826
      %v5828 = vmul.f32 %v5777, 1.442695
      %v5829 = vpow.pop %v5828
      %v5830 = vmul.f32 %v5778, 1.442695
      %v5831 = vpow.pop %v5830
      %v5832 = vmul.f32 %v5779, 1.442695
      %v5833 = vpow.pop %v5832
      %v5834 = vmul.f32 %v5780, 1.442695
      %v5835 = vpow.pop %v5834
      %v5836 = vmul.f32 %v5781, 1.442695
      %v5837 = vpow.pop %v5836
      %v5838 = vmul.f32 %v5782, 1.442695
      %v5839 = vpow.pop %v5838
      %v5840 = vmul.f32 %v5783, 1.442695
      %v5841 = vpow.pop %v5840
      %v5842 = vmul.f32 %v5784, 1.442695
      %v5843 = vpow.pop %v5842
      %v5844 = vmul.f32 %v5785, 1.442695
      %v5845 = vpow.pop %v5844
      %v5846 = vadd.f32 %v5787, 1.0
      %v5847 = vadd.f32 %v5789, 1.0
      %v5848 = vadd.f32 %v5791, 1.0
      %v5849 = vadd.f32 %v5793, 1.0
      %v5850 = vadd.f32 %v5795, 1.0
      %v5851 = vadd.f32 %v5797, 1.0
      %v5852 = vadd.f32 %v5799, 1.0
      %v5853 = vadd.f32 %v5801, 1.0
      %v5854 = vadd.f32 %v5803, 1.0
      %v5855 = vadd.f32 %v5805, 1.0
      %v5856 = vadd.f32 %v5807, 1.0
      %v5857 = vadd.f32 %v5809, 1.0
      %v5858 = vadd.f32 %v5811, 1.0
      %v5859 = vadd.f32 %v5813, 1.0
      %v5860 = vadd.f32 %v5815, 1.0
      %v5861 = vadd.f32 %v5817, 1.0
      %v5862 = vadd.f32 %v5819, 1.0
      %v5863 = vadd.f32 %v5821, 1.0
      %v5864 = vadd.f32 %v5823, 1.0
      %v5865 = vadd.f32 %v5825, 1.0
      %v5866 = vadd.f32 %v5827, 1.0
      %v5867 = vadd.f32 %v5829, 1.0
      %v5868 = vadd.f32 %v5831, 1.0
      %v5869 = vadd.f32 %v5833, 1.0
      %v5870 = vadd.f32 %v5835, 1.0
      %v5871 = vadd.f32 %v5837, 1.0
      %v5872 = vadd.f32 %v5839, 1.0
      %v5873 = vadd.f32 %v5841, 1.0
      %v5874 = vadd.f32 %v5843, 1.0
      %v5875 = vadd.f32 %v5845, 1.0
      %v5876 = vrcp.pop %v5846
      %v5877 = vmul.f32 1.0, %v5876
      %v5878 = vrcp.pop %v5847
      %v5879 = vmul.f32 1.0, %v5878
      %v5880 = vrcp.pop %v5848
      %v5881 = vmul.f32 1.0, %v5880
      %v5882 = vrcp.pop %v5849
      %v5883 = vmul.f32 1.0, %v5882
      %v5884 = vrcp.pop %v5850
      %v5885 = vmul.f32 1.0, %v5884
      %v5886 = vrcp.pop %v5851
      %v5887 = vmul.f32 1.0, %v5886
      %v5888 = vrcp.pop %v5852
      %v5889 = vmul.f32 1.0, %v5888
      %v5890 = vrcp.pop %v5853
      %v5891 = vmul.f32 1.0, %v5890
      %v5892 = vrcp.pop %v5854
      %v5893 = vmul.f32 1.0, %v5892
      %v5894 = vrcp.pop %v5855
      %v5895 = vmul.f32 1.0, %v5894
      %v5896 = vrcp.pop %v5856
      %v5897 = vmul.f32 1.0, %v5896
      %v5898 = vrcp.pop %v5857
      %v5899 = vmul.f32 1.0, %v5898
      %v5900 = vrcp.pop %v5858
      %v5901 = vmul.f32 1.0, %v5900
      %v5902 = vrcp.pop %v5859
      %v5903 = vmul.f32 1.0, %v5902
      %v5904 = vrcp.pop %v5860
      %v5905 = vmul.f32 1.0, %v5904
      %v5906 = vrcp.pop %v5861
      %v5907 = vmul.f32 1.0, %v5906
      %v5908 = vrcp.pop %v5862
      %v5909 = vmul.f32 1.0, %v5908
      %v5910 = vrcp.pop %v5863
      %v5911 = vmul.f32 1.0, %v5910
      %v5912 = vrcp.pop %v5864
      %v5913 = vmul.f32 1.0, %v5912
      %v5914 = vrcp.pop %v5865
      %v5915 = vmul.f32 1.0, %v5914
      %v5916 = vrcp.pop %v5866
      %v5917 = vmul.f32 1.0, %v5916
      %v5918 = vrcp.pop %v5867
      %v5919 = vmul.f32 1.0, %v5918
      %v5920 = vrcp.pop %v5868
      %v5921 = vmul.f32 1.0, %v5920
      %v5922 = vrcp.pop %v5869
      %v5923 = vmul.f32 1.0, %v5922
      %v5924 = vrcp.pop %v5870
      %v5925 = vmul.f32 1.0, %v5924
      %v5926 = vrcp.pop %v5871
      %v5927 = vmul.f32 1.0, %v5926
      %v5928 = vrcp.pop %v5872
      %v5929 = vmul.f32 1.0, %v5928
      %v5930 = vrcp.pop %v5873
      %v5931 = vmul.f32 1.0, %v5930
      %v5932 = vrcp.pop %v5874
      %v5933 = vmul.f32 1.0, %v5932
      %v5934 = vrcp.pop %v5875
      %v5935 = vmul.f32 1.0, %v5934
      %v5936 = vmul.f32 %v5726, %v5877
      %v5937 = vmul.f32 %v5727, %v5879
      %v5938 = vmul.f32 %v5728, %v5881
      %v5939 = vmul.f32 %v5729, %v5883
      %v5940 = vmul.f32 %v5730, %v5885
      %v5941 = vmul.f32 %v5731, %v5887
      %v5942 = vmul.f32 %v5732, %v5889
      %v5943 = vmul.f32 %v5733, %v5891
      %v5944 = vmul.f32 %v5734, %v5893
      %v5945 = vmul.f32 %v5735, %v5895
      %v5946 = vmul.f32 %v5736, %v5897
      %v5947 = vmul.f32 %v5737, %v5899
      %v5948 = vmul.f32 %v5738, %v5901
      %v5949 = vmul.f32 %v5739, %v5903
      %v5950 = vmul.f32 %v5740, %v5905
      %v5951 = vmul.f32 %v5741, %v5907
      %v5952 = vmul.f32 %v5742, %v5909
      %v5953 = vmul.f32 %v5743, %v5911
      %v5954 = vmul.f32 %v5744, %v5913
      %v5955 = vmul.f32 %v5745, %v5915
      %v5956 = vmul.f32 %v5746, %v5917
      %v5957 = vmul.f32 %v5747, %v5919
      %v5958 = vmul.f32 %v5748, %v5921
      %v5959 = vmul.f32 %v5749, %v5923
      %v5960 = vmul.f32 %v5750, %v5925
      %v5961 = vmul.f32 %v5751, %v5927
      %v5962 = vmul.f32 %v5752, %v5929
      %v5963 = vmul.f32 %v5753, %v5931
      %v5964 = vmul.f32 %v5754, %v5933
      %v5965 = vmul.f32 %v5755, %v5935
      %5966 = vst [vmem:[%s197] sm:$0xff] %v5936
      %5967 = vst [vmem:[%s197 + $0x8] sm:$0x7f] %v5937
      %5968 = vst [vmem:[%s197 + $0x10] sm:$0xff] %v5938
      %5969 = vst [vmem:[%s197 + $0x18] sm:$0x7f] %v5939
      %5970 = vst [vmem:[%s197 + $0x20] sm:$0xff] %v5940
      %5971 = vst [vmem:[%s197 + $0x28] sm:$0x7f] %v5941
      %5972 = vst [vmem:[%s197 + $0x30] sm:$0xff] %v5942
      %5973 = vst [vmem:[%s197 + $0x38] sm:$0x7f] %v5943
      %5974 = vst [vmem:[%s197 + $0x40] sm:$0xff] %v5944
      %5975 = vst [vmem:[%s197 + $0x48] sm:$0x7f] %v5945
      %5976 = vst [vmem:[%s197 + $0x50] sm:$0xff] %v5946
      %5977 = vst [vmem:[%s197 + $0x58] sm:$0x7f] %v5947
      %5978 = vst [vmem:[%s197 + $0x60] sm:$0xff] %v5948
      %5979 = vst [vmem:[%s197 + $0x68] sm:$0x7f] %v5949
      %5980 = vst [vmem:[%s197 + $0x70] sm:$0xff] %v5950
      %5981 = vst [vmem:[%s197 + $0x78] sm:$0x7f] %v5951
      %5982 = vst [vmem:[%s197 + $0x80] sm:$0xff] %v5952
      %5983 = vst [vmem:[%s197 + $0x88] sm:$0x7f] %v5953
      %5984 = vst [vmem:[%s197 + $0x90] sm:$0xff] %v5954
      %5985 = vst [vmem:[%s197 + $0x98] sm:$0x7f] %v5955
      %5986 = vst [vmem:[%s197 + $0xa0] sm:$0xff] %v5956
      %5987 = vst [vmem:[%s197 + $0xa8] sm:$0x7f] %v5957
      %5988 = vst [vmem:[%s197 + $0xb0] sm:$0xff] %v5958
      %5989 = vst [vmem:[%s197 + $0xb8] sm:$0x7f] %v5959
      %5990 = vst [vmem:[%s197 + $0xc0] sm:$0xff] %v5960
      %5991 = vst [vmem:[%s197 + $0xc8] sm:$0x7f] %v5961
      %5992 = vst [vmem:[%s197 + $0xd0] sm:$0xff] %v5962
      %5993 = vst [vmem:[%s197 + $0xd8] sm:$0x7f] %v5963
      %5994 = vst [vmem:[%s197 + $0xe0] sm:$0xff] %v5964
      %5995 = vst [vmem:[%s197 + $0xe8] sm:$0x7f] %v5965
      %p5996 = scmp.lt.s32.totalorder %s15, 1
      %s5997 = scalar_select %p5996, %s15, 1
      %s5998 = smul.addr %s5997, 30
      %s5999 = smul.addr %s5998, 8
      %s6000 = scalar_lea.vmem %s4, %s5999
      // Predicated region
      $region37: #{tpu_custom_call.1} parent=35 // pred_check
        %p6001 = pneg %p122
      $region38: #{tpu_custom_call.1} parent=35 // pred_check_branch
        %6003 = sbr.rel (%p6001) target = $region40
      $region39: #{tpu_custom_call.1} parent=35 // pred_region
        _
      $region40: #{tpu_custom_call.1} parent=35 // pred_fallthru
        _
    $region36: #{tpu_custom_call.1} parent=5 // pred_fallthru
      _
    %p6004 = scmp.le.s32.totalorder 2, %s10
    // Predicated region
    $region41: #{tpu_custom_call.1} parent=5 // pred_check
      %p6005 = pneg %p6004
    $region42: #{tpu_custom_call.1} parent=5 // pred_check_branch
      %6007 = sbr.rel (%p6005) target = $region44
    $region43: #{tpu_custom_call.1} parent=5 // pred_region
      %s6008 = ssub.s32 %s10, 2
      // Predicated region
      $region45: #{tpu_custom_call.1} parent=43 // pred_check
        %p6009 = pneg %p128
      $region46: #{tpu_custom_call.1} parent=43 // pred_check_branch
        %6011 = sbr.rel (%p6009) target = $region48
      $region47: #{tpu_custom_call.1} parent=43 // pred_region
        %p6012 = scmp.lt.s32.totalorder %s16, 1
        %s6013 = scalar_select %p6012, %s16, 1
        %s6014 = smul.addr %s6013, 30
        %s6015 = smul.addr %s6014, 8
        %s6016 = scalar_lea.vmem %s4, %s6015
      $region48: #{tpu_custom_call.1} parent=43 // pred_fallthru
        _
    $region44: #{tpu_custom_call.1} parent=5 // pred_fallthru
      _
  $region6: #{tpu_custom_call.1} parent=0 // loop_footer
    %s14 = sadd.s32 1, %s10
  $region7: #{tpu_custom_call.1} parent=0 // loop_footer_branch
    %9 = sbr.rel target = $region3
  $region8: #{tpu_custom_call.1} parent=0 // loop_exit
    _

</llo_original>
